<compile_context>
chip_gen: v7x
topology: tpu7x:2x2x1
jax: 0.10.0
libtpu: 0.0.40
codegen_flags: <defaults>
</compile_context>

<pallas_src>
import functools

import numpy as np

import jax
import jax.numpy as jnp
from jax.experimental import pallas as pl
from jax.experimental.pallas import tpu as pltpu


# ---------------------------------------------------------------------------- kernel


def _convnext_fused_kernel(
        # per-tile packed input: BT images folded along rows
        xp_ref,                                          # (BT*H0, W0*P*P*Cin) bf16
        # structured weights (constant index maps)
        emb_w_ref, g0_ref, g1_ref,
        dw0_ref, pw1w0_ref, pw2w0_ref,
        sev_ref, sod_ref, dsa0_ref, dsa1_ref,
        dw1_ref, pw1w1_ref, pw2w1_ref,
        gpool_ref, rowpool_ref, headw_ref,
        vec_ref, pwb_ref,
        # output: lane-dense (BT, 128) = [y | pooled | 0]
        out_ref,
        *, h_img0, h_img1):
    f32 = jnp.float32
    bf16 = jnp.bfloat16

    def vec(i):
        return vec_ref[i:i + 1, :]                       # (1, 128) f32

    def packed_ln(x, g_ref, gamma, beta, eps):
        # LayerNorm over channels in lane-packed (rows, W*C) layout.  g is the
        # (W*C, W*C) group matrix pre-scaled by 1/C, so x @ g is the per-group mean
        # broadcast back to every lane of its group (stays lane-dense, f32 stats).
        g = g_ref[...]
        mean = jnp.dot(x, g, preferred_element_type=f32)
        xc = x - mean
        var = jnp.dot(xc * xc, g, preferred_element_type=f32)
        return xc * jax.lax.rsqrt(var + eps) * gamma + beta

    def dwconv7x7(h, dw_ref, h_img):
        # Depthwise 7x7 (pad=3): 7 dy-shifted copies of h via sublane roll + per-row
        # boundary mask (images are h_img consecutive rows), concatenated along lanes
        # and multiplied by ONE stacked (7*128, 128) weight (x-taps + per-channel
        # weights folded in host-side).
        nrows = h.shape[0]
        ridx = jax.lax.broadcasted_iota(jnp.int32, (nrows, 1), 0)
        yin = ridx % h_img
        parts = []
        for ky in range(7):
            dy = ky - 3
            if dy == 0:
                parts.append(h)
            else:
                rolled = pltpu.roll(h, shift=(-dy) % nrows, axis=0)
                valid = jnp.logical_and(yin + dy >= 0, yin + dy < h_img)
                parts.append(jnp.where(valid, rolled, 0.0))
        stacked = jnp.concatenate(parts, axis=-1).astype(bf16)    # (rows, 896)
        return jnp.dot(stacked, dw_ref[...], preferred_element_type=f32)

    def block(h, dw_ref, dw_b, ln_g, ln_b, g_ref, pw1w_ref, pw1_b, pw2w_ref,
              pw2_b, h_img):
        dwc = dwconv7x7(h, dw_ref, h_img) + dw_b
        ln = packed_ln(dwc, g_ref, ln_g, ln_b, 1e-6)
        t = jnp.dot(ln.astype(bf16), pw1w_ref[...],
                    preferred_element_type=f32) + pw1_b
        # TODO(synk): HF ConvNeXt uses exact (erf) GELU; tanh approximation kept for
        #             guaranteed Mosaic lowering.
        t = jax.nn.gelu(t, approximate=True)
        t = jnp.dot(t.astype(bf16), pw2w_ref[...],
                    preferred_element_type=f32) + pw2_b
        return h + t                                     # layer-scale folded into pw2

    # ---- patch embedding: 4x4/s4 conv as one block-diagonal matmul, then LN(1e-6)
    h = jnp.dot(xp_ref[...], emb_w_ref[...], preferred_element_type=f32) + vec(0)
    h = packed_ln(h, g0_ref, vec(1), vec(2), 1e-6)       # (BT*H0, W0*C0)

    # ---- stage-0 ConvNeXt block
    h = block(h, dw0_ref, vec(3), vec(4), vec(5), g0_ref,
              pw1w0_ref, pwb_ref[0:1, :], pw2w0_ref, vec(6), h_img0)

    # ---- downsample: LN(1e-6) + 2x2/s2 conv (even/odd row select, then channel mix)
    hln = packed_ln(h, g0_ref, vec(7), vec(8), 1e-6).astype(bf16)
    he = jnp.dot(sev_ref[...], hln, preferred_element_type=f32)
    ho = jnp.dot(sod_ref[...], hln, preferred_element_type=f32)
    h1 = (jnp.dot(he.astype(bf16), dsa0_ref[...], preferred_element_type=f32)
          + jnp.dot(ho.astype(bf16), dsa1_ref[...], preferred_element_type=f32)
          + vec(9))                                      # (BT*H1, W1*C1)

    # ---- stage-1 ConvNeXt block
    h1 = block(h1, dw1_ref, vec(10), vec(11), vec(12), g1_ref,
               pw1w1_ref, pwb_ref[1:2, :], pw2w1_ref, vec(13), h_img1)

    # ---- pooler: global spatial mean (1/(H1*W1) folded into gpool) + LN(eps=1e-12)
    s = jnp.dot(h1, gpool_ref[...], preferred_element_type=f32)        # (BT*H1, C1)
    pooled = jnp.dot(rowpool_ref[...], s, preferred_element_type=f32)  # (BT, C1)
    mu = jnp.mean(pooled, axis=-1, keepdims=True)
    var = jnp.mean(jnp.square(pooled - mu), axis=-1, keepdims=True)
    q = (pooled - mu) * jax.lax.rsqrt(var + 1e-12)

    # ---- fused head: pooler-LN affine + fc + lane-dense [y | pooled | 0] packing in
    #      ONE (BT,128) matmul + bias row; single unmasked store per grid step.
    out_ref[...] = (jnp.dot(q, headw_ref[...], preferred_element_type=f32)
                    + vec(14)).astype(out_ref.dtype)


# ---------------------------------------------------------------------------- wrapper


def _const_map(ndim):
    return lambda *args, _n=ndim: (0,) * _n


def _forward(weight_ops, x_nchw, *, patch, H0, W0, H1, W1, bt, proj_dim, feat_dim):
    B, Cin = x_nchw.shape[0], x_nchw.shape[1]
    lane_in = W0 * patch * patch * Cin

    # NCHW -> lane-packed patch rows (one lane-dense row per image row), then fold BT
    # images along the sublane axis.  Single tiny XLA prep op inside the jit; all of
    # the network runs in the one fused Pallas call below.
    xn = jnp.transpose(x_nchw, (0, 2, 3, 1))
    xp = xn.reshape(B, H0, patch, W0, patch, Cin)
    xp = xp.transpose(0, 1, 3, 2, 4, 5).reshape(B, H0, lane_in)

    Bp = ((B + bt - 1) // bt) * bt
    if Bp != B:
        xp = jnp.pad(xp, ((0, Bp - B), (0, 0), (0, 0)))
    ntiles = Bp // bt
    xp = xp.reshape(ntiles * bt * H0, lane_in).astype(jnp.bfloat16)

    kern = functools.partial(_convnext_fused_kernel, h_img0=H0, h_img1=H1)
    in_specs = [pl.BlockSpec((bt * H0, lane_in), lambda t: (t, 0))]
    in_specs += [pl.BlockSpec(w.shape, _const_map(w.ndim)) for w in weight_ops]

    out = pl.pallas_call(
        kern,
        out_shape=jax.ShapeDtypeStruct((ntiles * bt, 128), jnp.float32),
        grid=(ntiles,),
        in_specs=in_specs,
        out_specs=pl.BlockSpec((bt, 128), lambda t: (t, 0)),
        compiler_params=pltpu.CompilerParams(dimension_semantics=("parallel",)),
    )(xp, *weight_ops)

    out = out[:B]
    return out[:, :proj_dim], out[:, proj_dim:proj_dim + feat_dim]


class ConvNextFcPallas:
    """Scaled-down ConvNextFc: backbone -> pooler_output -> Linear; returns (y, pooled)."""

    def __init__(self, in_ch=3, image_size=32, patch_size=4, hidden_sizes=(16, 32),
                 depths=(1, 1), feature_dim=32, projector_dim=16, block_batch=8,
                 seed=1234):
        assert tuple(hidden_sizes) == (16, 32) and tuple(depths) == (1, 1)
        assert feature_dim == hidden_sizes[-1]
        # block_batch = images folded per grid step; 16-32 is the perf sweet spot for
        # large batches (keep grid length >= 4 on v7x so both TCs pipeline).
        assert block_batch % 8 == 0
        self.in_ch = in_ch
        self.image_size = image_size
        self.patch = patch_size
        self.feature_dim = feature_dim
        self.proj_dim = projector_dim
        self.bt = block_batch

        self.H0 = self.W0 = image_size // patch_size             # 8
        self.H1 = self.W1 = self.H0 // 2                         # 4
        self.C0, self.C1 = hidden_sizes
        assert self.W0 * self.C0 == 128 and self.W1 * self.C1 == 128, (
            "lane-packed layout requires W*C == 128 per stage")

        raw = self._init_raw_params(seed)
        self._weight_ops = self._pack_operands(raw)
        self._fwd = jax.jit(functools.partial(
            _forward, patch=self.patch, H0=self.H0, W0=self.W0,
            H1=self.H1, W1=self.W1, bt=self.bt,
            proj_dim=self.proj_dim, feat_dim=self.feature_dim))

    # ---------------- synthetic weights in natural shapes ----------------

    def _init_raw_params(self, seed):
        keys = iter(jax.random.split(jax.random.PRNGKey(seed), 64))

        def nrm(shape, scale=0.02):
            return scale * jax.random.normal(next(keys), shape, jnp.float32)

        C0, C1, P, Cin = self.C0, self.C1, self.patch, self.in_ch
        p = {}
        p['embed_w'] = nrm((P * P * Cin, C0))
        p['embed_b'] = jnp.zeros((C0,), jnp.float32)
        p['embed_ln_g'] = jnp.ones((C0,), jnp.float32)
        p['embed_ln_b'] = jnp.zeros((C0,), jnp.float32)
        for s, dim in enumerate((C0, C1)):
            pre = f's{s}_'
            p[pre + 'dw_w'] = nrm((7, 7, dim))
            p[pre + 'dw_b'] = jnp.zeros((dim,), jnp.float32)
            p[pre + 'ln_g'] = jnp.ones((dim,), jnp.float32)
            p[pre + 'ln_b'] = jnp.zeros((dim,), jnp.float32)
            p[pre + 'w1'] = nrm((dim, 4 * dim))
            p[pre + 'b1'] = jnp.zeros((4 * dim,), jnp.float32)
            p[pre + 'w2'] = nrm((4 * dim, dim))
            p[pre + 'b2'] = jnp.zeros((dim,), jnp.float32)
            p[pre + 'ls'] = 1e-6 * jnp.ones((dim,), jnp.float32)
        p['ds_ln_g'] = jnp.ones((C0,), jnp.float32)
        p['ds_ln_b'] = jnp.zeros((C0,), jnp.float32)
        p['ds_w'] = nrm((2, 2, C0, C1))
        p['ds_b'] = jnp.zeros((C1,), jnp.float32)
        p['pool_ln_g'] = jnp.ones((C1,), jnp.float32)
        p['pool_ln_b'] = jnp.zeros((C1,), jnp.float32)
        p['fc_w'] = nrm((self.feature_dim, self.proj_dim))
        p['fc_b'] = jnp.zeros((self.proj_dim,), jnp.float32)
        return {k: np.asarray(v, np.float32) for k, v in p.items()}

    # -------- pack weights into lane-dense structured matrices (bf16 for MXU) --------

    def _pack_operands(self, r):
        H0, W0, C0 = self.H0, self.W0, self.C0
        H1, W1, C1 = self.H1, self.W1, self.C1
        BT = self.bt

        def tile_vec(v, reps):
            return np.tile(np.asarray(v, np.float32), reps)

        def group_mean(W, C):
            # group-ones matrix pre-scaled by 1/C: x @ g == per-group channel mean
            return np.kron(np.eye(W, dtype=np.float32),
                           np.full((C, C), 1.0 / C, np.float32))

        def dw_stack(w, W, C):
            # (7,7,C) depthwise weights -> stacked (7*W*C, W*C): for each ky the x-shift
            # and per-channel weights are one lane-dense block (zero padding folded in).
            out = np.zeros((7, W * C, W * C), np.float32)
            for ky in range(7):
                for kx in range(7):
                    dx = kx - 3
                    for x in range(W):
                        xi = x + dx
                        if 0 <= xi < W:
                            out[ky, xi * C:(xi + 1) * C, x * C:(x + 1) * C] += \
                                np.diag(w[ky, kx])
            return out.reshape(7 * W * C, W * C)

        def ds_mats(w):
            # (2,2,C0,C1) -> two (W0*C0, W1*C1) channel-mix matrices, one per dy tap
            a = np.zeros((2, W0 * C0, W1 * C1), np.float32)
            for dy in range(2):
                for x1 in range(W1):
                    for dx in range(2):
                        xin = 2 * x1 + dx
                        a[dy, xin * C0:(xin + 1) * C0, x1 * C1:(x1 + 1) * C1] = w[dy, dx]
            return a[0], a[1]

        # even/odd row selection, block-diagonal over the BT folded images
        sev1 = np.zeros((H1, H0), np.float32)
        sod1 = np.zeros((H1, H0), np.float32)
        for y1 in range(H1):
            sev1[y1, 2 * y1] = 1.0
            sod1[y1, 2 * y1 + 1] = 1.0
        sev = np.kron(np.eye(BT, dtype=np.float32), sev1)
        sod = np.kron(np.eye(BT, dtype=np.float32), sod1)
        a0, a1 = ds_mats(r['ds_w'])

        # pooling: lanes -> channels (scaled by 1/(H1*W1)), then per-image row sum
        gpool = np.kron(np.ones((W1, 1), np.float32),
                        np.eye(C1, dtype=np.float32)) / float(H1 * W1)
        rowpool = np.kron(np.eye(BT, dtype=np.float32), np.ones((1, H1), np.float32))

        # fused head: pooler-LN affine + fc + lane-dense [y | pooled | 0] packing
        gam, bet = r['pool_ln_g'], r['pool_ln_b']
        fc_w, fc_b = r['fc_w'], r['fc_b']
        pad_lanes = 128 - self.proj_dim - C1
        base = np.concatenate([fc_w, np.eye(C1, dtype=np.float32),
                               np.zeros((C1, pad_lanes), np.float32)], axis=1)
        head_w = gam[:, None] * base                                  # (32, 128)
        head_b = np.concatenate([bet @ fc_w + fc_b, bet,
                                 np.zeros((pad_lanes,), np.float32)])  # (128,)

        # consolidated (16,128) vector stack (layer-scale folded into pwconv2 bias)
        vec = np.zeros((16, 128), np.float32)
        vec[0] = tile_vec(r['embed_b'], W0)
        vec[1] = tile_vec(r['embed_ln_g'], W0)
        vec[2] = tile_vec(r['embed_ln_b'], W0)
        vec[3] = tile_vec(r['s0_dw_b'], W0)
        vec[4] = tile_vec(r['s0_ln_g'], W0)
        vec[5] = tile_vec(r['s0_ln_b'], W0)
        vec[6] = tile_vec(r['s0_b2'] * r['s0_ls'], W0)
        vec[7] = tile_vec(r['ds_ln_g'], W0)
        vec[8] = tile_vec(r['ds_ln_b'], W0)
        vec[9] = tile_vec(r['ds_b'], W1)
        vec[10] = tile_vec(r['s1_dw_b'], W1)
        vec[11] = tile_vec(r['s1_ln_g'], W1)
        vec[12] = tile_vec(r['s1_ln_b'], W1)
        vec[13] = tile_vec(r['s1_b2'] * r['s1_ls'], W1)
        vec[14] = head_b

        pwb = np.zeros((8, 512), np.float32)                          # pwconv1 biases
        pwb[0] = tile_vec(r['s0_b1'], W0)
        pwb[1] = tile_vec(r['s1_b1'], W1)

        bf, f32 = jnp.bfloat16, jnp.float32
        ops = [
            (np.kron(np.eye(W0, dtype=np.float32), r['embed_w']), bf),    # emb_w (384,128)
            (group_mean(W0, C0), f32),                                    # g0  (128,128)
            (group_mean(W1, C1), f32),                                    # g1  (128,128)
            (dw_stack(r['s0_dw_w'], W0, C0), bf),                         # dw0 (896,128)
            (np.kron(np.eye(W0, dtype=np.float32), r['s0_w1']), bf),      # pw1w0 (128,512)
            (np.kron(np.eye(W0, dtype=np.float32),
                     r['s0_w2'] * r['s0_ls'][None, :]), bf),              # pw2w0 (512,128)
            (sev, bf), (sod, bf),                                         # row select
            (a0, bf), (a1, bf),                                           # ds channel mix
            (dw_stack(r['s1_dw_w'], W1, C1), bf),                         # dw1 (896,128)
            (np.kron(np.eye(W1, dtype=np.float32), r['s1_w1']), bf),      # pw1w1 (128,512)
            (np.kron(np.eye(W1, dtype=np.float32),
                     r['s1_w2'] * r['s1_ls'][None, :]), bf),              # pw2w1 (512,128)
            (gpool, f32), (rowpool, f32), (head_w, f32),                  # pooler + head
            (vec, f32), (pwb, f32),                                       # vector stacks
        ]
        return tuple(jnp.asarray(a, d) for a, d in ops)

    def __call__(self, x_nchw):
        B, Cin, H, W = x_nchw.shape
        assert Cin == self.in_ch and H == self.image_size and W == self.image_size
        return self._fwd(self._weight_ops, x_nchw)


# ---------------------------------------------------------------------------- main


if __name__ == "__main__":
    key = jax.random.PRNGKey(0)
    x = jax.random.normal(key, (2, 3, 32, 32), jnp.float32)      # NCHW like PyTorch

    model = ConvNextFcPallas(in_ch=3, image_size=32, patch_size=4,
                             hidden_sizes=(16, 32), depths=(1, 1),
                             feature_dim=32, projector_dim=16, block_batch=8)
    y, feat = model(x)
    jax.block_until_ready((y, feat))

    assert y.shape == (2, 16), y.shape
    assert feat.shape == (2, 32), feat.shape
    assert bool(jnp.all(jnp.isfinite(y))) and bool(jnp.all(jnp.isfinite(feat)))
    print("KERNEL_OK")
</pallas_src>

<mosaic_0001>
module attributes {stable_mosaic.version = 11 : i64} {
  func.func @_convnext_fused_kernel(%arg0: i32, %arg1: memref<64x384xbf16, #tpu.memory_space<vmem>>, %arg2: memref<384x128xbf16, #tpu.memory_space<vmem>>, %arg3: memref<128x128xf32, #tpu.memory_space<vmem>>, %arg4: memref<128x128xf32, #tpu.memory_space<vmem>>, %arg5: memref<896x128xbf16, #tpu.memory_space<vmem>>, %arg6: memref<128x512xbf16, #tpu.memory_space<vmem>>, %arg7: memref<512x128xbf16, #tpu.memory_space<vmem>>, %arg8: memref<32x64xbf16, #tpu.memory_space<vmem>>, %arg9: memref<32x64xbf16, #tpu.memory_space<vmem>>, %arg10: memref<128x128xbf16, #tpu.memory_space<vmem>>, %arg11: memref<128x128xbf16, #tpu.memory_space<vmem>>, %arg12: memref<896x128xbf16, #tpu.memory_space<vmem>>, %arg13: memref<128x512xbf16, #tpu.memory_space<vmem>>, %arg14: memref<512x128xbf16, #tpu.memory_space<vmem>>, %arg15: memref<128x32xf32, #tpu.memory_space<vmem>>, %arg16: memref<8x32xf32, #tpu.memory_space<vmem>>, %arg17: memref<32x128xf32, #tpu.memory_space<vmem>>, %arg18: memref<16x128xf32, #tpu.memory_space<vmem>>, %arg19: memref<8x512xf32, #tpu.memory_space<vmem>>, %arg20: memref<8x128xf32, #tpu.memory_space<vmem>>) attributes {dimension_semantics = [#tpu.dimension_semantics<parallel>], iteration_bounds = array<i64: 1>, scalar_prefetch = 0 : i64, scratch_operands = 0 : i64, tpu.core_type = #tpu.core_type<tc>, window_params = [{transform_indices = @transform_0, window_bounds = array<i64: 64, 384>}, {pipeline_mode = #tpu.pipeline_mode<synchronous>, transform_indices = @transform_1, window_bounds = array<i64: 384, 128>}, {pipeline_mode = #tpu.pipeline_mode<synchronous>, transform_indices = @transform_2, window_bounds = array<i64: 128, 128>}, {pipeline_mode = #tpu.pipeline_mode<synchronous>, transform_indices = @transform_3, window_bounds = array<i64: 128, 128>}, {pipeline_mode = #tpu.pipeline_mode<synchronous>, transform_indices = @transform_4, window_bounds = array<i64: 896, 128>}, {pipeline_mode = #tpu.pipeline_mode<synchronous>, transform_indices = @transform_5, window_bounds = array<i64: 128, 512>}, {pipeline_mode = #tpu.pipeline_mode<synchronous>, transform_indices = @transform_6, window_bounds = array<i64: 512, 128>}, {pipeline_mode = #tpu.pipeline_mode<synchronous>, transform_indices = @transform_7, window_bounds = array<i64: 32, 64>}, {pipeline_mode = #tpu.pipeline_mode<synchronous>, transform_indices = @transform_8, window_bounds = array<i64: 32, 64>}, {pipeline_mode = #tpu.pipeline_mode<synchronous>, transform_indices = @transform_9, window_bounds = array<i64: 128, 128>}, {pipeline_mode = #tpu.pipeline_mode<synchronous>, transform_indices = @transform_10, window_bounds = array<i64: 128, 128>}, {pipeline_mode = #tpu.pipeline_mode<synchronous>, transform_indices = @transform_11, window_bounds = array<i64: 896, 128>}, {pipeline_mode = #tpu.pipeline_mode<synchronous>, transform_indices = @transform_12, window_bounds = array<i64: 128, 512>}, {pipeline_mode = #tpu.pipeline_mode<synchronous>, transform_indices = @transform_13, window_bounds = array<i64: 512, 128>}, {pipeline_mode = #tpu.pipeline_mode<synchronous>, transform_indices = @transform_14, window_bounds = array<i64: 128, 32>}, {pipeline_mode = #tpu.pipeline_mode<synchronous>, transform_indices = @transform_15, window_bounds = array<i64: 8, 32>}, {pipeline_mode = #tpu.pipeline_mode<synchronous>, transform_indices = @transform_16, window_bounds = array<i64: 32, 128>}, {pipeline_mode = #tpu.pipeline_mode<synchronous>, transform_indices = @transform_17, window_bounds = array<i64: 16, 128>}, {pipeline_mode = #tpu.pipeline_mode<synchronous>, transform_indices = @transform_18, window_bounds = array<i64: 8, 512>}, {transform_indices = @transform_19, window_bounds = array<i64: 8, 128>}]} {
    %c0 = arith.constant 0 : index
    %c0_0 = arith.constant 0 : index
    %0 = vector.load %arg1[%c0, %c0_0] : memref<64x384xbf16, #tpu.memory_space<vmem>>, vector<64x384xbf16>
    %c0_1 = arith.constant 0 : index
    %c0_2 = arith.constant 0 : index
    %1 = vector.load %arg2[%c0_1, %c0_2] : memref<384x128xbf16, #tpu.memory_space<vmem>>, vector<384x128xbf16>
    %cst = arith.constant dense<0.000000e+00> : vector<64x128xf32>
    %2 = tpu.matmul %0, %1, %cst {dimension_numbers = #tpu.dot_dimension_numbers<[1], [0], [0], [1], [0, 0, 1, 1], [], []>} : vector<64x384xbf16>, vector<384x128xbf16>, vector<64x128xf32> -> vector<64x128xf32>
    %c0_3 = arith.constant 0 : index
    %c0_4 = arith.constant 0 : index
    %3 = vector.load %arg18[%c0_3, %c0_4] : memref<16x128xf32, #tpu.memory_space<vmem>>, vector<1x128xf32>
    %4 = vector.broadcast %3 : vector<1x128xf32> to vector<64x128xf32>
    %5 = arith.addf %2, %4 : vector<64x128xf32>
    %c1 = arith.constant 1 : index
    %c0_5 = arith.constant 0 : index
    %6 = vector.load %arg18[%c1, %c0_5] : memref<16x128xf32, #tpu.memory_space<vmem>>, vector<1x128xf32>
    %c2 = arith.constant 2 : index
    %c0_6 = arith.constant 0 : index
    %7 = vector.load %arg18[%c2, %c0_6] : memref<16x128xf32, #tpu.memory_space<vmem>>, vector<1x128xf32>
    %c0_7 = arith.constant 0 : index
    %c0_8 = arith.constant 0 : index
    %8 = vector.load %arg3[%c0_7, %c0_8] : memref<128x128xf32, #tpu.memory_space<vmem>>, vector<128x128xf32>
    %cst_9 = arith.constant dense<0.000000e+00> : vector<64x128xf32>
    %9 = tpu.matmul %5, %8, %cst_9 {dimension_numbers = #tpu.dot_dimension_numbers<[1], [0], [0], [1], [0, 0, 1, 1], [], []>} : vector<64x128xf32>, vector<128x128xf32>, vector<64x128xf32> -> vector<64x128xf32>
    %10 = arith.subf %5, %9 : vector<64x128xf32>
    %11 = arith.mulf %10, %10 : vector<64x128xf32>
    %cst_10 = arith.constant dense<0.000000e+00> : vector<64x128xf32>
    %12 = tpu.matmul %11, %8, %cst_10 {dimension_numbers = #tpu.dot_dimension_numbers<[1], [0], [0], [1], [0, 0, 1, 1], [], []>} : vector<64x128xf32>, vector<128x128xf32>, vector<64x128xf32> -> vector<64x128xf32>
    %cst_11 = arith.constant 9.99999997E-7 : f32
    %13 = vector.broadcast %cst_11 : f32 to vector<64x128xf32>
    %14 = arith.addf %12, %13 : vector<64x128xf32>
    %15 = math.rsqrt %14 : vector<64x128xf32>
    %16 = arith.mulf %10, %15 : vector<64x128xf32>
    %17 = vector.broadcast %6 : vector<1x128xf32> to vector<64x128xf32>
    %18 = arith.mulf %16, %17 : vector<64x128xf32>
    %19 = vector.broadcast %7 : vector<1x128xf32> to vector<64x128xf32>
    %20 = arith.addf %18, %19 : vector<64x128xf32>
    %c3 = arith.constant 3 : index
    %c0_12 = arith.constant 0 : index
    %21 = vector.load %arg18[%c3, %c0_12] : memref<16x128xf32, #tpu.memory_space<vmem>>, vector<1x128xf32>
    %c4 = arith.constant 4 : index
    %c0_13 = arith.constant 0 : index
    %22 = vector.load %arg18[%c4, %c0_13] : memref<16x128xf32, #tpu.memory_space<vmem>>, vector<1x128xf32>
    %c5 = arith.constant 5 : index
    %c0_14 = arith.constant 0 : index
    %23 = vector.load %arg18[%c5, %c0_14] : memref<16x128xf32, #tpu.memory_space<vmem>>, vector<1x128xf32>
    %c0_15 = arith.constant 0 : index
    %c0_16 = arith.constant 0 : index
    %24 = vector.load %arg19[%c0_15, %c0_16] : memref<8x512xf32, #tpu.memory_space<vmem>>, vector<1x512xf32>
    %c6 = arith.constant 6 : index
    %c0_17 = arith.constant 0 : index
    %25 = vector.load %arg18[%c6, %c0_17] : memref<16x128xf32, #tpu.memory_space<vmem>>, vector<1x128xf32>
    %26 = tpu.iota {dimensions = array<i32: 0>} : vector<64x1xi32>
    %c8_i32 = arith.constant 8 : i32
    %c0_i32 = arith.constant 0 : i32
    %27 = arith.cmpi eq, %c8_i32, %c0_i32 : i32
    %c1_i32 = arith.constant 1 : i32
    %28 = arith.select %27, %c1_i32, %c8_i32 : i32
    %29 = vector.broadcast %28 : i32 to vector<64x1xi32>
    %30 = arith.remsi %26, %29 : vector<64x1xi32>
    %c0_i32_18 = arith.constant 0 : i32
    %31 = vector.broadcast %c0_i32_18 : i32 to vector<64x1xi32>
    %32 = arith.cmpi ne, %30, %31 : vector<64x1xi32>
    %c0_i32_19 = arith.constant 0 : i32
    %33 = vector.broadcast %c0_i32_19 : i32 to vector<64x1xi32>
    %34 = arith.cmpi slt, %30, %33 : vector<64x1xi32>
    %c0_i32_20 = arith.constant 0 : i32
    %35 = arith.cmpi slt, %28, %c0_i32_20 : i32
    %36 = vector.broadcast %35 : i1 to vector<64x1xi1>
    %37 = vector.broadcast %36 : vector<64x1xi1> to vector<64x1xi1>
    %38 = arith.xori %34, %37 : vector<64x1xi1>
    %39 = arith.andi %38, %32 : vector<64x1xi1>
    %40 = vector.broadcast %28 : i32 to vector<64x1xi32>
    %41 = arith.addi %30, %40 : vector<64x1xi32>
    %42 = arith.select %39, %41, %30 : vector<64x1xi1>, vector<64x1xi32>
    %c3_i32 = arith.constant 3 : i32
    %43 = tpu.dynamic_rotate %20 by %c3_i32 dim 0 : vector<64x128xf32>, i32 -> vector<64x128xf32>
    %c-3_i32 = arith.constant -3 : i32
    %44 = vector.broadcast %c-3_i32 : i32 to vector<64x1xi32>
    %45 = arith.addi %42, %44 : vector<64x1xi32>
    %c0_i32_21 = arith.constant 0 : i32
    %46 = vector.broadcast %c0_i32_21 : i32 to vector<64x1xi32>
    %47 = arith.cmpi sge, %45, %46 : vector<64x1xi32>
    %c-3_i32_22 = arith.constant -3 : i32
    %48 = vector.broadcast %c-3_i32_22 : i32 to vector<64x1xi32>
    %49 = arith.addi %42, %48 : vector<64x1xi32>
    %c8_i32_23 = arith.constant 8 : i32
    %50 = vector.broadcast %c8_i32_23 : i32 to vector<64x1xi32>
    %51 = arith.cmpi slt, %49, %50 : vector<64x1xi32>
    %52 = arith.andi %47, %51 : vector<64x1xi1>
    %cst_24 = arith.constant 0.000000e+00 : f32
    %53 = vector.shape_cast %52 : vector<64x1xi1> to vector<64x1xi1>
    %54 = vector.broadcast %53 : vector<64x1xi1> to vector<64x128xi1>
    %55 = vector.broadcast %cst_24 : f32 to vector<64x128xf32>
    %56 = arith.select %54, %43, %55 : vector<64x128xi1>, vector<64x128xf32>
    %c2_i32 = arith.constant 2 : i32
    %57 = tpu.dynamic_rotate %20 by %c2_i32 dim 0 : vector<64x128xf32>, i32 -> vector<64x128xf32>
    %c-2_i32 = arith.constant -2 : i32
    %58 = vector.broadcast %c-2_i32 : i32 to vector<64x1xi32>
    %59 = arith.addi %42, %58 : vector<64x1xi32>
    %c0_i32_25 = arith.constant 0 : i32
    %60 = vector.broadcast %c0_i32_25 : i32 to vector<64x1xi32>
    %61 = arith.cmpi sge, %59, %60 : vector<64x1xi32>
    %c-2_i32_26 = arith.constant -2 : i32
    %62 = vector.broadcast %c-2_i32_26 : i32 to vector<64x1xi32>
    %63 = arith.addi %42, %62 : vector<64x1xi32>
    %c8_i32_27 = arith.constant 8 : i32
    %64 = vector.broadcast %c8_i32_27 : i32 to vector<64x1xi32>
    %65 = arith.cmpi slt, %63, %64 : vector<64x1xi32>
    %66 = arith.andi %61, %65 : vector<64x1xi1>
    %cst_28 = arith.constant 0.000000e+00 : f32
    %67 = vector.shape_cast %66 : vector<64x1xi1> to vector<64x1xi1>
    %68 = vector.broadcast %67 : vector<64x1xi1> to vector<64x128xi1>
    %69 = vector.broadcast %cst_28 : f32 to vector<64x128xf32>
    %70 = arith.select %68, %57, %69 : vector<64x128xi1>, vector<64x128xf32>
    %c1_i32_29 = arith.constant 1 : i32
    %71 = tpu.dynamic_rotate %20 by %c1_i32_29 dim 0 : vector<64x128xf32>, i32 -> vector<64x128xf32>
    %c-1_i32 = arith.constant -1 : i32
    %72 = vector.broadcast %c-1_i32 : i32 to vector<64x1xi32>
    %73 = arith.addi %42, %72 : vector<64x1xi32>
    %c0_i32_30 = arith.constant 0 : i32
    %74 = vector.broadcast %c0_i32_30 : i32 to vector<64x1xi32>
    %75 = arith.cmpi sge, %73, %74 : vector<64x1xi32>
    %c-1_i32_31 = arith.constant -1 : i32
    %76 = vector.broadcast %c-1_i32_31 : i32 to vector<64x1xi32>
    %77 = arith.addi %42, %76 : vector<64x1xi32>
    %c8_i32_32 = arith.constant 8 : i32
    %78 = vector.broadcast %c8_i32_32 : i32 to vector<64x1xi32>
    %79 = arith.cmpi slt, %77, %78 : vector<64x1xi32>
    %80 = arith.andi %75, %79 : vector<64x1xi1>
    %cst_33 = arith.constant 0.000000e+00 : f32
    %81 = vector.shape_cast %80 : vector<64x1xi1> to vector<64x1xi1>
    %82 = vector.broadcast %81 : vector<64x1xi1> to vector<64x128xi1>
    %83 = vector.broadcast %cst_33 : f32 to vector<64x128xf32>
    %84 = arith.select %82, %71, %83 : vector<64x128xi1>, vector<64x128xf32>
    %c63_i32 = arith.constant 63 : i32
    %85 = tpu.dynamic_rotate %20 by %c63_i32 dim 0 : vector<64x128xf32>, i32 -> vector<64x128xf32>
    %c1_i32_34 = arith.constant 1 : i32
    %86 = vector.broadcast %c1_i32_34 : i32 to vector<64x1xi32>
    %87 = arith.addi %42, %86 : vector<64x1xi32>
    %c0_i32_35 = arith.constant 0 : i32
    %88 = vector.broadcast %c0_i32_35 : i32 to vector<64x1xi32>
    %89 = arith.cmpi sge, %87, %88 : vector<64x1xi32>
    %c1_i32_36 = arith.constant 1 : i32
    %90 = vector.broadcast %c1_i32_36 : i32 to vector<64x1xi32>
    %91 = arith.addi %42, %90 : vector<64x1xi32>
    %c8_i32_37 = arith.constant 8 : i32
    %92 = vector.broadcast %c8_i32_37 : i32 to vector<64x1xi32>
    %93 = arith.cmpi slt, %91, %92 : vector<64x1xi32>
    %94 = arith.andi %89, %93 : vector<64x1xi1>
    %cst_38 = arith.constant 0.000000e+00 : f32
    %95 = vector.shape_cast %94 : vector<64x1xi1> to vector<64x1xi1>
    %96 = vector.broadcast %95 : vector<64x1xi1> to vector<64x128xi1>
    %97 = vector.broadcast %cst_38 : f32 to vector<64x128xf32>
    %98 = arith.select %96, %85, %97 : vector<64x128xi1>, vector<64x128xf32>
    %c62_i32 = arith.constant 62 : i32
    %99 = tpu.dynamic_rotate %20 by %c62_i32 dim 0 : vector<64x128xf32>, i32 -> vector<64x128xf32>
    %c2_i32_39 = arith.constant 2 : i32
    %100 = vector.broadcast %c2_i32_39 : i32 to vector<64x1xi32>
    %101 = arith.addi %42, %100 : vector<64x1xi32>
    %c0_i32_40 = arith.constant 0 : i32
    %102 = vector.broadcast %c0_i32_40 : i32 to vector<64x1xi32>
    %103 = arith.cmpi sge, %101, %102 : vector<64x1xi32>
    %c2_i32_41 = arith.constant 2 : i32
    %104 = vector.broadcast %c2_i32_41 : i32 to vector<64x1xi32>
    %105 = arith.addi %42, %104 : vector<64x1xi32>
    %c8_i32_42 = arith.constant 8 : i32
    %106 = vector.broadcast %c8_i32_42 : i32 to vector<64x1xi32>
    %107 = arith.cmpi slt, %105, %106 : vector<64x1xi32>
    %108 = arith.andi %103, %107 : vector<64x1xi1>
    %cst_43 = arith.constant 0.000000e+00 : f32
    %109 = vector.shape_cast %108 : vector<64x1xi1> to vector<64x1xi1>
    %110 = vector.broadcast %109 : vector<64x1xi1> to vector<64x128xi1>
    %111 = vector.broadcast %cst_43 : f32 to vector<64x128xf32>
    %112 = arith.select %110, %99, %111 : vector<64x128xi1>, vector<64x128xf32>
    %c61_i32 = arith.constant 61 : i32
    %113 = tpu.dynamic_rotate %20 by %c61_i32 dim 0 : vector<64x128xf32>, i32 -> vector<64x128xf32>
    %c3_i32_44 = arith.constant 3 : i32
    %114 = vector.broadcast %c3_i32_44 : i32 to vector<64x1xi32>
    %115 = arith.addi %42, %114 : vector<64x1xi32>
    %c0_i32_45 = arith.constant 0 : i32
    %116 = vector.broadcast %c0_i32_45 : i32 to vector<64x1xi32>
    %117 = arith.cmpi sge, %115, %116 : vector<64x1xi32>
    %c3_i32_46 = arith.constant 3 : i32
    %118 = vector.broadcast %c3_i32_46 : i32 to vector<64x1xi32>
    %119 = arith.addi %42, %118 : vector<64x1xi32>
    %c8_i32_47 = arith.constant 8 : i32
    %120 = vector.broadcast %c8_i32_47 : i32 to vector<64x1xi32>
    %121 = arith.cmpi slt, %119, %120 : vector<64x1xi32>
    %122 = arith.andi %117, %121 : vector<64x1xi1>
    %cst_48 = arith.constant 0.000000e+00 : f32
    %123 = vector.shape_cast %122 : vector<64x1xi1> to vector<64x1xi1>
    %124 = vector.broadcast %123 : vector<64x1xi1> to vector<64x128xi1>
    %125 = vector.broadcast %cst_48 : f32 to vector<64x128xf32>
    %126 = arith.select %124, %113, %125 : vector<64x128xi1>, vector<64x128xf32>
    %127 = tpu.concatenate %56, %70, %84, %20, %98, %112, %126 in 1 : vector<64x128xf32>, vector<64x128xf32>, vector<64x128xf32>, vector<64x128xf32>, vector<64x128xf32>, vector<64x128xf32>, vector<64x128xf32> -> vector<64x896xf32>
    %128 = arith.truncf %127 : vector<64x896xf32> to vector<64x896xbf16>
    %c0_49 = arith.constant 0 : index
    %c0_50 = arith.constant 0 : index
    %129 = vector.load %arg5[%c0_49, %c0_50] : memref<896x128xbf16, #tpu.memory_space<vmem>>, vector<896x128xbf16>
    %cst_51 = arith.constant dense<0.000000e+00> : vector<64x128xf32>
    %130 = tpu.matmul %128, %129, %cst_51 {dimension_numbers = #tpu.dot_dimension_numbers<[1], [0], [0], [1], [0, 0, 1, 1], [], []>} : vector<64x896xbf16>, vector<896x128xbf16>, vector<64x128xf32> -> vector<64x128xf32>
    %131 = vector.broadcast %21 : vector<1x128xf32> to vector<64x128xf32>
    %132 = arith.addf %130, %131 : vector<64x128xf32>
    %c0_52 = arith.constant 0 : index
    %c0_53 = arith.constant 0 : index
    %133 = vector.load %arg3[%c0_52, %c0_53] : memref<128x128xf32, #tpu.memory_space<vmem>>, vector<128x128xf32>
    %cst_54 = arith.constant dense<0.000000e+00> : vector<64x128xf32>
    %134 = tpu.matmul %132, %133, %cst_54 {dimension_numbers = #tpu.dot_dimension_numbers<[1], [0], [0], [1], [0, 0, 1, 1], [], []>} : vector<64x128xf32>, vector<128x128xf32>, vector<64x128xf32> -> vector<64x128xf32>
    %135 = arith.subf %132, %134 : vector<64x128xf32>
    %136 = arith.mulf %135, %135 : vector<64x128xf32>
    %cst_55 = arith.constant dense<0.000000e+00> : vector<64x128xf32>
    %137 = tpu.matmul %136, %133, %cst_55 {dimension_numbers = #tpu.dot_dimension_numbers<[1], [0], [0], [1], [0, 0, 1, 1], [], []>} : vector<64x128xf32>, vector<128x128xf32>, vector<64x128xf32> -> vector<64x128xf32>
    %cst_56 = arith.constant 9.99999997E-7 : f32
    %138 = vector.broadcast %cst_56 : f32 to vector<64x128xf32>
    %139 = arith.addf %137, %138 : vector<64x128xf32>
    %140 = math.rsqrt %139 : vector<64x128xf32>
    %141 = arith.mulf %135, %140 : vector<64x128xf32>
    %142 = vector.broadcast %22 : vector<1x128xf32> to vector<64x128xf32>
    %143 = arith.mulf %141, %142 : vector<64x128xf32>
    %144 = vector.broadcast %23 : vector<1x128xf32> to vector<64x128xf32>
    %145 = arith.addf %143, %144 : vector<64x128xf32>
    %146 = arith.truncf %145 : vector<64x128xf32> to vector<64x128xbf16>
    %c0_57 = arith.constant 0 : index
    %c0_58 = arith.constant 0 : index
    %147 = vector.load %arg6[%c0_57, %c0_58] : memref<128x512xbf16, #tpu.memory_space<vmem>>, vector<128x512xbf16>
    %cst_59 = arith.constant dense<0.000000e+00> : vector<64x512xf32>
    %148 = tpu.matmul %146, %147, %cst_59 {dimension_numbers = #tpu.dot_dimension_numbers<[1], [0], [0], [1], [0, 0, 1, 1], [], []>} : vector<64x128xbf16>, vector<128x512xbf16>, vector<64x512xf32> -> vector<64x512xf32>
    %149 = vector.broadcast %24 : vector<1x512xf32> to vector<64x512xf32>
    %150 = arith.addf %148, %149 : vector<64x512xf32>
    %151 = arith.mulf %150, %150 : vector<64x512xf32>
    %152 = arith.mulf %150, %151 : vector<64x512xf32>
    %cst_60 = arith.constant 4.471500e-02 : f32
    %153 = vector.broadcast %cst_60 : f32 to vector<64x512xf32>
    %154 = arith.mulf %153, %152 : vector<64x512xf32>
    %155 = arith.addf %150, %154 : vector<64x512xf32>
    %cst_61 = arith.constant 0.797884583 : f32
    %156 = vector.broadcast %cst_61 : f32 to vector<64x512xf32>
    %157 = arith.mulf %156, %155 : vector<64x512xf32>
    %158 = math.tanh %157 : vector<64x512xf32>
    %cst_62 = arith.constant 1.000000e+00 : f32
    %159 = vector.broadcast %cst_62 : f32 to vector<64x512xf32>
    %160 = arith.addf %159, %158 : vector<64x512xf32>
    %cst_63 = arith.constant 5.000000e-01 : f32
    %161 = vector.broadcast %cst_63 : f32 to vector<64x512xf32>
    %162 = arith.mulf %161, %160 : vector<64x512xf32>
    %163 = arith.mulf %150, %162 : vector<64x512xf32>
    %164 = arith.truncf %163 : vector<64x512xf32> to vector<64x512xbf16>
    %c0_64 = arith.constant 0 : index
    %c0_65 = arith.constant 0 : index
    %165 = vector.load %arg7[%c0_64, %c0_65] : memref<512x128xbf16, #tpu.memory_space<vmem>>, vector<512x128xbf16>
    %cst_66 = arith.constant dense<0.000000e+00> : vector<64x128xf32>
    %166 = tpu.matmul %164, %165, %cst_66 {dimension_numbers = #tpu.dot_dimension_numbers<[1], [0], [0], [1], [0, 0, 1, 1], [], []>} : vector<64x512xbf16>, vector<512x128xbf16>, vector<64x128xf32> -> vector<64x128xf32>
    %167 = vector.broadcast %25 : vector<1x128xf32> to vector<64x128xf32>
    %168 = arith.addf %166, %167 : vector<64x128xf32>
    %169 = arith.addf %20, %168 : vector<64x128xf32>
    %c7 = arith.constant 7 : index
    %c0_67 = arith.constant 0 : index
    %170 = vector.load %arg18[%c7, %c0_67] : memref<16x128xf32, #tpu.memory_space<vmem>>, vector<1x128xf32>
    %c8 = arith.constant 8 : index
    %c0_68 = arith.constant 0 : index
    %171 = vector.load %arg18[%c8, %c0_68] : memref<16x128xf32, #tpu.memory_space<vmem>>, vector<1x128xf32>
    %c0_69 = arith.constant 0 : index
    %c0_70 = arith.constant 0 : index
    %172 = vector.load %arg3[%c0_69, %c0_70] : memref<128x128xf32, #tpu.memory_space<vmem>>, vector<128x128xf32>
    %cst_71 = arith.constant dense<0.000000e+00> : vector<64x128xf32>
    %173 = tpu.matmul %169, %172, %cst_71 {dimension_numbers = #tpu.dot_dimension_numbers<[1], [0], [0], [1], [0, 0, 1, 1], [], []>} : vector<64x128xf32>, vector<128x128xf32>, vector<64x128xf32> -> vector<64x128xf32>
    %174 = arith.subf %169, %173 : vector<64x128xf32>
    %175 = arith.mulf %174, %174 : vector<64x128xf32>
    %cst_72 = arith.constant dense<0.000000e+00> : vector<64x128xf32>
    %176 = tpu.matmul %175, %172, %cst_72 {dimension_numbers = #tpu.dot_dimension_numbers<[1], [0], [0], [1], [0, 0, 1, 1], [], []>} : vector<64x128xf32>, vector<128x128xf32>, vector<64x128xf32> -> vector<64x128xf32>
    %cst_73 = arith.constant 9.99999997E-7 : f32
    %177 = vector.broadcast %cst_73 : f32 to vector<64x128xf32>
    %178 = arith.addf %176, %177 : vector<64x128xf32>
    %179 = math.rsqrt %178 : vector<64x128xf32>
    %180 = arith.mulf %174, %179 : vector<64x128xf32>
    %181 = vector.broadcast %170 : vector<1x128xf32> to vector<64x128xf32>
    %182 = arith.mulf %180, %181 : vector<64x128xf32>
    %183 = vector.broadcast %171 : vector<1x128xf32> to vector<64x128xf32>
    %184 = arith.addf %182, %183 : vector<64x128xf32>
    %185 = arith.truncf %184 : vector<64x128xf32> to vector<64x128xbf16>
    %c0_74 = arith.constant 0 : index
    %c0_75 = arith.constant 0 : index
    %186 = vector.load %arg8[%c0_74, %c0_75] : memref<32x64xbf16, #tpu.memory_space<vmem>>, vector<32x64xbf16>
    %cst_76 = arith.constant dense<0.000000e+00> : vector<32x128xf32>
    %187 = tpu.matmul %186, %185, %cst_76 {dimension_numbers = #tpu.dot_dimension_numbers<[1], [0], [0], [1], [0, 0, 1, 1], [], []>} : vector<32x64xbf16>, vector<64x128xbf16>, vector<32x128xf32> -> vector<32x128xf32>
    %c0_77 = arith.constant 0 : index
    %c0_78 = arith.constant 0 : index
    %188 = vector.load %arg9[%c0_77, %c0_78] : memref<32x64xbf16, #tpu.memory_space<vmem>>, vector<32x64xbf16>
    %cst_79 = arith.constant dense<0.000000e+00> : vector<32x128xf32>
    %189 = tpu.matmul %188, %185, %cst_79 {dimension_numbers = #tpu.dot_dimension_numbers<[1], [0], [0], [1], [0, 0, 1, 1], [], []>} : vector<32x64xbf16>, vector<64x128xbf16>, vector<32x128xf32> -> vector<32x128xf32>
    %190 = arith.truncf %187 : vector<32x128xf32> to vector<32x128xbf16>
    %c0_80 = arith.constant 0 : index
    %c0_81 = arith.constant 0 : index
    %191 = vector.load %arg10[%c0_80, %c0_81] : memref<128x128xbf16, #tpu.memory_space<vmem>>, vector<128x128xbf16>
    %cst_82 = arith.constant dense<0.000000e+00> : vector<32x128xf32>
    %192 = tpu.matmul %190, %191, %cst_82 {dimension_numbers = #tpu.dot_dimension_numbers<[1], [0], [0], [1], [0, 0, 1, 1], [], []>} : vector<32x128xbf16>, vector<128x128xbf16>, vector<32x128xf32> -> vector<32x128xf32>
    %193 = arith.truncf %189 : vector<32x128xf32> to vector<32x128xbf16>
    %c0_83 = arith.constant 0 : index
    %c0_84 = arith.constant 0 : index
    %194 = vector.load %arg11[%c0_83, %c0_84] : memref<128x128xbf16, #tpu.memory_space<vmem>>, vector<128x128xbf16>
    %cst_85 = arith.constant dense<0.000000e+00> : vector<32x128xf32>
    %195 = tpu.matmul %193, %194, %cst_85 {dimension_numbers = #tpu.dot_dimension_numbers<[1], [0], [0], [1], [0, 0, 1, 1], [], []>} : vector<32x128xbf16>, vector<128x128xbf16>, vector<32x128xf32> -> vector<32x128xf32>
    %196 = arith.addf %192, %195 : vector<32x128xf32>
    %c9 = arith.constant 9 : index
    %c0_86 = arith.constant 0 : index
    %197 = vector.load %arg18[%c9, %c0_86] : memref<16x128xf32, #tpu.memory_space<vmem>>, vector<1x128xf32>
    %198 = vector.broadcast %197 : vector<1x128xf32> to vector<32x128xf32>
    %199 = arith.addf %196, %198 : vector<32x128xf32>
    %c10 = arith.constant 10 : index
    %c0_87 = arith.constant 0 : index
    %200 = vector.load %arg18[%c10, %c0_87] : memref<16x128xf32, #tpu.memory_space<vmem>>, vector<1x128xf32>
    %c11 = arith.constant 11 : index
    %c0_88 = arith.constant 0 : index
    %201 = vector.load %arg18[%c11, %c0_88] : memref<16x128xf32, #tpu.memory_space<vmem>>, vector<1x128xf32>
    %c12 = arith.constant 12 : index
    %c0_89 = arith.constant 0 : index
    %202 = vector.load %arg18[%c12, %c0_89] : memref<16x128xf32, #tpu.memory_space<vmem>>, vector<1x128xf32>
    %c1_90 = arith.constant 1 : index
    %c0_91 = arith.constant 0 : index
    %203 = vector.load %arg19[%c1_90, %c0_91] : memref<8x512xf32, #tpu.memory_space<vmem>>, vector<1x512xf32>
    %c13 = arith.constant 13 : index
    %c0_92 = arith.constant 0 : index
    %204 = vector.load %arg18[%c13, %c0_92] : memref<16x128xf32, #tpu.memory_space<vmem>>, vector<1x128xf32>
    %205 = tpu.iota {dimensions = array<i32: 0>} : vector<32x1xi32>
    %c4_i32 = arith.constant 4 : i32
    %c0_i32_93 = arith.constant 0 : i32
    %206 = arith.cmpi eq, %c4_i32, %c0_i32_93 : i32
    %c1_i32_94 = arith.constant 1 : i32
    %207 = arith.select %206, %c1_i32_94, %c4_i32 : i32
    %208 = vector.broadcast %207 : i32 to vector<32x1xi32>
    %209 = arith.remsi %205, %208 : vector<32x1xi32>
    %c0_i32_95 = arith.constant 0 : i32
    %210 = vector.broadcast %c0_i32_95 : i32 to vector<32x1xi32>
    %211 = arith.cmpi ne, %209, %210 : vector<32x1xi32>
    %c0_i32_96 = arith.constant 0 : i32
    %212 = vector.broadcast %c0_i32_96 : i32 to vector<32x1xi32>
    %213 = arith.cmpi slt, %209, %212 : vector<32x1xi32>
    %c0_i32_97 = arith.constant 0 : i32
    %214 = arith.cmpi slt, %207, %c0_i32_97 : i32
    %215 = vector.broadcast %214 : i1 to vector<32x1xi1>
    %216 = vector.broadcast %215 : vector<32x1xi1> to vector<32x1xi1>
    %217 = arith.xori %213, %216 : vector<32x1xi1>
    %218 = arith.andi %217, %211 : vector<32x1xi1>
    %219 = vector.broadcast %207 : i32 to vector<32x1xi32>
    %220 = arith.addi %209, %219 : vector<32x1xi32>
    %221 = arith.select %218, %220, %209 : vector<32x1xi1>, vector<32x1xi32>
    %c3_i32_98 = arith.constant 3 : i32
    %222 = tpu.dynamic_rotate %199 by %c3_i32_98 dim 0 : vector<32x128xf32>, i32 -> vector<32x128xf32>
    %c-3_i32_99 = arith.constant -3 : i32
    %223 = vector.broadcast %c-3_i32_99 : i32 to vector<32x1xi32>
    %224 = arith.addi %221, %223 : vector<32x1xi32>
    %c0_i32_100 = arith.constant 0 : i32
    %225 = vector.broadcast %c0_i32_100 : i32 to vector<32x1xi32>
    %226 = arith.cmpi sge, %224, %225 : vector<32x1xi32>
    %c-3_i32_101 = arith.constant -3 : i32
    %227 = vector.broadcast %c-3_i32_101 : i32 to vector<32x1xi32>
    %228 = arith.addi %221, %227 : vector<32x1xi32>
    %c4_i32_102 = arith.constant 4 : i32
    %229 = vector.broadcast %c4_i32_102 : i32 to vector<32x1xi32>
    %230 = arith.cmpi slt, %228, %229 : vector<32x1xi32>
    %231 = arith.andi %226, %230 : vector<32x1xi1>
    %cst_103 = arith.constant 0.000000e+00 : f32
    %232 = vector.shape_cast %231 : vector<32x1xi1> to vector<32x1xi1>
    %233 = vector.broadcast %232 : vector<32x1xi1> to vector<32x128xi1>
    %234 = vector.broadcast %cst_103 : f32 to vector<32x128xf32>
    %235 = arith.select %233, %222, %234 : vector<32x128xi1>, vector<32x128xf32>
    %c2_i32_104 = arith.constant 2 : i32
    %236 = tpu.dynamic_rotate %199 by %c2_i32_104 dim 0 : vector<32x128xf32>, i32 -> vector<32x128xf32>
    %c-2_i32_105 = arith.constant -2 : i32
    %237 = vector.broadcast %c-2_i32_105 : i32 to vector<32x1xi32>
    %238 = arith.addi %221, %237 : vector<32x1xi32>
    %c0_i32_106 = arith.constant 0 : i32
    %239 = vector.broadcast %c0_i32_106 : i32 to vector<32x1xi32>
    %240 = arith.cmpi sge, %238, %239 : vector<32x1xi32>
    %c-2_i32_107 = arith.constant -2 : i32
    %241 = vector.broadcast %c-2_i32_107 : i32 to vector<32x1xi32>
    %242 = arith.addi %221, %241 : vector<32x1xi32>
    %c4_i32_108 = arith.constant 4 : i32
    %243 = vector.broadcast %c4_i32_108 : i32 to vector<32x1xi32>
    %244 = arith.cmpi slt, %242, %243 : vector<32x1xi32>
    %245 = arith.andi %240, %244 : vector<32x1xi1>
    %cst_109 = arith.constant 0.000000e+00 : f32
    %246 = vector.shape_cast %245 : vector<32x1xi1> to vector<32x1xi1>
    %247 = vector.broadcast %246 : vector<32x1xi1> to vector<32x128xi1>
    %248 = vector.broadcast %cst_109 : f32 to vector<32x128xf32>
    %249 = arith.select %247, %236, %248 : vector<32x128xi1>, vector<32x128xf32>
    %c1_i32_110 = arith.constant 1 : i32
    %250 = tpu.dynamic_rotate %199 by %c1_i32_110 dim 0 : vector<32x128xf32>, i32 -> vector<32x128xf32>
    %c-1_i32_111 = arith.constant -1 : i32
    %251 = vector.broadcast %c-1_i32_111 : i32 to vector<32x1xi32>
    %252 = arith.addi %221, %251 : vector<32x1xi32>
    %c0_i32_112 = arith.constant 0 : i32
    %253 = vector.broadcast %c0_i32_112 : i32 to vector<32x1xi32>
    %254 = arith.cmpi sge, %252, %253 : vector<32x1xi32>
    %c-1_i32_113 = arith.constant -1 : i32
    %255 = vector.broadcast %c-1_i32_113 : i32 to vector<32x1xi32>
    %256 = arith.addi %221, %255 : vector<32x1xi32>
    %c4_i32_114 = arith.constant 4 : i32
    %257 = vector.broadcast %c4_i32_114 : i32 to vector<32x1xi32>
    %258 = arith.cmpi slt, %256, %257 : vector<32x1xi32>
    %259 = arith.andi %254, %258 : vector<32x1xi1>
    %cst_115 = arith.constant 0.000000e+00 : f32
    %260 = vector.shape_cast %259 : vector<32x1xi1> to vector<32x1xi1>
    %261 = vector.broadcast %260 : vector<32x1xi1> to vector<32x128xi1>
    %262 = vector.broadcast %cst_115 : f32 to vector<32x128xf32>
    %263 = arith.select %261, %250, %262 : vector<32x128xi1>, vector<32x128xf32>
    %c31_i32 = arith.constant 31 : i32
    %264 = tpu.dynamic_rotate %199 by %c31_i32 dim 0 : vector<32x128xf32>, i32 -> vector<32x128xf32>
    %c1_i32_116 = arith.constant 1 : i32
    %265 = vector.broadcast %c1_i32_116 : i32 to vector<32x1xi32>
    %266 = arith.addi %221, %265 : vector<32x1xi32>
    %c0_i32_117 = arith.constant 0 : i32
    %267 = vector.broadcast %c0_i32_117 : i32 to vector<32x1xi32>
    %268 = arith.cmpi sge, %266, %267 : vector<32x1xi32>
    %c1_i32_118 = arith.constant 1 : i32
    %269 = vector.broadcast %c1_i32_118 : i32 to vector<32x1xi32>
    %270 = arith.addi %221, %269 : vector<32x1xi32>
    %c4_i32_119 = arith.constant 4 : i32
    %271 = vector.broadcast %c4_i32_119 : i32 to vector<32x1xi32>
    %272 = arith.cmpi slt, %270, %271 : vector<32x1xi32>
    %273 = arith.andi %268, %272 : vector<32x1xi1>
    %cst_120 = arith.constant 0.000000e+00 : f32
    %274 = vector.shape_cast %273 : vector<32x1xi1> to vector<32x1xi1>
    %275 = vector.broadcast %274 : vector<32x1xi1> to vector<32x128xi1>
    %276 = vector.broadcast %cst_120 : f32 to vector<32x128xf32>
    %277 = arith.select %275, %264, %276 : vector<32x128xi1>, vector<32x128xf32>
    %c30_i32 = arith.constant 30 : i32
    %278 = tpu.dynamic_rotate %199 by %c30_i32 dim 0 : vector<32x128xf32>, i32 -> vector<32x128xf32>
    %c2_i32_121 = arith.constant 2 : i32
    %279 = vector.broadcast %c2_i32_121 : i32 to vector<32x1xi32>
    %280 = arith.addi %221, %279 : vector<32x1xi32>
    %c0_i32_122 = arith.constant 0 : i32
    %281 = vector.broadcast %c0_i32_122 : i32 to vector<32x1xi32>
    %282 = arith.cmpi sge, %280, %281 : vector<32x1xi32>
    %c2_i32_123 = arith.constant 2 : i32
    %283 = vector.broadcast %c2_i32_123 : i32 to vector<32x1xi32>
    %284 = arith.addi %221, %283 : vector<32x1xi32>
    %c4_i32_124 = arith.constant 4 : i32
    %285 = vector.broadcast %c4_i32_124 : i32 to vector<32x1xi32>
    %286 = arith.cmpi slt, %284, %285 : vector<32x1xi32>
    %287 = arith.andi %282, %286 : vector<32x1xi1>
    %cst_125 = arith.constant 0.000000e+00 : f32
    %288 = vector.shape_cast %287 : vector<32x1xi1> to vector<32x1xi1>
    %289 = vector.broadcast %288 : vector<32x1xi1> to vector<32x128xi1>
    %290 = vector.broadcast %cst_125 : f32 to vector<32x128xf32>
    %291 = arith.select %289, %278, %290 : vector<32x128xi1>, vector<32x128xf32>
    %c29_i32 = arith.constant 29 : i32
    %292 = tpu.dynamic_rotate %199 by %c29_i32 dim 0 : vector<32x128xf32>, i32 -> vector<32x128xf32>
    %c3_i32_126 = arith.constant 3 : i32
    %293 = vector.broadcast %c3_i32_126 : i32 to vector<32x1xi32>
    %294 = arith.addi %221, %293 : vector<32x1xi32>
    %c0_i32_127 = arith.constant 0 : i32
    %295 = vector.broadcast %c0_i32_127 : i32 to vector<32x1xi32>
    %296 = arith.cmpi sge, %294, %295 : vector<32x1xi32>
    %c3_i32_128 = arith.constant 3 : i32
    %297 = vector.broadcast %c3_i32_128 : i32 to vector<32x1xi32>
    %298 = arith.addi %221, %297 : vector<32x1xi32>
    %c4_i32_129 = arith.constant 4 : i32
    %299 = vector.broadcast %c4_i32_129 : i32 to vector<32x1xi32>
    %300 = arith.cmpi slt, %298, %299 : vector<32x1xi32>
    %301 = arith.andi %296, %300 : vector<32x1xi1>
    %cst_130 = arith.constant 0.000000e+00 : f32
    %302 = vector.shape_cast %301 : vector<32x1xi1> to vector<32x1xi1>
    %303 = vector.broadcast %302 : vector<32x1xi1> to vector<32x128xi1>
    %304 = vector.broadcast %cst_130 : f32 to vector<32x128xf32>
    %305 = arith.select %303, %292, %304 : vector<32x128xi1>, vector<32x128xf32>
    %306 = tpu.concatenate %235, %249, %263, %199, %277, %291, %305 in 1 : vector<32x128xf32>, vector<32x128xf32>, vector<32x128xf32>, vector<32x128xf32>, vector<32x128xf32>, vector<32x128xf32>, vector<32x128xf32> -> vector<32x896xf32>
    %307 = arith.truncf %306 : vector<32x896xf32> to vector<32x896xbf16>
    %c0_131 = arith.constant 0 : index
    %c0_132 = arith.constant 0 : index
    %308 = vector.load %arg12[%c0_131, %c0_132] : memref<896x128xbf16, #tpu.memory_space<vmem>>, vector<896x128xbf16>
    %cst_133 = arith.constant dense<0.000000e+00> : vector<32x128xf32>
    %309 = tpu.matmul %307, %308, %cst_133 {dimension_numbers = #tpu.dot_dimension_numbers<[1], [0], [0], [1], [0, 0, 1, 1], [], []>} : vector<32x896xbf16>, vector<896x128xbf16>, vector<32x128xf32> -> vector<32x128xf32>
    %310 = vector.broadcast %200 : vector<1x128xf32> to vector<32x128xf32>
    %311 = arith.addf %309, %310 : vector<32x128xf32>
    %c0_134 = arith.constant 0 : index
    %c0_135 = arith.constant 0 : index
    %312 = vector.load %arg4[%c0_134, %c0_135] : memref<128x128xf32, #tpu.memory_space<vmem>>, vector<128x128xf32>
    %cst_136 = arith.constant dense<0.000000e+00> : vector<32x128xf32>
    %313 = tpu.matmul %311, %312, %cst_136 {dimension_numbers = #tpu.dot_dimension_numbers<[1], [0], [0], [1], [0, 0, 1, 1], [], []>} : vector<32x128xf32>, vector<128x128xf32>, vector<32x128xf32> -> vector<32x128xf32>
    %314 = arith.subf %311, %313 : vector<32x128xf32>
    %315 = arith.mulf %314, %314 : vector<32x128xf32>
    %cst_137 = arith.constant dense<0.000000e+00> : vector<32x128xf32>
    %316 = tpu.matmul %315, %312, %cst_137 {dimension_numbers = #tpu.dot_dimension_numbers<[1], [0], [0], [1], [0, 0, 1, 1], [], []>} : vector<32x128xf32>, vector<128x128xf32>, vector<32x128xf32> -> vector<32x128xf32>
    %cst_138 = arith.constant 9.99999997E-7 : f32
    %317 = vector.broadcast %cst_138 : f32 to vector<32x128xf32>
    %318 = arith.addf %316, %317 : vector<32x128xf32>
    %319 = math.rsqrt %318 : vector<32x128xf32>
    %320 = arith.mulf %314, %319 : vector<32x128xf32>
    %321 = vector.broadcast %201 : vector<1x128xf32> to vector<32x128xf32>
    %322 = arith.mulf %320, %321 : vector<32x128xf32>
    %323 = vector.broadcast %202 : vector<1x128xf32> to vector<32x128xf32>
    %324 = arith.addf %322, %323 : vector<32x128xf32>
    %325 = arith.truncf %324 : vector<32x128xf32> to vector<32x128xbf16>
    %c0_139 = arith.constant 0 : index
    %c0_140 = arith.constant 0 : index
    %326 = vector.load %arg13[%c0_139, %c0_140] : memref<128x512xbf16, #tpu.memory_space<vmem>>, vector<128x512xbf16>
    %cst_141 = arith.constant dense<0.000000e+00> : vector<32x512xf32>
    %327 = tpu.matmul %325, %326, %cst_141 {dimension_numbers = #tpu.dot_dimension_numbers<[1], [0], [0], [1], [0, 0, 1, 1], [], []>} : vector<32x128xbf16>, vector<128x512xbf16>, vector<32x512xf32> -> vector<32x512xf32>
    %328 = vector.broadcast %203 : vector<1x512xf32> to vector<32x512xf32>
    %329 = arith.addf %327, %328 : vector<32x512xf32>
    %330 = arith.mulf %329, %329 : vector<32x512xf32>
    %331 = arith.mulf %329, %330 : vector<32x512xf32>
    %cst_142 = arith.constant 4.471500e-02 : f32
    %332 = vector.broadcast %cst_142 : f32 to vector<32x512xf32>
    %333 = arith.mulf %332, %331 : vector<32x512xf32>
    %334 = arith.addf %329, %333 : vector<32x512xf32>
    %cst_143 = arith.constant 0.797884583 : f32
    %335 = vector.broadcast %cst_143 : f32 to vector<32x512xf32>
    %336 = arith.mulf %335, %334 : vector<32x512xf32>
    %337 = math.tanh %336 : vector<32x512xf32>
    %cst_144 = arith.constant 1.000000e+00 : f32
    %338 = vector.broadcast %cst_144 : f32 to vector<32x512xf32>
    %339 = arith.addf %338, %337 : vector<32x512xf32>
    %cst_145 = arith.constant 5.000000e-01 : f32
    %340 = vector.broadcast %cst_145 : f32 to vector<32x512xf32>
    %341 = arith.mulf %340, %339 : vector<32x512xf32>
    %342 = arith.mulf %329, %341 : vector<32x512xf32>
    %343 = arith.truncf %342 : vector<32x512xf32> to vector<32x512xbf16>
    %c0_146 = arith.constant 0 : index
    %c0_147 = arith.constant 0 : index
    %344 = vector.load %arg14[%c0_146, %c0_147] : memref<512x128xbf16, #tpu.memory_space<vmem>>, vector<512x128xbf16>
    %cst_148 = arith.constant dense<0.000000e+00> : vector<32x128xf32>
    %345 = tpu.matmul %343, %344, %cst_148 {dimension_numbers = #tpu.dot_dimension_numbers<[1], [0], [0], [1], [0, 0, 1, 1], [], []>} : vector<32x512xbf16>, vector<512x128xbf16>, vector<32x128xf32> -> vector<32x128xf32>
    %346 = vector.broadcast %204 : vector<1x128xf32> to vector<32x128xf32>
    %347 = arith.addf %345, %346 : vector<32x128xf32>
    %348 = arith.addf %199, %347 : vector<32x128xf32>
    %c0_149 = arith.constant 0 : index
    %c0_150 = arith.constant 0 : index
    %349 = vector.load %arg15[%c0_149, %c0_150] : memref<128x32xf32, #tpu.memory_space<vmem>>, vector<128x32xf32>
    %cst_151 = arith.constant dense<0.000000e+00> : vector<32x32xf32>
    %350 = tpu.matmul %348, %349, %cst_151 {dimension_numbers = #tpu.dot_dimension_numbers<[1], [0], [0], [1], [0, 0, 1, 1], [], []>} : vector<32x128xf32>, vector<128x32xf32>, vector<32x32xf32> -> vector<32x32xf32>
    %c0_152 = arith.constant 0 : index
    %c0_153 = arith.constant 0 : index
    %351 = vector.load %arg16[%c0_152, %c0_153] : memref<8x32xf32, #tpu.memory_space<vmem>>, vector<8x32xf32>
    %cst_154 = arith.constant dense<0.000000e+00> : vector<8x32xf32>
    %352 = tpu.matmul %351, %350, %cst_154 {dimension_numbers = #tpu.dot_dimension_numbers<[1], [0], [0], [1], [0, 0, 1, 1], [], []>} : vector<8x32xf32>, vector<32x32xf32>, vector<8x32xf32> -> vector<8x32xf32>
    %cst_155 = arith.constant dense<0.000000e+00> : vector<8xf32>
    %353 = vector.multi_reduction <add>, %352, %cst_155 [1] : vector<8x32xf32> to vector<8xf32>
    %354 = vector.shape_cast %353 : vector<8xf32> to vector<8x1xf32>
    %cst_156 = arith.constant 3.200000e+01 : f32
    %355 = vector.broadcast %cst_156 : f32 to vector<8x1xf32>
    %356 = arith.divf %354, %355 : vector<8x1xf32>
    %357 = vector.broadcast %356 : vector<8x1xf32> to vector<8x32xf32>
    %358 = arith.subf %352, %357 : vector<8x32xf32>
    %359 = arith.mulf %358, %358 : vector<8x32xf32>
    %cst_157 = arith.constant dense<0.000000e+00> : vector<8xf32>
    %360 = vector.multi_reduction <add>, %359, %cst_157 [1] : vector<8x32xf32> to vector<8xf32>
    %361 = vector.shape_cast %360 : vector<8xf32> to vector<8x1xf32>
    %cst_158 = arith.constant 3.200000e+01 : f32
    %362 = vector.broadcast %cst_158 : f32 to vector<8x1xf32>
    %363 = arith.divf %361, %362 : vector<8x1xf32>
    %364 = vector.broadcast %356 : vector<8x1xf32> to vector<8x32xf32>
    %365 = arith.subf %352, %364 : vector<8x32xf32>
    %cst_159 = arith.constant 9.99999996E-13 : f32
    %366 = vector.broadcast %cst_159 : f32 to vector<8x1xf32>
    %367 = arith.addf %363, %366 : vector<8x1xf32>
    %368 = math.rsqrt %367 : vector<8x1xf32>
    %369 = vector.broadcast %368 : vector<8x1xf32> to vector<8x32xf32>
    %370 = arith.mulf %365, %369 : vector<8x32xf32>
    %c0_160 = arith.constant 0 : index
    %c0_161 = arith.constant 0 : index
    %371 = vector.load %arg17[%c0_160, %c0_161] : memref<32x128xf32, #tpu.memory_space<vmem>>, vector<32x128xf32>
    %cst_162 = arith.constant dense<0.000000e+00> : vector<8x128xf32>
    %372 = tpu.matmul %370, %371, %cst_162 {dimension_numbers = #tpu.dot_dimension_numbers<[1], [0], [0], [1], [0, 0, 1, 1], [], []>} : vector<8x32xf32>, vector<32x128xf32>, vector<8x128xf32> -> vector<8x128xf32>
    %c14 = arith.constant 14 : index
    %c0_163 = arith.constant 0 : index
    %373 = vector.load %arg18[%c14, %c0_163] : memref<16x128xf32, #tpu.memory_space<vmem>>, vector<1x128xf32>
    %374 = vector.broadcast %373 : vector<1x128xf32> to vector<8x128xf32>
    %375 = arith.addf %372, %374 : vector<8x128xf32>
    %c0_164 = arith.constant 0 : index
    %c0_165 = arith.constant 0 : index
    %376 = vector.load %arg20[%c0_164, %c0_165] : memref<8x128xf32, #tpu.memory_space<vmem>>, vector<8x128xf32>
    tpu.vector_store %arg20[%c0_164, %c0_165], %375 {strides = array<i32>} : memref<8x128xf32, #tpu.memory_space<vmem>>, vector<8x128xf32>,
    return
  }
  func.func @transform_0(%arg0: i32) -> (i32, i32) {
    %c0_i32 = arith.constant 0 : i32
    %c0_i32_0 = arith.constant 0 : i32
    return %arg0, %c0_i32 : i32, i32
  }
  func.func @transform_1(%arg0: i32) -> (i32, i32) {
    %c0_i32 = arith.constant 0 : i32
    %c0_i32_0 = arith.constant 0 : i32
    %c0_i32_1 = arith.constant 0 : i32
    return %c0_i32, %c0_i32_0 : i32, i32
  }
  func.func @transform_2(%arg0: i32) -> (i32, i32) {
    %c0_i32 = arith.constant 0 : i32
    %c0_i32_0 = arith.constant 0 : i32
    %c0_i32_1 = arith.constant 0 : i32
    return %c0_i32, %c0_i32_0 : i32, i32
  }
  func.func @transform_3(%arg0: i32) -> (i32, i32) {
    %c0_i32 = arith.constant 0 : i32
    %c0_i32_0 = arith.constant 0 : i32
    %c0_i32_1 = arith.constant 0 : i32
    return %c0_i32, %c0_i32_0 : i32, i32
  }
  func.func @transform_4(%arg0: i32) -> (i32, i32) {
    %c0_i32 = arith.constant 0 : i32
    %c0_i32_0 = arith.constant 0 : i32
    %c0_i32_1 = arith.constant 0 : i32
    return %c0_i32, %c0_i32_0 : i32, i32
  }
  func.func @transform_5(%arg0: i32) -> (i32, i32) {
    %c0_i32 = arith.constant 0 : i32
    %c0_i32_0 = arith.constant 0 : i32
    %c0_i32_1 = arith.constant 0 : i32
    return %c0_i32, %c0_i32_0 : i32, i32
  }
  func.func @transform_6(%arg0: i32) -> (i32, i32) {
    %c0_i32 = arith.constant 0 : i32
    %c0_i32_0 = arith.constant 0 : i32
    %c0_i32_1 = arith.constant 0 : i32
    return %c0_i32, %c0_i32_0 : i32, i32
  }
  func.func @transform_7(%arg0: i32) -> (i32, i32) {
    %c0_i32 = arith.constant 0 : i32
    %c0_i32_0 = arith.constant 0 : i32
    %c0_i32_1 = arith.constant 0 : i32
    return %c0_i32, %c0_i32_0 : i32, i32
  }
  func.func @transform_8(%arg0: i32) -> (i32, i32) {
    %c0_i32 = arith.constant 0 : i32
    %c0_i32_0 = arith.constant 0 : i32
    %c0_i32_1 = arith.constant 0 : i32
    return %c0_i32, %c0_i32_0 : i32, i32
  }
  func.func @transform_9(%arg0: i32) -> (i32, i32) {
    %c0_i32 = arith.constant 0 : i32
    %c0_i32_0 = arith.constant 0 : i32
    %c0_i32_1 = arith.constant 0 : i32
    return %c0_i32, %c0_i32_0 : i32, i32
  }
  func.func @transform_10(%arg0: i32) -> (i32, i32) {
    %c0_i32 = arith.constant 0 : i32
    %c0_i32_0 = arith.constant 0 : i32
    %c0_i32_1 = arith.constant 0 : i32
    return %c0_i32, %c0_i32_0 : i32, i32
  }
  func.func @transform_11(%arg0: i32) -> (i32, i32) {
    %c0_i32 = arith.constant 0 : i32
    %c0_i32_0 = arith.constant 0 : i32
    %c0_i32_1 = arith.constant 0 : i32
    return %c0_i32, %c0_i32_0 : i32, i32
  }
  func.func @transform_12(%arg0: i32) -> (i32, i32) {
    %c0_i32 = arith.constant 0 : i32
    %c0_i32_0 = arith.constant 0 : i32
    %c0_i32_1 = arith.constant 0 : i32
    return %c0_i32, %c0_i32_0 : i32, i32
  }
  func.func @transform_13(%arg0: i32) -> (i32, i32) {
    %c0_i32 = arith.constant 0 : i32
    %c0_i32_0 = arith.constant 0 : i32
    %c0_i32_1 = arith.constant 0 : i32
    return %c0_i32, %c0_i32_0 : i32, i32
  }
  func.func @transform_14(%arg0: i32) -> (i32, i32) {
    %c0_i32 = arith.constant 0 : i32
    %c0_i32_0 = arith.constant 0 : i32
    %c0_i32_1 = arith.constant 0 : i32
    return %c0_i32, %c0_i32_0 : i32, i32
  }
  func.func @transform_15(%arg0: i32) -> (i32, i32) {
    %c0_i32 = arith.constant 0 : i32
    %c0_i32_0 = arith.constant 0 : i32
    %c0_i32_1 = arith.constant 0 : i32
    return %c0_i32, %c0_i32_0 : i32, i32
  }
  func.func @transform_16(%arg0: i32) -> (i32, i32) {
    %c0_i32 = arith.constant 0 : i32
    %c0_i32_0 = arith.constant 0 : i32
    %c0_i32_1 = arith.constant 0 : i32
    return %c0_i32, %c0_i32_0 : i32, i32
  }
  func.func @transform_17(%arg0: i32) -> (i32, i32) {
    %c0_i32 = arith.constant 0 : i32
    %c0_i32_0 = arith.constant 0 : i32
    %c0_i32_1 = arith.constant 0 : i32
    return %c0_i32, %c0_i32_0 : i32, i32
  }
  func.func @transform_18(%arg0: i32) -> (i32, i32) {
    %c0_i32 = arith.constant 0 : i32
    %c0_i32_0 = arith.constant 0 : i32
    %c0_i32_1 = arith.constant 0 : i32
    return %c0_i32, %c0_i32_0 : i32, i32
  }
  func.func @transform_19(%arg0: i32) -> (i32, i32) {
    %c0_i32 = arith.constant 0 : i32
    %c0_i32_0 = arith.constant 0 : i32
    return %arg0, %c0_i32 : i32, i32
  }
}

</mosaic_0001>

<llo_original>
// kernel: _forward.1
$region0: #{_forward.1}
  #allocation0 [shape = 'u32[]', space=smem, size = 0x4, offset = 0x4, fixed_abs, tag = 'smem constant byte address 0x4 - core index']
  #allocation1 [shape = 'u32[144,128]{1,0:T(1,128)}', space=vmem, size = 0x12000, scoped, tag = 'internal scratch']
  %s0 = inlined_call_operand.vmem [shape: bf16[64,384], index: 0, kind: input, shape index: {}]
  %s1 = inlined_call_operand.vmem [shape: bf16[384,128], index: 1, kind: input, shape index: {}]
  %s2 = inlined_call_operand.vmem [shape: f32[128,128], index: 2, kind: input, shape index: {}]
  %s3 = inlined_call_operand.vmem [shape: f32[128,128], index: 3, kind: input, shape index: {}]
  %s4 = inlined_call_operand.vmem [shape: bf16[896,128], index: 4, kind: input, shape index: {}]
  %s5 = inlined_call_operand.vmem [shape: bf16[128,512], index: 5, kind: input, shape index: {}]
  %s6 = inlined_call_operand.vmem [shape: bf16[512,128], index: 6, kind: input, shape index: {}]
  %s7 = inlined_call_operand.vmem [shape: bf16[32,64], index: 7, kind: input, shape index: {}]
  %s8 = inlined_call_operand.vmem [shape: bf16[32,64], index: 8, kind: input, shape index: {}]
  %s9 = inlined_call_operand.vmem [shape: bf16[128,128], index: 9, kind: input, shape index: {}]
  %s10 = inlined_call_operand.vmem [shape: bf16[128,128], index: 10, kind: input, shape index: {}]
  %s11 = inlined_call_operand.vmem [shape: bf16[896,128], index: 11, kind: input, shape index: {}]
  %s12 = inlined_call_operand.vmem [shape: bf16[128,512], index: 12, kind: input, shape index: {}]
  %s13 = inlined_call_operand.vmem [shape: bf16[512,128], index: 13, kind: input, shape index: {}]
  %s14 = inlined_call_operand.vmem [shape: f32[128,32], index: 14, kind: input, shape index: {}]
  %s15 = inlined_call_operand.vmem [shape: f32[8,32], index: 15, kind: input, shape index: {}]
  %s16 = inlined_call_operand.vmem [shape: f32[32,128], index: 16, kind: input, shape index: {}]
  %s17 = inlined_call_operand.vmem [shape: f32[16,128], index: 17, kind: input, shape index: {}]
  %s18 = inlined_call_operand.vmem [shape: f32[8,512], index: 18, kind: input, shape index: {}]
  %s19 = inlined_call_operand.vmem [shape: f32[8,128], index: 19, kind: output, shape index: {}]
  %s20 = sld [smem:[#allocation0]]
  $region86: #{_forward.1} parent=0
    _
  %s22 = ssub.s32 1, %s20
  %s23 = scalar_select 0, %s22, %s20
  // Predicated region
  $region2: #{_forward.1} parent=0 // pred_check
    _
  $region3: #{_forward.1} parent=0 // pred_check_branch
    %25 = sbr.rel (0) target = $region5
  $region4: #{_forward.1} parent=0 // pred_region
    _
  $region5: #{_forward.1} parent=0 // pred_fallthru
    _
  // Predicated region
  $region6: #{_forward.1} parent=0 // pred_check
    _
  $region7: #{_forward.1} parent=0 // pred_check_branch
    %27 = sbr.rel (0) target = $region9
  $region8: #{_forward.1} parent=0 // pred_region
    _
  $region9: #{_forward.1} parent=0 // pred_fallthru
    _
  // Predicated region
  $region10: #{_forward.1} parent=0 // pred_check
    _
  $region11: #{_forward.1} parent=0 // pred_check_branch
    %29 = sbr.rel (0) target = $region13
  $region12: #{_forward.1} parent=0 // pred_region
    _
  $region13: #{_forward.1} parent=0 // pred_fallthru
    _
  // Predicated region
  $region14: #{_forward.1} parent=0 // pred_check
    _
  $region15: #{_forward.1} parent=0 // pred_check_branch
    %31 = sbr.rel (0) target = $region17
  $region16: #{_forward.1} parent=0 // pred_region
    _
  $region17: #{_forward.1} parent=0 // pred_fallthru
    _
  // Predicated region
  $region18: #{_forward.1} parent=0 // pred_check
    _
  $region19: #{_forward.1} parent=0 // pred_check_branch
    %33 = sbr.rel (0) target = $region21
  $region20: #{_forward.1} parent=0 // pred_region
    _
  $region21: #{_forward.1} parent=0 // pred_fallthru
    _
  // Predicated region
  $region22: #{_forward.1} parent=0 // pred_check
    _
  $region23: #{_forward.1} parent=0 // pred_check_branch
    %35 = sbr.rel (0) target = $region25
  $region24: #{_forward.1} parent=0 // pred_region
    _
  $region25: #{_forward.1} parent=0 // pred_fallthru
    _
  // Predicated region
  $region26: #{_forward.1} parent=0 // pred_check
    _
  $region27: #{_forward.1} parent=0 // pred_check_branch
    %37 = sbr.rel (0) target = $region29
  $region28: #{_forward.1} parent=0 // pred_region
    _
  $region29: #{_forward.1} parent=0 // pred_fallthru
    _
  // Predicated region
  $region30: #{_forward.1} parent=0 // pred_check
    _
  $region31: #{_forward.1} parent=0 // pred_check_branch
    %39 = sbr.rel (0) target = $region33
  $region32: #{_forward.1} parent=0 // pred_region
    _
  $region33: #{_forward.1} parent=0 // pred_fallthru
    _
  // Predicated region
  $region34: #{_forward.1} parent=0 // pred_check
    _
  $region35: #{_forward.1} parent=0 // pred_check_branch
    %41 = sbr.rel (0) target = $region37
  $region36: #{_forward.1} parent=0 // pred_region
    _
  $region37: #{_forward.1} parent=0 // pred_fallthru
    _
  // Predicated region
  $region38: #{_forward.1} parent=0 // pred_check
    _
  $region39: #{_forward.1} parent=0 // pred_check_branch
    %43 = sbr.rel (0) target = $region41
  $region40: #{_forward.1} parent=0 // pred_region
    _
  $region41: #{_forward.1} parent=0 // pred_fallthru
    _
  // Predicated region
  $region42: #{_forward.1} parent=0 // pred_check
    _
  $region43: #{_forward.1} parent=0 // pred_check_branch
    %45 = sbr.rel (0) target = $region45
  $region44: #{_forward.1} parent=0 // pred_region
    _
  $region45: #{_forward.1} parent=0 // pred_fallthru
    _
  // Predicated region
  $region46: #{_forward.1} parent=0 // pred_check
    _
  $region47: #{_forward.1} parent=0 // pred_check_branch
    %47 = sbr.rel (0) target = $region49
  $region48: #{_forward.1} parent=0 // pred_region
    _
  $region49: #{_forward.1} parent=0 // pred_fallthru
    _
  // Predicated region
  $region50: #{_forward.1} parent=0 // pred_check
    _
  $region51: #{_forward.1} parent=0 // pred_check_branch
    %49 = sbr.rel (0) target = $region53
  $region52: #{_forward.1} parent=0 // pred_region
    _
  $region53: #{_forward.1} parent=0 // pred_fallthru
    _
  // Predicated region
  $region54: #{_forward.1} parent=0 // pred_check
    _
  $region55: #{_forward.1} parent=0 // pred_check_branch
    %51 = sbr.rel (0) target = $region57
  $region56: #{_forward.1} parent=0 // pred_region
    _
  $region57: #{_forward.1} parent=0 // pred_fallthru
    _
  // Predicated region
  $region58: #{_forward.1} parent=0 // pred_check
    _
  $region59: #{_forward.1} parent=0 // pred_check_branch
    %53 = sbr.rel (0) target = $region61
  $region60: #{_forward.1} parent=0 // pred_region
    _
  $region61: #{_forward.1} parent=0 // pred_fallthru
    _
  // Predicated region
  $region62: #{_forward.1} parent=0 // pred_check
    _
  $region63: #{_forward.1} parent=0 // pred_check_branch
    %55 = sbr.rel (0) target = $region65
  $region64: #{_forward.1} parent=0 // pred_region
    _
  $region65: #{_forward.1} parent=0 // pred_fallthru
    _
  // Predicated region
  $region66: #{_forward.1} parent=0 // pred_check
    _
  $region67: #{_forward.1} parent=0 // pred_check_branch
    %57 = sbr.rel (0) target = $region69
  $region68: #{_forward.1} parent=0 // pred_region
    _
  $region69: #{_forward.1} parent=0 // pred_fallthru
    _
  // Predicated region
  $region70: #{_forward.1} parent=0 // pred_check
    _
  $region71: #{_forward.1} parent=0 // pred_check_branch
    %59 = sbr.rel (0) target = $region73
  $region72: #{_forward.1} parent=0 // pred_region
    _
  $region73: #{_forward.1} parent=0 // pred_fallthru
    _
  // Predicated region
  $region74: #{_forward.1} parent=0 // pred_check
    _
  $region75: #{_forward.1} parent=0 // pred_check_branch
    %61 = sbr.rel (0) target = $region77
  $region76: #{_forward.1} parent=0 // pred_region
    _
  $region77: #{_forward.1} parent=0 // pred_fallthru
    _
  %v63 = vld [vmem:[%s0] sm:$0xff]
  %v64 = vld [vmem:[%s0 + $0x8] sm:$0xf]
  %v65 = vld [vmem:[%s0 + $0xc] sm:$0xff]
  %v66 = vld [vmem:[%s0 + $0x14] sm:$0xf]
  %v67 = vld [vmem:[%s0 + $0x18] sm:$0xff]
  %v68 = vld [vmem:[%s0 + $0x20] sm:$0xf]
  %v69 = vld [vmem:[%s0 + $0x24] sm:$0xff]
  %v70 = vld [vmem:[%s0 + $0x2c] sm:$0xf]
  %v71 = vld [vmem:[%s0 + $0x30] sm:$0xff]
  %v72 = vld [vmem:[%s0 + $0x38] sm:$0xf]
  %v73 = vld [vmem:[%s0 + $0x3c] sm:$0xff]
  %v74 = vld [vmem:[%s0 + $0x44] sm:$0xf]
  %v75 = vld [vmem:[%s0 + $0x48] sm:$0xff]
  %v76 = vld [vmem:[%s0 + $0x50] sm:$0xf]
  %v77 = vld [vmem:[%s0 + $0x54] sm:$0xff]
  %v78 = vld [vmem:[%s0 + $0x5c] sm:$0xf]
  %v79 = vld [vmem:[%s1] sm:$0xf]
  %v80 = vld [vmem:[%s1 + $0x4] sm:$0xf]
  %v81 = vld [vmem:[%s1 + $0x8] sm:$0xf]
  %v82 = vld [vmem:[%s1 + $0xc] sm:$0xf]
  %v83 = vld [vmem:[%s1 + $0x10] sm:$0xf]
  %v84 = vld [vmem:[%s1 + $0x14] sm:$0xf]
  %v85 = vld [vmem:[%s1 + $0x18] sm:$0xf]
  %v86 = vld [vmem:[%s1 + $0x1c] sm:$0xf]
  %v87 = vld [vmem:[%s1 + $0x20] sm:$0xf]
  %v88 = vld [vmem:[%s1 + $0x24] sm:$0xf]
  %v89 = vld [vmem:[%s1 + $0x28] sm:$0xf]
  %v90 = vld [vmem:[%s1 + $0x2c] sm:$0xf]
  %v91 = vld [vmem:[%s1 + $0x30] sm:$0xf]
  %v92 = vld [vmem:[%s1 + $0x34] sm:$0xf]
  %v93 = vld [vmem:[%s1 + $0x38] sm:$0xf]
  %v94 = vld [vmem:[%s1 + $0x3c] sm:$0xf]
  %v95 = vld [vmem:[%s1 + $0x40] sm:$0xf]
  %v96 = vld [vmem:[%s1 + $0x44] sm:$0xf]
  %v97 = vld [vmem:[%s1 + $0x48] sm:$0xf]
  %v98 = vld [vmem:[%s1 + $0x4c] sm:$0xf]
  %v99 = vld [vmem:[%s1 + $0x50] sm:$0xf]
  %v100 = vld [vmem:[%s1 + $0x54] sm:$0xf]
  %v101 = vld [vmem:[%s1 + $0x58] sm:$0xf]
  %v102 = vld [vmem:[%s1 + $0x5c] sm:$0xf]
  %v103 = vld [vmem:[%s1 + $0x60] sm:$0xf]
  %v104 = vld [vmem:[%s1 + $0x64] sm:$0xf]
  %v105 = vld [vmem:[%s1 + $0x68] sm:$0xf]
  %v106 = vld [vmem:[%s1 + $0x6c] sm:$0xf]
  %v107 = vld [vmem:[%s1 + $0x70] sm:$0xf]
  %v108 = vld [vmem:[%s1 + $0x74] sm:$0xf]
  %v109 = vld [vmem:[%s1 + $0x78] sm:$0xf]
  %v110 = vld [vmem:[%s1 + $0x7c] sm:$0xf]
  %v111 = vld [vmem:[%s1 + $0x80] sm:$0xf]
  %v112 = vld [vmem:[%s1 + $0x84] sm:$0xf]
  %v113 = vld [vmem:[%s1 + $0x88] sm:$0xf]
  %v114 = vld [vmem:[%s1 + $0x8c] sm:$0xf]
  %v115 = vld [vmem:[%s1 + $0x90] sm:$0xf]
  %v116 = vld [vmem:[%s1 + $0x94] sm:$0xf]
  %v117 = vld [vmem:[%s1 + $0x98] sm:$0xf]
  %v118 = vld [vmem:[%s1 + $0x9c] sm:$0xf]
  %v119 = vld [vmem:[%s1 + $0xa0] sm:$0xf]
  %v120 = vld [vmem:[%s1 + $0xa4] sm:$0xf]
  %v121 = vld [vmem:[%s1 + $0xa8] sm:$0xf]
  %v122 = vld [vmem:[%s1 + $0xac] sm:$0xf]
  %v123 = vld [vmem:[%s1 + $0xb0] sm:$0xf]
  %v124 = vld [vmem:[%s1 + $0xb4] sm:$0xf]
  %v125 = vld [vmem:[%s1 + $0xb8] sm:$0xf]
  %v126 = vld [vmem:[%s1 + $0xbc] sm:$0xf]
  %v127 = vld [vmem:[%s17] sm:$0x1]
  %v128 = vlaneseq
  %v129 = vshrl.u32 %v128, 7
  %v130 = vsub.s32 0, %v129
  %v131 = vrot.slane %v127, %v130
  %v148 = vunpack.c.l.b16 %v63
  %v149 = vunpack.c.h.b16 %v63
  %v150 = vunpack.c.l.b16 %v64
  %v151 = vunpack.c.l.b16 %v65
  %v152 = vunpack.c.h.b16 %v65
  %v153 = vunpack.c.l.b16 %v66
  %v154 = vunpack.c.l.b16 %v67
  %v155 = vunpack.c.h.b16 %v67
  %v156 = vunpack.c.l.b16 %v68
  %v157 = vunpack.c.l.b16 %v69
  %v158 = vunpack.c.h.b16 %v69
  %v159 = vunpack.c.l.b16 %v70
  %v160 = vunpack.c.l.b16 %v71
  %v161 = vunpack.c.h.b16 %v71
  %v162 = vunpack.c.l.b16 %v72
  %v163 = vunpack.c.l.b16 %v73
  %v164 = vunpack.c.h.b16 %v73
  %v165 = vunpack.c.l.b16 %v74
  %v166 = vunpack.c.l.b16 %v75
  %v167 = vunpack.c.h.b16 %v75
  %v168 = vunpack.c.l.b16 %v76
  %v169 = vunpack.c.l.b16 %v77
  %v170 = vunpack.c.h.b16 %v77
  %v171 = vunpack.c.l.b16 %v78
  %v172 = vpack.c.b16 %v151, %v148
  %v173 = vpack.c.b16 %v152, %v149
  %v174 = vpack.c.b16 %v153, %v150
  %v175 = vpack.c.b16 %v157, %v154
  %v176 = vpack.c.b16 %v158, %v155
  %v177 = vpack.c.b16 %v159, %v156
  %v178 = vpack.c.b16 %v163, %v160
  %v179 = vpack.c.b16 %v164, %v161
  %v180 = vpack.c.b16 %v165, %v162
  %v181 = vpack.c.b16 %v169, %v166
  %v182 = vpack.c.b16 %v170, %v167
  %v183 = vpack.c.b16 %v171, %v168
  %v244 = vunpack.c.l.b16 %v79
  %v245 = vunpack.c.l.b16 %v80
  %v246 = vunpack.c.l.b16 %v81
  %v247 = vunpack.c.l.b16 %v82
  %v248 = vunpack.c.l.b16 %v83
  %v249 = vunpack.c.l.b16 %v84
  %v250 = vunpack.c.l.b16 %v85
  %v251 = vunpack.c.l.b16 %v86
  %v252 = vunpack.c.l.b16 %v87
  %v253 = vunpack.c.l.b16 %v88
  %v254 = vunpack.c.l.b16 %v89
  %v255 = vunpack.c.l.b16 %v90
  %v256 = vunpack.c.l.b16 %v91
  %v257 = vunpack.c.l.b16 %v92
  %v258 = vunpack.c.l.b16 %v93
  %v259 = vunpack.c.l.b16 %v94
  %v260 = vunpack.c.l.b16 %v95
  %v261 = vunpack.c.l.b16 %v96
  %v262 = vunpack.c.l.b16 %v97
  %v263 = vunpack.c.l.b16 %v98
  %v264 = vunpack.c.l.b16 %v99
  %v265 = vunpack.c.l.b16 %v100
  %v266 = vunpack.c.l.b16 %v101
  %v267 = vunpack.c.l.b16 %v102
  %v268 = vunpack.c.l.b16 %v103
  %v269 = vunpack.c.l.b16 %v104
  %v270 = vunpack.c.l.b16 %v105
  %v271 = vunpack.c.l.b16 %v106
  %v272 = vunpack.c.l.b16 %v107
  %v273 = vunpack.c.l.b16 %v108
  %v274 = vunpack.c.l.b16 %v109
  %v275 = vunpack.c.l.b16 %v110
  %v276 = vunpack.c.l.b16 %v111
  %v277 = vunpack.c.l.b16 %v112
  %v278 = vunpack.c.l.b16 %v113
  %v279 = vunpack.c.l.b16 %v114
  %v280 = vunpack.c.l.b16 %v115
  %v281 = vunpack.c.l.b16 %v116
  %v282 = vunpack.c.l.b16 %v117
  %v283 = vunpack.c.l.b16 %v118
  %v284 = vunpack.c.l.b16 %v119
  %v285 = vunpack.c.l.b16 %v120
  %v286 = vunpack.c.l.b16 %v121
  %v287 = vunpack.c.l.b16 %v122
  %v288 = vunpack.c.l.b16 %v123
  %v289 = vunpack.c.l.b16 %v124
  %v290 = vunpack.c.l.b16 %v125
  %v291 = vunpack.c.l.b16 %v126
  %v292 = vpack.c.b16 %v245, %v244
  %v293 = vpack.c.b16 %v247, %v246
  %v294 = vpack.c.b16 %v249, %v248
  %v295 = vpack.c.b16 %v251, %v250
  %v296 = vpack.c.b16 %v253, %v252
  %v297 = vpack.c.b16 %v255, %v254
  %v298 = vpack.c.b16 %v257, %v256
  %v299 = vpack.c.b16 %v259, %v258
  %v300 = vpack.c.b16 %v261, %v260
  %v301 = vpack.c.b16 %v263, %v262
  %v302 = vpack.c.b16 %v265, %v264
  %v303 = vpack.c.b16 %v267, %v266
  %v304 = vpack.c.b16 %v269, %v268
  %v305 = vpack.c.b16 %v271, %v270
  %v306 = vpack.c.b16 %v273, %v272
  %v307 = vpack.c.b16 %v275, %v274
  %v308 = vpack.c.b16 %v277, %v276
  %v309 = vpack.c.b16 %v279, %v278
  %v310 = vpack.c.b16 %v281, %v280
  %v311 = vpack.c.b16 %v283, %v282
  %v312 = vpack.c.b16 %v285, %v284
  %v313 = vpack.c.b16 %v287, %v286
  %v314 = vpack.c.b16 %v289, %v288
  %v315 = vpack.c.b16 %v291, %v290
  %340 = vmatprep.subr.bf16.mxu0 0
  %341 = vmatpush1.bf16.msra.mxu0 %v292
  %342 = vmatprep.subr.bf16.mxu0 0
  %343 = vmatpush1.bf16.msra.mxu0 %v293
  %344 = vmatprep.subr.bf16.mxu0 0
  %345 = vmatpush1.bf16.msra.mxu0 %v294
  %346 = vmatprep.subr.bf16.mxu0 0
  %347 = vmatpush1.bf16.msra.mxu0 %v295
  %348 = vmatprep.subr.bf16.mxu0 0
  %349 = vmatpush1.bf16.msra.mxu0 %v296
  %350 = vmatprep.subr.bf16.mxu0 0
  %351 = vmatpush1.bf16.msra.mxu0 %v297
  %352 = vmatprep.subr.bf16.mxu0 0
  %353 = vmatpush1.bf16.msra.mxu0 %v298
  %354 = vmatprep.subr.bf16.mxu0 0
  %355 = vmatpush1.bf16.msra.mxu0 %v299
  %356 = vmatprep.subr.bf16.mxu0 0
  %357 = vmatpush1.bf16.msra.mxu0 %v300
  %358 = vmatprep.subr.bf16.mxu0 0
  %359 = vmatpush1.bf16.msra.mxu0 %v301
  %360 = vmatprep.subr.bf16.mxu0 0
  %361 = vmatpush1.bf16.msra.mxu0 %v302
  %362 = vmatprep.subr.bf16.mxu0 0
  %363 = vmatpush1.bf16.msra.mxu0 %v303
  %364 = vmatprep.subr.bf16.mxu0 0
  %365 = vmatpush1.bf16.msra.mxu0 %v304
  %366 = vmatprep.subr.bf16.mxu0 0
  %367 = vmatpush1.bf16.msra.mxu0 %v305
  %368 = vmatprep.subr.bf16.mxu0 0
  %369 = vmatpush1.bf16.msra.mxu0 %v306
  %370 = vmatprep.subr.bf16.mxu0 0
  %371 = vmatpush1.bf16.msra.mxu0 %v307
  %372 = vmatprep.mubr.bf16.mxu0 %v173
  %373 = vmatmul.mubr.bf16.gmra.mrb[0].mxu0 %v172
  %v374 = vpop.f32.mrb[0].mxu0
  %v375 = vadd.f32 %v131, %v374
  %v376 = vpop.f32.mrb[0].mxu0
  %v377 = vpop.f32.mrb[0].mxu0
  %v378 = vadd.f32 %v131, %v377
  %v379 = vpop.f32.mrb[0].mxu0
  %380 = vmatprep.mubr.bf16.mxu0 %v176
  %381 = vmatmul.mubr.bf16.gmra.mrb[0].mxu0 %v175
  %v382 = vpop.f32.mrb[0].mxu0
  %v383 = vadd.f32 %v131, %v382
  %v384 = vpop.f32.mrb[0].mxu0
  %v385 = vpop.f32.mrb[0].mxu0
  %v386 = vadd.f32 %v131, %v385
  %v387 = vpop.f32.mrb[0].mxu0
  %388 = vmatprep.mubr.bf16.mxu0 %v179
  %389 = vmatmul.mubr.bf16.gmra.mrb[0].mxu0 %v178
  %v390 = vpop.f32.mrb[0].mxu0
  %v391 = vadd.f32 %v131, %v390
  %v392 = vpop.f32.mrb[0].mxu0
  %v393 = vpop.f32.mrb[0].mxu0
  %v394 = vadd.f32 %v131, %v393
  %v395 = vpop.f32.mrb[0].mxu0
  %396 = vmatprep.mubr.bf16.mxu0 %v182
  %397 = vmatmul.mubr.bf16.gmra.mrb[0].mxu0 %v181
  %v398 = vpop.f32.mrb[0].mxu0
  %v399 = vadd.f32 %v131, %v398
  %v400 = vpop.f32.mrb[0].mxu0
  %v401 = vpop.f32.mrb[0].mxu0
  %v402 = vadd.f32 %v131, %v401
  %v403 = vpop.f32.mrb[0].mxu0
  %404 = vdwg.mxu0
  %405 = vmatprep.subr.bf16.mxu0 0
  %406 = vmatpush1.bf16.msra.mxu0 %v308
  %407 = vmatprep.subr.bf16.mxu0 0
  %408 = vmatpush1.bf16.msra.mxu0 %v309
  %409 = vmatprep.subr.bf16.mxu0 0
  %410 = vmatpush1.bf16.msra.mxu0 %v310
  %411 = vmatprep.subr.bf16.mxu0 0
  %412 = vmatpush1.bf16.msra.mxu0 %v311
  %413 = vmatprep.subr.bf16.mxu0 0
  %414 = vmatpush1.bf16.msra.mxu0 %v312
  %415 = vmatprep.subr.bf16.mxu0 0
  %416 = vmatpush1.bf16.msra.mxu0 %v313
  %417 = vmatprep.subr.bf16.mxu0 0
  %418 = vmatpush1.bf16.msra.mxu0 %v314
  %419 = vmatprep.subr.bf16.mxu0 0
  %420 = vmatpush1.bf16.msra.mxu0 %v315
  %421 = vmatprep.subr.bf16.mxu0 0
  %422 = vmatpush1.bf16.msra.mxu0 0
  %423 = vmatprep.subr.bf16.mxu0 0
  %424 = vmatpush1.bf16.msra.mxu0 0
  %425 = vmatprep.subr.bf16.mxu0 0
  %426 = vmatpush1.bf16.msra.mxu0 0
  %427 = vmatprep.subr.bf16.mxu0 0
  %428 = vmatpush1.bf16.msra.mxu0 0
  %429 = vmatprep.subr.bf16.mxu0 0
  %430 = vmatpush1.bf16.msra.mxu0 0
  %431 = vmatprep.subr.bf16.mxu0 0
  %432 = vmatpush1.bf16.msra.mxu0 0
  %433 = vmatprep.subr.bf16.mxu0 0
  %434 = vmatpush1.bf16.msra.mxu0 0
  %435 = vmatprep.subr.bf16.mxu0 0
  %436 = vmatpush1.bf16.msra.mxu0 0
  %437 = vmatprep.mubr.bf16.mxu0 0
  %438 = vmatmul.mubr.bf16.gmra.mrb[0].mxu0 %v174
  %v439 = vpop.f32.mrb[0].mxu0
  %v440 = vadd.f32 %v375, %v439
  %v441 = vpop.f32.mrb[0].mxu0
  %v442 = vpop.f32.mrb[0].mxu0
  %v443 = vadd.f32 %v378, %v442
  %v444 = vpop.f32.mrb[0].mxu0
  %445 = vmatprep.mubr.bf16.mxu0 0
  %446 = vmatmul.mubr.bf16.gmra.mrb[0].mxu0 %v177
  %v447 = vpop.f32.mrb[0].mxu0
  %v448 = vadd.f32 %v383, %v447
  %v449 = vpop.f32.mrb[0].mxu0
  %v450 = vpop.f32.mrb[0].mxu0
  %v451 = vadd.f32 %v386, %v450
  %v452 = vpop.f32.mrb[0].mxu0
  %453 = vmatprep.mubr.bf16.mxu0 0
  %454 = vmatmul.mubr.bf16.gmra.mrb[0].mxu0 %v180
  %v455 = vpop.f32.mrb[0].mxu0
  %v456 = vadd.f32 %v391, %v455
  %v457 = vpop.f32.mrb[0].mxu0
  %v458 = vpop.f32.mrb[0].mxu0
  %v459 = vadd.f32 %v394, %v458
  %v460 = vpop.f32.mrb[0].mxu0
  %461 = vmatprep.mubr.bf16.mxu0 0
  %462 = vmatmul.mubr.bf16.gmra.mrb[0].mxu0 %v183
  %v463 = vpop.f32.mrb[0].mxu0
  %v464 = vadd.f32 %v399, %v463
  %v465 = vpop.f32.mrb[0].mxu0
  %v466 = vpop.f32.mrb[0].mxu0
  %v467 = vadd.f32 %v402, %v466
  %v468 = vpop.f32.mrb[0].mxu0
  %469 = vdwg.mxu0
  %v470 = vld [vmem:[%s17 + $0x1] sm:$0x1]
  %v471 = vld [vmem:[%s17 + $0x2] sm:$0x1]
  %v472 = vld [vmem:[%s2] sm:$0xff]
  %v473 = vld [vmem:[%s2 + $0x8] sm:$0xff]
  %v474 = vld [vmem:[%s2 + $0x10] sm:$0xff]
  %v475 = vld [vmem:[%s2 + $0x18] sm:$0xff]
  %v476 = vld [vmem:[%s2 + $0x20] sm:$0xff]
  %v477 = vld [vmem:[%s2 + $0x28] sm:$0xff]
  %v478 = vld [vmem:[%s2 + $0x30] sm:$0xff]
  %v479 = vld [vmem:[%s2 + $0x38] sm:$0xff]
  %v480 = vld [vmem:[%s2 + $0x40] sm:$0xff]
  %v481 = vld [vmem:[%s2 + $0x48] sm:$0xff]
  %v482 = vld [vmem:[%s2 + $0x50] sm:$0xff]
  %v483 = vld [vmem:[%s2 + $0x58] sm:$0xff]
  %v484 = vld [vmem:[%s2 + $0x60] sm:$0xff]
  %v485 = vld [vmem:[%s2 + $0x68] sm:$0xff]
  %v486 = vld [vmem:[%s2 + $0x70] sm:$0xff]
  %v487 = vld [vmem:[%s2 + $0x78] sm:$0xff]
  %488 = vmatprep.subr.mxu0 0.0
  %489 = vmatpush1.msra.mxu0 %v472
  %490 = vmatprep.subr.mxu0 0.0
  %491 = vmatpush1.msra.mxu0 %v473
  %492 = vmatprep.subr.mxu0 0.0
  %493 = vmatpush1.msra.mxu0 %v474
  %494 = vmatprep.subr.mxu0 0.0
  %495 = vmatpush1.msra.mxu0 %v475
  %496 = vmatprep.subr.mxu0 0.0
  %497 = vmatpush1.msra.mxu0 %v476
  %498 = vmatprep.subr.mxu0 0.0
  %499 = vmatpush1.msra.mxu0 %v477
  %500 = vmatprep.subr.mxu0 0.0
  %501 = vmatpush1.msra.mxu0 %v478
  %502 = vmatprep.subr.mxu0 0.0
  %503 = vmatpush1.msra.mxu0 %v479
  %504 = vmatprep.subr.mxu0 0.0
  %505 = vmatpush1.msra.mxu0 %v480
  %506 = vmatprep.subr.mxu0 0.0
  %507 = vmatpush1.msra.mxu0 %v481
  %508 = vmatprep.subr.mxu0 0.0
  %509 = vmatpush1.msra.mxu0 %v482
  %510 = vmatprep.subr.mxu0 0.0
  %511 = vmatpush1.msra.mxu0 %v483
  %512 = vmatprep.subr.mxu0 0.0
  %513 = vmatpush1.msra.mxu0 %v484
  %514 = vmatprep.subr.mxu0 0.0
  %515 = vmatpush1.msra.mxu0 %v485
  %516 = vmatprep.subr.mxu0 0.0
  %517 = vmatpush1.msra.mxu0 %v486
  %518 = vmatprep.subr.mxu0 0.0
  %519 = vmatpush1.msra.mxu0 %v487
  %520 = vmatprep.subr.mxu0 0.0
  %521 = vmatpush1.msra.mxu0 0.0
  %522 = vmatprep.subr.mxu0 0.0
  %523 = vmatpush1.msra.mxu0 0.0
  %524 = vmatprep.subr.mxu0 0.0
  %525 = vmatpush1.msra.mxu0 0.0
  %526 = vmatprep.subr.mxu0 0.0
  %527 = vmatpush1.msra.mxu0 0.0
  %528 = vmatprep.subr.mxu0 0.0
  %529 = vmatpush1.msra.mxu0 0.0
  %530 = vmatprep.subr.mxu0 0.0
  %531 = vmatpush1.msra.mxu0 0.0
  %532 = vmatprep.subr.mxu0 0.0
  %533 = vmatpush1.msra.mxu0 0.0
  %534 = vmatprep.subr.mxu0 0.0
  %535 = vmatpush1.msra.mxu0 0.0
  %536 = vmatprep.subr.mxu0 0.0
  %537 = vmatpush1.msra.mxu0 0.0
  %538 = vmatprep.subr.mxu0 0.0
  %539 = vmatpush1.msra.mxu0 0.0
  %540 = vmatprep.subr.mxu0 0.0
  %541 = vmatpush1.msra.mxu0 0.0
  %542 = vmatprep.subr.mxu0 0.0
  %543 = vmatpush1.msra.mxu0 0.0
  %544 = vmatprep.subr.mxu0 0.0
  %545 = vmatpush1.msra.mxu0 0.0
  %546 = vmatprep.subr.mxu0 0.0
  %547 = vmatpush1.msra.mxu0 0.0
  %548 = vmatprep.subr.mxu0 0.0
  %549 = vmatpush1.msra.mxu0 0.0
  %550 = vmatprep.subr.mxu0 0.0
  %551 = vmatpush1.msra.mxu0 0.0
  %552 = vmatprep.mubr.f32.mxu0 0.0
  %553 = vmatmul.mubr.f32.gmra.mrb[0].mxu0 %v440
  %v554 = vpop.f32.mrb[0].mxu0
  %v555 = vadd.f32 0.0, %v554
  %v556 = vpop.f32.mrb[0].mxu0
  %557 = vmatprep.mubr.f32.mxu0 0.0
  %558 = vmatmul.mubr.f32.gmra.mrb[0].mxu0 %v443
  %v559 = vpop.f32.mrb[0].mxu0
  %v560 = vadd.f32 0.0, %v559
  %v561 = vpop.f32.mrb[0].mxu0
  %562 = vmatprep.mubr.f32.mxu0 0.0
  %563 = vmatmul.mubr.f32.gmra.mrb[0].mxu0 %v448
  %v564 = vpop.f32.mrb[0].mxu0
  %v565 = vadd.f32 0.0, %v564
  %v566 = vpop.f32.mrb[0].mxu0
  %567 = vmatprep.mubr.f32.mxu0 0.0
  %568 = vmatmul.mubr.f32.gmra.mrb[0].mxu0 %v451
  %v569 = vpop.f32.mrb[0].mxu0
  %v570 = vadd.f32 0.0, %v569
  %v571 = vpop.f32.mrb[0].mxu0
  %572 = vmatprep.mubr.f32.mxu0 0.0
  %573 = vmatmul.mubr.f32.gmra.mrb[0].mxu0 %v456
  %v574 = vpop.f32.mrb[0].mxu0
  %v575 = vadd.f32 0.0, %v574
  %v576 = vpop.f32.mrb[0].mxu0
  %577 = vmatprep.mubr.f32.mxu0 0.0
  %578 = vmatmul.mubr.f32.gmra.mrb[0].mxu0 %v459
  %v579 = vpop.f32.mrb[0].mxu0
  %v580 = vadd.f32 0.0, %v579
  %v581 = vpop.f32.mrb[0].mxu0
  %582 = vmatprep.mubr.f32.mxu0 0.0
  %583 = vmatmul.mubr.f32.gmra.mrb[0].mxu0 %v464
  %v584 = vpop.f32.mrb[0].mxu0
  %v585 = vadd.f32 0.0, %v584
  %v586 = vpop.f32.mrb[0].mxu0
  %587 = vmatprep.mubr.f32.mxu0 0.0
  %588 = vmatmul.mubr.f32.gmra.mrb[0].mxu0 %v467
  %v589 = vpop.f32.mrb[0].mxu0
  %v590 = vadd.f32 0.0, %v589
  %v591 = vpop.f32.mrb[0].mxu0
  %592 = vdwg.mxu0
  %v593 = vsub.f32 %v440, %v555
  %v594 = vsub.f32 %v443, %v560
  %v595 = vsub.f32 %v448, %v565
  %v596 = vsub.f32 %v451, %v570
  %v597 = vsub.f32 %v456, %v575
  %v598 = vsub.f32 %v459, %v580
  %v599 = vsub.f32 %v464, %v585
  %v600 = vsub.f32 %v467, %v590
  %v601 = vmul.f32 %v593, %v593
  %v602 = vmul.f32 %v594, %v594
  %v603 = vmul.f32 %v595, %v595
  %v604 = vmul.f32 %v596, %v596
  %v605 = vmul.f32 %v597, %v597
  %v606 = vmul.f32 %v598, %v598
  %v607 = vmul.f32 %v599, %v599
  %v608 = vmul.f32 %v600, %v600
  %609 = vmatprep.subr.mxu0 0.0
  %610 = vmatpush1.msra.mxu0 %v472
  %611 = vmatprep.subr.mxu0 0.0
  %612 = vmatpush1.msra.mxu0 %v473
  %613 = vmatprep.subr.mxu0 0.0
  %614 = vmatpush1.msra.mxu0 %v474
  %615 = vmatprep.subr.mxu0 0.0
  %616 = vmatpush1.msra.mxu0 %v475
  %617 = vmatprep.subr.mxu0 0.0
  %618 = vmatpush1.msra.mxu0 %v476
  %619 = vmatprep.subr.mxu0 0.0
  %620 = vmatpush1.msra.mxu0 %v477
  %621 = vmatprep.subr.mxu0 0.0
  %622 = vmatpush1.msra.mxu0 %v478
  %623 = vmatprep.subr.mxu0 0.0
  %624 = vmatpush1.msra.mxu0 %v479
  %625 = vmatprep.subr.mxu0 0.0
  %626 = vmatpush1.msra.mxu0 %v480
  %627 = vmatprep.subr.mxu0 0.0
  %628 = vmatpush1.msra.mxu0 %v481
  %629 = vmatprep.subr.mxu0 0.0
  %630 = vmatpush1.msra.mxu0 %v482
  %631 = vmatprep.subr.mxu0 0.0
  %632 = vmatpush1.msra.mxu0 %v483
  %633 = vmatprep.subr.mxu0 0.0
  %634 = vmatpush1.msra.mxu0 %v484
  %635 = vmatprep.subr.mxu0 0.0
  %636 = vmatpush1.msra.mxu0 %v485
  %637 = vmatprep.subr.mxu0 0.0
  %638 = vmatpush1.msra.mxu0 %v486
  %639 = vmatprep.subr.mxu0 0.0
  %640 = vmatpush1.msra.mxu0 %v487
  %641 = vmatprep.subr.mxu0 0.0
  %642 = vmatpush1.msra.mxu0 0.0
  %643 = vmatprep.subr.mxu0 0.0
  %644 = vmatpush1.msra.mxu0 0.0
  %645 = vmatprep.subr.mxu0 0.0
  %646 = vmatpush1.msra.mxu0 0.0
  %647 = vmatprep.subr.mxu0 0.0
  %648 = vmatpush1.msra.mxu0 0.0
  %649 = vmatprep.subr.mxu0 0.0
  %650 = vmatpush1.msra.mxu0 0.0
  %651 = vmatprep.subr.mxu0 0.0
  %652 = vmatpush1.msra.mxu0 0.0
  %653 = vmatprep.subr.mxu0 0.0
  %654 = vmatpush1.msra.mxu0 0.0
  %655 = vmatprep.subr.mxu0 0.0
  %656 = vmatpush1.msra.mxu0 0.0
  %657 = vmatprep.subr.mxu0 0.0
  %658 = vmatpush1.msra.mxu0 0.0
  %659 = vmatprep.subr.mxu0 0.0
  %660 = vmatpush1.msra.mxu0 0.0
  %661 = vmatprep.subr.mxu0 0.0
  %662 = vmatpush1.msra.mxu0 0.0
  %663 = vmatprep.subr.mxu0 0.0
  %664 = vmatpush1.msra.mxu0 0.0
  %665 = vmatprep.subr.mxu0 0.0
  %666 = vmatpush1.msra.mxu0 0.0
  %667 = vmatprep.subr.mxu0 0.0
  %668 = vmatpush1.msra.mxu0 0.0
  %669 = vmatprep.subr.mxu0 0.0
  %670 = vmatpush1.msra.mxu0 0.0
  %671 = vmatprep.subr.mxu0 0.0
  %672 = vmatpush1.msra.mxu0 0.0
  %673 = vmatprep.mubr.f32.mxu0 0.0
  %674 = vmatmul.mubr.f32.gmra.mrb[0].mxu0 %v601
  %v675 = vpop.f32.mrb[0].mxu0
  %v676 = vadd.f32 1e-06, %v675
  %v677 = vpop.f32.mrb[0].mxu0
  %678 = vmatprep.mubr.f32.mxu0 0.0
  %679 = vmatmul.mubr.f32.gmra.mrb[0].mxu0 %v602
  %v680 = vpop.f32.mrb[0].mxu0
  %v681 = vadd.f32 1e-06, %v680
  %v682 = vpop.f32.mrb[0].mxu0
  %683 = vmatprep.mubr.f32.mxu0 0.0
  %684 = vmatmul.mubr.f32.gmra.mrb[0].mxu0 %v603
  %v685 = vpop.f32.mrb[0].mxu0
  %v686 = vadd.f32 1e-06, %v685
  %v687 = vpop.f32.mrb[0].mxu0
  %688 = vmatprep.mubr.f32.mxu0 0.0
  %689 = vmatmul.mubr.f32.gmra.mrb[0].mxu0 %v604
  %v690 = vpop.f32.mrb[0].mxu0
  %v691 = vadd.f32 1e-06, %v690
  %v692 = vpop.f32.mrb[0].mxu0
  %693 = vmatprep.mubr.f32.mxu0 0.0
  %694 = vmatmul.mubr.f32.gmra.mrb[0].mxu0 %v605
  %v695 = vpop.f32.mrb[0].mxu0
  %v696 = vadd.f32 1e-06, %v695
  %v697 = vpop.f32.mrb[0].mxu0
  %698 = vmatprep.mubr.f32.mxu0 0.0
  %699 = vmatmul.mubr.f32.gmra.mrb[0].mxu0 %v606
  %v700 = vpop.f32.mrb[0].mxu0
  %v701 = vadd.f32 1e-06, %v700
  %v702 = vpop.f32.mrb[0].mxu0
  %703 = vmatprep.mubr.f32.mxu0 0.0
  %704 = vmatmul.mubr.f32.gmra.mrb[0].mxu0 %v607
  %v705 = vpop.f32.mrb[0].mxu0
  %v706 = vadd.f32 1e-06, %v705
  %v707 = vpop.f32.mrb[0].mxu0
  %708 = vmatprep.mubr.f32.mxu0 0.0
  %709 = vmatmul.mubr.f32.gmra.mrb[0].mxu0 %v608
  %v710 = vpop.f32.mrb[0].mxu0
  %v711 = vadd.f32 1e-06, %v710
  %v712 = vpop.f32.mrb[0].mxu0
  %713 = vdwg.mxu0
  %v714 = vrsqrt.pop %v676
  %v715 = vrsqrt.pop %v681
  %v716 = vrsqrt.pop %v686
  %v717 = vrsqrt.pop %v691
  %v718 = vrsqrt.pop %v696
  %v719 = vrsqrt.pop %v701
  %v720 = vrsqrt.pop %v706
  %v721 = vrsqrt.pop %v711
  %v722 = vmul.f32 %v593, %v714
  %v723 = vmul.f32 %v594, %v715
  %v724 = vmul.f32 %v595, %v716
  %v725 = vmul.f32 %v596, %v717
  %v726 = vmul.f32 %v597, %v718
  %v727 = vmul.f32 %v598, %v719
  %v728 = vmul.f32 %v599, %v720
  %v729 = vmul.f32 %v600, %v721
  %v730 = vlaneseq
  %v731 = vshrl.u32 %v730, 7
  %v732 = vsub.s32 0, %v731
  %v733 = vrot.slane %v470, %v732
  %v734 = vmul.f32 %v722, %v733
  %v735 = vmul.f32 %v723, %v733
  %v736 = vmul.f32 %v724, %v733
  %v737 = vmul.f32 %v725, %v733
  %v738 = vmul.f32 %v726, %v733
  %v739 = vmul.f32 %v727, %v733
  %v740 = vmul.f32 %v728, %v733
  %v741 = vmul.f32 %v729, %v733
  %v742 = vlaneseq
  %v743 = vshrl.u32 %v742, 7
  %v744 = vsub.s32 0, %v743
  %v745 = vrot.slane %v471, %v744
  %v746 = vadd.f32 %v734, %v745
  %v747 = vadd.f32 %v735, %v745
  %v748 = vadd.f32 %v736, %v745
  %v749 = vadd.f32 %v737, %v745
  %v750 = vadd.f32 %v738, %v745
  %v751 = vadd.f32 %v739, %v745
  %v752 = vadd.f32 %v740, %v745
  %v753 = vadd.f32 %v741, %v745
  %v754 = vld [vmem:[%s17 + $0x3] sm:$0x1]
  %v755 = vld [vmem:[%s17 + $0x4] sm:$0x1]
  %v756 = vld [vmem:[%s17 + $0x5] sm:$0x1]
  %v757 = vld [vmem:[%s18] ss:$8 sm:$0xf]
  %v758 = vld [vmem:[%s17 + $0x6] sm:$0x1]
  %v759 = vlaneseq
  %v760 = vshrl.u32 %v759, 7
  %v761 = vadd.s32 %v760, 8
  %v762 = vadd.s32 %v760, 16
  %v763 = vadd.s32 %v760, 24
  %v764 = vadd.s32 %v760, 32
  %v765 = vadd.s32 %v760, 40
  %v766 = vadd.s32 %v760, 48
  %v767 = vadd.s32 %v760, 56
  %vm768 = vcmp.lt.s32.totalorder %v760, 0
  %v769 = vsub.s32 0, %v760
  %v770 = vsel %vm768, %v769, %v760
  %v771 = vshrl.u32 %v770, 3
  %v772 = vand.u32 %v770, 7
  %v773 = vsub.s32 0, %v772
  %v774 = vsel %vm768, %v773, %v772
  %vm775 = vcmp.lt.s32.totalorder %v761, 0
  %v776 = vsub.s32 0, %v761
  %v777 = vsel %vm775, %v776, %v761
  %v778 = vshrl.u32 %v777, 3
  %v779 = vand.u32 %v777, 7
  %v780 = vsub.s32 0, %v779
  %v781 = vsel %vm775, %v780, %v779
  %vm782 = vcmp.lt.s32.totalorder %v762, 0
  %v783 = vsub.s32 0, %v762
  %v784 = vsel %vm782, %v783, %v762
  %v785 = vshrl.u32 %v784, 3
  %v786 = vand.u32 %v784, 7
  %v787 = vsub.s32 0, %v786
  %v788 = vsel %vm782, %v787, %v786
  %vm789 = vcmp.lt.s32.totalorder %v763, 0
  %v790 = vsub.s32 0, %v763
  %v791 = vsel %vm789, %v790, %v763
  %v792 = vshrl.u32 %v791, 3
  %v793 = vand.u32 %v791, 7
  %v794 = vsub.s32 0, %v793
  %v795 = vsel %vm789, %v794, %v793
  %vm796 = vcmp.lt.s32.totalorder %v764, 0
  %v797 = vsub.s32 0, %v764
  %v798 = vsel %vm796, %v797, %v764
  %v799 = vshrl.u32 %v798, 3
  %v800 = vand.u32 %v798, 7
  %v801 = vsub.s32 0, %v800
  %v802 = vsel %vm796, %v801, %v800
  %vm803 = vcmp.lt.s32.totalorder %v765, 0
  %v804 = vsub.s32 0, %v765
  %v805 = vsel %vm803, %v804, %v765
  %v806 = vshrl.u32 %v805, 3
  %v807 = vand.u32 %v805, 7
  %v808 = vsub.s32 0, %v807
  %v809 = vsel %vm803, %v808, %v807
  %vm810 = vcmp.lt.s32.totalorder %v766, 0
  %v811 = vsub.s32 0, %v766
  %v812 = vsel %vm810, %v811, %v766
  %v813 = vshrl.u32 %v812, 3
  %v814 = vand.u32 %v812, 7
  %v815 = vsub.s32 0, %v814
  %v816 = vsel %vm810, %v815, %v814
  %vm817 = vcmp.lt.s32.totalorder %v767, 0
  %v818 = vsub.s32 0, %v767
  %v819 = vsel %vm817, %v818, %v767
  %v820 = vshrl.u32 %v819, 3
  %v821 = vand.u32 %v819, 7
  %v822 = vsub.s32 0, %v821
  %v823 = vsel %vm817, %v822, %v821
  %vm824 = vcmp.ne.s32.totalorder %v774, 0
  %vm825 = vcmp.ne.s32.totalorder %v781, 0
  %vm826 = vcmp.ne.s32.totalorder %v788, 0
  %vm827 = vcmp.ne.s32.totalorder %v795, 0
  %vm828 = vcmp.ne.s32.totalorder %v802, 0
  %vm829 = vcmp.ne.s32.totalorder %v809, 0
  %vm830 = vcmp.ne.s32.totalorder %v816, 0
  %vm831 = vcmp.ne.s32.totalorder %v823, 0
  %vm832 = vcmp.lt.s32.totalorder %v774, 0
  %vm833 = vcmp.lt.s32.totalorder %v781, 0
  %vm834 = vcmp.lt.s32.totalorder %v788, 0
  %vm835 = vcmp.lt.s32.totalorder %v795, 0
  %vm836 = vcmp.lt.s32.totalorder %v802, 0
  %vm837 = vcmp.lt.s32.totalorder %v809, 0
  %vm838 = vcmp.lt.s32.totalorder %v816, 0
  %vm839 = vcmp.lt.s32.totalorder %v823, 0
  %vm840 = vmand %vm832, %vm824
  %vm841 = vmand %vm833, %vm825
  %vm842 = vmand %vm834, %vm826
  %vm843 = vmand %vm835, %vm827
  %vm844 = vmand %vm836, %vm828
  %vm845 = vmand %vm837, %vm829
  %vm846 = vmand %vm838, %vm830
  %vm847 = vmand %vm839, %vm831
  %v848 = vadd.s32 %v774, 8
  %v849 = vadd.s32 %v781, 8
  %v850 = vadd.s32 %v788, 8
  %v851 = vadd.s32 %v795, 8
  %v852 = vadd.s32 %v802, 8
  %v853 = vadd.s32 %v809, 8
  %v854 = vadd.s32 %v816, 8
  %v855 = vadd.s32 %v823, 8
  %v856 = vsel %vm840, %v848, %v774
  %v857 = vsel %vm841, %v849, %v781
  %v858 = vsel %vm842, %v850, %v788
  %v859 = vsel %vm843, %v851, %v795
  %v860 = vsel %vm844, %v852, %v802
  %v861 = vsel %vm845, %v853, %v809
  %v862 = vsel %vm846, %v854, %v816
  %v863 = vsel %vm847, %v855, %v823
  %v864 = vrot.slane %v746, 5
  %v865 = vrot.slane %v747, 5
  %v866 = vrot.slane %v748, 5
  %v867 = vrot.slane %v749, 5
  %v868 = vrot.slane %v750, 5
  %v869 = vrot.slane %v751, 5
  %v870 = vrot.slane %v752, 5
  %v871 = vrot.slane %v753, 5
  %vm872 = vcmp.lt.s32.totalorder %v760, 3
  %v873 = vsel %vm872, %v870, %v871
  %v874 = vsel %vm872, %v869, %v870
  %v875 = vsel %vm872, %v868, %v869
  %v876 = vsel %vm872, %v867, %v868
  %v877 = vsel %vm872, %v866, %v867
  %v878 = vsel %vm872, %v865, %v866
  %v879 = vsel %vm872, %v864, %v865
  %v880 = vsel %vm872, %v871, %v864
  %v881 = vadd.s32 %v856, 4294967293
  %v882 = vadd.s32 %v857, 4294967293
  %v883 = vadd.s32 %v858, 4294967293
  %v884 = vadd.s32 %v859, 4294967293
  %v885 = vadd.s32 %v860, 4294967293
  %v886 = vadd.s32 %v861, 4294967293
  %v887 = vadd.s32 %v862, 4294967293
  %v888 = vadd.s32 %v863, 4294967293
  %vm889 = vcmp.ge.s32.totalorder %v881, 0
  %vm890 = vcmp.ge.s32.totalorder %v882, 0
  %vm891 = vcmp.ge.s32.totalorder %v883, 0
  %vm892 = vcmp.ge.s32.totalorder %v884, 0
  %vm893 = vcmp.ge.s32.totalorder %v885, 0
  %vm894 = vcmp.ge.s32.totalorder %v886, 0
  %vm895 = vcmp.ge.s32.totalorder %v887, 0
  %vm896 = vcmp.ge.s32.totalorder %v888, 0
  %vm897 = vcmp.lt.s32.totalorder %v881, 8
  %vm898 = vcmp.lt.s32.totalorder %v882, 8
  %vm899 = vcmp.lt.s32.totalorder %v883, 8
  %vm900 = vcmp.lt.s32.totalorder %v884, 8
  %vm901 = vcmp.lt.s32.totalorder %v885, 8
  %vm902 = vcmp.lt.s32.totalorder %v886, 8
  %vm903 = vcmp.lt.s32.totalorder %v887, 8
  %vm904 = vcmp.lt.s32.totalorder %v888, 8
  %vm905 = vmand %vm889, %vm897
  %vm906 = vmand %vm890, %vm898
  %vm907 = vmand %vm891, %vm899
  %vm908 = vmand %vm892, %vm900
  %vm909 = vmand %vm893, %vm901
  %vm910 = vmand %vm894, %vm902
  %vm911 = vmand %vm895, %vm903
  %vm912 = vmand %vm896, %vm904
  %v913 = vsel %vm905, 1, 0
  %v914 = vsel %vm906, 1, 0
  %v915 = vsel %vm907, 1, 0
  %v916 = vsel %vm908, 1, 0
  %v917 = vsel %vm909, 1, 0
  %v918 = vsel %vm910, 1, 0
  %v919 = vsel %vm911, 1, 0
  %v920 = vsel %vm912, 1, 0
  %vm921 = vcmp.eq.s32.totalorder %v913, 1
  %vm922 = vcmp.eq.s32.totalorder %v914, 1
  %vm923 = vcmp.eq.s32.totalorder %v915, 1
  %vm924 = vcmp.eq.s32.totalorder %v916, 1
  %vm925 = vcmp.eq.s32.totalorder %v917, 1
  %vm926 = vcmp.eq.s32.totalorder %v918, 1
  %vm927 = vcmp.eq.s32.totalorder %v919, 1
  %vm928 = vcmp.eq.s32.totalorder %v920, 1
  %v929 = vsel %vm921, %v880, 0.0
  %v930 = vsel %vm922, %v879, 0.0
  %v931 = vsel %vm923, %v878, 0.0
  %v932 = vsel %vm924, %v877, 0.0
  %v933 = vsel %vm925, %v876, 0.0
  %v934 = vsel %vm926, %v875, 0.0
  %v935 = vsel %vm927, %v874, 0.0
  %v936 = vsel %vm928, %v873, 0.0
  %v937 = vrot.slane %v746, 6
  %v938 = vrot.slane %v747, 6
  %v939 = vrot.slane %v748, 6
  %v940 = vrot.slane %v749, 6
  %v941 = vrot.slane %v750, 6
  %v942 = vrot.slane %v751, 6
  %v943 = vrot.slane %v752, 6
  %v944 = vrot.slane %v753, 6
  %vm945 = vcmp.lt.s32.totalorder %v760, 2
  %v946 = vsel %vm945, %v943, %v944
  %v947 = vsel %vm945, %v942, %v943
  %v948 = vsel %vm945, %v941, %v942
  %v949 = vsel %vm945, %v940, %v941
  %v950 = vsel %vm945, %v939, %v940
  %v951 = vsel %vm945, %v938, %v939
  %v952 = vsel %vm945, %v937, %v938
  %v953 = vsel %vm945, %v944, %v937
  %v954 = vadd.s32 %v856, 4294967294
  %v955 = vadd.s32 %v857, 4294967294
  %v956 = vadd.s32 %v858, 4294967294
  %v957 = vadd.s32 %v859, 4294967294
  %v958 = vadd.s32 %v860, 4294967294
  %v959 = vadd.s32 %v861, 4294967294
  %v960 = vadd.s32 %v862, 4294967294
  %v961 = vadd.s32 %v863, 4294967294
  %vm962 = vcmp.ge.s32.totalorder %v954, 0
  %vm963 = vcmp.ge.s32.totalorder %v955, 0
  %vm964 = vcmp.ge.s32.totalorder %v956, 0
  %vm965 = vcmp.ge.s32.totalorder %v957, 0
  %vm966 = vcmp.ge.s32.totalorder %v958, 0
  %vm967 = vcmp.ge.s32.totalorder %v959, 0
  %vm968 = vcmp.ge.s32.totalorder %v960, 0
  %vm969 = vcmp.ge.s32.totalorder %v961, 0
  %vm970 = vcmp.lt.s32.totalorder %v954, 8
  %vm971 = vcmp.lt.s32.totalorder %v955, 8
  %vm972 = vcmp.lt.s32.totalorder %v956, 8
  %vm973 = vcmp.lt.s32.totalorder %v957, 8
  %vm974 = vcmp.lt.s32.totalorder %v958, 8
  %vm975 = vcmp.lt.s32.totalorder %v959, 8
  %vm976 = vcmp.lt.s32.totalorder %v960, 8
  %vm977 = vcmp.lt.s32.totalorder %v961, 8
  %vm978 = vmand %vm962, %vm970
  %vm979 = vmand %vm963, %vm971
  %vm980 = vmand %vm964, %vm972
  %vm981 = vmand %vm965, %vm973
  %vm982 = vmand %vm966, %vm974
  %vm983 = vmand %vm967, %vm975
  %vm984 = vmand %vm968, %vm976
  %vm985 = vmand %vm969, %vm977
  %v986 = vsel %vm978, 1, 0
  %v987 = vsel %vm979, 1, 0
  %v988 = vsel %vm980, 1, 0
  %v989 = vsel %vm981, 1, 0
  %v990 = vsel %vm982, 1, 0
  %v991 = vsel %vm983, 1, 0
  %v992 = vsel %vm984, 1, 0
  %v993 = vsel %vm985, 1, 0
  %vm994 = vcmp.eq.s32.totalorder %v986, 1
  %vm995 = vcmp.eq.s32.totalorder %v987, 1
  %vm996 = vcmp.eq.s32.totalorder %v988, 1
  %vm997 = vcmp.eq.s32.totalorder %v989, 1
  %vm998 = vcmp.eq.s32.totalorder %v990, 1
  %vm999 = vcmp.eq.s32.totalorder %v991, 1
  %vm1000 = vcmp.eq.s32.totalorder %v992, 1
  %vm1001 = vcmp.eq.s32.totalorder %v993, 1
  %v1002 = vsel %vm994, %v953, 0.0
  %v1003 = vsel %vm995, %v952, 0.0
  %v1004 = vsel %vm996, %v951, 0.0
  %v1005 = vsel %vm997, %v950, 0.0
  %v1006 = vsel %vm998, %v949, 0.0
  %v1007 = vsel %vm999, %v948, 0.0
  %v1008 = vsel %vm1000, %v947, 0.0
  %v1009 = vsel %vm1001, %v946, 0.0
  %v1010 = vrot.slane %v746, 7
  %v1011 = vrot.slane %v747, 7
  %v1012 = vrot.slane %v748, 7
  %v1013 = vrot.slane %v749, 7
  %v1014 = vrot.slane %v750, 7
  %v1015 = vrot.slane %v751, 7
  %v1016 = vrot.slane %v752, 7
  %v1017 = vrot.slane %v753, 7
  %vm1018 = vcmp.lt.s32.totalorder %v760, 1
  %v1019 = vsel %vm1018, %v1016, %v1017
  %v1020 = vsel %vm1018, %v1015, %v1016
  %v1021 = vsel %vm1018, %v1014, %v1015
  %v1022 = vsel %vm1018, %v1013, %v1014
  %v1023 = vsel %vm1018, %v1012, %v1013
  %v1024 = vsel %vm1018, %v1011, %v1012
  %v1025 = vsel %vm1018, %v1010, %v1011
  %v1026 = vsel %vm1018, %v1017, %v1010
  %v1027 = vadd.s32 %v856, 4294967295
  %v1028 = vadd.s32 %v857, 4294967295
  %v1029 = vadd.s32 %v858, 4294967295
  %v1030 = vadd.s32 %v859, 4294967295
  %v1031 = vadd.s32 %v860, 4294967295
  %v1032 = vadd.s32 %v861, 4294967295
  %v1033 = vadd.s32 %v862, 4294967295
  %v1034 = vadd.s32 %v863, 4294967295
  %vm1035 = vcmp.ge.s32.totalorder %v1027, 0
  %vm1036 = vcmp.ge.s32.totalorder %v1028, 0
  %vm1037 = vcmp.ge.s32.totalorder %v1029, 0
  %vm1038 = vcmp.ge.s32.totalorder %v1030, 0
  %vm1039 = vcmp.ge.s32.totalorder %v1031, 0
  %vm1040 = vcmp.ge.s32.totalorder %v1032, 0
  %vm1041 = vcmp.ge.s32.totalorder %v1033, 0
  %vm1042 = vcmp.ge.s32.totalorder %v1034, 0
  %vm1043 = vcmp.lt.s32.totalorder %v1027, 8
  %vm1044 = vcmp.lt.s32.totalorder %v1028, 8
  %vm1045 = vcmp.lt.s32.totalorder %v1029, 8
  %vm1046 = vcmp.lt.s32.totalorder %v1030, 8
  %vm1047 = vcmp.lt.s32.totalorder %v1031, 8
  %vm1048 = vcmp.lt.s32.totalorder %v1032, 8
  %vm1049 = vcmp.lt.s32.totalorder %v1033, 8
  %vm1050 = vcmp.lt.s32.totalorder %v1034, 8
  %vm1051 = vmand %vm1035, %vm1043
  %vm1052 = vmand %vm1036, %vm1044
  %vm1053 = vmand %vm1037, %vm1045
  %vm1054 = vmand %vm1038, %vm1046
  %vm1055 = vmand %vm1039, %vm1047
  %vm1056 = vmand %vm1040, %vm1048
  %vm1057 = vmand %vm1041, %vm1049
  %vm1058 = vmand %vm1042, %vm1050
  %v1059 = vsel %vm1051, 1, 0
  %v1060 = vsel %vm1052, 1, 0
  %v1061 = vsel %vm1053, 1, 0
  %v1062 = vsel %vm1054, 1, 0
  %v1063 = vsel %vm1055, 1, 0
  %v1064 = vsel %vm1056, 1, 0
  %v1065 = vsel %vm1057, 1, 0
  %v1066 = vsel %vm1058, 1, 0
  %vm1067 = vcmp.eq.s32.totalorder %v1059, 1
  %vm1068 = vcmp.eq.s32.totalorder %v1060, 1
  %vm1069 = vcmp.eq.s32.totalorder %v1061, 1
  %vm1070 = vcmp.eq.s32.totalorder %v1062, 1
  %vm1071 = vcmp.eq.s32.totalorder %v1063, 1
  %vm1072 = vcmp.eq.s32.totalorder %v1064, 1
  %vm1073 = vcmp.eq.s32.totalorder %v1065, 1
  %vm1074 = vcmp.eq.s32.totalorder %v1066, 1
  %v1075 = vsel %vm1067, %v1026, 0.0
  %v1076 = vsel %vm1068, %v1025, 0.0
  %v1077 = vsel %vm1069, %v1024, 0.0
  %v1078 = vsel %vm1070, %v1023, 0.0
  %v1079 = vsel %vm1071, %v1022, 0.0
  %v1080 = vsel %vm1072, %v1021, 0.0
  %v1081 = vsel %vm1073, %v1020, 0.0
  %v1082 = vsel %vm1074, %v1019, 0.0
  %v1083 = vrot.slane %v746, 1
  %v1084 = vrot.slane %v747, 1
  %v1085 = vrot.slane %v748, 1
  %v1086 = vrot.slane %v749, 1
  %v1087 = vrot.slane %v750, 1
  %v1088 = vrot.slane %v751, 1
  %v1089 = vrot.slane %v752, 1
  %v1090 = vrot.slane %v753, 1
  %vm1091 = vcmp.lt.s32.totalorder %v760, 7
  %v1092 = vsel %vm1091, %v1089, %v1090
  %v1093 = vsel %vm1091, %v1088, %v1089
  %v1094 = vsel %vm1091, %v1087, %v1088
  %v1095 = vsel %vm1091, %v1086, %v1087
  %v1096 = vsel %vm1091, %v1085, %v1086
  %v1097 = vsel %vm1091, %v1084, %v1085
  %v1098 = vsel %vm1091, %v1083, %v1084
  %v1099 = vsel %vm1091, %v1090, %v1083
  %v1100 = vadd.s32 %v856, 1
  %v1101 = vadd.s32 %v857, 1
  %v1102 = vadd.s32 %v858, 1
  %v1103 = vadd.s32 %v859, 1
  %v1104 = vadd.s32 %v860, 1
  %v1105 = vadd.s32 %v861, 1
  %v1106 = vadd.s32 %v862, 1
  %v1107 = vadd.s32 %v863, 1
  %vm1108 = vcmp.ge.s32.totalorder %v1100, 0
  %vm1109 = vcmp.ge.s32.totalorder %v1101, 0
  %vm1110 = vcmp.ge.s32.totalorder %v1102, 0
  %vm1111 = vcmp.ge.s32.totalorder %v1103, 0
  %vm1112 = vcmp.ge.s32.totalorder %v1104, 0
  %vm1113 = vcmp.ge.s32.totalorder %v1105, 0
  %vm1114 = vcmp.ge.s32.totalorder %v1106, 0
  %vm1115 = vcmp.ge.s32.totalorder %v1107, 0
  %vm1116 = vcmp.lt.s32.totalorder %v1100, 8
  %vm1117 = vcmp.lt.s32.totalorder %v1101, 8
  %vm1118 = vcmp.lt.s32.totalorder %v1102, 8
  %vm1119 = vcmp.lt.s32.totalorder %v1103, 8
  %vm1120 = vcmp.lt.s32.totalorder %v1104, 8
  %vm1121 = vcmp.lt.s32.totalorder %v1105, 8
  %vm1122 = vcmp.lt.s32.totalorder %v1106, 8
  %vm1123 = vcmp.lt.s32.totalorder %v1107, 8
  %vm1124 = vmand %vm1108, %vm1116
  %vm1125 = vmand %vm1109, %vm1117
  %vm1126 = vmand %vm1110, %vm1118
  %vm1127 = vmand %vm1111, %vm1119
  %vm1128 = vmand %vm1112, %vm1120
  %vm1129 = vmand %vm1113, %vm1121
  %vm1130 = vmand %vm1114, %vm1122
  %vm1131 = vmand %vm1115, %vm1123
  %v1132 = vsel %vm1124, 1, 0
  %v1133 = vsel %vm1125, 1, 0
  %v1134 = vsel %vm1126, 1, 0
  %v1135 = vsel %vm1127, 1, 0
  %v1136 = vsel %vm1128, 1, 0
  %v1137 = vsel %vm1129, 1, 0
  %v1138 = vsel %vm1130, 1, 0
  %v1139 = vsel %vm1131, 1, 0
  %vm1140 = vcmp.eq.s32.totalorder %v1132, 1
  %vm1141 = vcmp.eq.s32.totalorder %v1133, 1
  %vm1142 = vcmp.eq.s32.totalorder %v1134, 1
  %vm1143 = vcmp.eq.s32.totalorder %v1135, 1
  %vm1144 = vcmp.eq.s32.totalorder %v1136, 1
  %vm1145 = vcmp.eq.s32.totalorder %v1137, 1
  %vm1146 = vcmp.eq.s32.totalorder %v1138, 1
  %vm1147 = vcmp.eq.s32.totalorder %v1139, 1
  %v1148 = vsel %vm1140, %v1098, 0.0
  %v1149 = vsel %vm1141, %v1097, 0.0
  %v1150 = vsel %vm1142, %v1096, 0.0
  %v1151 = vsel %vm1143, %v1095, 0.0
  %v1152 = vsel %vm1144, %v1094, 0.0
  %v1153 = vsel %vm1145, %v1093, 0.0
  %v1154 = vsel %vm1146, %v1092, 0.0
  %v1155 = vsel %vm1147, %v1099, 0.0
  %v1156 = vrot.slane %v746, 2
  %v1157 = vrot.slane %v747, 2
  %v1158 = vrot.slane %v748, 2
  %v1159 = vrot.slane %v749, 2
  %v1160 = vrot.slane %v750, 2
  %v1161 = vrot.slane %v751, 2
  %v1162 = vrot.slane %v752, 2
  %v1163 = vrot.slane %v753, 2
  %vm1164 = vcmp.lt.s32.totalorder %v760, 6
  %v1165 = vsel %vm1164, %v1162, %v1163
  %v1166 = vsel %vm1164, %v1161, %v1162
  %v1167 = vsel %vm1164, %v1160, %v1161
  %v1168 = vsel %vm1164, %v1159, %v1160
  %v1169 = vsel %vm1164, %v1158, %v1159
  %v1170 = vsel %vm1164, %v1157, %v1158
  %v1171 = vsel %vm1164, %v1156, %v1157
  %v1172 = vsel %vm1164, %v1163, %v1156
  %v1173 = vadd.s32 %v856, 2
  %v1174 = vadd.s32 %v857, 2
  %v1175 = vadd.s32 %v858, 2
  %v1176 = vadd.s32 %v859, 2
  %v1177 = vadd.s32 %v860, 2
  %v1178 = vadd.s32 %v861, 2
  %v1179 = vadd.s32 %v862, 2
  %v1180 = vadd.s32 %v863, 2
  %vm1181 = vcmp.ge.s32.totalorder %v1173, 0
  %vm1182 = vcmp.ge.s32.totalorder %v1174, 0
  %vm1183 = vcmp.ge.s32.totalorder %v1175, 0
  %vm1184 = vcmp.ge.s32.totalorder %v1176, 0
  %vm1185 = vcmp.ge.s32.totalorder %v1177, 0
  %vm1186 = vcmp.ge.s32.totalorder %v1178, 0
  %vm1187 = vcmp.ge.s32.totalorder %v1179, 0
  %vm1188 = vcmp.ge.s32.totalorder %v1180, 0
  %vm1189 = vcmp.lt.s32.totalorder %v1173, 8
  %vm1190 = vcmp.lt.s32.totalorder %v1174, 8
  %vm1191 = vcmp.lt.s32.totalorder %v1175, 8
  %vm1192 = vcmp.lt.s32.totalorder %v1176, 8
  %vm1193 = vcmp.lt.s32.totalorder %v1177, 8
  %vm1194 = vcmp.lt.s32.totalorder %v1178, 8
  %vm1195 = vcmp.lt.s32.totalorder %v1179, 8
  %vm1196 = vcmp.lt.s32.totalorder %v1180, 8
  %vm1197 = vmand %vm1181, %vm1189
  %vm1198 = vmand %vm1182, %vm1190
  %vm1199 = vmand %vm1183, %vm1191
  %vm1200 = vmand %vm1184, %vm1192
  %vm1201 = vmand %vm1185, %vm1193
  %vm1202 = vmand %vm1186, %vm1194
  %vm1203 = vmand %vm1187, %vm1195
  %vm1204 = vmand %vm1188, %vm1196
  %v1205 = vsel %vm1197, 1, 0
  %v1206 = vsel %vm1198, 1, 0
  %v1207 = vsel %vm1199, 1, 0
  %v1208 = vsel %vm1200, 1, 0
  %v1209 = vsel %vm1201, 1, 0
  %v1210 = vsel %vm1202, 1, 0
  %v1211 = vsel %vm1203, 1, 0
  %v1212 = vsel %vm1204, 1, 0
  %vm1213 = vcmp.eq.s32.totalorder %v1205, 1
  %vm1214 = vcmp.eq.s32.totalorder %v1206, 1
  %vm1215 = vcmp.eq.s32.totalorder %v1207, 1
  %vm1216 = vcmp.eq.s32.totalorder %v1208, 1
  %vm1217 = vcmp.eq.s32.totalorder %v1209, 1
  %vm1218 = vcmp.eq.s32.totalorder %v1210, 1
  %vm1219 = vcmp.eq.s32.totalorder %v1211, 1
  %vm1220 = vcmp.eq.s32.totalorder %v1212, 1
  %v1221 = vsel %vm1213, %v1171, 0.0
  %v1222 = vsel %vm1214, %v1170, 0.0
  %v1223 = vsel %vm1215, %v1169, 0.0
  %v1224 = vsel %vm1216, %v1168, 0.0
  %v1225 = vsel %vm1217, %v1167, 0.0
  %v1226 = vsel %vm1218, %v1166, 0.0
  %v1227 = vsel %vm1219, %v1165, 0.0
  %v1228 = vsel %vm1220, %v1172, 0.0
  %v1229 = vrot.slane %v746, 3
  %v1230 = vrot.slane %v747, 3
  %v1231 = vrot.slane %v748, 3
  %v1232 = vrot.slane %v749, 3
  %v1233 = vrot.slane %v750, 3
  %v1234 = vrot.slane %v751, 3
  %v1235 = vrot.slane %v752, 3
  %v1236 = vrot.slane %v753, 3
  %vm1237 = vcmp.lt.s32.totalorder %v760, 5
  %v1238 = vsel %vm1237, %v1235, %v1236
  %v1239 = vsel %vm1237, %v1234, %v1235
  %v1240 = vsel %vm1237, %v1233, %v1234
  %v1241 = vsel %vm1237, %v1232, %v1233
  %v1242 = vsel %vm1237, %v1231, %v1232
  %v1243 = vsel %vm1237, %v1230, %v1231
  %v1244 = vsel %vm1237, %v1229, %v1230
  %v1245 = vsel %vm1237, %v1236, %v1229
  %v1246 = vadd.s32 %v856, 3
  %v1247 = vadd.s32 %v857, 3
  %v1248 = vadd.s32 %v858, 3
  %v1249 = vadd.s32 %v859, 3
  %v1250 = vadd.s32 %v860, 3
  %v1251 = vadd.s32 %v861, 3
  %v1252 = vadd.s32 %v862, 3
  %v1253 = vadd.s32 %v863, 3
  %vm1254 = vcmp.ge.s32.totalorder %v1246, 0
  %vm1255 = vcmp.ge.s32.totalorder %v1247, 0
  %vm1256 = vcmp.ge.s32.totalorder %v1248, 0
  %vm1257 = vcmp.ge.s32.totalorder %v1249, 0
  %vm1258 = vcmp.ge.s32.totalorder %v1250, 0
  %vm1259 = vcmp.ge.s32.totalorder %v1251, 0
  %vm1260 = vcmp.ge.s32.totalorder %v1252, 0
  %vm1261 = vcmp.ge.s32.totalorder %v1253, 0
  %vm1262 = vcmp.lt.s32.totalorder %v1246, 8
  %vm1263 = vcmp.lt.s32.totalorder %v1247, 8
  %vm1264 = vcmp.lt.s32.totalorder %v1248, 8
  %vm1265 = vcmp.lt.s32.totalorder %v1249, 8
  %vm1266 = vcmp.lt.s32.totalorder %v1250, 8
  %vm1267 = vcmp.lt.s32.totalorder %v1251, 8
  %vm1268 = vcmp.lt.s32.totalorder %v1252, 8
  %vm1269 = vcmp.lt.s32.totalorder %v1253, 8
  %vm1270 = vmand %vm1254, %vm1262
  %vm1271 = vmand %vm1255, %vm1263
  %vm1272 = vmand %vm1256, %vm1264
  %vm1273 = vmand %vm1257, %vm1265
  %vm1274 = vmand %vm1258, %vm1266
  %vm1275 = vmand %vm1259, %vm1267
  %vm1276 = vmand %vm1260, %vm1268
  %vm1277 = vmand %vm1261, %vm1269
  %v1278 = vsel %vm1270, 1, 0
  %v1279 = vsel %vm1271, 1, 0
  %v1280 = vsel %vm1272, 1, 0
  %v1281 = vsel %vm1273, 1, 0
  %v1282 = vsel %vm1274, 1, 0
  %v1283 = vsel %vm1275, 1, 0
  %v1284 = vsel %vm1276, 1, 0
  %v1285 = vsel %vm1277, 1, 0
  %vm1286 = vcmp.eq.s32.totalorder %v1278, 1
  %vm1287 = vcmp.eq.s32.totalorder %v1279, 1
  %vm1288 = vcmp.eq.s32.totalorder %v1280, 1
  %vm1289 = vcmp.eq.s32.totalorder %v1281, 1
  %vm1290 = vcmp.eq.s32.totalorder %v1282, 1
  %vm1291 = vcmp.eq.s32.totalorder %v1283, 1
  %vm1292 = vcmp.eq.s32.totalorder %v1284, 1
  %vm1293 = vcmp.eq.s32.totalorder %v1285, 1
  %v1294 = vsel %vm1286, %v1244, 0.0
  %v1295 = vsel %vm1287, %v1243, 0.0
  %v1296 = vsel %vm1288, %v1242, 0.0
  %v1297 = vsel %vm1289, %v1241, 0.0
  %v1298 = vsel %vm1290, %v1240, 0.0
  %v1299 = vsel %vm1291, %v1239, 0.0
  %v1300 = vsel %vm1292, %v1238, 0.0
  %v1301 = vsel %vm1293, %v1245, 0.0
  %v1302 = vpack.c.bf16 %v930, %v929
  %v1303 = vpack.c.bf16 %v1003, %v1002
  %v1304 = vpack.c.bf16 %v1076, %v1075
  %v1305 = vpack.c.bf16 %v747, %v746
  %v1306 = vpack.c.bf16 %v1149, %v1148
  %v1307 = vpack.c.bf16 %v1222, %v1221
  %v1308 = vpack.c.bf16 %v1295, %v1294
  %v1309 = vpack.c.bf16 %v932, %v931
  %v1310 = vpack.c.bf16 %v1005, %v1004
  %v1311 = vpack.c.bf16 %v1078, %v1077
  %v1312 = vpack.c.bf16 %v749, %v748
  %v1313 = vpack.c.bf16 %v1151, %v1150
  %v1314 = vpack.c.bf16 %v1224, %v1223
  %v1315 = vpack.c.bf16 %v1297, %v1296
  %v1316 = vpack.c.bf16 %v934, %v933
  %v1317 = vpack.c.bf16 %v1007, %v1006
  %v1318 = vpack.c.bf16 %v1080, %v1079
  %v1319 = vpack.c.bf16 %v751, %v750
  %v1320 = vpack.c.bf16 %v1153, %v1152
  %v1321 = vpack.c.bf16 %v1226, %v1225
  %v1322 = vpack.c.bf16 %v1299, %v1298
  %v1323 = vpack.c.bf16 %v936, %v935
  %v1324 = vpack.c.bf16 %v1009, %v1008
  %v1325 = vpack.c.bf16 %v1082, %v1081
  %v1326 = vpack.c.bf16 %v753, %v752
  %v1327 = vpack.c.bf16 %v1155, %v1154
  %v1328 = vpack.c.bf16 %v1228, %v1227
  %v1329 = vpack.c.bf16 %v1301, %v1300
  %v1330 = vld [vmem:[%s4] sm:$0xf]
  %v1331 = vld [vmem:[%s4 + $0x4] sm:$0xf]
  %v1332 = vld [vmem:[%s4 + $0x8] sm:$0xf]
  %v1333 = vld [vmem:[%s4 + $0xc] sm:$0xf]
  %v1334 = vld [vmem:[%s4 + $0x10] sm:$0xf]
  %v1335 = vld [vmem:[%s4 + $0x14] sm:$0xf]
  %v1336 = vld [vmem:[%s4 + $0x18] sm:$0xf]
  %v1337 = vld [vmem:[%s4 + $0x1c] sm:$0xf]
  %v1338 = vld [vmem:[%s4 + $0x20] sm:$0xf]
  %v1339 = vld [vmem:[%s4 + $0x24] sm:$0xf]
  %v1340 = vld [vmem:[%s4 + $0x28] sm:$0xf]
  %v1341 = vld [vmem:[%s4 + $0x2c] sm:$0xf]
  %v1342 = vld [vmem:[%s4 + $0x30] sm:$0xf]
  %v1343 = vld [vmem:[%s4 + $0x34] sm:$0xf]
  %v1344 = vld [vmem:[%s4 + $0x38] sm:$0xf]
  %v1345 = vld [vmem:[%s4 + $0x3c] sm:$0xf]
  %v1346 = vld [vmem:[%s4 + $0x40] sm:$0xf]
  %v1347 = vld [vmem:[%s4 + $0x44] sm:$0xf]
  %v1348 = vld [vmem:[%s4 + $0x48] sm:$0xf]
  %v1349 = vld [vmem:[%s4 + $0x4c] sm:$0xf]
  %v1350 = vld [vmem:[%s4 + $0x50] sm:$0xf]
  %v1351 = vld [vmem:[%s4 + $0x54] sm:$0xf]
  %v1352 = vld [vmem:[%s4 + $0x58] sm:$0xf]
  %v1353 = vld [vmem:[%s4 + $0x5c] sm:$0xf]
  %v1354 = vld [vmem:[%s4 + $0x60] sm:$0xf]
  %v1355 = vld [vmem:[%s4 + $0x64] sm:$0xf]
  %v1356 = vld [vmem:[%s4 + $0x68] sm:$0xf]
  %v1357 = vld [vmem:[%s4 + $0x6c] sm:$0xf]
  %v1358 = vld [vmem:[%s4 + $0x70] sm:$0xf]
  %v1359 = vld [vmem:[%s4 + $0x74] sm:$0xf]
  %v1360 = vld [vmem:[%s4 + $0x78] sm:$0xf]
  %v1361 = vld [vmem:[%s4 + $0x7c] sm:$0xf]
  %v1362 = vld [vmem:[%s4 + $0x80] sm:$0xf]
  %v1363 = vld [vmem:[%s4 + $0x84] sm:$0xf]
  %v1364 = vld [vmem:[%s4 + $0x88] sm:$0xf]
  %v1365 = vld [vmem:[%s4 + $0x8c] sm:$0xf]
  %v1366 = vld [vmem:[%s4 + $0x90] sm:$0xf]
  %v1367 = vld [vmem:[%s4 + $0x94] sm:$0xf]
  %v1368 = vld [vmem:[%s4 + $0x98] sm:$0xf]
  %v1369 = vld [vmem:[%s4 + $0x9c] sm:$0xf]
  %v1370 = vld [vmem:[%s4 + $0xa0] sm:$0xf]
  %v1371 = vld [vmem:[%s4 + $0xa4] sm:$0xf]
  %v1372 = vld [vmem:[%s4 + $0xa8] sm:$0xf]
  %v1373 = vld [vmem:[%s4 + $0xac] sm:$0xf]
  %v1374 = vld [vmem:[%s4 + $0xb0] sm:$0xf]
  %v1375 = vld [vmem:[%s4 + $0xb4] sm:$0xf]
  %v1376 = vld [vmem:[%s4 + $0xb8] sm:$0xf]
  %v1377 = vld [vmem:[%s4 + $0xbc] sm:$0xf]
  %v1378 = vld [vmem:[%s4 + $0xc0] sm:$0xf]
  %v1379 = vld [vmem:[%s4 + $0xc4] sm:$0xf]
  %v1380 = vld [vmem:[%s4 + $0xc8] sm:$0xf]
  %v1381 = vld [vmem:[%s4 + $0xcc] sm:$0xf]
  %v1382 = vld [vmem:[%s4 + $0xd0] sm:$0xf]
  %v1383 = vld [vmem:[%s4 + $0xd4] sm:$0xf]
  %v1384 = vld [vmem:[%s4 + $0xd8] sm:$0xf]
  %v1385 = vld [vmem:[%s4 + $0xdc] sm:$0xf]
  %v1386 = vld [vmem:[%s4 + $0xe0] sm:$0xf]
  %v1387 = vld [vmem:[%s4 + $0xe4] sm:$0xf]
  %v1388 = vld [vmem:[%s4 + $0xe8] sm:$0xf]
  %v1389 = vld [vmem:[%s4 + $0xec] sm:$0xf]
  %v1390 = vld [vmem:[%s4 + $0xf0] sm:$0xf]
  %v1391 = vld [vmem:[%s4 + $0xf4] sm:$0xf]
  %v1392 = vld [vmem:[%s4 + $0xf8] sm:$0xf]
  %v1393 = vld [vmem:[%s4 + $0xfc] sm:$0xf]
  %v1394 = vld [vmem:[%s4 + $0x100] sm:$0xf]
  %v1395 = vld [vmem:[%s4 + $0x104] sm:$0xf]
  %v1396 = vld [vmem:[%s4 + $0x108] sm:$0xf]
  %v1397 = vld [vmem:[%s4 + $0x10c] sm:$0xf]
  %v1398 = vld [vmem:[%s4 + $0x110] sm:$0xf]
  %v1399 = vld [vmem:[%s4 + $0x114] sm:$0xf]
  %v1400 = vld [vmem:[%s4 + $0x118] sm:$0xf]
  %v1401 = vld [vmem:[%s4 + $0x11c] sm:$0xf]
  %v1402 = vld [vmem:[%s4 + $0x120] sm:$0xf]
  %v1403 = vld [vmem:[%s4 + $0x124] sm:$0xf]
  %v1404 = vld [vmem:[%s4 + $0x128] sm:$0xf]
  %v1405 = vld [vmem:[%s4 + $0x12c] sm:$0xf]
  %v1406 = vld [vmem:[%s4 + $0x130] sm:$0xf]
  %v1407 = vld [vmem:[%s4 + $0x134] sm:$0xf]
  %v1408 = vld [vmem:[%s4 + $0x138] sm:$0xf]
  %v1409 = vld [vmem:[%s4 + $0x13c] sm:$0xf]
  %v1410 = vld [vmem:[%s4 + $0x140] sm:$0xf]
  %v1411 = vld [vmem:[%s4 + $0x144] sm:$0xf]
  %v1412 = vld [vmem:[%s4 + $0x148] sm:$0xf]
  %v1413 = vld [vmem:[%s4 + $0x14c] sm:$0xf]
  %v1414 = vld [vmem:[%s4 + $0x150] sm:$0xf]
  %v1415 = vld [vmem:[%s4 + $0x154] sm:$0xf]
  %v1416 = vld [vmem:[%s4 + $0x158] sm:$0xf]
  %v1417 = vld [vmem:[%s4 + $0x15c] sm:$0xf]
  %v1418 = vld [vmem:[%s4 + $0x160] sm:$0xf]
  %v1419 = vld [vmem:[%s4 + $0x164] sm:$0xf]
  %v1420 = vld [vmem:[%s4 + $0x168] sm:$0xf]
  %v1421 = vld [vmem:[%s4 + $0x16c] sm:$0xf]
  %v1422 = vld [vmem:[%s4 + $0x170] sm:$0xf]
  %v1423 = vld [vmem:[%s4 + $0x174] sm:$0xf]
  %v1424 = vld [vmem:[%s4 + $0x178] sm:$0xf]
  %v1425 = vld [vmem:[%s4 + $0x17c] sm:$0xf]
  %v1426 = vld [vmem:[%s4 + $0x180] sm:$0xf]
  %v1427 = vld [vmem:[%s4 + $0x184] sm:$0xf]
  %v1428 = vld [vmem:[%s4 + $0x188] sm:$0xf]
  %v1429 = vld [vmem:[%s4 + $0x18c] sm:$0xf]
  %v1430 = vld [vmem:[%s4 + $0x190] sm:$0xf]
  %v1431 = vld [vmem:[%s4 + $0x194] sm:$0xf]
  %v1432 = vld [vmem:[%s4 + $0x198] sm:$0xf]
  %v1433 = vld [vmem:[%s4 + $0x19c] sm:$0xf]
  %v1434 = vld [vmem:[%s4 + $0x1a0] sm:$0xf]
  %v1435 = vld [vmem:[%s4 + $0x1a4] sm:$0xf]
  %v1436 = vld [vmem:[%s4 + $0x1a8] sm:$0xf]
  %v1437 = vld [vmem:[%s4 + $0x1ac] sm:$0xf]
  %v1438 = vld [vmem:[%s4 + $0x1b0] sm:$0xf]
  %v1439 = vld [vmem:[%s4 + $0x1b4] sm:$0xf]
  %v1440 = vld [vmem:[%s4 + $0x1b8] sm:$0xf]
  %v1441 = vld [vmem:[%s4 + $0x1bc] sm:$0xf]
  %v1442 = vlaneseq
  %v1443 = vshrl.u32 %v1442, 7
  %v1444 = vsub.s32 0, %v1443
  %v1445 = vrot.slane %v754, %v1444
  %v1558 = vunpack.c.l.b16 %v1330
  %v1559 = vunpack.c.l.b16 %v1331
  %v1560 = vunpack.c.l.b16 %v1332
  %v1561 = vunpack.c.l.b16 %v1333
  %v1562 = vunpack.c.l.b16 %v1334
  %v1563 = vunpack.c.l.b16 %v1335
  %v1564 = vunpack.c.l.b16 %v1336
  %v1565 = vunpack.c.l.b16 %v1337
  %v1566 = vunpack.c.l.b16 %v1338
  %v1567 = vunpack.c.l.b16 %v1339
  %v1568 = vunpack.c.l.b16 %v1340
  %v1569 = vunpack.c.l.b16 %v1341
  %v1570 = vunpack.c.l.b16 %v1342
  %v1571 = vunpack.c.l.b16 %v1343
  %v1572 = vunpack.c.l.b16 %v1344
  %v1573 = vunpack.c.l.b16 %v1345
  %v1574 = vunpack.c.l.b16 %v1346
  %v1575 = vunpack.c.l.b16 %v1347
  %v1576 = vunpack.c.l.b16 %v1348
  %v1577 = vunpack.c.l.b16 %v1349
  %v1578 = vunpack.c.l.b16 %v1350
  %v1579 = vunpack.c.l.b16 %v1351
  %v1580 = vunpack.c.l.b16 %v1352
  %v1581 = vunpack.c.l.b16 %v1353
  %v1582 = vunpack.c.l.b16 %v1354
  %v1583 = vunpack.c.l.b16 %v1355
  %v1584 = vunpack.c.l.b16 %v1356
  %v1585 = vunpack.c.l.b16 %v1357
  %v1586 = vunpack.c.l.b16 %v1358
  %v1587 = vunpack.c.l.b16 %v1359
  %v1588 = vunpack.c.l.b16 %v1360
  %v1589 = vunpack.c.l.b16 %v1361
  %v1590 = vunpack.c.l.b16 %v1362
  %v1591 = vunpack.c.l.b16 %v1363
  %v1592 = vunpack.c.l.b16 %v1364
  %v1593 = vunpack.c.l.b16 %v1365
  %v1594 = vunpack.c.l.b16 %v1366
  %v1595 = vunpack.c.l.b16 %v1367
  %v1596 = vunpack.c.l.b16 %v1368
  %v1597 = vunpack.c.l.b16 %v1369
  %v1598 = vunpack.c.l.b16 %v1370
  %v1599 = vunpack.c.l.b16 %v1371
  %v1600 = vunpack.c.l.b16 %v1372
  %v1601 = vunpack.c.l.b16 %v1373
  %v1602 = vunpack.c.l.b16 %v1374
  %v1603 = vunpack.c.l.b16 %v1375
  %v1604 = vunpack.c.l.b16 %v1376
  %v1605 = vunpack.c.l.b16 %v1377
  %v1606 = vunpack.c.l.b16 %v1378
  %v1607 = vunpack.c.l.b16 %v1379
  %v1608 = vunpack.c.l.b16 %v1380
  %v1609 = vunpack.c.l.b16 %v1381
  %v1610 = vunpack.c.l.b16 %v1382
  %v1611 = vunpack.c.l.b16 %v1383
  %v1612 = vunpack.c.l.b16 %v1384
  %v1613 = vunpack.c.l.b16 %v1385
  %v1614 = vunpack.c.l.b16 %v1386
  %v1615 = vunpack.c.l.b16 %v1387
  %v1616 = vunpack.c.l.b16 %v1388
  %v1617 = vunpack.c.l.b16 %v1389
  %v1618 = vunpack.c.l.b16 %v1390
  %v1619 = vunpack.c.l.b16 %v1391
  %v1620 = vunpack.c.l.b16 %v1392
  %v1621 = vunpack.c.l.b16 %v1393
  %v1622 = vunpack.c.l.b16 %v1394
  %v1623 = vunpack.c.l.b16 %v1395
  %v1624 = vunpack.c.l.b16 %v1396
  %v1625 = vunpack.c.l.b16 %v1397
  %v1626 = vunpack.c.l.b16 %v1398
  %v1627 = vunpack.c.l.b16 %v1399
  %v1628 = vunpack.c.l.b16 %v1400
  %v1629 = vunpack.c.l.b16 %v1401
  %v1630 = vunpack.c.l.b16 %v1402
  %v1631 = vunpack.c.l.b16 %v1403
  %v1632 = vunpack.c.l.b16 %v1404
  %v1633 = vunpack.c.l.b16 %v1405
  %v1634 = vunpack.c.l.b16 %v1406
  %v1635 = vunpack.c.l.b16 %v1407
  %v1636 = vunpack.c.l.b16 %v1408
  %v1637 = vunpack.c.l.b16 %v1409
  %v1638 = vunpack.c.l.b16 %v1410
  %v1639 = vunpack.c.l.b16 %v1411
  %v1640 = vunpack.c.l.b16 %v1412
  %v1641 = vunpack.c.l.b16 %v1413
  %v1642 = vunpack.c.l.b16 %v1414
  %v1643 = vunpack.c.l.b16 %v1415
  %v1644 = vunpack.c.l.b16 %v1416
  %v1645 = vunpack.c.l.b16 %v1417
  %v1646 = vunpack.c.l.b16 %v1418
  %v1647 = vunpack.c.l.b16 %v1419
  %v1648 = vunpack.c.l.b16 %v1420
  %v1649 = vunpack.c.l.b16 %v1421
  %v1650 = vunpack.c.l.b16 %v1422
  %v1651 = vunpack.c.l.b16 %v1423
  %v1652 = vunpack.c.l.b16 %v1424
  %v1653 = vunpack.c.l.b16 %v1425
  %v1654 = vunpack.c.l.b16 %v1426
  %v1655 = vunpack.c.l.b16 %v1427
  %v1656 = vunpack.c.l.b16 %v1428
  %v1657 = vunpack.c.l.b16 %v1429
  %v1658 = vunpack.c.l.b16 %v1430
  %v1659 = vunpack.c.l.b16 %v1431
  %v1660 = vunpack.c.l.b16 %v1432
  %v1661 = vunpack.c.l.b16 %v1433
  %v1662 = vunpack.c.l.b16 %v1434
  %v1663 = vunpack.c.l.b16 %v1435
  %v1664 = vunpack.c.l.b16 %v1436
  %v1665 = vunpack.c.l.b16 %v1437
  %v1666 = vunpack.c.l.b16 %v1438
  %v1667 = vunpack.c.l.b16 %v1439
  %v1668 = vunpack.c.l.b16 %v1440
  %v1669 = vunpack.c.l.b16 %v1441
  %v1670 = vpack.c.b16 %v1559, %v1558
  %v1671 = vpack.c.b16 %v1561, %v1560
  %v1672 = vpack.c.b16 %v1563, %v1562
  %v1673 = vpack.c.b16 %v1565, %v1564
  %v1674 = vpack.c.b16 %v1567, %v1566
  %v1675 = vpack.c.b16 %v1569, %v1568
  %v1676 = vpack.c.b16 %v1571, %v1570
  %v1677 = vpack.c.b16 %v1573, %v1572
  %v1678 = vpack.c.b16 %v1575, %v1574
  %v1679 = vpack.c.b16 %v1577, %v1576
  %v1680 = vpack.c.b16 %v1579, %v1578
  %v1681 = vpack.c.b16 %v1581, %v1580
  %v1682 = vpack.c.b16 %v1583, %v1582
  %v1683 = vpack.c.b16 %v1585, %v1584
  %v1684 = vpack.c.b16 %v1587, %v1586
  %v1685 = vpack.c.b16 %v1589, %v1588
  %v1686 = vpack.c.b16 %v1591, %v1590
  %v1687 = vpack.c.b16 %v1593, %v1592
  %v1688 = vpack.c.b16 %v1595, %v1594
  %v1689 = vpack.c.b16 %v1597, %v1596
  %v1690 = vpack.c.b16 %v1599, %v1598
  %v1691 = vpack.c.b16 %v1601, %v1600
  %v1692 = vpack.c.b16 %v1603, %v1602
  %v1693 = vpack.c.b16 %v1605, %v1604
  %v1694 = vpack.c.b16 %v1607, %v1606
  %v1695 = vpack.c.b16 %v1609, %v1608
  %v1696 = vpack.c.b16 %v1611, %v1610
  %v1697 = vpack.c.b16 %v1613, %v1612
  %v1698 = vpack.c.b16 %v1615, %v1614
  %v1699 = vpack.c.b16 %v1617, %v1616
  %v1700 = vpack.c.b16 %v1619, %v1618
  %v1701 = vpack.c.b16 %v1621, %v1620
  %v1702 = vpack.c.b16 %v1623, %v1622
  %v1703 = vpack.c.b16 %v1625, %v1624
  %v1704 = vpack.c.b16 %v1627, %v1626
  %v1705 = vpack.c.b16 %v1629, %v1628
  %v1706 = vpack.c.b16 %v1631, %v1630
  %v1707 = vpack.c.b16 %v1633, %v1632
  %v1708 = vpack.c.b16 %v1635, %v1634
  %v1709 = vpack.c.b16 %v1637, %v1636
  %v1710 = vpack.c.b16 %v1639, %v1638
  %v1711 = vpack.c.b16 %v1641, %v1640
  %v1712 = vpack.c.b16 %v1643, %v1642
  %v1713 = vpack.c.b16 %v1645, %v1644
  %v1714 = vpack.c.b16 %v1647, %v1646
  %v1715 = vpack.c.b16 %v1649, %v1648
  %v1716 = vpack.c.b16 %v1651, %v1650
  %v1717 = vpack.c.b16 %v1653, %v1652
  %v1718 = vpack.c.b16 %v1655, %v1654
  %v1719 = vpack.c.b16 %v1657, %v1656
  %v1720 = vpack.c.b16 %v1659, %v1658
  %v1721 = vpack.c.b16 %v1661, %v1660
  %v1722 = vpack.c.b16 %v1663, %v1662
  %v1723 = vpack.c.b16 %v1665, %v1664
  %v1724 = vpack.c.b16 %v1667, %v1666
  %v1725 = vpack.c.b16 %v1669, %v1668
  %1782 = vmatprep.subr.bf16.mxu0 0
  %1783 = vmatpush1.bf16.msra.mxu0 %v1670
  %1784 = vmatprep.subr.bf16.mxu0 0
  %1785 = vmatpush1.bf16.msra.mxu0 %v1671
  %1786 = vmatprep.subr.bf16.mxu0 0
  %1787 = vmatpush1.bf16.msra.mxu0 %v1672
  %1788 = vmatprep.subr.bf16.mxu0 0
  %1789 = vmatpush1.bf16.msra.mxu0 %v1673
  %1790 = vmatprep.subr.bf16.mxu0 0
  %1791 = vmatpush1.bf16.msra.mxu0 %v1674
  %1792 = vmatprep.subr.bf16.mxu0 0
  %1793 = vmatpush1.bf16.msra.mxu0 %v1675
  %1794 = vmatprep.subr.bf16.mxu0 0
  %1795 = vmatpush1.bf16.msra.mxu0 %v1676
  %1796 = vmatprep.subr.bf16.mxu0 0
  %1797 = vmatpush1.bf16.msra.mxu0 %v1677
  %1798 = vmatprep.subr.bf16.mxu0 0
  %1799 = vmatpush1.bf16.msra.mxu0 %v1678
  %1800 = vmatprep.subr.bf16.mxu0 0
  %1801 = vmatpush1.bf16.msra.mxu0 %v1679
  %1802 = vmatprep.subr.bf16.mxu0 0
  %1803 = vmatpush1.bf16.msra.mxu0 %v1680
  %1804 = vmatprep.subr.bf16.mxu0 0
  %1805 = vmatpush1.bf16.msra.mxu0 %v1681
  %1806 = vmatprep.subr.bf16.mxu0 0
  %1807 = vmatpush1.bf16.msra.mxu0 %v1682
  %1808 = vmatprep.subr.bf16.mxu0 0
  %1809 = vmatpush1.bf16.msra.mxu0 %v1683
  %1810 = vmatprep.subr.bf16.mxu0 0
  %1811 = vmatpush1.bf16.msra.mxu0 %v1684
  %1812 = vmatprep.subr.bf16.mxu0 0
  %1813 = vmatpush1.bf16.msra.mxu0 %v1685
  %1814 = vmatprep.mubr.bf16.mxu0 %v1303
  %1815 = vmatmul.mubr.bf16.gmra.mrb[0].mxu0 %v1302
  %v1816 = vpop.f32.mrb[0].mxu0
  %v1817 = vadd.f32 %v1445, %v1816
  %v1818 = vpop.f32.mrb[0].mxu0
  %v1819 = vpop.f32.mrb[0].mxu0
  %v1820 = vadd.f32 %v1445, %v1819
  %v1821 = vpop.f32.mrb[0].mxu0
  %1822 = vmatprep.mubr.bf16.mxu0 %v1310
  %1823 = vmatmul.mubr.bf16.gmra.mrb[0].mxu0 %v1309
  %v1824 = vpop.f32.mrb[0].mxu0
  %v1825 = vadd.f32 %v1445, %v1824
  %v1826 = vpop.f32.mrb[0].mxu0
  %v1827 = vpop.f32.mrb[0].mxu0
  %v1828 = vadd.f32 %v1445, %v1827
  %v1829 = vpop.f32.mrb[0].mxu0
  %1830 = vmatprep.mubr.bf16.mxu0 %v1317
  %1831 = vmatmul.mubr.bf16.gmra.mrb[0].mxu0 %v1316
  %v1832 = vpop.f32.mrb[0].mxu0
  %v1833 = vadd.f32 %v1445, %v1832
  %v1834 = vpop.f32.mrb[0].mxu0
  %v1835 = vpop.f32.mrb[0].mxu0
  %v1836 = vadd.f32 %v1445, %v1835
  %v1837 = vpop.f32.mrb[0].mxu0
  %1838 = vmatprep.mubr.bf16.mxu0 %v1324
  %1839 = vmatmul.mubr.bf16.gmra.mrb[0].mxu0 %v1323
  %v1840 = vpop.f32.mrb[0].mxu0
  %v1841 = vadd.f32 %v1445, %v1840
  %v1842 = vpop.f32.mrb[0].mxu0
  %v1843 = vpop.f32.mrb[0].mxu0
  %v1844 = vadd.f32 %v1445, %v1843
  %v1845 = vpop.f32.mrb[0].mxu0
  %1846 = vdwg.mxu0
  %1847 = vmatprep.subr.bf16.mxu0 0
  %1848 = vmatpush1.bf16.msra.mxu0 %v1686
  %1849 = vmatprep.subr.bf16.mxu0 0
  %1850 = vmatpush1.bf16.msra.mxu0 %v1687
  %1851 = vmatprep.subr.bf16.mxu0 0
  %1852 = vmatpush1.bf16.msra.mxu0 %v1688
  %1853 = vmatprep.subr.bf16.mxu0 0
  %1854 = vmatpush1.bf16.msra.mxu0 %v1689
  %1855 = vmatprep.subr.bf16.mxu0 0
  %1856 = vmatpush1.bf16.msra.mxu0 %v1690
  %1857 = vmatprep.subr.bf16.mxu0 0
  %1858 = vmatpush1.bf16.msra.mxu0 %v1691
  %1859 = vmatprep.subr.bf16.mxu0 0
  %1860 = vmatpush1.bf16.msra.mxu0 %v1692
  %1861 = vmatprep.subr.bf16.mxu0 0
  %1862 = vmatpush1.bf16.msra.mxu0 %v1693
  %1863 = vmatprep.subr.bf16.mxu0 0
  %1864 = vmatpush1.bf16.msra.mxu0 %v1694
  %1865 = vmatprep.subr.bf16.mxu0 0
  %1866 = vmatpush1.bf16.msra.mxu0 %v1695
  %1867 = vmatprep.subr.bf16.mxu0 0
  %1868 = vmatpush1.bf16.msra.mxu0 %v1696
  %1869 = vmatprep.subr.bf16.mxu0 0
  %1870 = vmatpush1.bf16.msra.mxu0 %v1697
  %1871 = vmatprep.subr.bf16.mxu0 0
  %1872 = vmatpush1.bf16.msra.mxu0 %v1698
  %1873 = vmatprep.subr.bf16.mxu0 0
  %1874 = vmatpush1.bf16.msra.mxu0 %v1699
  %1875 = vmatprep.subr.bf16.mxu0 0
  %1876 = vmatpush1.bf16.msra.mxu0 %v1700
  %1877 = vmatprep.subr.bf16.mxu0 0
  %1878 = vmatpush1.bf16.msra.mxu0 %v1701
  %1879 = vmatprep.mubr.bf16.mxu0 %v1305
  %1880 = vmatmul.mubr.bf16.gmra.mrb[0].mxu0 %v1304
  %v1881 = vpop.f32.mrb[0].mxu0
  %v1882 = vadd.f32 %v1817, %v1881
  %v1883 = vpop.f32.mrb[0].mxu0
  %v1884 = vpop.f32.mrb[0].mxu0
  %v1885 = vadd.f32 %v1820, %v1884
  %v1886 = vpop.f32.mrb[0].mxu0
  %1887 = vmatprep.mubr.bf16.mxu0 %v1312
  %1888 = vmatmul.mubr.bf16.gmra.mrb[0].mxu0 %v1311
  %v1889 = vpop.f32.mrb[0].mxu0
  %v1890 = vadd.f32 %v1825, %v1889
  %v1891 = vpop.f32.mrb[0].mxu0
  %v1892 = vpop.f32.mrb[0].mxu0
  %v1893 = vadd.f32 %v1828, %v1892
  %v1894 = vpop.f32.mrb[0].mxu0
  %1895 = vmatprep.mubr.bf16.mxu0 %v1319
  %1896 = vmatmul.mubr.bf16.gmra.mrb[0].mxu0 %v1318
  %v1897 = vpop.f32.mrb[0].mxu0
  %v1898 = vadd.f32 %v1833, %v1897
  %v1899 = vpop.f32.mrb[0].mxu0
  %v1900 = vpop.f32.mrb[0].mxu0
  %v1901 = vadd.f32 %v1836, %v1900
  %v1902 = vpop.f32.mrb[0].mxu0
  %1903 = vmatprep.mubr.bf16.mxu0 %v1326
  %1904 = vmatmul.mubr.bf16.gmra.mrb[0].mxu0 %v1325
  %v1905 = vpop.f32.mrb[0].mxu0
  %v1906 = vadd.f32 %v1841, %v1905
  %v1907 = vpop.f32.mrb[0].mxu0
  %v1908 = vpop.f32.mrb[0].mxu0
  %v1909 = vadd.f32 %v1844, %v1908
  %v1910 = vpop.f32.mrb[0].mxu0
  %1911 = vdwg.mxu0
  %1912 = vmatprep.subr.bf16.mxu0 0
  %1913 = vmatpush1.bf16.msra.mxu0 %v1702
  %1914 = vmatprep.subr.bf16.mxu0 0
  %1915 = vmatpush1.bf16.msra.mxu0 %v1703
  %1916 = vmatprep.subr.bf16.mxu0 0
  %1917 = vmatpush1.bf16.msra.mxu0 %v1704
  %1918 = vmatprep.subr.bf16.mxu0 0
  %1919 = vmatpush1.bf16.msra.mxu0 %v1705
  %1920 = vmatprep.subr.bf16.mxu0 0
  %1921 = vmatpush1.bf16.msra.mxu0 %v1706
  %1922 = vmatprep.subr.bf16.mxu0 0
  %1923 = vmatpush1.bf16.msra.mxu0 %v1707
  %1924 = vmatprep.subr.bf16.mxu0 0
  %1925 = vmatpush1.bf16.msra.mxu0 %v1708
  %1926 = vmatprep.subr.bf16.mxu0 0
  %1927 = vmatpush1.bf16.msra.mxu0 %v1709
  %1928 = vmatprep.subr.bf16.mxu0 0
  %1929 = vmatpush1.bf16.msra.mxu0 %v1710
  %1930 = vmatprep.subr.bf16.mxu0 0
  %1931 = vmatpush1.bf16.msra.mxu0 %v1711
  %1932 = vmatprep.subr.bf16.mxu0 0
  %1933 = vmatpush1.bf16.msra.mxu0 %v1712
  %1934 = vmatprep.subr.bf16.mxu0 0
  %1935 = vmatpush1.bf16.msra.mxu0 %v1713
  %1936 = vmatprep.subr.bf16.mxu0 0
  %1937 = vmatpush1.bf16.msra.mxu0 %v1714
  %1938 = vmatprep.subr.bf16.mxu0 0
  %1939 = vmatpush1.bf16.msra.mxu0 %v1715
  %1940 = vmatprep.subr.bf16.mxu0 0
  %1941 = vmatpush1.bf16.msra.mxu0 %v1716
  %1942 = vmatprep.subr.bf16.mxu0 0
  %1943 = vmatpush1.bf16.msra.mxu0 %v1717
  %1944 = vmatprep.mubr.bf16.mxu0 %v1307
  %1945 = vmatmul.mubr.bf16.gmra.mrb[0].mxu0 %v1306
  %v1946 = vpop.f32.mrb[0].mxu0
  %v1947 = vadd.f32 %v1882, %v1946
  %v1948 = vpop.f32.mrb[0].mxu0
  %v1949 = vpop.f32.mrb[0].mxu0
  %v1950 = vadd.f32 %v1885, %v1949
  %v1951 = vpop.f32.mrb[0].mxu0
  %1952 = vmatprep.mubr.bf16.mxu0 %v1314
  %1953 = vmatmul.mubr.bf16.gmra.mrb[0].mxu0 %v1313
  %v1954 = vpop.f32.mrb[0].mxu0
  %v1955 = vadd.f32 %v1890, %v1954
  %v1956 = vpop.f32.mrb[0].mxu0
  %v1957 = vpop.f32.mrb[0].mxu0
  %v1958 = vadd.f32 %v1893, %v1957
  %v1959 = vpop.f32.mrb[0].mxu0
  %1960 = vmatprep.mubr.bf16.mxu0 %v1321
  %1961 = vmatmul.mubr.bf16.gmra.mrb[0].mxu0 %v1320
  %v1962 = vpop.f32.mrb[0].mxu0
  %v1963 = vadd.f32 %v1898, %v1962
  %v1964 = vpop.f32.mrb[0].mxu0
  %v1965 = vpop.f32.mrb[0].mxu0
  %v1966 = vadd.f32 %v1901, %v1965
  %v1967 = vpop.f32.mrb[0].mxu0
  %1968 = vmatprep.mubr.bf16.mxu0 %v1328
  %1969 = vmatmul.mubr.bf16.gmra.mrb[0].mxu0 %v1327
  %v1970 = vpop.f32.mrb[0].mxu0
  %v1971 = vadd.f32 %v1906, %v1970
  %v1972 = vpop.f32.mrb[0].mxu0
  %v1973 = vpop.f32.mrb[0].mxu0
  %v1974 = vadd.f32 %v1909, %v1973
  %v1975 = vpop.f32.mrb[0].mxu0
  %1976 = vdwg.mxu0
  %1977 = vmatprep.subr.bf16.mxu0 0
  %1978 = vmatpush1.bf16.msra.mxu0 %v1718
  %1979 = vmatprep.subr.bf16.mxu0 0
  %1980 = vmatpush1.bf16.msra.mxu0 %v1719
  %1981 = vmatprep.subr.bf16.mxu0 0
  %1982 = vmatpush1.bf16.msra.mxu0 %v1720
  %1983 = vmatprep.subr.bf16.mxu0 0
  %1984 = vmatpush1.bf16.msra.mxu0 %v1721
  %1985 = vmatprep.subr.bf16.mxu0 0
  %1986 = vmatpush1.bf16.msra.mxu0 %v1722
  %1987 = vmatprep.subr.bf16.mxu0 0
  %1988 = vmatpush1.bf16.msra.mxu0 %v1723
  %1989 = vmatprep.subr.bf16.mxu0 0
  %1990 = vmatpush1.bf16.msra.mxu0 %v1724
  %1991 = vmatprep.subr.bf16.mxu0 0
  %1992 = vmatpush1.bf16.msra.mxu0 %v1725
  %1993 = vmatprep.subr.bf16.mxu0 0
  %1994 = vmatpush1.bf16.msra.mxu0 0
  %1995 = vmatprep.subr.bf16.mxu0 0
  %1996 = vmatpush1.bf16.msra.mxu0 0
  %1997 = vmatprep.subr.bf16.mxu0 0
  %1998 = vmatpush1.bf16.msra.mxu0 0
  %1999 = vmatprep.subr.bf16.mxu0 0
  %2000 = vmatpush1.bf16.msra.mxu0 0
  %2001 = vmatprep.subr.bf16.mxu0 0
  %2002 = vmatpush1.bf16.msra.mxu0 0
  %2003 = vmatprep.subr.bf16.mxu0 0
  %2004 = vmatpush1.bf16.msra.mxu0 0
  %2005 = vmatprep.subr.bf16.mxu0 0
  %2006 = vmatpush1.bf16.msra.mxu0 0
  %2007 = vmatprep.subr.bf16.mxu0 0
  %2008 = vmatpush1.bf16.msra.mxu0 0
  %2009 = vmatprep.mubr.bf16.mxu0 0
  %2010 = vmatmul.mubr.bf16.gmra.mrb[0].mxu0 %v1308
  %v2011 = vpop.f32.mrb[0].mxu0
  %v2012 = vadd.f32 %v1947, %v2011
  %v2013 = vpop.f32.mrb[0].mxu0
  %v2014 = vpop.f32.mrb[0].mxu0
  %v2015 = vadd.f32 %v1950, %v2014
  %v2016 = vpop.f32.mrb[0].mxu0
  %2017 = vmatprep.mubr.bf16.mxu0 0
  %2018 = vmatmul.mubr.bf16.gmra.mrb[0].mxu0 %v1315
  %v2019 = vpop.f32.mrb[0].mxu0
  %v2020 = vadd.f32 %v1955, %v2019
  %v2021 = vpop.f32.mrb[0].mxu0
  %v2022 = vpop.f32.mrb[0].mxu0
  %v2023 = vadd.f32 %v1958, %v2022
  %v2024 = vpop.f32.mrb[0].mxu0
  %2025 = vmatprep.mubr.bf16.mxu0 0
  %2026 = vmatmul.mubr.bf16.gmra.mrb[0].mxu0 %v1322
  %v2027 = vpop.f32.mrb[0].mxu0
  %v2028 = vadd.f32 %v1963, %v2027
  %v2029 = vpop.f32.mrb[0].mxu0
  %v2030 = vpop.f32.mrb[0].mxu0
  %v2031 = vadd.f32 %v1966, %v2030
  %v2032 = vpop.f32.mrb[0].mxu0
  %2033 = vmatprep.mubr.bf16.mxu0 0
  %2034 = vmatmul.mubr.bf16.gmra.mrb[0].mxu0 %v1329
  %v2035 = vpop.f32.mrb[0].mxu0
  %v2036 = vadd.f32 %v1971, %v2035
  %v2037 = vpop.f32.mrb[0].mxu0
  %v2038 = vpop.f32.mrb[0].mxu0
  %v2039 = vadd.f32 %v1974, %v2038
  %v2040 = vpop.f32.mrb[0].mxu0
  %2041 = vdwg.mxu0
  %2042 = vmatprep.subr.mxu0 0.0
  %2043 = vmatpush1.msra.mxu0 %v472
  %2044 = vmatprep.subr.mxu0 0.0
  %2045 = vmatpush1.msra.mxu0 %v473
  %2046 = vmatprep.subr.mxu0 0.0
  %2047 = vmatpush1.msra.mxu0 %v474
  %2048 = vmatprep.subr.mxu0 0.0
  %2049 = vmatpush1.msra.mxu0 %v475
  %2050 = vmatprep.subr.mxu0 0.0
  %2051 = vmatpush1.msra.mxu0 %v476
  %2052 = vmatprep.subr.mxu0 0.0
  %2053 = vmatpush1.msra.mxu0 %v477
  %2054 = vmatprep.subr.mxu0 0.0
  %2055 = vmatpush1.msra.mxu0 %v478
  %2056 = vmatprep.subr.mxu0 0.0
  %2057 = vmatpush1.msra.mxu0 %v479
  %2058 = vmatprep.subr.mxu0 0.0
  %2059 = vmatpush1.msra.mxu0 %v480
  %2060 = vmatprep.subr.mxu0 0.0
  %2061 = vmatpush1.msra.mxu0 %v481
  %2062 = vmatprep.subr.mxu0 0.0
  %2063 = vmatpush1.msra.mxu0 %v482
  %2064 = vmatprep.subr.mxu0 0.0
  %2065 = vmatpush1.msra.mxu0 %v483
  %2066 = vmatprep.subr.mxu0 0.0
  %2067 = vmatpush1.msra.mxu0 %v484
  %2068 = vmatprep.subr.mxu0 0.0
  %2069 = vmatpush1.msra.mxu0 %v485
  %2070 = vmatprep.subr.mxu0 0.0
  %2071 = vmatpush1.msra.mxu0 %v486
  %2072 = vmatprep.subr.mxu0 0.0
  %2073 = vmatpush1.msra.mxu0 %v487
  %2074 = vmatprep.subr.mxu0 0.0
  %2075 = vmatpush1.msra.mxu0 0.0
  %2076 = vmatprep.subr.mxu0 0.0
  %2077 = vmatpush1.msra.mxu0 0.0
  %2078 = vmatprep.subr.mxu0 0.0
  %2079 = vmatpush1.msra.mxu0 0.0
  %2080 = vmatprep.subr.mxu0 0.0
  %2081 = vmatpush1.msra.mxu0 0.0
  %2082 = vmatprep.subr.mxu0 0.0
  %2083 = vmatpush1.msra.mxu0 0.0
  %2084 = vmatprep.subr.mxu0 0.0
  %2085 = vmatpush1.msra.mxu0 0.0
  %2086 = vmatprep.subr.mxu0 0.0
  %2087 = vmatpush1.msra.mxu0 0.0
  %2088 = vmatprep.subr.mxu0 0.0
  %2089 = vmatpush1.msra.mxu0 0.0
  %2090 = vmatprep.subr.mxu0 0.0
  %2091 = vmatpush1.msra.mxu0 0.0
  %2092 = vmatprep.subr.mxu0 0.0
  %2093 = vmatpush1.msra.mxu0 0.0
  %2094 = vmatprep.subr.mxu0 0.0
  %2095 = vmatpush1.msra.mxu0 0.0
  %2096 = vmatprep.subr.mxu0 0.0
  %2097 = vmatpush1.msra.mxu0 0.0
  %2098 = vmatprep.subr.mxu0 0.0
  %2099 = vmatpush1.msra.mxu0 0.0
  %2100 = vmatprep.subr.mxu0 0.0
  %2101 = vmatpush1.msra.mxu0 0.0
  %2102 = vmatprep.subr.mxu0 0.0
  %2103 = vmatpush1.msra.mxu0 0.0
  %2104 = vmatprep.subr.mxu0 0.0
  %2105 = vmatpush1.msra.mxu0 0.0
  %2106 = vmatprep.mubr.f32.mxu0 0.0
  %2107 = vmatmul.mubr.f32.gmra.mrb[0].mxu0 %v2012
  %v2108 = vpop.f32.mrb[0].mxu0
  %v2109 = vadd.f32 0.0, %v2108
  %v2110 = vpop.f32.mrb[0].mxu0
  %2111 = vmatprep.mubr.f32.mxu0 0.0
  %2112 = vmatmul.mubr.f32.gmra.mrb[0].mxu0 %v2015
  %v2113 = vpop.f32.mrb[0].mxu0
  %v2114 = vadd.f32 0.0, %v2113
  %v2115 = vpop.f32.mrb[0].mxu0
  %2116 = vmatprep.mubr.f32.mxu0 0.0
  %2117 = vmatmul.mubr.f32.gmra.mrb[0].mxu0 %v2020
  %v2118 = vpop.f32.mrb[0].mxu0
  %v2119 = vadd.f32 0.0, %v2118
  %v2120 = vpop.f32.mrb[0].mxu0
  %2121 = vmatprep.mubr.f32.mxu0 0.0
  %2122 = vmatmul.mubr.f32.gmra.mrb[0].mxu0 %v2023
  %v2123 = vpop.f32.mrb[0].mxu0
  %v2124 = vadd.f32 0.0, %v2123
  %v2125 = vpop.f32.mrb[0].mxu0
  %2126 = vmatprep.mubr.f32.mxu0 0.0
  %2127 = vmatmul.mubr.f32.gmra.mrb[0].mxu0 %v2028
  %v2128 = vpop.f32.mrb[0].mxu0
  %v2129 = vadd.f32 0.0, %v2128
  %v2130 = vpop.f32.mrb[0].mxu0
  %2131 = vmatprep.mubr.f32.mxu0 0.0
  %2132 = vmatmul.mubr.f32.gmra.mrb[0].mxu0 %v2031
  %v2133 = vpop.f32.mrb[0].mxu0
  %v2134 = vadd.f32 0.0, %v2133
  %v2135 = vpop.f32.mrb[0].mxu0
  %2136 = vmatprep.mubr.f32.mxu0 0.0
  %2137 = vmatmul.mubr.f32.gmra.mrb[0].mxu0 %v2036
  %v2138 = vpop.f32.mrb[0].mxu0
  %v2139 = vadd.f32 0.0, %v2138
  %v2140 = vpop.f32.mrb[0].mxu0
  %2141 = vmatprep.mubr.f32.mxu0 0.0
  %2142 = vmatmul.mubr.f32.gmra.mrb[0].mxu0 %v2039
  %v2143 = vpop.f32.mrb[0].mxu0
  %v2144 = vadd.f32 0.0, %v2143
  %v2145 = vpop.f32.mrb[0].mxu0
  %2146 = vdwg.mxu0
  %v2147 = vsub.f32 %v2012, %v2109
  %v2148 = vsub.f32 %v2015, %v2114
  %v2149 = vsub.f32 %v2020, %v2119
  %v2150 = vsub.f32 %v2023, %v2124
  %v2151 = vsub.f32 %v2028, %v2129
  %v2152 = vsub.f32 %v2031, %v2134
  %v2153 = vsub.f32 %v2036, %v2139
  %v2154 = vsub.f32 %v2039, %v2144
  %v2155 = vmul.f32 %v2147, %v2147
  %v2156 = vmul.f32 %v2148, %v2148
  %v2157 = vmul.f32 %v2149, %v2149
  %v2158 = vmul.f32 %v2150, %v2150
  %v2159 = vmul.f32 %v2151, %v2151
  %v2160 = vmul.f32 %v2152, %v2152
  %v2161 = vmul.f32 %v2153, %v2153
  %v2162 = vmul.f32 %v2154, %v2154
  %2163 = vmatprep.subr.mxu0 0.0
  %2164 = vmatpush1.msra.mxu0 %v472
  %2165 = vmatprep.subr.mxu0 0.0
  %2166 = vmatpush1.msra.mxu0 %v473
  %2167 = vmatprep.subr.mxu0 0.0
  %2168 = vmatpush1.msra.mxu0 %v474
  %2169 = vmatprep.subr.mxu0 0.0
  %2170 = vmatpush1.msra.mxu0 %v475
  %2171 = vmatprep.subr.mxu0 0.0
  %2172 = vmatpush1.msra.mxu0 %v476
  %2173 = vmatprep.subr.mxu0 0.0
  %2174 = vmatpush1.msra.mxu0 %v477
  %2175 = vmatprep.subr.mxu0 0.0
  %2176 = vmatpush1.msra.mxu0 %v478
  %2177 = vmatprep.subr.mxu0 0.0
  %2178 = vmatpush1.msra.mxu0 %v479
  %2179 = vmatprep.subr.mxu0 0.0
  %2180 = vmatpush1.msra.mxu0 %v480
  %2181 = vmatprep.subr.mxu0 0.0
  %2182 = vmatpush1.msra.mxu0 %v481
  %2183 = vmatprep.subr.mxu0 0.0
  %2184 = vmatpush1.msra.mxu0 %v482
  %2185 = vmatprep.subr.mxu0 0.0
  %2186 = vmatpush1.msra.mxu0 %v483
  %2187 = vmatprep.subr.mxu0 0.0
  %2188 = vmatpush1.msra.mxu0 %v484
  %2189 = vmatprep.subr.mxu0 0.0
  %2190 = vmatpush1.msra.mxu0 %v485
  %2191 = vmatprep.subr.mxu0 0.0
  %2192 = vmatpush1.msra.mxu0 %v486
  %2193 = vmatprep.subr.mxu0 0.0
  %2194 = vmatpush1.msra.mxu0 %v487
  %2195 = vmatprep.subr.mxu0 0.0
  %2196 = vmatpush1.msra.mxu0 0.0
  %2197 = vmatprep.subr.mxu0 0.0
  %2198 = vmatpush1.msra.mxu0 0.0
  %2199 = vmatprep.subr.mxu0 0.0
  %2200 = vmatpush1.msra.mxu0 0.0
  %2201 = vmatprep.subr.mxu0 0.0
  %2202 = vmatpush1.msra.mxu0 0.0
  %2203 = vmatprep.subr.mxu0 0.0
  %2204 = vmatpush1.msra.mxu0 0.0
  %2205 = vmatprep.subr.mxu0 0.0
  %2206 = vmatpush1.msra.mxu0 0.0
  %2207 = vmatprep.subr.mxu0 0.0
  %2208 = vmatpush1.msra.mxu0 0.0
  %2209 = vmatprep.subr.mxu0 0.0
  %2210 = vmatpush1.msra.mxu0 0.0
  %2211 = vmatprep.subr.mxu0 0.0
  %2212 = vmatpush1.msra.mxu0 0.0
  %2213 = vmatprep.subr.mxu0 0.0
  %2214 = vmatpush1.msra.mxu0 0.0
  %2215 = vmatprep.subr.mxu0 0.0
  %2216 = vmatpush1.msra.mxu0 0.0
  %2217 = vmatprep.subr.mxu0 0.0
  %2218 = vmatpush1.msra.mxu0 0.0
  %2219 = vmatprep.subr.mxu0 0.0
  %2220 = vmatpush1.msra.mxu0 0.0
  %2221 = vmatprep.subr.mxu0 0.0
  %2222 = vmatpush1.msra.mxu0 0.0
  %2223 = vmatprep.subr.mxu0 0.0
  %2224 = vmatpush1.msra.mxu0 0.0
  %2225 = vmatprep.subr.mxu0 0.0
  %2226 = vmatpush1.msra.mxu0 0.0
  %2227 = vmatprep.mubr.f32.mxu0 0.0
  %2228 = vmatmul.mubr.f32.gmra.mrb[0].mxu0 %v2155
  %v2229 = vpop.f32.mrb[0].mxu0
  %v2230 = vadd.f32 1e-06, %v2229
  %v2231 = vpop.f32.mrb[0].mxu0
  %2232 = vmatprep.mubr.f32.mxu0 0.0
  %2233 = vmatmul.mubr.f32.gmra.mrb[0].mxu0 %v2156
  %v2234 = vpop.f32.mrb[0].mxu0
  %v2235 = vadd.f32 1e-06, %v2234
  %v2236 = vpop.f32.mrb[0].mxu0
  %2237 = vmatprep.mubr.f32.mxu0 0.0
  %2238 = vmatmul.mubr.f32.gmra.mrb[0].mxu0 %v2157
  %v2239 = vpop.f32.mrb[0].mxu0
  %v2240 = vadd.f32 1e-06, %v2239
  %v2241 = vpop.f32.mrb[0].mxu0
  %2242 = vmatprep.mubr.f32.mxu0 0.0
  %2243 = vmatmul.mubr.f32.gmra.mrb[0].mxu0 %v2158
  %v2244 = vpop.f32.mrb[0].mxu0
  %v2245 = vadd.f32 1e-06, %v2244
  %v2246 = vpop.f32.mrb[0].mxu0
  %2247 = vmatprep.mubr.f32.mxu0 0.0
  %2248 = vmatmul.mubr.f32.gmra.mrb[0].mxu0 %v2159
  %v2249 = vpop.f32.mrb[0].mxu0
  %v2250 = vadd.f32 1e-06, %v2249
  %v2251 = vpop.f32.mrb[0].mxu0
  %2252 = vmatprep.mubr.f32.mxu0 0.0
  %2253 = vmatmul.mubr.f32.gmra.mrb[0].mxu0 %v2160
  %v2254 = vpop.f32.mrb[0].mxu0
  %v2255 = vadd.f32 1e-06, %v2254
  %v2256 = vpop.f32.mrb[0].mxu0
  %2257 = vmatprep.mubr.f32.mxu0 0.0
  %2258 = vmatmul.mubr.f32.gmra.mrb[0].mxu0 %v2161
  %v2259 = vpop.f32.mrb[0].mxu0
  %v2260 = vadd.f32 1e-06, %v2259
  %v2261 = vpop.f32.mrb[0].mxu0
  %2262 = vmatprep.mubr.f32.mxu0 0.0
  %2263 = vmatmul.mubr.f32.gmra.mrb[0].mxu0 %v2162
  %v2264 = vpop.f32.mrb[0].mxu0
  %v2265 = vadd.f32 1e-06, %v2264
  %v2266 = vpop.f32.mrb[0].mxu0
  %2267 = vdwg.mxu0
  %v2268 = vrsqrt.pop %v2230
  %v2269 = vrsqrt.pop %v2235
  %v2270 = vrsqrt.pop %v2240
  %v2271 = vrsqrt.pop %v2245
  %v2272 = vrsqrt.pop %v2250
  %v2273 = vrsqrt.pop %v2255
  %v2274 = vrsqrt.pop %v2260
  %v2275 = vrsqrt.pop %v2265
  %v2276 = vmul.f32 %v2147, %v2268
  %v2277 = vmul.f32 %v2148, %v2269
  %v2278 = vmul.f32 %v2149, %v2270
  %v2279 = vmul.f32 %v2150, %v2271
  %v2280 = vmul.f32 %v2151, %v2272
  %v2281 = vmul.f32 %v2152, %v2273
  %v2282 = vmul.f32 %v2153, %v2274
  %v2283 = vmul.f32 %v2154, %v2275
  %v2284 = vlaneseq
  %v2285 = vshrl.u32 %v2284, 7
  %v2286 = vsub.s32 0, %v2285
  %v2287 = vrot.slane %v755, %v2286
  %v2288 = vmul.f32 %v2276, %v2287
  %v2289 = vmul.f32 %v2277, %v2287
  %v2290 = vmul.f32 %v2278, %v2287
  %v2291 = vmul.f32 %v2279, %v2287
  %v2292 = vmul.f32 %v2280, %v2287
  %v2293 = vmul.f32 %v2281, %v2287
  %v2294 = vmul.f32 %v2282, %v2287
  %v2295 = vmul.f32 %v2283, %v2287
  %v2296 = vlaneseq
  %v2297 = vshrl.u32 %v2296, 7
  %v2298 = vsub.s32 0, %v2297
  %v2299 = vrot.slane %v756, %v2298
  %v2300 = vadd.f32 %v2288, %v2299
  %v2301 = vadd.f32 %v2289, %v2299
  %v2302 = vadd.f32 %v2290, %v2299
  %v2303 = vadd.f32 %v2291, %v2299
  %v2304 = vadd.f32 %v2292, %v2299
  %v2305 = vadd.f32 %v2293, %v2299
  %v2306 = vadd.f32 %v2294, %v2299
  %v2307 = vadd.f32 %v2295, %v2299
  %v2308 = vpack.c.bf16 %v2301, %v2300
  %v2309 = vpack.c.bf16 %v2303, %v2302
  %v2310 = vpack.c.bf16 %v2305, %v2304
  %v2311 = vpack.c.bf16 %v2307, %v2306
  %v2312 = vld [vmem:[%s5] sm:$0xff]
  %v2313 = vld [vmem:[%s5 + $0x8] sm:$0xff]
  %v2314 = vld [vmem:[%s5 + $0x10] sm:$0xff]
  %v2315 = vld [vmem:[%s5 + $0x18] sm:$0xff]
  %v2316 = vld [vmem:[%s5 + $0x20] sm:$0xff]
  %v2317 = vld [vmem:[%s5 + $0x28] sm:$0xff]
  %v2318 = vld [vmem:[%s5 + $0x30] sm:$0xff]
  %v2319 = vld [vmem:[%s5 + $0x38] sm:$0xff]
  %v2320 = vld [vmem:[%s5 + $0x40] sm:$0xff]
  %v2321 = vld [vmem:[%s5 + $0x48] sm:$0xff]
  %v2322 = vld [vmem:[%s5 + $0x50] sm:$0xff]
  %v2323 = vld [vmem:[%s5 + $0x58] sm:$0xff]
  %v2324 = vld [vmem:[%s5 + $0x60] sm:$0xff]
  %v2325 = vld [vmem:[%s5 + $0x68] sm:$0xff]
  %v2326 = vld [vmem:[%s5 + $0x70] sm:$0xff]
  %v2327 = vld [vmem:[%s5 + $0x78] sm:$0xff]
  %v2328 = vld [vmem:[%s5 + $0x80] sm:$0xff]
  %v2329 = vld [vmem:[%s5 + $0x88] sm:$0xff]
  %v2330 = vld [vmem:[%s5 + $0x90] sm:$0xff]
  %v2331 = vld [vmem:[%s5 + $0x98] sm:$0xff]
  %v2332 = vld [vmem:[%s5 + $0xa0] sm:$0xff]
  %v2333 = vld [vmem:[%s5 + $0xa8] sm:$0xff]
  %v2334 = vld [vmem:[%s5 + $0xb0] sm:$0xff]
  %v2335 = vld [vmem:[%s5 + $0xb8] sm:$0xff]
  %v2336 = vld [vmem:[%s5 + $0xc0] sm:$0xff]
  %v2337 = vld [vmem:[%s5 + $0xc8] sm:$0xff]
  %v2338 = vld [vmem:[%s5 + $0xd0] sm:$0xff]
  %v2339 = vld [vmem:[%s5 + $0xd8] sm:$0xff]
  %v2340 = vld [vmem:[%s5 + $0xe0] sm:$0xff]
  %v2341 = vld [vmem:[%s5 + $0xe8] sm:$0xff]
  %v2342 = vld [vmem:[%s5 + $0xf0] sm:$0xff]
  %v2343 = vld [vmem:[%s5 + $0xf8] sm:$0xff]
  %v2345 = vlaneseq
  %v2346 = vshrl.u32 %v2345, 7
  %v2347 = vsub.s32 0, %v2346
  %v2348 = vrot.slane %v757, %v2347
  %v2349 = vlaneseq
  %v2350 = vshrl.u32 %v2349, 7
  %v2351 = vsub.s32 1, %v2350
  %v2352 = vrot.slane %v757, %v2351
  %v2353 = vlaneseq
  %v2354 = vshrl.u32 %v2353, 7
  %v2355 = vsub.s32 2, %v2354
  %v2356 = vrot.slane %v757, %v2355
  %v2357 = vlaneseq
  %v2358 = vshrl.u32 %v2357, 7
  %v2359 = vsub.s32 3, %v2358
  %v2360 = vrot.slane %v757, %v2359
  %v2397 = vunpack.c.l.b16 %v2312
  %v2398 = vunpack.c.h.b16 %v2312
  %v2399 = vunpack.c.l.b16 %v2313
  %v2400 = vunpack.c.h.b16 %v2313
  %v2401 = vunpack.c.l.b16 %v2314
  %v2402 = vunpack.c.h.b16 %v2314
  %v2403 = vunpack.c.l.b16 %v2315
  %v2404 = vunpack.c.h.b16 %v2315
  %v2405 = vunpack.c.l.b16 %v2316
  %v2406 = vunpack.c.h.b16 %v2316
  %v2407 = vunpack.c.l.b16 %v2317
  %v2408 = vunpack.c.h.b16 %v2317
  %v2409 = vunpack.c.l.b16 %v2318
  %v2410 = vunpack.c.h.b16 %v2318
  %v2411 = vunpack.c.l.b16 %v2319
  %v2412 = vunpack.c.h.b16 %v2319
  %v2413 = vunpack.c.l.b16 %v2320
  %v2414 = vunpack.c.h.b16 %v2320
  %v2415 = vunpack.c.l.b16 %v2321
  %v2416 = vunpack.c.h.b16 %v2321
  %v2417 = vunpack.c.l.b16 %v2322
  %v2418 = vunpack.c.h.b16 %v2322
  %v2419 = vunpack.c.l.b16 %v2323
  %v2420 = vunpack.c.h.b16 %v2323
  %v2421 = vunpack.c.l.b16 %v2324
  %v2422 = vunpack.c.h.b16 %v2324
  %v2423 = vunpack.c.l.b16 %v2325
  %v2424 = vunpack.c.h.b16 %v2325
  %v2425 = vunpack.c.l.b16 %v2326
  %v2426 = vunpack.c.h.b16 %v2326
  %v2427 = vunpack.c.l.b16 %v2327
  %v2428 = vunpack.c.h.b16 %v2327
  %v2429 = vunpack.c.l.b16 %v2328
  %v2430 = vunpack.c.h.b16 %v2328
  %v2431 = vunpack.c.l.b16 %v2329
  %v2432 = vunpack.c.h.b16 %v2329
  %v2433 = vunpack.c.l.b16 %v2330
  %v2434 = vunpack.c.h.b16 %v2330
  %v2435 = vunpack.c.l.b16 %v2331
  %v2436 = vunpack.c.h.b16 %v2331
  %v2437 = vunpack.c.l.b16 %v2332
  %v2438 = vunpack.c.h.b16 %v2332
  %v2439 = vunpack.c.l.b16 %v2333
  %v2440 = vunpack.c.h.b16 %v2333
  %v2441 = vunpack.c.l.b16 %v2334
  %v2442 = vunpack.c.h.b16 %v2334
  %v2443 = vunpack.c.l.b16 %v2335
  %v2444 = vunpack.c.h.b16 %v2335
  %v2445 = vunpack.c.l.b16 %v2336
  %v2446 = vunpack.c.h.b16 %v2336
  %v2447 = vunpack.c.l.b16 %v2337
  %v2448 = vunpack.c.h.b16 %v2337
  %v2449 = vunpack.c.l.b16 %v2338
  %v2450 = vunpack.c.h.b16 %v2338
  %v2451 = vunpack.c.l.b16 %v2339
  %v2452 = vunpack.c.h.b16 %v2339
  %v2453 = vunpack.c.l.b16 %v2340
  %v2454 = vunpack.c.h.b16 %v2340
  %v2455 = vunpack.c.l.b16 %v2341
  %v2456 = vunpack.c.h.b16 %v2341
  %v2457 = vunpack.c.l.b16 %v2342
  %v2458 = vunpack.c.h.b16 %v2342
  %v2459 = vunpack.c.l.b16 %v2343
  %v2460 = vunpack.c.h.b16 %v2343
  %v2461 = vpack.c.b16 %v2401, %v2397
  %v2462 = vpack.c.b16 %v2402, %v2398
  %v2463 = vpack.c.b16 %v2403, %v2399
  %v2464 = vpack.c.b16 %v2404, %v2400
  %v2465 = vpack.c.b16 %v2409, %v2405
  %v2466 = vpack.c.b16 %v2410, %v2406
  %v2467 = vpack.c.b16 %v2411, %v2407
  %v2468 = vpack.c.b16 %v2412, %v2408
  %v2469 = vpack.c.b16 %v2417, %v2413
  %v2470 = vpack.c.b16 %v2418, %v2414
  %v2471 = vpack.c.b16 %v2419, %v2415
  %v2472 = vpack.c.b16 %v2420, %v2416
  %v2473 = vpack.c.b16 %v2425, %v2421
  %v2474 = vpack.c.b16 %v2426, %v2422
  %v2475 = vpack.c.b16 %v2427, %v2423
  %v2476 = vpack.c.b16 %v2428, %v2424
  %v2477 = vpack.c.b16 %v2433, %v2429
  %v2478 = vpack.c.b16 %v2434, %v2430
  %v2479 = vpack.c.b16 %v2435, %v2431
  %v2480 = vpack.c.b16 %v2436, %v2432
  %v2481 = vpack.c.b16 %v2441, %v2437
  %v2482 = vpack.c.b16 %v2442, %v2438
  %v2483 = vpack.c.b16 %v2443, %v2439
  %v2484 = vpack.c.b16 %v2444, %v2440
  %v2485 = vpack.c.b16 %v2449, %v2445
  %v2486 = vpack.c.b16 %v2450, %v2446
  %v2487 = vpack.c.b16 %v2451, %v2447
  %v2488 = vpack.c.b16 %v2452, %v2448
  %v2489 = vpack.c.b16 %v2457, %v2453
  %v2490 = vpack.c.b16 %v2458, %v2454
  %v2491 = vpack.c.b16 %v2459, %v2455
  %v2492 = vpack.c.b16 %v2460, %v2456
  %2525 = vmatprep.subr.bf16.mxu0 %v2462
  %2526 = vmatpush1.bf16.msra.mxu0 %v2461
  %2527 = vmatprep.subr.bf16.mxu0 %v2466
  %2528 = vmatpush1.bf16.msra.mxu0 %v2465
  %2529 = vmatprep.subr.bf16.mxu0 %v2470
  %2530 = vmatpush1.bf16.msra.mxu0 %v2469
  %2531 = vmatprep.subr.bf16.mxu0 %v2474
  %2532 = vmatpush1.bf16.msra.mxu0 %v2473
  %2533 = vmatprep.subr.bf16.mxu0 %v2478
  %2534 = vmatpush1.bf16.msra.mxu0 %v2477
  %2535 = vmatprep.subr.bf16.mxu0 %v2482
  %2536 = vmatpush1.bf16.msra.mxu0 %v2481
  %2537 = vmatprep.subr.bf16.mxu0 %v2486
  %2538 = vmatpush1.bf16.msra.mxu0 %v2485
  %2539 = vmatprep.subr.bf16.mxu0 %v2490
  %2540 = vmatpush1.bf16.msra.mxu0 %v2489
  %2541 = vmatprep.subr.bf16.mxu0 0
  %2542 = vmatpush1.bf16.msra.mxu0 0
  %2543 = vmatprep.subr.bf16.mxu0 0
  %2544 = vmatpush1.bf16.msra.mxu0 0
  %2545 = vmatprep.subr.bf16.mxu0 0
  %2546 = vmatpush1.bf16.msra.mxu0 0
  %2547 = vmatprep.subr.bf16.mxu0 0
  %2548 = vmatpush1.bf16.msra.mxu0 0
  %2549 = vmatprep.subr.bf16.mxu0 0
  %2550 = vmatpush1.bf16.msra.mxu0 0
  %2551 = vmatprep.subr.bf16.mxu0 0
  %2552 = vmatpush1.bf16.msra.mxu0 0
  %2553 = vmatprep.subr.bf16.mxu0 0
  %2554 = vmatpush1.bf16.msra.mxu0 0
  %2555 = vmatprep.subr.bf16.mxu0 0
  %2556 = vmatpush1.bf16.msra.mxu0 0
  %2557 = vmatprep.mubr.bf16.mxu0 0
  %2558 = vmatmul.mubr.bf16.gmra.mrb[0].mxu0 %v2308
  %v2559 = vpop.f32.mrb[0].mxu0
  %v2560 = vadd.f32 %v2348, %v2559
  %v2561 = vpop.f32.mrb[0].mxu0
  %v2562 = vadd.f32 %v2352, %v2561
  %v2563 = vpop.f32.mrb[0].mxu0
  %v2564 = vadd.f32 %v2348, %v2563
  %v2565 = vpop.f32.mrb[0].mxu0
  %v2566 = vadd.f32 %v2352, %v2565
  %2567 = vmatprep.mubr.bf16.mxu0 0
  %2568 = vmatmul.mubr.bf16.gmra.mrb[0].mxu0 %v2309
  %v2569 = vpop.f32.mrb[0].mxu0
  %v2570 = vadd.f32 %v2348, %v2569
  %v2571 = vpop.f32.mrb[0].mxu0
  %v2572 = vadd.f32 %v2352, %v2571
  %v2573 = vpop.f32.mrb[0].mxu0
  %v2574 = vadd.f32 %v2348, %v2573
  %v2575 = vpop.f32.mrb[0].mxu0
  %v2576 = vadd.f32 %v2352, %v2575
  %2577 = vmatprep.mubr.bf16.mxu0 0
  %2578 = vmatmul.mubr.bf16.gmra.mrb[0].mxu0 %v2310
  %v2579 = vpop.f32.mrb[0].mxu0
  %v2580 = vadd.f32 %v2348, %v2579
  %v2581 = vpop.f32.mrb[0].mxu0
  %v2582 = vadd.f32 %v2352, %v2581
  %v2583 = vpop.f32.mrb[0].mxu0
  %v2584 = vadd.f32 %v2348, %v2583
  %v2585 = vpop.f32.mrb[0].mxu0
  %v2586 = vadd.f32 %v2352, %v2585
  %2587 = vmatprep.mubr.bf16.mxu0 0
  %2588 = vmatmul.mubr.bf16.gmra.mrb[0].mxu0 %v2311
  %v2589 = vpop.f32.mrb[0].mxu0
  %v2590 = vadd.f32 %v2348, %v2589
  %v2591 = vpop.f32.mrb[0].mxu0
  %v2592 = vadd.f32 %v2352, %v2591
  %v2593 = vpop.f32.mrb[0].mxu0
  %v2594 = vadd.f32 %v2348, %v2593
  %v2595 = vpop.f32.mrb[0].mxu0
  %v2596 = vadd.f32 %v2352, %v2595
  %2597 = vdwg.mxu0
  %2598 = vmatprep.subr.bf16.mxu0 %v2464
  %2599 = vmatpush1.bf16.msra.mxu0 %v2463
  %2600 = vmatprep.subr.bf16.mxu0 %v2468
  %2601 = vmatpush1.bf16.msra.mxu0 %v2467
  %2602 = vmatprep.subr.bf16.mxu0 %v2472
  %2603 = vmatpush1.bf16.msra.mxu0 %v2471
  %2604 = vmatprep.subr.bf16.mxu0 %v2476
  %2605 = vmatpush1.bf16.msra.mxu0 %v2475
  %2606 = vmatprep.subr.bf16.mxu0 %v2480
  %2607 = vmatpush1.bf16.msra.mxu0 %v2479
  %2608 = vmatprep.subr.bf16.mxu0 %v2484
  %2609 = vmatpush1.bf16.msra.mxu0 %v2483
  %2610 = vmatprep.subr.bf16.mxu0 %v2488
  %2611 = vmatpush1.bf16.msra.mxu0 %v2487
  %2612 = vmatprep.subr.bf16.mxu0 %v2492
  %2613 = vmatpush1.bf16.msra.mxu0 %v2491
  %2614 = vmatprep.subr.bf16.mxu0 0
  %2615 = vmatpush1.bf16.msra.mxu0 0
  %2616 = vmatprep.subr.bf16.mxu0 0
  %2617 = vmatpush1.bf16.msra.mxu0 0
  %2618 = vmatprep.subr.bf16.mxu0 0
  %2619 = vmatpush1.bf16.msra.mxu0 0
  %2620 = vmatprep.subr.bf16.mxu0 0
  %2621 = vmatpush1.bf16.msra.mxu0 0
  %2622 = vmatprep.subr.bf16.mxu0 0
  %2623 = vmatpush1.bf16.msra.mxu0 0
  %2624 = vmatprep.subr.bf16.mxu0 0
  %2625 = vmatpush1.bf16.msra.mxu0 0
  %2626 = vmatprep.subr.bf16.mxu0 0
  %2627 = vmatpush1.bf16.msra.mxu0 0
  %2628 = vmatprep.subr.bf16.mxu0 0
  %2629 = vmatpush1.bf16.msra.mxu0 0
  %2630 = vmatprep.mubr.bf16.mxu0 0
  %2631 = vmatmul.mubr.bf16.gmra.mrb[0].mxu0 %v2308
  %v2632 = vpop.f32.mrb[0].mxu0
  %v2633 = vadd.f32 %v2356, %v2632
  %v2634 = vpop.f32.mrb[0].mxu0
  %v2635 = vadd.f32 %v2360, %v2634
  %v2636 = vpop.f32.mrb[0].mxu0
  %v2637 = vadd.f32 %v2356, %v2636
  %v2638 = vpop.f32.mrb[0].mxu0
  %v2639 = vadd.f32 %v2360, %v2638
  %2640 = vmatprep.mubr.bf16.mxu0 0
  %2641 = vmatmul.mubr.bf16.gmra.mrb[0].mxu0 %v2309
  %v2642 = vpop.f32.mrb[0].mxu0
  %v2643 = vadd.f32 %v2356, %v2642
  %v2644 = vpop.f32.mrb[0].mxu0
  %v2645 = vadd.f32 %v2360, %v2644
  %v2646 = vpop.f32.mrb[0].mxu0
  %v2647 = vadd.f32 %v2356, %v2646
  %v2648 = vpop.f32.mrb[0].mxu0
  %v2649 = vadd.f32 %v2360, %v2648
  %2650 = vmatprep.mubr.bf16.mxu0 0
  %2651 = vmatmul.mubr.bf16.gmra.mrb[0].mxu0 %v2310
  %v2652 = vpop.f32.mrb[0].mxu0
  %v2653 = vadd.f32 %v2356, %v2652
  %v2654 = vpop.f32.mrb[0].mxu0
  %v2655 = vadd.f32 %v2360, %v2654
  %v2656 = vpop.f32.mrb[0].mxu0
  %v2657 = vadd.f32 %v2356, %v2656
  %v2658 = vpop.f32.mrb[0].mxu0
  %v2659 = vadd.f32 %v2360, %v2658
  %2660 = vmatprep.mubr.bf16.mxu0 0
  %2661 = vmatmul.mubr.bf16.gmra.mrb[0].mxu0 %v2311
  %v2662 = vpop.f32.mrb[0].mxu0
  %v2663 = vadd.f32 %v2356, %v2662
  %v2664 = vpop.f32.mrb[0].mxu0
  %v2665 = vadd.f32 %v2360, %v2664
  %v2666 = vpop.f32.mrb[0].mxu0
  %v2667 = vadd.f32 %v2356, %v2666
  %v2668 = vpop.f32.mrb[0].mxu0
  %v2669 = vadd.f32 %v2360, %v2668
  %2670 = vdwg.mxu0
  %v2671 = vmul.f32 %v2560, %v2560
  %v2672 = vmul.f32 %v2562, %v2562
  %v2673 = vmul.f32 %v2633, %v2633
  %v2674 = vmul.f32 %v2635, %v2635
  %v2675 = vmul.f32 %v2564, %v2564
  %v2676 = vmul.f32 %v2566, %v2566
  %v2677 = vmul.f32 %v2637, %v2637
  %v2678 = vmul.f32 %v2639, %v2639
  %v2679 = vmul.f32 %v2570, %v2570
  %v2680 = vmul.f32 %v2572, %v2572
  %v2681 = vmul.f32 %v2643, %v2643
  %v2682 = vmul.f32 %v2645, %v2645
  %v2683 = vmul.f32 %v2574, %v2574
  %v2684 = vmul.f32 %v2576, %v2576
  %v2685 = vmul.f32 %v2647, %v2647
  %v2686 = vmul.f32 %v2649, %v2649
  %v2687 = vmul.f32 %v2580, %v2580
  %v2688 = vmul.f32 %v2582, %v2582
  %v2689 = vmul.f32 %v2653, %v2653
  %v2690 = vmul.f32 %v2655, %v2655
  %v2691 = vmul.f32 %v2584, %v2584
  %v2692 = vmul.f32 %v2586, %v2586
  %v2693 = vmul.f32 %v2657, %v2657
  %v2694 = vmul.f32 %v2659, %v2659
  %v2695 = vmul.f32 %v2590, %v2590
  %v2696 = vmul.f32 %v2592, %v2592
  %v2697 = vmul.f32 %v2663, %v2663
  %v2698 = vmul.f32 %v2665, %v2665
  %v2699 = vmul.f32 %v2594, %v2594
  %v2700 = vmul.f32 %v2596, %v2596
  %v2701 = vmul.f32 %v2667, %v2667
  %v2702 = vmul.f32 %v2669, %v2669
  %v2703 = vmul.f32 %v2560, %v2671
  %v2704 = vmul.f32 %v2562, %v2672
  %v2705 = vmul.f32 %v2633, %v2673
  %v2706 = vmul.f32 %v2635, %v2674
  %v2707 = vmul.f32 %v2564, %v2675
  %v2708 = vmul.f32 %v2566, %v2676
  %v2709 = vmul.f32 %v2637, %v2677
  %v2710 = vmul.f32 %v2639, %v2678
  %v2711 = vmul.f32 %v2570, %v2679
  %v2712 = vmul.f32 %v2572, %v2680
  %v2713 = vmul.f32 %v2643, %v2681
  %v2714 = vmul.f32 %v2645, %v2682
  %v2715 = vmul.f32 %v2574, %v2683
  %v2716 = vmul.f32 %v2576, %v2684
  %v2717 = vmul.f32 %v2647, %v2685
  %v2718 = vmul.f32 %v2649, %v2686
  %v2719 = vmul.f32 %v2580, %v2687
  %v2720 = vmul.f32 %v2582, %v2688
  %v2721 = vmul.f32 %v2653, %v2689
  %v2722 = vmul.f32 %v2655, %v2690
  %v2723 = vmul.f32 %v2584, %v2691
  %v2724 = vmul.f32 %v2586, %v2692
  %v2725 = vmul.f32 %v2657, %v2693
  %v2726 = vmul.f32 %v2659, %v2694
  %v2727 = vmul.f32 %v2590, %v2695
  %v2728 = vmul.f32 %v2592, %v2696
  %v2729 = vmul.f32 %v2663, %v2697
  %v2730 = vmul.f32 %v2665, %v2698
  %v2731 = vmul.f32 %v2594, %v2699
  %v2732 = vmul.f32 %v2596, %v2700
  %v2733 = vmul.f32 %v2667, %v2701
  %v2734 = vmul.f32 %v2669, %v2702
  %v2735 = vmul.f32 %v2703, 0.044715
  %v2736 = vmul.f32 %v2704, 0.044715
  %v2737 = vmul.f32 %v2705, 0.044715
  %v2738 = vmul.f32 %v2706, 0.044715
  %v2739 = vmul.f32 %v2707, 0.044715
  %v2740 = vmul.f32 %v2708, 0.044715
  %v2741 = vmul.f32 %v2709, 0.044715
  %v2742 = vmul.f32 %v2710, 0.044715
  %v2743 = vmul.f32 %v2711, 0.044715
  %v2744 = vmul.f32 %v2712, 0.044715
  %v2745 = vmul.f32 %v2713, 0.044715
  %v2746 = vmul.f32 %v2714, 0.044715
  %v2747 = vmul.f32 %v2715, 0.044715
  %v2748 = vmul.f32 %v2716, 0.044715
  %v2749 = vmul.f32 %v2717, 0.044715
  %v2750 = vmul.f32 %v2718, 0.044715
  %v2751 = vmul.f32 %v2719, 0.044715
  %v2752 = vmul.f32 %v2720, 0.044715
  %v2753 = vmul.f32 %v2721, 0.044715
  %v2754 = vmul.f32 %v2722, 0.044715
  %v2755 = vmul.f32 %v2723, 0.044715
  %v2756 = vmul.f32 %v2724, 0.044715
  %v2757 = vmul.f32 %v2725, 0.044715
  %v2758 = vmul.f32 %v2726, 0.044715
  %v2759 = vmul.f32 %v2727, 0.044715
  %v2760 = vmul.f32 %v2728, 0.044715
  %v2761 = vmul.f32 %v2729, 0.044715
  %v2762 = vmul.f32 %v2730, 0.044715
  %v2763 = vmul.f32 %v2731, 0.044715
  %v2764 = vmul.f32 %v2732, 0.044715
  %v2765 = vmul.f32 %v2733, 0.044715
  %v2766 = vmul.f32 %v2734, 0.044715
  %v2767 = vadd.f32 %v2560, %v2735
  %v2768 = vadd.f32 %v2562, %v2736
  %v2769 = vadd.f32 %v2633, %v2737
  %v2770 = vadd.f32 %v2635, %v2738
  %v2771 = vadd.f32 %v2564, %v2739
  %v2772 = vadd.f32 %v2566, %v2740
  %v2773 = vadd.f32 %v2637, %v2741
  %v2774 = vadd.f32 %v2639, %v2742
  %v2775 = vadd.f32 %v2570, %v2743
  %v2776 = vadd.f32 %v2572, %v2744
  %v2777 = vadd.f32 %v2643, %v2745
  %v2778 = vadd.f32 %v2645, %v2746
  %v2779 = vadd.f32 %v2574, %v2747
  %v2780 = vadd.f32 %v2576, %v2748
  %v2781 = vadd.f32 %v2647, %v2749
  %v2782 = vadd.f32 %v2649, %v2750
  %v2783 = vadd.f32 %v2580, %v2751
  %v2784 = vadd.f32 %v2582, %v2752
  %v2785 = vadd.f32 %v2653, %v2753
  %v2786 = vadd.f32 %v2655, %v2754
  %v2787 = vadd.f32 %v2584, %v2755
  %v2788 = vadd.f32 %v2586, %v2756
  %v2789 = vadd.f32 %v2657, %v2757
  %v2790 = vadd.f32 %v2659, %v2758
  %v2791 = vadd.f32 %v2590, %v2759
  %v2792 = vadd.f32 %v2592, %v2760
  %v2793 = vadd.f32 %v2663, %v2761
  %v2794 = vadd.f32 %v2665, %v2762
  %v2795 = vadd.f32 %v2594, %v2763
  %v2796 = vadd.f32 %v2596, %v2764
  %v2797 = vadd.f32 %v2667, %v2765
  %v2798 = vadd.f32 %v2669, %v2766
  %v2799 = vmul.f32 %v2767, 0.7978846
  %v2800 = vmul.f32 %v2768, 0.7978846
  %v2801 = vmul.f32 %v2769, 0.7978846
  %v2802 = vmul.f32 %v2770, 0.7978846
  %v2803 = vmul.f32 %v2771, 0.7978846
  %v2804 = vmul.f32 %v2772, 0.7978846
  %v2805 = vmul.f32 %v2773, 0.7978846
  %v2806 = vmul.f32 %v2774, 0.7978846
  %v2807 = vmul.f32 %v2775, 0.7978846
  %v2808 = vmul.f32 %v2776, 0.7978846
  %v2809 = vmul.f32 %v2777, 0.7978846
  %v2810 = vmul.f32 %v2778, 0.7978846
  %v2811 = vmul.f32 %v2779, 0.7978846
  %v2812 = vmul.f32 %v2780, 0.7978846
  %v2813 = vmul.f32 %v2781, 0.7978846
  %v2814 = vmul.f32 %v2782, 0.7978846
  %v2815 = vmul.f32 %v2783, 0.7978846
  %v2816 = vmul.f32 %v2784, 0.7978846
  %v2817 = vmul.f32 %v2785, 0.7978846
  %v2818 = vmul.f32 %v2786, 0.7978846
  %v2819 = vmul.f32 %v2787, 0.7978846
  %v2820 = vmul.f32 %v2788, 0.7978846
  %v2821 = vmul.f32 %v2789, 0.7978846
  %v2822 = vmul.f32 %v2790, 0.7978846
  %v2823 = vmul.f32 %v2791, 0.7978846
  %v2824 = vmul.f32 %v2792, 0.7978846
  %v2825 = vmul.f32 %v2793, 0.7978846
  %v2826 = vmul.f32 %v2794, 0.7978846
  %v2827 = vmul.f32 %v2795, 0.7978846
  %v2828 = vmul.f32 %v2796, 0.7978846
  %v2829 = vmul.f32 %v2797, 0.7978846
  %v2830 = vmul.f32 %v2798, 0.7978846
  %v2831 = vtanh.pop %v2799
  %v2832 = vtanh.pop %v2800
  %v2833 = vtanh.pop %v2801
  %v2834 = vtanh.pop %v2802
  %v2835 = vtanh.pop %v2803
  %v2836 = vtanh.pop %v2804
  %v2837 = vtanh.pop %v2805
  %v2838 = vtanh.pop %v2806
  %v2839 = vtanh.pop %v2807
  %v2840 = vtanh.pop %v2808
  %v2841 = vtanh.pop %v2809
  %v2842 = vtanh.pop %v2810
  %v2843 = vtanh.pop %v2811
  %v2844 = vtanh.pop %v2812
  %v2845 = vtanh.pop %v2813
  %v2846 = vtanh.pop %v2814
  %v2847 = vtanh.pop %v2815
  %v2848 = vtanh.pop %v2816
  %v2849 = vtanh.pop %v2817
  %v2850 = vtanh.pop %v2818
  %v2851 = vtanh.pop %v2819
  %v2852 = vtanh.pop %v2820
  %v2853 = vtanh.pop %v2821
  %v2854 = vtanh.pop %v2822
  %v2855 = vtanh.pop %v2823
  %v2856 = vtanh.pop %v2824
  %v2857 = vtanh.pop %v2825
  %v2858 = vtanh.pop %v2826
  %v2859 = vtanh.pop %v2827
  %v2860 = vtanh.pop %v2828
  %v2861 = vtanh.pop %v2829
  %v2862 = vtanh.pop %v2830
  %v2863 = vadd.f32 %v2831, 1.0
  %v2864 = vadd.f32 %v2832, 1.0
  %v2865 = vadd.f32 %v2833, 1.0
  %v2866 = vadd.f32 %v2834, 1.0
  %v2867 = vadd.f32 %v2835, 1.0
  %v2868 = vadd.f32 %v2836, 1.0
  %v2869 = vadd.f32 %v2837, 1.0
  %v2870 = vadd.f32 %v2838, 1.0
  %v2871 = vadd.f32 %v2839, 1.0
  %v2872 = vadd.f32 %v2840, 1.0
  %v2873 = vadd.f32 %v2841, 1.0
  %v2874 = vadd.f32 %v2842, 1.0
  %v2875 = vadd.f32 %v2843, 1.0
  %v2876 = vadd.f32 %v2844, 1.0
  %v2877 = vadd.f32 %v2845, 1.0
  %v2878 = vadd.f32 %v2846, 1.0
  %v2879 = vadd.f32 %v2847, 1.0
  %v2880 = vadd.f32 %v2848, 1.0
  %v2881 = vadd.f32 %v2849, 1.0
  %v2882 = vadd.f32 %v2850, 1.0
  %v2883 = vadd.f32 %v2851, 1.0
  %v2884 = vadd.f32 %v2852, 1.0
  %v2885 = vadd.f32 %v2853, 1.0
  %v2886 = vadd.f32 %v2854, 1.0
  %v2887 = vadd.f32 %v2855, 1.0
  %v2888 = vadd.f32 %v2856, 1.0
  %v2889 = vadd.f32 %v2857, 1.0
  %v2890 = vadd.f32 %v2858, 1.0
  %v2891 = vadd.f32 %v2859, 1.0
  %v2892 = vadd.f32 %v2860, 1.0
  %v2893 = vadd.f32 %v2861, 1.0
  %v2894 = vadd.f32 %v2862, 1.0
  %v2895 = vmul.f32 %v2863, 0.5
  %v2896 = vmul.f32 %v2864, 0.5
  %v2897 = vmul.f32 %v2865, 0.5
  %v2898 = vmul.f32 %v2866, 0.5
  %v2899 = vmul.f32 %v2867, 0.5
  %v2900 = vmul.f32 %v2868, 0.5
  %v2901 = vmul.f32 %v2869, 0.5
  %v2902 = vmul.f32 %v2870, 0.5
  %v2903 = vmul.f32 %v2871, 0.5
  %v2904 = vmul.f32 %v2872, 0.5
  %v2905 = vmul.f32 %v2873, 0.5
  %v2906 = vmul.f32 %v2874, 0.5
  %v2907 = vmul.f32 %v2875, 0.5
  %v2908 = vmul.f32 %v2876, 0.5
  %v2909 = vmul.f32 %v2877, 0.5
  %v2910 = vmul.f32 %v2878, 0.5
  %v2911 = vmul.f32 %v2879, 0.5
  %v2912 = vmul.f32 %v2880, 0.5
  %v2913 = vmul.f32 %v2881, 0.5
  %v2914 = vmul.f32 %v2882, 0.5
  %v2915 = vmul.f32 %v2883, 0.5
  %v2916 = vmul.f32 %v2884, 0.5
  %v2917 = vmul.f32 %v2885, 0.5
  %v2918 = vmul.f32 %v2886, 0.5
  %v2919 = vmul.f32 %v2887, 0.5
  %v2920 = vmul.f32 %v2888, 0.5
  %v2921 = vmul.f32 %v2889, 0.5
  %v2922 = vmul.f32 %v2890, 0.5
  %v2923 = vmul.f32 %v2891, 0.5
  %v2924 = vmul.f32 %v2892, 0.5
  %v2925 = vmul.f32 %v2893, 0.5
  %v2926 = vmul.f32 %v2894, 0.5
  %v2927 = vmul.f32 %v2560, %v2895
  %v2928 = vmul.f32 %v2562, %v2896
  %v2929 = vmul.f32 %v2633, %v2897
  %v2930 = vmul.f32 %v2635, %v2898
  %v2931 = vmul.f32 %v2564, %v2899
  %v2932 = vmul.f32 %v2566, %v2900
  %v2933 = vmul.f32 %v2637, %v2901
  %v2934 = vmul.f32 %v2639, %v2902
  %v2935 = vmul.f32 %v2570, %v2903
  %v2936 = vmul.f32 %v2572, %v2904
  %v2937 = vmul.f32 %v2643, %v2905
  %v2938 = vmul.f32 %v2645, %v2906
  %v2939 = vmul.f32 %v2574, %v2907
  %v2940 = vmul.f32 %v2576, %v2908
  %v2941 = vmul.f32 %v2647, %v2909
  %v2942 = vmul.f32 %v2649, %v2910
  %v2943 = vmul.f32 %v2580, %v2911
  %v2944 = vmul.f32 %v2582, %v2912
  %v2945 = vmul.f32 %v2653, %v2913
  %v2946 = vmul.f32 %v2655, %v2914
  %v2947 = vmul.f32 %v2584, %v2915
  %v2948 = vmul.f32 %v2586, %v2916
  %v2949 = vmul.f32 %v2657, %v2917
  %v2950 = vmul.f32 %v2659, %v2918
  %v2951 = vmul.f32 %v2590, %v2919
  %v2952 = vmul.f32 %v2592, %v2920
  %v2953 = vmul.f32 %v2663, %v2921
  %v2954 = vmul.f32 %v2665, %v2922
  %v2955 = vmul.f32 %v2594, %v2923
  %v2956 = vmul.f32 %v2596, %v2924
  %v2957 = vmul.f32 %v2667, %v2925
  %v2958 = vmul.f32 %v2669, %v2926
  %v2959 = vpack.c.bf16 %v2931, %v2927
  %v2960 = vpack.c.bf16 %v2932, %v2928
  %v2961 = vpack.c.bf16 %v2933, %v2929
  %v2962 = vpack.c.bf16 %v2934, %v2930
  %v2963 = vpack.c.bf16 %v2939, %v2935
  %v2964 = vpack.c.bf16 %v2940, %v2936
  %v2965 = vpack.c.bf16 %v2941, %v2937
  %v2966 = vpack.c.bf16 %v2942, %v2938
  %v2967 = vpack.c.bf16 %v2947, %v2943
  %v2968 = vpack.c.bf16 %v2948, %v2944
  %v2969 = vpack.c.bf16 %v2949, %v2945
  %v2970 = vpack.c.bf16 %v2950, %v2946
  %v2971 = vpack.c.bf16 %v2955, %v2951
  %v2972 = vpack.c.bf16 %v2956, %v2952
  %v2973 = vpack.c.bf16 %v2957, %v2953
  %v2974 = vpack.c.bf16 %v2958, %v2954
  %v2975 = vld [vmem:[%s6] sm:$0xf]
  %v2976 = vld [vmem:[%s6 + $0x4] sm:$0xf]
  %v2977 = vld [vmem:[%s6 + $0x8] sm:$0xf]
  %v2978 = vld [vmem:[%s6 + $0xc] sm:$0xf]
  %v2979 = vld [vmem:[%s6 + $0x10] sm:$0xf]
  %v2980 = vld [vmem:[%s6 + $0x14] sm:$0xf]
  %v2981 = vld [vmem:[%s6 + $0x18] sm:$0xf]
  %v2982 = vld [vmem:[%s6 + $0x1c] sm:$0xf]
  %v2983 = vld [vmem:[%s6 + $0x20] sm:$0xf]
  %v2984 = vld [vmem:[%s6 + $0x24] sm:$0xf]
  %v2985 = vld [vmem:[%s6 + $0x28] sm:$0xf]
  %v2986 = vld [vmem:[%s6 + $0x2c] sm:$0xf]
  %v2987 = vld [vmem:[%s6 + $0x30] sm:$0xf]
  %v2988 = vld [vmem:[%s6 + $0x34] sm:$0xf]
  %v2989 = vld [vmem:[%s6 + $0x38] sm:$0xf]
  %v2990 = vld [vmem:[%s6 + $0x3c] sm:$0xf]
  %v2991 = vld [vmem:[%s6 + $0x40] sm:$0xf]
  %v2992 = vld [vmem:[%s6 + $0x44] sm:$0xf]
  %v2993 = vld [vmem:[%s6 + $0x48] sm:$0xf]
  %v2994 = vld [vmem:[%s6 + $0x4c] sm:$0xf]
  %v2995 = vld [vmem:[%s6 + $0x50] sm:$0xf]
  %v2996 = vld [vmem:[%s6 + $0x54] sm:$0xf]
  %v2997 = vld [vmem:[%s6 + $0x58] sm:$0xf]
  %v2998 = vld [vmem:[%s6 + $0x5c] sm:$0xf]
  %v2999 = vld [vmem:[%s6 + $0x60] sm:$0xf]
  %v3000 = vld [vmem:[%s6 + $0x64] sm:$0xf]
  %v3001 = vld [vmem:[%s6 + $0x68] sm:$0xf]
  %v3002 = vld [vmem:[%s6 + $0x6c] sm:$0xf]
  %v3003 = vld [vmem:[%s6 + $0x70] sm:$0xf]
  %v3004 = vld [vmem:[%s6 + $0x74] sm:$0xf]
  %v3005 = vld [vmem:[%s6 + $0x78] sm:$0xf]
  %v3006 = vld [vmem:[%s6 + $0x7c] sm:$0xf]
  %v3007 = vld [vmem:[%s6 + $0x80] sm:$0xf]
  %v3008 = vld [vmem:[%s6 + $0x84] sm:$0xf]
  %v3009 = vld [vmem:[%s6 + $0x88] sm:$0xf]
  %v3010 = vld [vmem:[%s6 + $0x8c] sm:$0xf]
  %v3011 = vld [vmem:[%s6 + $0x90] sm:$0xf]
  %v3012 = vld [vmem:[%s6 + $0x94] sm:$0xf]
  %v3013 = vld [vmem:[%s6 + $0x98] sm:$0xf]
  %v3014 = vld [vmem:[%s6 + $0x9c] sm:$0xf]
  %v3015 = vld [vmem:[%s6 + $0xa0] sm:$0xf]
  %v3016 = vld [vmem:[%s6 + $0xa4] sm:$0xf]
  %v3017 = vld [vmem:[%s6 + $0xa8] sm:$0xf]
  %v3018 = vld [vmem:[%s6 + $0xac] sm:$0xf]
  %v3019 = vld [vmem:[%s6 + $0xb0] sm:$0xf]
  %v3020 = vld [vmem:[%s6 + $0xb4] sm:$0xf]
  %v3021 = vld [vmem:[%s6 + $0xb8] sm:$0xf]
  %v3022 = vld [vmem:[%s6 + $0xbc] sm:$0xf]
  %v3023 = vld [vmem:[%s6 + $0xc0] sm:$0xf]
  %v3024 = vld [vmem:[%s6 + $0xc4] sm:$0xf]
  %v3025 = vld [vmem:[%s6 + $0xc8] sm:$0xf]
  %v3026 = vld [vmem:[%s6 + $0xcc] sm:$0xf]
  %v3027 = vld [vmem:[%s6 + $0xd0] sm:$0xf]
  %v3028 = vld [vmem:[%s6 + $0xd4] sm:$0xf]
  %v3029 = vld [vmem:[%s6 + $0xd8] sm:$0xf]
  %v3030 = vld [vmem:[%s6 + $0xdc] sm:$0xf]
  %v3031 = vld [vmem:[%s6 + $0xe0] sm:$0xf]
  %v3032 = vld [vmem:[%s6 + $0xe4] sm:$0xf]
  %v3033 = vld [vmem:[%s6 + $0xe8] sm:$0xf]
  %v3034 = vld [vmem:[%s6 + $0xec] sm:$0xf]
  %v3035 = vld [vmem:[%s6 + $0xf0] sm:$0xf]
  %v3036 = vld [vmem:[%s6 + $0xf4] sm:$0xf]
  %v3037 = vld [vmem:[%s6 + $0xf8] sm:$0xf]
  %v3038 = vld [vmem:[%s6 + $0xfc] sm:$0xf]
  %v3039 = vlaneseq
  %v3040 = vshrl.u32 %v3039, 7
  %v3041 = vsub.s32 0, %v3040
  %v3042 = vrot.slane %v758, %v3041
  %v3107 = vunpack.c.l.b16 %v2975
  %v3108 = vunpack.c.l.b16 %v2976
  %v3109 = vunpack.c.l.b16 %v2977
  %v3110 = vunpack.c.l.b16 %v2978
  %v3111 = vunpack.c.l.b16 %v2979
  %v3112 = vunpack.c.l.b16 %v2980
  %v3113 = vunpack.c.l.b16 %v2981
  %v3114 = vunpack.c.l.b16 %v2982
  %v3115 = vunpack.c.l.b16 %v2983
  %v3116 = vunpack.c.l.b16 %v2984
  %v3117 = vunpack.c.l.b16 %v2985
  %v3118 = vunpack.c.l.b16 %v2986
  %v3119 = vunpack.c.l.b16 %v2987
  %v3120 = vunpack.c.l.b16 %v2988
  %v3121 = vunpack.c.l.b16 %v2989
  %v3122 = vunpack.c.l.b16 %v2990
  %v3123 = vunpack.c.l.b16 %v2991
  %v3124 = vunpack.c.l.b16 %v2992
  %v3125 = vunpack.c.l.b16 %v2993
  %v3126 = vunpack.c.l.b16 %v2994
  %v3127 = vunpack.c.l.b16 %v2995
  %v3128 = vunpack.c.l.b16 %v2996
  %v3129 = vunpack.c.l.b16 %v2997
  %v3130 = vunpack.c.l.b16 %v2998
  %v3131 = vunpack.c.l.b16 %v2999
  %v3132 = vunpack.c.l.b16 %v3000
  %v3133 = vunpack.c.l.b16 %v3001
  %v3134 = vunpack.c.l.b16 %v3002
  %v3135 = vunpack.c.l.b16 %v3003
  %v3136 = vunpack.c.l.b16 %v3004
  %v3137 = vunpack.c.l.b16 %v3005
  %v3138 = vunpack.c.l.b16 %v3006
  %v3139 = vunpack.c.l.b16 %v3007
  %v3140 = vunpack.c.l.b16 %v3008
  %v3141 = vunpack.c.l.b16 %v3009
  %v3142 = vunpack.c.l.b16 %v3010
  %v3143 = vunpack.c.l.b16 %v3011
  %v3144 = vunpack.c.l.b16 %v3012
  %v3145 = vunpack.c.l.b16 %v3013
  %v3146 = vunpack.c.l.b16 %v3014
  %v3147 = vunpack.c.l.b16 %v3015
  %v3148 = vunpack.c.l.b16 %v3016
  %v3149 = vunpack.c.l.b16 %v3017
  %v3150 = vunpack.c.l.b16 %v3018
  %v3151 = vunpack.c.l.b16 %v3019
  %v3152 = vunpack.c.l.b16 %v3020
  %v3153 = vunpack.c.l.b16 %v3021
  %v3154 = vunpack.c.l.b16 %v3022
  %v3155 = vunpack.c.l.b16 %v3023
  %v3156 = vunpack.c.l.b16 %v3024
  %v3157 = vunpack.c.l.b16 %v3025
  %v3158 = vunpack.c.l.b16 %v3026
  %v3159 = vunpack.c.l.b16 %v3027
  %v3160 = vunpack.c.l.b16 %v3028
  %v3161 = vunpack.c.l.b16 %v3029
  %v3162 = vunpack.c.l.b16 %v3030
  %v3163 = vunpack.c.l.b16 %v3031
  %v3164 = vunpack.c.l.b16 %v3032
  %v3165 = vunpack.c.l.b16 %v3033
  %v3166 = vunpack.c.l.b16 %v3034
  %v3167 = vunpack.c.l.b16 %v3035
  %v3168 = vunpack.c.l.b16 %v3036
  %v3169 = vunpack.c.l.b16 %v3037
  %v3170 = vunpack.c.l.b16 %v3038
  %v3171 = vpack.c.b16 %v3108, %v3107
  %v3172 = vpack.c.b16 %v3110, %v3109
  %v3173 = vpack.c.b16 %v3112, %v3111
  %v3174 = vpack.c.b16 %v3114, %v3113
  %v3175 = vpack.c.b16 %v3116, %v3115
  %v3176 = vpack.c.b16 %v3118, %v3117
  %v3177 = vpack.c.b16 %v3120, %v3119
  %v3178 = vpack.c.b16 %v3122, %v3121
  %v3179 = vpack.c.b16 %v3124, %v3123
  %v3180 = vpack.c.b16 %v3126, %v3125
  %v3181 = vpack.c.b16 %v3128, %v3127
  %v3182 = vpack.c.b16 %v3130, %v3129
  %v3183 = vpack.c.b16 %v3132, %v3131
  %v3184 = vpack.c.b16 %v3134, %v3133
  %v3185 = vpack.c.b16 %v3136, %v3135
  %v3186 = vpack.c.b16 %v3138, %v3137
  %v3187 = vpack.c.b16 %v3140, %v3139
  %v3188 = vpack.c.b16 %v3142, %v3141
  %v3189 = vpack.c.b16 %v3144, %v3143
  %v3190 = vpack.c.b16 %v3146, %v3145
  %v3191 = vpack.c.b16 %v3148, %v3147
  %v3192 = vpack.c.b16 %v3150, %v3149
  %v3193 = vpack.c.b16 %v3152, %v3151
  %v3194 = vpack.c.b16 %v3154, %v3153
  %v3195 = vpack.c.b16 %v3156, %v3155
  %v3196 = vpack.c.b16 %v3158, %v3157
  %v3197 = vpack.c.b16 %v3160, %v3159
  %v3198 = vpack.c.b16 %v3162, %v3161
  %v3199 = vpack.c.b16 %v3164, %v3163
  %v3200 = vpack.c.b16 %v3166, %v3165
  %v3201 = vpack.c.b16 %v3168, %v3167
  %v3202 = vpack.c.b16 %v3170, %v3169
  %3235 = vmatprep.subr.bf16.mxu0 0
  %3236 = vmatpush1.bf16.msra.mxu0 %v3171
  %3237 = vmatprep.subr.bf16.mxu0 0
  %3238 = vmatpush1.bf16.msra.mxu0 %v3172
  %3239 = vmatprep.subr.bf16.mxu0 0
  %3240 = vmatpush1.bf16.msra.mxu0 %v3173
  %3241 = vmatprep.subr.bf16.mxu0 0
  %3242 = vmatpush1.bf16.msra.mxu0 %v3174
  %3243 = vmatprep.subr.bf16.mxu0 0
  %3244 = vmatpush1.bf16.msra.mxu0 %v3175
  %3245 = vmatprep.subr.bf16.mxu0 0
  %3246 = vmatpush1.bf16.msra.mxu0 %v3176
  %3247 = vmatprep.subr.bf16.mxu0 0
  %3248 = vmatpush1.bf16.msra.mxu0 %v3177
  %3249 = vmatprep.subr.bf16.mxu0 0
  %3250 = vmatpush1.bf16.msra.mxu0 %v3178
  %3251 = vmatprep.subr.bf16.mxu0 0
  %3252 = vmatpush1.bf16.msra.mxu0 %v3179
  %3253 = vmatprep.subr.bf16.mxu0 0
  %3254 = vmatpush1.bf16.msra.mxu0 %v3180
  %3255 = vmatprep.subr.bf16.mxu0 0
  %3256 = vmatpush1.bf16.msra.mxu0 %v3181
  %3257 = vmatprep.subr.bf16.mxu0 0
  %3258 = vmatpush1.bf16.msra.mxu0 %v3182
  %3259 = vmatprep.subr.bf16.mxu0 0
  %3260 = vmatpush1.bf16.msra.mxu0 %v3183
  %3261 = vmatprep.subr.bf16.mxu0 0
  %3262 = vmatpush1.bf16.msra.mxu0 %v3184
  %3263 = vmatprep.subr.bf16.mxu0 0
  %3264 = vmatpush1.bf16.msra.mxu0 %v3185
  %3265 = vmatprep.subr.bf16.mxu0 0
  %3266 = vmatpush1.bf16.msra.mxu0 %v3186
  %3267 = vmatprep.mubr.bf16.mxu0 %v2960
  %3268 = vmatmul.mubr.bf16.gmra.mrb[0].mxu0 %v2959
  %v3269 = vpop.f32.mrb[0].mxu0
  %v3270 = vadd.f32 %v3042, %v3269
  %v3271 = vpop.f32.mrb[0].mxu0
  %v3272 = vpop.f32.mrb[0].mxu0
  %v3273 = vadd.f32 %v3042, %v3272
  %v3274 = vpop.f32.mrb[0].mxu0
  %3275 = vmatprep.mubr.bf16.mxu0 %v2964
  %3276 = vmatmul.mubr.bf16.gmra.mrb[0].mxu0 %v2963
  %v3277 = vpop.f32.mrb[0].mxu0
  %v3278 = vadd.f32 %v3042, %v3277
  %v3279 = vpop.f32.mrb[0].mxu0
  %v3280 = vpop.f32.mrb[0].mxu0
  %v3281 = vadd.f32 %v3042, %v3280
  %v3282 = vpop.f32.mrb[0].mxu0
  %3283 = vmatprep.mubr.bf16.mxu0 %v2968
  %3284 = vmatmul.mubr.bf16.gmra.mrb[0].mxu0 %v2967
  %v3285 = vpop.f32.mrb[0].mxu0
  %v3286 = vadd.f32 %v3042, %v3285
  %v3287 = vpop.f32.mrb[0].mxu0
  %v3288 = vpop.f32.mrb[0].mxu0
  %v3289 = vadd.f32 %v3042, %v3288
  %v3290 = vpop.f32.mrb[0].mxu0
  %3291 = vmatprep.mubr.bf16.mxu0 %v2972
  %3292 = vmatmul.mubr.bf16.gmra.mrb[0].mxu0 %v2971
  %v3293 = vpop.f32.mrb[0].mxu0
  %v3294 = vadd.f32 %v3042, %v3293
  %v3295 = vpop.f32.mrb[0].mxu0
  %v3296 = vpop.f32.mrb[0].mxu0
  %v3297 = vadd.f32 %v3042, %v3296
  %v3298 = vpop.f32.mrb[0].mxu0
  %3299 = vdwg.mxu0
  %3300 = vmatprep.subr.bf16.mxu0 0
  %3301 = vmatpush1.bf16.msra.mxu0 %v3187
  %3302 = vmatprep.subr.bf16.mxu0 0
  %3303 = vmatpush1.bf16.msra.mxu0 %v3188
  %3304 = vmatprep.subr.bf16.mxu0 0
  %3305 = vmatpush1.bf16.msra.mxu0 %v3189
  %3306 = vmatprep.subr.bf16.mxu0 0
  %3307 = vmatpush1.bf16.msra.mxu0 %v3190
  %3308 = vmatprep.subr.bf16.mxu0 0
  %3309 = vmatpush1.bf16.msra.mxu0 %v3191
  %3310 = vmatprep.subr.bf16.mxu0 0
  %3311 = vmatpush1.bf16.msra.mxu0 %v3192
  %3312 = vmatprep.subr.bf16.mxu0 0
  %3313 = vmatpush1.bf16.msra.mxu0 %v3193
  %3314 = vmatprep.subr.bf16.mxu0 0
  %3315 = vmatpush1.bf16.msra.mxu0 %v3194
  %3316 = vmatprep.subr.bf16.mxu0 0
  %3317 = vmatpush1.bf16.msra.mxu0 %v3195
  %3318 = vmatprep.subr.bf16.mxu0 0
  %3319 = vmatpush1.bf16.msra.mxu0 %v3196
  %3320 = vmatprep.subr.bf16.mxu0 0
  %3321 = vmatpush1.bf16.msra.mxu0 %v3197
  %3322 = vmatprep.subr.bf16.mxu0 0
  %3323 = vmatpush1.bf16.msra.mxu0 %v3198
  %3324 = vmatprep.subr.bf16.mxu0 0
  %3325 = vmatpush1.bf16.msra.mxu0 %v3199
  %3326 = vmatprep.subr.bf16.mxu0 0
  %3327 = vmatpush1.bf16.msra.mxu0 %v3200
  %3328 = vmatprep.subr.bf16.mxu0 0
  %3329 = vmatpush1.bf16.msra.mxu0 %v3201
  %3330 = vmatprep.subr.bf16.mxu0 0
  %3331 = vmatpush1.bf16.msra.mxu0 %v3202
  %3332 = vmatprep.mubr.bf16.mxu0 %v2962
  %3333 = vmatmul.mubr.bf16.gmra.mrb[0].mxu0 %v2961
  %v3334 = vpop.f32.mrb[0].mxu0
  %v3335 = vadd.f32 %v3270, %v3334
  %v3336 = vpop.f32.mrb[0].mxu0
  %v3337 = vpop.f32.mrb[0].mxu0
  %v3338 = vadd.f32 %v3273, %v3337
  %v3339 = vpop.f32.mrb[0].mxu0
  %3340 = vmatprep.mubr.bf16.mxu0 %v2966
  %3341 = vmatmul.mubr.bf16.gmra.mrb[0].mxu0 %v2965
  %v3342 = vpop.f32.mrb[0].mxu0
  %v3343 = vadd.f32 %v3278, %v3342
  %v3344 = vpop.f32.mrb[0].mxu0
  %v3345 = vpop.f32.mrb[0].mxu0
  %v3346 = vadd.f32 %v3281, %v3345
  %v3347 = vpop.f32.mrb[0].mxu0
  %3348 = vmatprep.mubr.bf16.mxu0 %v2970
  %3349 = vmatmul.mubr.bf16.gmra.mrb[0].mxu0 %v2969
  %v3350 = vpop.f32.mrb[0].mxu0
  %v3351 = vadd.f32 %v3286, %v3350
  %v3352 = vpop.f32.mrb[0].mxu0
  %v3353 = vpop.f32.mrb[0].mxu0
  %v3354 = vadd.f32 %v3289, %v3353
  %v3355 = vpop.f32.mrb[0].mxu0
  %3356 = vmatprep.mubr.bf16.mxu0 %v2974
  %3357 = vmatmul.mubr.bf16.gmra.mrb[0].mxu0 %v2973
  %v3358 = vpop.f32.mrb[0].mxu0
  %v3359 = vadd.f32 %v3294, %v3358
  %v3360 = vpop.f32.mrb[0].mxu0
  %v3361 = vpop.f32.mrb[0].mxu0
  %v3362 = vadd.f32 %v3297, %v3361
  %v3363 = vpop.f32.mrb[0].mxu0
  %3364 = vdwg.mxu0
  %v3365 = vadd.f32 %v746, %v3335
  %v3366 = vadd.f32 %v747, %v3338
  %v3367 = vadd.f32 %v748, %v3343
  %v3368 = vadd.f32 %v749, %v3346
  %v3369 = vadd.f32 %v750, %v3351
  %v3370 = vadd.f32 %v751, %v3354
  %v3371 = vadd.f32 %v752, %v3359
  %v3372 = vadd.f32 %v753, %v3362
  %v3373 = vld [vmem:[%s17 + $0x7] sm:$0x1]
  %v3374 = vld [vmem:[%s17 + $0x8] sm:$0x1]
  %3375 = vmatprep.subr.mxu0 0.0
  %3376 = vmatpush1.msra.mxu0 %v472
  %3377 = vmatprep.subr.mxu0 0.0
  %3378 = vmatpush1.msra.mxu0 %v473
  %3379 = vmatprep.subr.mxu0 0.0
  %3380 = vmatpush1.msra.mxu0 %v474
  %3381 = vmatprep.subr.mxu0 0.0
  %3382 = vmatpush1.msra.mxu0 %v475
  %3383 = vmatprep.subr.mxu0 0.0
  %3384 = vmatpush1.msra.mxu0 %v476
  %3385 = vmatprep.subr.mxu0 0.0
  %3386 = vmatpush1.msra.mxu0 %v477
  %3387 = vmatprep.subr.mxu0 0.0
  %3388 = vmatpush1.msra.mxu0 %v478
  %3389 = vmatprep.subr.mxu0 0.0
  %3390 = vmatpush1.msra.mxu0 %v479
  %3391 = vmatprep.subr.mxu0 0.0
  %3392 = vmatpush1.msra.mxu0 %v480
  %3393 = vmatprep.subr.mxu0 0.0
  %3394 = vmatpush1.msra.mxu0 %v481
  %3395 = vmatprep.subr.mxu0 0.0
  %3396 = vmatpush1.msra.mxu0 %v482
  %3397 = vmatprep.subr.mxu0 0.0
  %3398 = vmatpush1.msra.mxu0 %v483
  %3399 = vmatprep.subr.mxu0 0.0
  %3400 = vmatpush1.msra.mxu0 %v484
  %3401 = vmatprep.subr.mxu0 0.0
  %3402 = vmatpush1.msra.mxu0 %v485
  %3403 = vmatprep.subr.mxu0 0.0
  %3404 = vmatpush1.msra.mxu0 %v486
  %3405 = vmatprep.subr.mxu0 0.0
  %3406 = vmatpush1.msra.mxu0 %v487
  %3407 = vmatprep.subr.mxu0 0.0
  %3408 = vmatpush1.msra.mxu0 0.0
  %3409 = vmatprep.subr.mxu0 0.0
  %3410 = vmatpush1.msra.mxu0 0.0
  %3411 = vmatprep.subr.mxu0 0.0
  %3412 = vmatpush1.msra.mxu0 0.0
  %3413 = vmatprep.subr.mxu0 0.0
  %3414 = vmatpush1.msra.mxu0 0.0
  %3415 = vmatprep.subr.mxu0 0.0
  %3416 = vmatpush1.msra.mxu0 0.0
  %3417 = vmatprep.subr.mxu0 0.0
  %3418 = vmatpush1.msra.mxu0 0.0
  %3419 = vmatprep.subr.mxu0 0.0
  %3420 = vmatpush1.msra.mxu0 0.0
  %3421 = vmatprep.subr.mxu0 0.0
  %3422 = vmatpush1.msra.mxu0 0.0
  %3423 = vmatprep.subr.mxu0 0.0
  %3424 = vmatpush1.msra.mxu0 0.0
  %3425 = vmatprep.subr.mxu0 0.0
  %3426 = vmatpush1.msra.mxu0 0.0
  %3427 = vmatprep.subr.mxu0 0.0
  %3428 = vmatpush1.msra.mxu0 0.0
  %3429 = vmatprep.subr.mxu0 0.0
  %3430 = vmatpush1.msra.mxu0 0.0
  %3431 = vmatprep.subr.mxu0 0.0
  %3432 = vmatpush1.msra.mxu0 0.0
  %3433 = vmatprep.subr.mxu0 0.0
  %3434 = vmatpush1.msra.mxu0 0.0
  %3435 = vmatprep.subr.mxu0 0.0
  %3436 = vmatpush1.msra.mxu0 0.0
  %3437 = vmatprep.subr.mxu0 0.0
  %3438 = vmatpush1.msra.mxu0 0.0
  %3439 = vmatprep.mubr.f32.mxu0 0.0
  %3440 = vmatmul.mubr.f32.gmra.mrb[0].mxu0 %v3365
  %v3441 = vpop.f32.mrb[0].mxu0
  %v3442 = vadd.f32 0.0, %v3441
  %v3443 = vpop.f32.mrb[0].mxu0
  %3444 = vmatprep.mubr.f32.mxu0 0.0
  %3445 = vmatmul.mubr.f32.gmra.mrb[0].mxu0 %v3366
  %v3446 = vpop.f32.mrb[0].mxu0
  %v3447 = vadd.f32 0.0, %v3446
  %v3448 = vpop.f32.mrb[0].mxu0
  %3449 = vmatprep.mubr.f32.mxu0 0.0
  %3450 = vmatmul.mubr.f32.gmra.mrb[0].mxu0 %v3367
  %v3451 = vpop.f32.mrb[0].mxu0
  %v3452 = vadd.f32 0.0, %v3451
  %v3453 = vpop.f32.mrb[0].mxu0
  %3454 = vmatprep.mubr.f32.mxu0 0.0
  %3455 = vmatmul.mubr.f32.gmra.mrb[0].mxu0 %v3368
  %v3456 = vpop.f32.mrb[0].mxu0
  %v3457 = vadd.f32 0.0, %v3456
  %v3458 = vpop.f32.mrb[0].mxu0
  %3459 = vmatprep.mubr.f32.mxu0 0.0
  %3460 = vmatmul.mubr.f32.gmra.mrb[0].mxu0 %v3369
  %v3461 = vpop.f32.mrb[0].mxu0
  %v3462 = vadd.f32 0.0, %v3461
  %v3463 = vpop.f32.mrb[0].mxu0
  %3464 = vmatprep.mubr.f32.mxu0 0.0
  %3465 = vmatmul.mubr.f32.gmra.mrb[0].mxu0 %v3370
  %v3466 = vpop.f32.mrb[0].mxu0
  %v3467 = vadd.f32 0.0, %v3466
  %v3468 = vpop.f32.mrb[0].mxu0
  %3469 = vmatprep.mubr.f32.mxu0 0.0
  %3470 = vmatmul.mubr.f32.gmra.mrb[0].mxu0 %v3371
  %v3471 = vpop.f32.mrb[0].mxu0
  %v3472 = vadd.f32 0.0, %v3471
  %v3473 = vpop.f32.mrb[0].mxu0
  %3474 = vmatprep.mubr.f32.mxu0 0.0
  %3475 = vmatmul.mubr.f32.gmra.mrb[0].mxu0 %v3372
  %v3476 = vpop.f32.mrb[0].mxu0
  %v3477 = vadd.f32 0.0, %v3476
  %v3478 = vpop.f32.mrb[0].mxu0
  %3479 = vdwg.mxu0
  %v3480 = vsub.f32 %v3365, %v3442
  %v3481 = vsub.f32 %v3366, %v3447
  %v3482 = vsub.f32 %v3367, %v3452
  %v3483 = vsub.f32 %v3368, %v3457
  %v3484 = vsub.f32 %v3369, %v3462
  %v3485 = vsub.f32 %v3370, %v3467
  %v3486 = vsub.f32 %v3371, %v3472
  %v3487 = vsub.f32 %v3372, %v3477
  %v3488 = vmul.f32 %v3480, %v3480
  %v3489 = vmul.f32 %v3481, %v3481
  %v3490 = vmul.f32 %v3482, %v3482
  %v3491 = vmul.f32 %v3483, %v3483
  %v3492 = vmul.f32 %v3484, %v3484
  %v3493 = vmul.f32 %v3485, %v3485
  %v3494 = vmul.f32 %v3486, %v3486
  %v3495 = vmul.f32 %v3487, %v3487
  %3496 = vmatprep.subr.mxu0 0.0
  %3497 = vmatpush1.msra.mxu0 %v472
  %3498 = vmatprep.subr.mxu0 0.0
  %3499 = vmatpush1.msra.mxu0 %v473
  %3500 = vmatprep.subr.mxu0 0.0
  %3501 = vmatpush1.msra.mxu0 %v474
  %3502 = vmatprep.subr.mxu0 0.0
  %3503 = vmatpush1.msra.mxu0 %v475
  %3504 = vmatprep.subr.mxu0 0.0
  %3505 = vmatpush1.msra.mxu0 %v476
  %3506 = vmatprep.subr.mxu0 0.0
  %3507 = vmatpush1.msra.mxu0 %v477
  %3508 = vmatprep.subr.mxu0 0.0
  %3509 = vmatpush1.msra.mxu0 %v478
  %3510 = vmatprep.subr.mxu0 0.0
  %3511 = vmatpush1.msra.mxu0 %v479
  %3512 = vmatprep.subr.mxu0 0.0
  %3513 = vmatpush1.msra.mxu0 %v480
  %3514 = vmatprep.subr.mxu0 0.0
  %3515 = vmatpush1.msra.mxu0 %v481
  %3516 = vmatprep.subr.mxu0 0.0
  %3517 = vmatpush1.msra.mxu0 %v482
  %3518 = vmatprep.subr.mxu0 0.0
  %3519 = vmatpush1.msra.mxu0 %v483
  %3520 = vmatprep.subr.mxu0 0.0
  %3521 = vmatpush1.msra.mxu0 %v484
  %3522 = vmatprep.subr.mxu0 0.0
  %3523 = vmatpush1.msra.mxu0 %v485
  %3524 = vmatprep.subr.mxu0 0.0
  %3525 = vmatpush1.msra.mxu0 %v486
  %3526 = vmatprep.subr.mxu0 0.0
  %3527 = vmatpush1.msra.mxu0 %v487
  %3528 = vmatprep.subr.mxu0 0.0
  %3529 = vmatpush1.msra.mxu0 0.0
  %3530 = vmatprep.subr.mxu0 0.0
  %3531 = vmatpush1.msra.mxu0 0.0
  %3532 = vmatprep.subr.mxu0 0.0
  %3533 = vmatpush1.msra.mxu0 0.0
  %3534 = vmatprep.subr.mxu0 0.0
  %3535 = vmatpush1.msra.mxu0 0.0
  %3536 = vmatprep.subr.mxu0 0.0
  %3537 = vmatpush1.msra.mxu0 0.0
  %3538 = vmatprep.subr.mxu0 0.0
  %3539 = vmatpush1.msra.mxu0 0.0
  %3540 = vmatprep.subr.mxu0 0.0
  %3541 = vmatpush1.msra.mxu0 0.0
  %3542 = vmatprep.subr.mxu0 0.0
  %3543 = vmatpush1.msra.mxu0 0.0
  %3544 = vmatprep.subr.mxu0 0.0
  %3545 = vmatpush1.msra.mxu0 0.0
  %3546 = vmatprep.subr.mxu0 0.0
  %3547 = vmatpush1.msra.mxu0 0.0
  %3548 = vmatprep.subr.mxu0 0.0
  %3549 = vmatpush1.msra.mxu0 0.0
  %3550 = vmatprep.subr.mxu0 0.0
  %3551 = vmatpush1.msra.mxu0 0.0
  %3552 = vmatprep.subr.mxu0 0.0
  %3553 = vmatpush1.msra.mxu0 0.0
  %3554 = vmatprep.subr.mxu0 0.0
  %3555 = vmatpush1.msra.mxu0 0.0
  %3556 = vmatprep.subr.mxu0 0.0
  %3557 = vmatpush1.msra.mxu0 0.0
  %3558 = vmatprep.subr.mxu0 0.0
  %3559 = vmatpush1.msra.mxu0 0.0
  %3560 = vmatprep.mubr.f32.mxu0 0.0
  %3561 = vmatmul.mubr.f32.gmra.mrb[0].mxu0 %v3488
  %v3562 = vpop.f32.mrb[0].mxu0
  %v3563 = vadd.f32 1e-06, %v3562
  %v3564 = vpop.f32.mrb[0].mxu0
  %3565 = vmatprep.mubr.f32.mxu0 0.0
  %3566 = vmatmul.mubr.f32.gmra.mrb[0].mxu0 %v3489
  %v3567 = vpop.f32.mrb[0].mxu0
  %v3568 = vadd.f32 1e-06, %v3567
  %v3569 = vpop.f32.mrb[0].mxu0
  %3570 = vmatprep.mubr.f32.mxu0 0.0
  %3571 = vmatmul.mubr.f32.gmra.mrb[0].mxu0 %v3490
  %v3572 = vpop.f32.mrb[0].mxu0
  %v3573 = vadd.f32 1e-06, %v3572
  %v3574 = vpop.f32.mrb[0].mxu0
  %3575 = vmatprep.mubr.f32.mxu0 0.0
  %3576 = vmatmul.mubr.f32.gmra.mrb[0].mxu0 %v3491
  %v3577 = vpop.f32.mrb[0].mxu0
  %v3578 = vadd.f32 1e-06, %v3577
  %v3579 = vpop.f32.mrb[0].mxu0
  %3580 = vmatprep.mubr.f32.mxu0 0.0
  %3581 = vmatmul.mubr.f32.gmra.mrb[0].mxu0 %v3492
  %v3582 = vpop.f32.mrb[0].mxu0
  %v3583 = vadd.f32 1e-06, %v3582
  %v3584 = vpop.f32.mrb[0].mxu0
  %3585 = vmatprep.mubr.f32.mxu0 0.0
  %3586 = vmatmul.mubr.f32.gmra.mrb[0].mxu0 %v3493
  %v3587 = vpop.f32.mrb[0].mxu0
  %v3588 = vadd.f32 1e-06, %v3587
  %v3589 = vpop.f32.mrb[0].mxu0
  %3590 = vmatprep.mubr.f32.mxu0 0.0
  %3591 = vmatmul.mubr.f32.gmra.mrb[0].mxu0 %v3494
  %v3592 = vpop.f32.mrb[0].mxu0
  %v3593 = vadd.f32 1e-06, %v3592
  %v3594 = vpop.f32.mrb[0].mxu0
  %3595 = vmatprep.mubr.f32.mxu0 0.0
  %3596 = vmatmul.mubr.f32.gmra.mrb[0].mxu0 %v3495
  %v3597 = vpop.f32.mrb[0].mxu0
  %v3598 = vadd.f32 1e-06, %v3597
  %v3599 = vpop.f32.mrb[0].mxu0
  %3600 = vdwg.mxu0
  %v3601 = vrsqrt.pop %v3563
  %v3602 = vrsqrt.pop %v3568
  %v3603 = vrsqrt.pop %v3573
  %v3604 = vrsqrt.pop %v3578
  %v3605 = vrsqrt.pop %v3583
  %v3606 = vrsqrt.pop %v3588
  %v3607 = vrsqrt.pop %v3593
  %v3608 = vrsqrt.pop %v3598
  %v3609 = vmul.f32 %v3480, %v3601
  %v3610 = vmul.f32 %v3481, %v3602
  %v3611 = vmul.f32 %v3482, %v3603
  %v3612 = vmul.f32 %v3483, %v3604
  %v3613 = vmul.f32 %v3484, %v3605
  %v3614 = vmul.f32 %v3485, %v3606
  %v3615 = vmul.f32 %v3486, %v3607
  %v3616 = vmul.f32 %v3487, %v3608
  %v3617 = vlaneseq
  %v3618 = vshrl.u32 %v3617, 7
  %v3619 = vsub.s32 0, %v3618
  %v3620 = vrot.slane %v3373, %v3619
  %v3621 = vmul.f32 %v3609, %v3620
  %v3622 = vmul.f32 %v3610, %v3620
  %v3623 = vmul.f32 %v3611, %v3620
  %v3624 = vmul.f32 %v3612, %v3620
  %v3625 = vmul.f32 %v3613, %v3620
  %v3626 = vmul.f32 %v3614, %v3620
  %v3627 = vmul.f32 %v3615, %v3620
  %v3628 = vmul.f32 %v3616, %v3620
  %v3629 = vlaneseq
  %v3630 = vshrl.u32 %v3629, 7
  %v3631 = vsub.s32 0, %v3630
  %v3632 = vrot.slane %v3374, %v3631
  %v3633 = vadd.f32 %v3621, %v3632
  %v3634 = vadd.f32 %v3622, %v3632
  %v3635 = vadd.f32 %v3623, %v3632
  %v3636 = vadd.f32 %v3624, %v3632
  %v3637 = vadd.f32 %v3625, %v3632
  %v3638 = vadd.f32 %v3626, %v3632
  %v3639 = vadd.f32 %v3627, %v3632
  %v3640 = vadd.f32 %v3628, %v3632
  %v3641 = vpack.c.bf16 %v3634, %v3633
  %v3642 = vpack.c.bf16 %v3636, %v3635
  %v3643 = vpack.c.bf16 %v3638, %v3637
  %v3644 = vpack.c.bf16 %v3640, %v3639
  %v3645 = vld [vmem:[%s7] sm:$0xf]
  %v3646 = vld [vmem:[%s7 + $0x4] sm:$0xf]
  %v3647 = vld [vmem:[%s7 + $0x8] sm:$0xf]
  %v3648 = vld [vmem:[%s7 + $0xc] sm:$0xf]
  %v3653 = vunpack.c.l.b16 %v3645
  %v3654 = vunpack.c.l.b16 %v3646
  %v3655 = vunpack.c.l.b16 %v3647
  %v3656 = vunpack.c.l.b16 %v3648
  %v3657 = vpack.c.b16 %v3654, %v3653
  %v3658 = vpack.c.b16 %v3656, %v3655
  %vm3659 = vcmask 523264
  %v3661 = vsel %vm3659, %v3657, 0
  %v3664 = vsel %vm3659, %v3658, 0
  %3666 = vmatprep.subr.bf16.mxu0 0
  %3667 = vmatpush1.bf16.msra.mxu0 %v3641
  %3668 = vmatprep.subr.bf16.mxu0 0
  %3669 = vmatpush1.bf16.msra.mxu0 %v3642
  %3670 = vmatprep.subr.bf16.mxu0 0
  %3671 = vmatpush1.bf16.msra.mxu0 %v3643
  %3672 = vmatprep.subr.bf16.mxu0 0
  %3673 = vmatpush1.bf16.msra.mxu0 %v3644
  %3674 = vmatprep.subr.bf16.mxu0 0
  %3675 = vmatpush1.bf16.msra.mxu0 0
  %3676 = vmatprep.subr.bf16.mxu0 0
  %3677 = vmatpush1.bf16.msra.mxu0 0
  %3678 = vmatprep.subr.bf16.mxu0 0
  %3679 = vmatpush1.bf16.msra.mxu0 0
  %3680 = vmatprep.subr.bf16.mxu0 0
  %3681 = vmatpush1.bf16.msra.mxu0 0
  %3682 = vmatprep.subr.bf16.mxu0 0
  %3683 = vmatpush1.bf16.msra.mxu0 0
  %3684 = vmatprep.subr.bf16.mxu0 0
  %3685 = vmatpush1.bf16.msra.mxu0 0
  %3686 = vmatprep.subr.bf16.mxu0 0
  %3687 = vmatpush1.bf16.msra.mxu0 0
  %3688 = vmatprep.subr.bf16.mxu0 0
  %3689 = vmatpush1.bf16.msra.mxu0 0
  %3690 = vmatprep.subr.bf16.mxu0 0
  %3691 = vmatpush1.bf16.msra.mxu0 0
  %3692 = vmatprep.subr.bf16.mxu0 0
  %3693 = vmatpush1.bf16.msra.mxu0 0
  %3694 = vmatprep.subr.bf16.mxu0 0
  %3695 = vmatpush1.bf16.msra.mxu0 0
  %3696 = vmatprep.subr.bf16.mxu0 0
  %3697 = vmatpush1.bf16.msra.mxu0 0
  %3698 = vmatprep.mubr.bf16.mxu0 0
  %3699 = vmatmul.mubr.bf16.gmra.mrb[0].mxu0 %v3661
  %v3700 = vpop.f32.mrb[0].mxu0
  %v3701 = vadd.f32 0.0, %v3700
  %v3702 = vpop.f32.mrb[0].mxu0
  %v3703 = vpop.f32.mrb[0].mxu0
  %v3704 = vadd.f32 0.0, %v3703
  %v3705 = vpop.f32.mrb[0].mxu0
  %3706 = vmatprep.mubr.bf16.mxu0 0
  %3707 = vmatmul.mubr.bf16.gmra.mrb[0].mxu0 %v3664
  %v3708 = vpop.f32.mrb[0].mxu0
  %v3709 = vadd.f32 0.0, %v3708
  %v3710 = vpop.f32.mrb[0].mxu0
  %v3711 = vpop.f32.mrb[0].mxu0
  %v3712 = vadd.f32 0.0, %v3711
  %v3713 = vpop.f32.mrb[0].mxu0
  %3714 = vdwg.mxu0
  %v3715 = vld [vmem:[%s8] sm:$0xf]
  %v3716 = vld [vmem:[%s8 + $0x4] sm:$0xf]
  %v3717 = vld [vmem:[%s8 + $0x8] sm:$0xf]
  %v3718 = vld [vmem:[%s8 + $0xc] sm:$0xf]
  %v3723 = vunpack.c.l.b16 %v3715
  %v3724 = vunpack.c.l.b16 %v3716
  %v3725 = vunpack.c.l.b16 %v3717
  %v3726 = vunpack.c.l.b16 %v3718
  %v3727 = vpack.c.b16 %v3724, %v3723
  %v3728 = vpack.c.b16 %v3726, %v3725
  %v3730 = vsel %vm3659, %v3727, 0
  %v3733 = vsel %vm3659, %v3728, 0
  %3735 = vmatprep.subr.bf16.mxu0 0
  %3736 = vmatpush1.bf16.msra.mxu0 %v3641
  %3737 = vmatprep.subr.bf16.mxu0 0
  %3738 = vmatpush1.bf16.msra.mxu0 %v3642
  %3739 = vmatprep.subr.bf16.mxu0 0
  %3740 = vmatpush1.bf16.msra.mxu0 %v3643
  %3741 = vmatprep.subr.bf16.mxu0 0
  %3742 = vmatpush1.bf16.msra.mxu0 %v3644
  %3743 = vmatprep.subr.bf16.mxu0 0
  %3744 = vmatpush1.bf16.msra.mxu0 0
  %3745 = vmatprep.subr.bf16.mxu0 0
  %3746 = vmatpush1.bf16.msra.mxu0 0
  %3747 = vmatprep.subr.bf16.mxu0 0
  %3748 = vmatpush1.bf16.msra.mxu0 0
  %3749 = vmatprep.subr.bf16.mxu0 0
  %3750 = vmatpush1.bf16.msra.mxu0 0
  %3751 = vmatprep.subr.bf16.mxu0 0
  %3752 = vmatpush1.bf16.msra.mxu0 0
  %3753 = vmatprep.subr.bf16.mxu0 0
  %3754 = vmatpush1.bf16.msra.mxu0 0
  %3755 = vmatprep.subr.bf16.mxu0 0
  %3756 = vmatpush1.bf16.msra.mxu0 0
  %3757 = vmatprep.subr.bf16.mxu0 0
  %3758 = vmatpush1.bf16.msra.mxu0 0
  %3759 = vmatprep.subr.bf16.mxu0 0
  %3760 = vmatpush1.bf16.msra.mxu0 0
  %3761 = vmatprep.subr.bf16.mxu0 0
  %3762 = vmatpush1.bf16.msra.mxu0 0
  %3763 = vmatprep.subr.bf16.mxu0 0
  %3764 = vmatpush1.bf16.msra.mxu0 0
  %3765 = vmatprep.subr.bf16.mxu0 0
  %3766 = vmatpush1.bf16.msra.mxu0 0
  %3767 = vmatprep.mubr.bf16.mxu0 0
  %3768 = vmatmul.mubr.bf16.gmra.mrb[0].mxu0 %v3730
  %v3769 = vpop.f32.mrb[0].mxu0
  %v3770 = vadd.f32 0.0, %v3769
  %v3771 = vpop.f32.mrb[0].mxu0
  %v3772 = vpop.f32.mrb[0].mxu0
  %v3773 = vadd.f32 0.0, %v3772
  %v3774 = vpop.f32.mrb[0].mxu0
  %3775 = vmatprep.mubr.bf16.mxu0 0
  %3776 = vmatmul.mubr.bf16.gmra.mrb[0].mxu0 %v3733
  %v3777 = vpop.f32.mrb[0].mxu0
  %v3778 = vadd.f32 0.0, %v3777
  %v3779 = vpop.f32.mrb[0].mxu0
  %v3780 = vpop.f32.mrb[0].mxu0
  %v3781 = vadd.f32 0.0, %v3780
  %v3782 = vpop.f32.mrb[0].mxu0
  %3783 = vdwg.mxu0
  %v3784 = vpack.c.bf16 %v3704, %v3701
  %v3785 = vpack.c.bf16 %v3712, %v3709
  %v3786 = vld [vmem:[%s9] sm:$0xf]
  %v3787 = vld [vmem:[%s9 + $0x4] sm:$0xf]
  %v3788 = vld [vmem:[%s9 + $0x8] sm:$0xf]
  %v3789 = vld [vmem:[%s9 + $0xc] sm:$0xf]
  %v3790 = vld [vmem:[%s9 + $0x10] sm:$0xf]
  %v3791 = vld [vmem:[%s9 + $0x14] sm:$0xf]
  %v3792 = vld [vmem:[%s9 + $0x18] sm:$0xf]
  %v3793 = vld [vmem:[%s9 + $0x1c] sm:$0xf]
  %v3794 = vld [vmem:[%s9 + $0x20] sm:$0xf]
  %v3795 = vld [vmem:[%s9 + $0x24] sm:$0xf]
  %v3796 = vld [vmem:[%s9 + $0x28] sm:$0xf]
  %v3797 = vld [vmem:[%s9 + $0x2c] sm:$0xf]
  %v3798 = vld [vmem:[%s9 + $0x30] sm:$0xf]
  %v3799 = vld [vmem:[%s9 + $0x34] sm:$0xf]
  %v3800 = vld [vmem:[%s9 + $0x38] sm:$0xf]
  %v3801 = vld [vmem:[%s9 + $0x3c] sm:$0xf]
  %v3802 = vpack.c.bf16 %v3773, %v3770
  %v3803 = vpack.c.bf16 %v3781, %v3778
  %v3804 = vld [vmem:[%s10] sm:$0xf]
  %v3805 = vld [vmem:[%s10 + $0x4] sm:$0xf]
  %v3806 = vld [vmem:[%s10 + $0x8] sm:$0xf]
  %v3807 = vld [vmem:[%s10 + $0xc] sm:$0xf]
  %v3808 = vld [vmem:[%s10 + $0x10] sm:$0xf]
  %v3809 = vld [vmem:[%s10 + $0x14] sm:$0xf]
  %v3810 = vld [vmem:[%s10 + $0x18] sm:$0xf]
  %v3811 = vld [vmem:[%s10 + $0x1c] sm:$0xf]
  %v3812 = vld [vmem:[%s10 + $0x20] sm:$0xf]
  %v3813 = vld [vmem:[%s10 + $0x24] sm:$0xf]
  %v3814 = vld [vmem:[%s10 + $0x28] sm:$0xf]
  %v3815 = vld [vmem:[%s10 + $0x2c] sm:$0xf]
  %v3816 = vld [vmem:[%s10 + $0x30] sm:$0xf]
  %v3817 = vld [vmem:[%s10 + $0x34] sm:$0xf]
  %v3818 = vld [vmem:[%s10 + $0x38] sm:$0xf]
  %v3819 = vld [vmem:[%s10 + $0x3c] sm:$0xf]
  %v3836 = vunpack.c.l.b16 %v3804
  %v3837 = vunpack.c.l.b16 %v3805
  %v3838 = vunpack.c.l.b16 %v3806
  %v3839 = vunpack.c.l.b16 %v3807
  %v3840 = vunpack.c.l.b16 %v3808
  %v3841 = vunpack.c.l.b16 %v3809
  %v3842 = vunpack.c.l.b16 %v3810
  %v3843 = vunpack.c.l.b16 %v3811
  %v3844 = vunpack.c.l.b16 %v3812
  %v3845 = vunpack.c.l.b16 %v3813
  %v3846 = vunpack.c.l.b16 %v3814
  %v3847 = vunpack.c.l.b16 %v3815
  %v3848 = vunpack.c.l.b16 %v3816
  %v3849 = vunpack.c.l.b16 %v3817
  %v3850 = vunpack.c.l.b16 %v3818
  %v3851 = vunpack.c.l.b16 %v3819
  %v3852 = vpack.c.b16 %v3837, %v3836
  %v3853 = vpack.c.b16 %v3839, %v3838
  %v3854 = vpack.c.b16 %v3841, %v3840
  %v3855 = vpack.c.b16 %v3843, %v3842
  %v3856 = vpack.c.b16 %v3845, %v3844
  %v3857 = vpack.c.b16 %v3847, %v3846
  %v3858 = vpack.c.b16 %v3849, %v3848
  %v3859 = vpack.c.b16 %v3851, %v3850
  %3868 = vmatprep.subr.bf16.mxu0 0
  %3869 = vmatpush1.bf16.msra.mxu0 %v3852
  %3870 = vmatprep.subr.bf16.mxu0 0
  %3871 = vmatpush1.bf16.msra.mxu0 %v3853
  %3872 = vmatprep.subr.bf16.mxu0 0
  %3873 = vmatpush1.bf16.msra.mxu0 %v3854
  %3874 = vmatprep.subr.bf16.mxu0 0
  %3875 = vmatpush1.bf16.msra.mxu0 %v3855
  %3876 = vmatprep.subr.bf16.mxu0 0
  %3877 = vmatpush1.bf16.msra.mxu0 %v3856
  %3878 = vmatprep.subr.bf16.mxu0 0
  %3879 = vmatpush1.bf16.msra.mxu0 %v3857
  %3880 = vmatprep.subr.bf16.mxu0 0
  %3881 = vmatpush1.bf16.msra.mxu0 %v3858
  %3882 = vmatprep.subr.bf16.mxu0 0
  %3883 = vmatpush1.bf16.msra.mxu0 %v3859
  %3884 = vmatprep.subr.bf16.mxu0 0
  %3885 = vmatpush1.bf16.msra.mxu0 0
  %3886 = vmatprep.subr.bf16.mxu0 0
  %3887 = vmatpush1.bf16.msra.mxu0 0
  %3888 = vmatprep.subr.bf16.mxu0 0
  %3889 = vmatpush1.bf16.msra.mxu0 0
  %3890 = vmatprep.subr.bf16.mxu0 0
  %3891 = vmatpush1.bf16.msra.mxu0 0
  %3892 = vmatprep.subr.bf16.mxu0 0
  %3893 = vmatpush1.bf16.msra.mxu0 0
  %3894 = vmatprep.subr.bf16.mxu0 0
  %3895 = vmatpush1.bf16.msra.mxu0 0
  %3896 = vmatprep.subr.bf16.mxu0 0
  %3897 = vmatpush1.bf16.msra.mxu0 0
  %3898 = vmatprep.subr.bf16.mxu0 0
  %3899 = vmatpush1.bf16.msra.mxu0 0
  %3900 = vmatprep.mubr.bf16.mxu0 0
  %3901 = vmatmul.mubr.bf16.gmra.mrb[0].mxu0 %v3802
  %v3902 = vpop.f32.mrb[0].mxu0
  %v3903 = vadd.f32 0.0, %v3902
  %v3904 = vpop.f32.mrb[0].mxu0
  %v3905 = vpop.f32.mrb[0].mxu0
  %v3906 = vadd.f32 0.0, %v3905
  %v3907 = vpop.f32.mrb[0].mxu0
  %3908 = vmatprep.mubr.bf16.mxu0 0
  %3909 = vmatmul.mubr.bf16.gmra.mrb[0].mxu0 %v3803
  %v3910 = vpop.f32.mrb[0].mxu0
  %v3911 = vadd.f32 0.0, %v3910
  %v3912 = vpop.f32.mrb[0].mxu0
  %v3913 = vpop.f32.mrb[0].mxu0
  %v3914 = vadd.f32 0.0, %v3913
  %v3915 = vpop.f32.mrb[0].mxu0
  %3916 = vdwg.mxu0
  %v3933 = vunpack.c.l.b16 %v3786
  %v3934 = vunpack.c.l.b16 %v3787
  %v3935 = vunpack.c.l.b16 %v3788
  %v3936 = vunpack.c.l.b16 %v3789
  %v3937 = vunpack.c.l.b16 %v3790
  %v3938 = vunpack.c.l.b16 %v3791
  %v3939 = vunpack.c.l.b16 %v3792
  %v3940 = vunpack.c.l.b16 %v3793
  %v3941 = vunpack.c.l.b16 %v3794
  %v3942 = vunpack.c.l.b16 %v3795
  %v3943 = vunpack.c.l.b16 %v3796
  %v3944 = vunpack.c.l.b16 %v3797
  %v3945 = vunpack.c.l.b16 %v3798
  %v3946 = vunpack.c.l.b16 %v3799
  %v3947 = vunpack.c.l.b16 %v3800
  %v3948 = vunpack.c.l.b16 %v3801
  %v3949 = vpack.c.b16 %v3934, %v3933
  %v3950 = vpack.c.b16 %v3936, %v3935
  %v3951 = vpack.c.b16 %v3938, %v3937
  %v3952 = vpack.c.b16 %v3940, %v3939
  %v3953 = vpack.c.b16 %v3942, %v3941
  %v3954 = vpack.c.b16 %v3944, %v3943
  %v3955 = vpack.c.b16 %v3946, %v3945
  %v3956 = vpack.c.b16 %v3948, %v3947
  %3965 = vmatprep.subr.bf16.mxu0 0
  %3966 = vmatpush1.bf16.msra.mxu0 %v3949
  %3967 = vmatprep.subr.bf16.mxu0 0
  %3968 = vmatpush1.bf16.msra.mxu0 %v3950
  %3969 = vmatprep.subr.bf16.mxu0 0
  %3970 = vmatpush1.bf16.msra.mxu0 %v3951
  %3971 = vmatprep.subr.bf16.mxu0 0
  %3972 = vmatpush1.bf16.msra.mxu0 %v3952
  %3973 = vmatprep.subr.bf16.mxu0 0
  %3974 = vmatpush1.bf16.msra.mxu0 %v3953
  %3975 = vmatprep.subr.bf16.mxu0 0
  %3976 = vmatpush1.bf16.msra.mxu0 %v3954
  %3977 = vmatprep.subr.bf16.mxu0 0
  %3978 = vmatpush1.bf16.msra.mxu0 %v3955
  %3979 = vmatprep.subr.bf16.mxu0 0
  %3980 = vmatpush1.bf16.msra.mxu0 %v3956
  %3981 = vmatprep.subr.bf16.mxu0 0
  %3982 = vmatpush1.bf16.msra.mxu0 0
  %3983 = vmatprep.subr.bf16.mxu0 0
  %3984 = vmatpush1.bf16.msra.mxu0 0
  %3985 = vmatprep.subr.bf16.mxu0 0
  %3986 = vmatpush1.bf16.msra.mxu0 0
  %3987 = vmatprep.subr.bf16.mxu0 0
  %3988 = vmatpush1.bf16.msra.mxu0 0
  %3989 = vmatprep.subr.bf16.mxu0 0
  %3990 = vmatpush1.bf16.msra.mxu0 0
  %3991 = vmatprep.subr.bf16.mxu0 0
  %3992 = vmatpush1.bf16.msra.mxu0 0
  %3993 = vmatprep.subr.bf16.mxu0 0
  %3994 = vmatpush1.bf16.msra.mxu0 0
  %3995 = vmatprep.subr.bf16.mxu0 0
  %3996 = vmatpush1.bf16.msra.mxu0 0
  %3997 = vmatprep.mubr.bf16.mxu0 0
  %3998 = vmatmul.mubr.bf16.gmra.mrb[0].mxu0 %v3784
  %v3999 = vpop.f32.mrb[0].mxu0
  %v4000 = vadd.f32 %v3903, %v3999
  %v4001 = vpop.f32.mrb[0].mxu0
  %v4002 = vpop.f32.mrb[0].mxu0
  %v4003 = vadd.f32 %v3906, %v4002
  %v4004 = vpop.f32.mrb[0].mxu0
  %4005 = vmatprep.mubr.bf16.mxu0 0
  %4006 = vmatmul.mubr.bf16.gmra.mrb[0].mxu0 %v3785
  %v4007 = vpop.f32.mrb[0].mxu0
  %v4008 = vadd.f32 %v3911, %v4007
  %v4009 = vpop.f32.mrb[0].mxu0
  %v4010 = vpop.f32.mrb[0].mxu0
  %v4011 = vadd.f32 %v3914, %v4010
  %v4012 = vpop.f32.mrb[0].mxu0
  %4013 = vdwg.mxu0
  %v4014 = vld [vmem:[%s17 + $0x9] sm:$0x1]
  %v4015 = vlaneseq
  %v4016 = vshrl.u32 %v4015, 7
  %v4017 = vsub.s32 0, %v4016
  %v4018 = vrot.slane %v4014, %v4017
  %v4019 = vadd.f32 %v4000, %v4018
  %v4020 = vadd.f32 %v4003, %v4018
  %v4021 = vadd.f32 %v4008, %v4018
  %v4022 = vadd.f32 %v4011, %v4018
  %v4023 = vld [vmem:[%s17 + $0xa] sm:$0x1]
  %v4024 = vld [vmem:[%s17 + $0xb] sm:$0x1]
  %v4025 = vld [vmem:[%s17 + $0xc] sm:$0x1]
  %s4026 = scalar_lea.vmem %s18, 1
  %v4027 = vld [vmem:[%s4026] ss:$8 sm:$0xf]
  %v4028 = vld [vmem:[%s17 + $0xd] sm:$0x1]
  %vm4029 = vcmp.lt.s32.totalorder %v760, 0
  %v4030 = vsub.s32 0, %v760
  %v4031 = vsel %vm4029, %v4030, %v760
  %v4032 = vshrl.u32 %v4031, 2
  %v4033 = vand.u32 %v4031, 3
  %v4034 = vsub.s32 0, %v4033
  %v4035 = vsel %vm4029, %v4034, %v4033
  %vm4036 = vcmp.lt.s32.totalorder %v761, 0
  %v4037 = vsub.s32 0, %v761
  %v4038 = vsel %vm4036, %v4037, %v761
  %v4039 = vshrl.u32 %v4038, 2
  %v4040 = vand.u32 %v4038, 3
  %v4041 = vsub.s32 0, %v4040
  %v4042 = vsel %vm4036, %v4041, %v4040
  %vm4043 = vcmp.lt.s32.totalorder %v762, 0
  %v4044 = vsub.s32 0, %v762
  %v4045 = vsel %vm4043, %v4044, %v762
  %v4046 = vshrl.u32 %v4045, 2
  %v4047 = vand.u32 %v4045, 3
  %v4048 = vsub.s32 0, %v4047
  %v4049 = vsel %vm4043, %v4048, %v4047
  %vm4050 = vcmp.lt.s32.totalorder %v763, 0
  %v4051 = vsub.s32 0, %v763
  %v4052 = vsel %vm4050, %v4051, %v763
  %v4053 = vshrl.u32 %v4052, 2
  %v4054 = vand.u32 %v4052, 3
  %v4055 = vsub.s32 0, %v4054
  %v4056 = vsel %vm4050, %v4055, %v4054
  %vm4057 = vcmp.ne.s32.totalorder %v4035, 0
  %vm4058 = vcmp.ne.s32.totalorder %v4042, 0
  %vm4059 = vcmp.ne.s32.totalorder %v4049, 0
  %vm4060 = vcmp.ne.s32.totalorder %v4056, 0
  %vm4061 = vcmp.lt.s32.totalorder %v4035, 0
  %vm4062 = vcmp.lt.s32.totalorder %v4042, 0
  %vm4063 = vcmp.lt.s32.totalorder %v4049, 0
  %vm4064 = vcmp.lt.s32.totalorder %v4056, 0
  %vm4065 = vmand %vm4061, %vm4057
  %vm4066 = vmand %vm4062, %vm4058
  %vm4067 = vmand %vm4063, %vm4059
  %vm4068 = vmand %vm4064, %vm4060
  %v4069 = vadd.s32 %v4035, 4
  %v4070 = vadd.s32 %v4042, 4
  %v4071 = vadd.s32 %v4049, 4
  %v4072 = vadd.s32 %v4056, 4
  %v4073 = vsel %vm4065, %v4069, %v4035
  %v4074 = vsel %vm4066, %v4070, %v4042
  %v4075 = vsel %vm4067, %v4071, %v4049
  %v4076 = vsel %vm4068, %v4072, %v4056
  %v4077 = vrot.slane %v4019, 5
  %v4078 = vrot.slane %v4020, 5
  %v4079 = vrot.slane %v4021, 5
  %v4080 = vrot.slane %v4022, 5
  %v4081 = vsel %vm872, %v4079, %v4080
  %v4082 = vsel %vm872, %v4078, %v4079
  %v4083 = vsel %vm872, %v4077, %v4078
  %v4084 = vsel %vm872, %v4080, %v4077
  %v4085 = vadd.s32 %v4073, 4294967293
  %v4086 = vadd.s32 %v4074, 4294967293
  %v4087 = vadd.s32 %v4075, 4294967293
  %v4088 = vadd.s32 %v4076, 4294967293
  %vm4089 = vcmp.ge.s32.totalorder %v4085, 0
  %vm4090 = vcmp.ge.s32.totalorder %v4086, 0
  %vm4091 = vcmp.ge.s32.totalorder %v4087, 0
  %vm4092 = vcmp.ge.s32.totalorder %v4088, 0
  %vm4093 = vcmp.lt.s32.totalorder %v4085, 4
  %vm4094 = vcmp.lt.s32.totalorder %v4086, 4
  %vm4095 = vcmp.lt.s32.totalorder %v4087, 4
  %vm4096 = vcmp.lt.s32.totalorder %v4088, 4
  %vm4097 = vmand %vm4089, %vm4093
  %vm4098 = vmand %vm4090, %vm4094
  %vm4099 = vmand %vm4091, %vm4095
  %vm4100 = vmand %vm4092, %vm4096
  %v4101 = vsel %vm4097, 1, 0
  %v4102 = vsel %vm4098, 1, 0
  %v4103 = vsel %vm4099, 1, 0
  %v4104 = vsel %vm4100, 1, 0
  %vm4105 = vcmp.eq.s32.totalorder %v4101, 1
  %vm4106 = vcmp.eq.s32.totalorder %v4102, 1
  %vm4107 = vcmp.eq.s32.totalorder %v4103, 1
  %vm4108 = vcmp.eq.s32.totalorder %v4104, 1
  %v4109 = vsel %vm4105, %v4084, 0.0
  %v4110 = vsel %vm4106, %v4083, 0.0
  %v4111 = vsel %vm4107, %v4082, 0.0
  %v4112 = vsel %vm4108, %v4081, 0.0
  %v4113 = vrot.slane %v4019, 6
  %v4114 = vrot.slane %v4020, 6
  %v4115 = vrot.slane %v4021, 6
  %v4116 = vrot.slane %v4022, 6
  %v4117 = vsel %vm945, %v4115, %v4116
  %v4118 = vsel %vm945, %v4114, %v4115
  %v4119 = vsel %vm945, %v4113, %v4114
  %v4120 = vsel %vm945, %v4116, %v4113
  %v4121 = vadd.s32 %v4073, 4294967294
  %v4122 = vadd.s32 %v4074, 4294967294
  %v4123 = vadd.s32 %v4075, 4294967294
  %v4124 = vadd.s32 %v4076, 4294967294
  %vm4125 = vcmp.ge.s32.totalorder %v4121, 0
  %vm4126 = vcmp.ge.s32.totalorder %v4122, 0
  %vm4127 = vcmp.ge.s32.totalorder %v4123, 0
  %vm4128 = vcmp.ge.s32.totalorder %v4124, 0
  %vm4129 = vcmp.lt.s32.totalorder %v4121, 4
  %vm4130 = vcmp.lt.s32.totalorder %v4122, 4
  %vm4131 = vcmp.lt.s32.totalorder %v4123, 4
  %vm4132 = vcmp.lt.s32.totalorder %v4124, 4
  %vm4133 = vmand %vm4125, %vm4129
  %vm4134 = vmand %vm4126, %vm4130
  %vm4135 = vmand %vm4127, %vm4131
  %vm4136 = vmand %vm4128, %vm4132
  %v4137 = vsel %vm4133, 1, 0
  %v4138 = vsel %vm4134, 1, 0
  %v4139 = vsel %vm4135, 1, 0
  %v4140 = vsel %vm4136, 1, 0
  %vm4141 = vcmp.eq.s32.totalorder %v4137, 1
  %vm4142 = vcmp.eq.s32.totalorder %v4138, 1
  %vm4143 = vcmp.eq.s32.totalorder %v4139, 1
  %vm4144 = vcmp.eq.s32.totalorder %v4140, 1
  %v4145 = vsel %vm4141, %v4120, 0.0
  %v4146 = vsel %vm4142, %v4119, 0.0
  %v4147 = vsel %vm4143, %v4118, 0.0
  %v4148 = vsel %vm4144, %v4117, 0.0
  %v4149 = vrot.slane %v4019, 7
  %v4150 = vrot.slane %v4020, 7
  %v4151 = vrot.slane %v4021, 7
  %v4152 = vrot.slane %v4022, 7
  %v4153 = vsel %vm1018, %v4151, %v4152
  %v4154 = vsel %vm1018, %v4150, %v4151
  %v4155 = vsel %vm1018, %v4149, %v4150
  %v4156 = vsel %vm1018, %v4152, %v4149
  %v4157 = vadd.s32 %v4073, 4294967295
  %v4158 = vadd.s32 %v4074, 4294967295
  %v4159 = vadd.s32 %v4075, 4294967295
  %v4160 = vadd.s32 %v4076, 4294967295
  %vm4161 = vcmp.ge.s32.totalorder %v4157, 0
  %vm4162 = vcmp.ge.s32.totalorder %v4158, 0
  %vm4163 = vcmp.ge.s32.totalorder %v4159, 0
  %vm4164 = vcmp.ge.s32.totalorder %v4160, 0
  %vm4165 = vcmp.lt.s32.totalorder %v4157, 4
  %vm4166 = vcmp.lt.s32.totalorder %v4158, 4
  %vm4167 = vcmp.lt.s32.totalorder %v4159, 4
  %vm4168 = vcmp.lt.s32.totalorder %v4160, 4
  %vm4169 = vmand %vm4161, %vm4165
  %vm4170 = vmand %vm4162, %vm4166
  %vm4171 = vmand %vm4163, %vm4167
  %vm4172 = vmand %vm4164, %vm4168
  %v4173 = vsel %vm4169, 1, 0
  %v4174 = vsel %vm4170, 1, 0
  %v4175 = vsel %vm4171, 1, 0
  %v4176 = vsel %vm4172, 1, 0
  %vm4177 = vcmp.eq.s32.totalorder %v4173, 1
  %vm4178 = vcmp.eq.s32.totalorder %v4174, 1
  %vm4179 = vcmp.eq.s32.totalorder %v4175, 1
  %vm4180 = vcmp.eq.s32.totalorder %v4176, 1
  %v4181 = vsel %vm4177, %v4156, 0.0
  %v4182 = vsel %vm4178, %v4155, 0.0
  %v4183 = vsel %vm4179, %v4154, 0.0
  %v4184 = vsel %vm4180, %v4153, 0.0
  %v4185 = vrot.slane %v4019, 1
  %v4186 = vrot.slane %v4020, 1
  %v4187 = vrot.slane %v4021, 1
  %v4188 = vrot.slane %v4022, 1
  %v4189 = vsel %vm1091, %v4187, %v4188
  %v4190 = vsel %vm1091, %v4186, %v4187
  %v4191 = vsel %vm1091, %v4185, %v4186
  %v4192 = vsel %vm1091, %v4188, %v4185
  %v4193 = vadd.s32 %v4073, 1
  %v4194 = vadd.s32 %v4074, 1
  %v4195 = vadd.s32 %v4075, 1
  %v4196 = vadd.s32 %v4076, 1
  %vm4197 = vcmp.ge.s32.totalorder %v4193, 0
  %vm4198 = vcmp.ge.s32.totalorder %v4194, 0
  %vm4199 = vcmp.ge.s32.totalorder %v4195, 0
  %vm4200 = vcmp.ge.s32.totalorder %v4196, 0
  %vm4201 = vcmp.lt.s32.totalorder %v4193, 4
  %vm4202 = vcmp.lt.s32.totalorder %v4194, 4
  %vm4203 = vcmp.lt.s32.totalorder %v4195, 4
  %vm4204 = vcmp.lt.s32.totalorder %v4196, 4
  %vm4205 = vmand %vm4197, %vm4201
  %vm4206 = vmand %vm4198, %vm4202
  %vm4207 = vmand %vm4199, %vm4203
  %vm4208 = vmand %vm4200, %vm4204
  %v4209 = vsel %vm4205, 1, 0
  %v4210 = vsel %vm4206, 1, 0
  %v4211 = vsel %vm4207, 1, 0
  %v4212 = vsel %vm4208, 1, 0
  %vm4213 = vcmp.eq.s32.totalorder %v4209, 1
  %vm4214 = vcmp.eq.s32.totalorder %v4210, 1
  %vm4215 = vcmp.eq.s32.totalorder %v4211, 1
  %vm4216 = vcmp.eq.s32.totalorder %v4212, 1
  %v4217 = vsel %vm4213, %v4191, 0.0
  %v4218 = vsel %vm4214, %v4190, 0.0
  %v4219 = vsel %vm4215, %v4189, 0.0
  %v4220 = vsel %vm4216, %v4192, 0.0
  %v4221 = vrot.slane %v4019, 2
  %v4222 = vrot.slane %v4020, 2
  %v4223 = vrot.slane %v4021, 2
  %v4224 = vrot.slane %v4022, 2
  %v4225 = vsel %vm1164, %v4223, %v4224
  %v4226 = vsel %vm1164, %v4222, %v4223
  %v4227 = vsel %vm1164, %v4221, %v4222
  %v4228 = vsel %vm1164, %v4224, %v4221
  %v4229 = vadd.s32 %v4073, 2
  %v4230 = vadd.s32 %v4074, 2
  %v4231 = vadd.s32 %v4075, 2
  %v4232 = vadd.s32 %v4076, 2
  %vm4233 = vcmp.ge.s32.totalorder %v4229, 0
  %vm4234 = vcmp.ge.s32.totalorder %v4230, 0
  %vm4235 = vcmp.ge.s32.totalorder %v4231, 0
  %vm4236 = vcmp.ge.s32.totalorder %v4232, 0
  %vm4237 = vcmp.lt.s32.totalorder %v4229, 4
  %vm4238 = vcmp.lt.s32.totalorder %v4230, 4
  %vm4239 = vcmp.lt.s32.totalorder %v4231, 4
  %vm4240 = vcmp.lt.s32.totalorder %v4232, 4
  %vm4241 = vmand %vm4233, %vm4237
  %vm4242 = vmand %vm4234, %vm4238
  %vm4243 = vmand %vm4235, %vm4239
  %vm4244 = vmand %vm4236, %vm4240
  %v4245 = vsel %vm4241, 1, 0
  %v4246 = vsel %vm4242, 1, 0
  %v4247 = vsel %vm4243, 1, 0
  %v4248 = vsel %vm4244, 1, 0
  %vm4249 = vcmp.eq.s32.totalorder %v4245, 1
  %vm4250 = vcmp.eq.s32.totalorder %v4246, 1
  %vm4251 = vcmp.eq.s32.totalorder %v4247, 1
  %vm4252 = vcmp.eq.s32.totalorder %v4248, 1
  %v4253 = vsel %vm4249, %v4227, 0.0
  %v4254 = vsel %vm4250, %v4226, 0.0
  %v4255 = vsel %vm4251, %v4225, 0.0
  %v4256 = vsel %vm4252, %v4228, 0.0
  %v4257 = vrot.slane %v4019, 3
  %v4258 = vrot.slane %v4020, 3
  %v4259 = vrot.slane %v4021, 3
  %v4260 = vrot.slane %v4022, 3
  %v4261 = vsel %vm1237, %v4259, %v4260
  %v4262 = vsel %vm1237, %v4258, %v4259
  %v4263 = vsel %vm1237, %v4257, %v4258
  %v4264 = vsel %vm1237, %v4260, %v4257
  %v4265 = vadd.s32 %v4073, 3
  %v4266 = vadd.s32 %v4074, 3
  %v4267 = vadd.s32 %v4075, 3
  %v4268 = vadd.s32 %v4076, 3
  %vm4269 = vcmp.ge.s32.totalorder %v4265, 0
  %vm4270 = vcmp.ge.s32.totalorder %v4266, 0
  %vm4271 = vcmp.ge.s32.totalorder %v4267, 0
  %vm4272 = vcmp.ge.s32.totalorder %v4268, 0
  %vm4273 = vcmp.lt.s32.totalorder %v4265, 4
  %vm4274 = vcmp.lt.s32.totalorder %v4266, 4
  %vm4275 = vcmp.lt.s32.totalorder %v4267, 4
  %vm4276 = vcmp.lt.s32.totalorder %v4268, 4
  %vm4277 = vmand %vm4269, %vm4273
  %vm4278 = vmand %vm4270, %vm4274
  %vm4279 = vmand %vm4271, %vm4275
  %vm4280 = vmand %vm4272, %vm4276
  %v4281 = vsel %vm4277, 1, 0
  %v4282 = vsel %vm4278, 1, 0
  %v4283 = vsel %vm4279, 1, 0
  %v4284 = vsel %vm4280, 1, 0
  %vm4285 = vcmp.eq.s32.totalorder %v4281, 1
  %vm4286 = vcmp.eq.s32.totalorder %v4282, 1
  %vm4287 = vcmp.eq.s32.totalorder %v4283, 1
  %vm4288 = vcmp.eq.s32.totalorder %v4284, 1
  %v4289 = vsel %vm4285, %v4263, 0.0
  %v4290 = vsel %vm4286, %v4262, 0.0
  %v4291 = vsel %vm4287, %v4261, 0.0
  %v4292 = vsel %vm4288, %v4264, 0.0
  %v4293 = vpack.c.bf16 %v4110, %v4109
  %v4294 = vpack.c.bf16 %v4146, %v4145
  %v4295 = vpack.c.bf16 %v4182, %v4181
  %v4296 = vpack.c.bf16 %v4020, %v4019
  %v4297 = vpack.c.bf16 %v4218, %v4217
  %v4298 = vpack.c.bf16 %v4254, %v4253
  %v4299 = vpack.c.bf16 %v4290, %v4289
  %v4300 = vpack.c.bf16 %v4112, %v4111
  %v4301 = vpack.c.bf16 %v4148, %v4147
  %v4302 = vpack.c.bf16 %v4184, %v4183
  %v4303 = vpack.c.bf16 %v4022, %v4021
  %v4304 = vpack.c.bf16 %v4220, %v4219
  %v4305 = vpack.c.bf16 %v4256, %v4255
  %v4306 = vpack.c.bf16 %v4292, %v4291
  %v4307 = vld [vmem:[%s11] sm:$0xf]
  %v4308 = vld [vmem:[%s11 + $0x4] sm:$0xf]
  %v4309 = vld [vmem:[%s11 + $0x8] sm:$0xf]
  %v4310 = vld [vmem:[%s11 + $0xc] sm:$0xf]
  %v4311 = vld [vmem:[%s11 + $0x10] sm:$0xf]
  %v4312 = vld [vmem:[%s11 + $0x14] sm:$0xf]
  %v4313 = vld [vmem:[%s11 + $0x18] sm:$0xf]
  %v4314 = vld [vmem:[%s11 + $0x1c] sm:$0xf]
  %v4315 = vld [vmem:[%s11 + $0x20] sm:$0xf]
  %v4316 = vld [vmem:[%s11 + $0x24] sm:$0xf]
  %v4317 = vld [vmem:[%s11 + $0x28] sm:$0xf]
  %v4318 = vld [vmem:[%s11 + $0x2c] sm:$0xf]
  %v4319 = vld [vmem:[%s11 + $0x30] sm:$0xf]
  %v4320 = vld [vmem:[%s11 + $0x34] sm:$0xf]
  %v4321 = vld [vmem:[%s11 + $0x38] sm:$0xf]
  %v4322 = vld [vmem:[%s11 + $0x3c] sm:$0xf]
  %v4323 = vld [vmem:[%s11 + $0x40] sm:$0xf]
  %v4324 = vld [vmem:[%s11 + $0x44] sm:$0xf]
  %v4325 = vld [vmem:[%s11 + $0x48] sm:$0xf]
  %v4326 = vld [vmem:[%s11 + $0x4c] sm:$0xf]
  %v4327 = vld [vmem:[%s11 + $0x50] sm:$0xf]
  %v4328 = vld [vmem:[%s11 + $0x54] sm:$0xf]
  %v4329 = vld [vmem:[%s11 + $0x58] sm:$0xf]
  %v4330 = vld [vmem:[%s11 + $0x5c] sm:$0xf]
  %v4331 = vld [vmem:[%s11 + $0x60] sm:$0xf]
  %v4332 = vld [vmem:[%s11 + $0x64] sm:$0xf]
  %v4333 = vld [vmem:[%s11 + $0x68] sm:$0xf]
  %v4334 = vld [vmem:[%s11 + $0x6c] sm:$0xf]
  %v4335 = vld [vmem:[%s11 + $0x70] sm:$0xf]
  %v4336 = vld [vmem:[%s11 + $0x74] sm:$0xf]
  %v4337 = vld [vmem:[%s11 + $0x78] sm:$0xf]
  %v4338 = vld [vmem:[%s11 + $0x7c] sm:$0xf]
  %v4339 = vld [vmem:[%s11 + $0x80] sm:$0xf]
  %v4340 = vld [vmem:[%s11 + $0x84] sm:$0xf]
  %v4341 = vld [vmem:[%s11 + $0x88] sm:$0xf]
  %v4342 = vld [vmem:[%s11 + $0x8c] sm:$0xf]
  %v4343 = vld [vmem:[%s11 + $0x90] sm:$0xf]
  %v4344 = vld [vmem:[%s11 + $0x94] sm:$0xf]
  %v4345 = vld [vmem:[%s11 + $0x98] sm:$0xf]
  %v4346 = vld [vmem:[%s11 + $0x9c] sm:$0xf]
  %v4347 = vld [vmem:[%s11 + $0xa0] sm:$0xf]
  %v4348 = vld [vmem:[%s11 + $0xa4] sm:$0xf]
  %v4349 = vld [vmem:[%s11 + $0xa8] sm:$0xf]
  %v4350 = vld [vmem:[%s11 + $0xac] sm:$0xf]
  %v4351 = vld [vmem:[%s11 + $0xb0] sm:$0xf]
  %v4352 = vld [vmem:[%s11 + $0xb4] sm:$0xf]
  %v4353 = vld [vmem:[%s11 + $0xb8] sm:$0xf]
  %v4354 = vld [vmem:[%s11 + $0xbc] sm:$0xf]
  %v4355 = vld [vmem:[%s11 + $0xc0] sm:$0xf]
  %v4356 = vld [vmem:[%s11 + $0xc4] sm:$0xf]
  %v4357 = vld [vmem:[%s11 + $0xc8] sm:$0xf]
  %v4358 = vld [vmem:[%s11 + $0xcc] sm:$0xf]
  %v4359 = vld [vmem:[%s11 + $0xd0] sm:$0xf]
  %v4360 = vld [vmem:[%s11 + $0xd4] sm:$0xf]
  %v4361 = vld [vmem:[%s11 + $0xd8] sm:$0xf]
  %v4362 = vld [vmem:[%s11 + $0xdc] sm:$0xf]
  %v4363 = vld [vmem:[%s11 + $0xe0] sm:$0xf]
  %v4364 = vld [vmem:[%s11 + $0xe4] sm:$0xf]
  %v4365 = vld [vmem:[%s11 + $0xe8] sm:$0xf]
  %v4366 = vld [vmem:[%s11 + $0xec] sm:$0xf]
  %v4367 = vld [vmem:[%s11 + $0xf0] sm:$0xf]
  %v4368 = vld [vmem:[%s11 + $0xf4] sm:$0xf]
  %v4369 = vld [vmem:[%s11 + $0xf8] sm:$0xf]
  %v4370 = vld [vmem:[%s11 + $0xfc] sm:$0xf]
  %v4371 = vld [vmem:[%s11 + $0x100] sm:$0xf]
  %v4372 = vld [vmem:[%s11 + $0x104] sm:$0xf]
  %v4373 = vld [vmem:[%s11 + $0x108] sm:$0xf]
  %v4374 = vld [vmem:[%s11 + $0x10c] sm:$0xf]
  %v4375 = vld [vmem:[%s11 + $0x110] sm:$0xf]
  %v4376 = vld [vmem:[%s11 + $0x114] sm:$0xf]
  %v4377 = vld [vmem:[%s11 + $0x118] sm:$0xf]
  %v4378 = vld [vmem:[%s11 + $0x11c] sm:$0xf]
  %v4379 = vld [vmem:[%s11 + $0x120] sm:$0xf]
  %v4380 = vld [vmem:[%s11 + $0x124] sm:$0xf]
  %v4381 = vld [vmem:[%s11 + $0x128] sm:$0xf]
  %v4382 = vld [vmem:[%s11 + $0x12c] sm:$0xf]
  %v4383 = vld [vmem:[%s11 + $0x130] sm:$0xf]
  %v4384 = vld [vmem:[%s11 + $0x134] sm:$0xf]
  %v4385 = vld [vmem:[%s11 + $0x138] sm:$0xf]
  %v4386 = vld [vmem:[%s11 + $0x13c] sm:$0xf]
  %v4387 = vld [vmem:[%s11 + $0x140] sm:$0xf]
  %v4388 = vld [vmem:[%s11 + $0x144] sm:$0xf]
  %v4389 = vld [vmem:[%s11 + $0x148] sm:$0xf]
  %v4390 = vld [vmem:[%s11 + $0x14c] sm:$0xf]
  %v4391 = vld [vmem:[%s11 + $0x150] sm:$0xf]
  %v4392 = vld [vmem:[%s11 + $0x154] sm:$0xf]
  %v4393 = vld [vmem:[%s11 + $0x158] sm:$0xf]
  %v4394 = vld [vmem:[%s11 + $0x15c] sm:$0xf]
  %v4395 = vld [vmem:[%s11 + $0x160] sm:$0xf]
  %v4396 = vld [vmem:[%s11 + $0x164] sm:$0xf]
  %v4397 = vld [vmem:[%s11 + $0x168] sm:$0xf]
  %v4398 = vld [vmem:[%s11 + $0x16c] sm:$0xf]
  %v4399 = vld [vmem:[%s11 + $0x170] sm:$0xf]
  %v4400 = vld [vmem:[%s11 + $0x174] sm:$0xf]
  %v4401 = vld [vmem:[%s11 + $0x178] sm:$0xf]
  %v4402 = vld [vmem:[%s11 + $0x17c] sm:$0xf]
  %v4403 = vld [vmem:[%s11 + $0x180] sm:$0xf]
  %v4404 = vld [vmem:[%s11 + $0x184] sm:$0xf]
  %v4405 = vld [vmem:[%s11 + $0x188] sm:$0xf]
  %v4406 = vld [vmem:[%s11 + $0x18c] sm:$0xf]
  %v4407 = vld [vmem:[%s11 + $0x190] sm:$0xf]
  %v4408 = vld [vmem:[%s11 + $0x194] sm:$0xf]
  %v4409 = vld [vmem:[%s11 + $0x198] sm:$0xf]
  %v4410 = vld [vmem:[%s11 + $0x19c] sm:$0xf]
  %v4411 = vld [vmem:[%s11 + $0x1a0] sm:$0xf]
  %v4412 = vld [vmem:[%s11 + $0x1a4] sm:$0xf]
  %v4413 = vld [vmem:[%s11 + $0x1a8] sm:$0xf]
  %v4414 = vld [vmem:[%s11 + $0x1ac] sm:$0xf]
  %v4415 = vld [vmem:[%s11 + $0x1b0] sm:$0xf]
  %v4416 = vld [vmem:[%s11 + $0x1b4] sm:$0xf]
  %v4417 = vld [vmem:[%s11 + $0x1b8] sm:$0xf]
  %v4418 = vld [vmem:[%s11 + $0x1bc] sm:$0xf]
  %v4419 = vlaneseq
  %v4420 = vshrl.u32 %v4419, 7
  %v4421 = vsub.s32 0, %v4420
  %v4422 = vrot.slane %v4023, %v4421
  %v4535 = vunpack.c.l.b16 %v4307
  %v4536 = vunpack.c.l.b16 %v4308
  %v4537 = vunpack.c.l.b16 %v4309
  %v4538 = vunpack.c.l.b16 %v4310
  %v4539 = vunpack.c.l.b16 %v4311
  %v4540 = vunpack.c.l.b16 %v4312
  %v4541 = vunpack.c.l.b16 %v4313
  %v4542 = vunpack.c.l.b16 %v4314
  %v4543 = vunpack.c.l.b16 %v4315
  %v4544 = vunpack.c.l.b16 %v4316
  %v4545 = vunpack.c.l.b16 %v4317
  %v4546 = vunpack.c.l.b16 %v4318
  %v4547 = vunpack.c.l.b16 %v4319
  %v4548 = vunpack.c.l.b16 %v4320
  %v4549 = vunpack.c.l.b16 %v4321
  %v4550 = vunpack.c.l.b16 %v4322
  %v4551 = vunpack.c.l.b16 %v4323
  %v4552 = vunpack.c.l.b16 %v4324
  %v4553 = vunpack.c.l.b16 %v4325
  %v4554 = vunpack.c.l.b16 %v4326
  %v4555 = vunpack.c.l.b16 %v4327
  %v4556 = vunpack.c.l.b16 %v4328
  %v4557 = vunpack.c.l.b16 %v4329
  %v4558 = vunpack.c.l.b16 %v4330
  %v4559 = vunpack.c.l.b16 %v4331
  %v4560 = vunpack.c.l.b16 %v4332
  %v4561 = vunpack.c.l.b16 %v4333
  %v4562 = vunpack.c.l.b16 %v4334
  %v4563 = vunpack.c.l.b16 %v4335
  %v4564 = vunpack.c.l.b16 %v4336
  %v4565 = vunpack.c.l.b16 %v4337
  %v4566 = vunpack.c.l.b16 %v4338
  %v4567 = vunpack.c.l.b16 %v4339
  %v4568 = vunpack.c.l.b16 %v4340
  %v4569 = vunpack.c.l.b16 %v4341
  %v4570 = vunpack.c.l.b16 %v4342
  %v4571 = vunpack.c.l.b16 %v4343
  %v4572 = vunpack.c.l.b16 %v4344
  %v4573 = vunpack.c.l.b16 %v4345
  %v4574 = vunpack.c.l.b16 %v4346
  %v4575 = vunpack.c.l.b16 %v4347
  %v4576 = vunpack.c.l.b16 %v4348
  %v4577 = vunpack.c.l.b16 %v4349
  %v4578 = vunpack.c.l.b16 %v4350
  %v4579 = vunpack.c.l.b16 %v4351
  %v4580 = vunpack.c.l.b16 %v4352
  %v4581 = vunpack.c.l.b16 %v4353
  %v4582 = vunpack.c.l.b16 %v4354
  %v4583 = vunpack.c.l.b16 %v4355
  %v4584 = vunpack.c.l.b16 %v4356
  %v4585 = vunpack.c.l.b16 %v4357
  %v4586 = vunpack.c.l.b16 %v4358
  %v4587 = vunpack.c.l.b16 %v4359
  %v4588 = vunpack.c.l.b16 %v4360
  %v4589 = vunpack.c.l.b16 %v4361
  %v4590 = vunpack.c.l.b16 %v4362
  %v4591 = vunpack.c.l.b16 %v4363
  %v4592 = vunpack.c.l.b16 %v4364
  %v4593 = vunpack.c.l.b16 %v4365
  %v4594 = vunpack.c.l.b16 %v4366
  %v4595 = vunpack.c.l.b16 %v4367
  %v4596 = vunpack.c.l.b16 %v4368
  %v4597 = vunpack.c.l.b16 %v4369
  %v4598 = vunpack.c.l.b16 %v4370
  %v4599 = vunpack.c.l.b16 %v4371
  %v4600 = vunpack.c.l.b16 %v4372
  %v4601 = vunpack.c.l.b16 %v4373
  %v4602 = vunpack.c.l.b16 %v4374
  %v4603 = vunpack.c.l.b16 %v4375
  %v4604 = vunpack.c.l.b16 %v4376
  %v4605 = vunpack.c.l.b16 %v4377
  %v4606 = vunpack.c.l.b16 %v4378
  %v4607 = vunpack.c.l.b16 %v4379
  %v4608 = vunpack.c.l.b16 %v4380
  %v4609 = vunpack.c.l.b16 %v4381
  %v4610 = vunpack.c.l.b16 %v4382
  %v4611 = vunpack.c.l.b16 %v4383
  %v4612 = vunpack.c.l.b16 %v4384
  %v4613 = vunpack.c.l.b16 %v4385
  %v4614 = vunpack.c.l.b16 %v4386
  %v4615 = vunpack.c.l.b16 %v4387
  %v4616 = vunpack.c.l.b16 %v4388
  %v4617 = vunpack.c.l.b16 %v4389
  %v4618 = vunpack.c.l.b16 %v4390
  %v4619 = vunpack.c.l.b16 %v4391
  %v4620 = vunpack.c.l.b16 %v4392
  %v4621 = vunpack.c.l.b16 %v4393
  %v4622 = vunpack.c.l.b16 %v4394
  %v4623 = vunpack.c.l.b16 %v4395
  %v4624 = vunpack.c.l.b16 %v4396
  %v4625 = vunpack.c.l.b16 %v4397
  %v4626 = vunpack.c.l.b16 %v4398
  %v4627 = vunpack.c.l.b16 %v4399
  %v4628 = vunpack.c.l.b16 %v4400
  %v4629 = vunpack.c.l.b16 %v4401
  %v4630 = vunpack.c.l.b16 %v4402
  %v4631 = vunpack.c.l.b16 %v4403
  %v4632 = vunpack.c.l.b16 %v4404
  %v4633 = vunpack.c.l.b16 %v4405
  %v4634 = vunpack.c.l.b16 %v4406
  %v4635 = vunpack.c.l.b16 %v4407
  %v4636 = vunpack.c.l.b16 %v4408
  %v4637 = vunpack.c.l.b16 %v4409
  %v4638 = vunpack.c.l.b16 %v4410
  %v4639 = vunpack.c.l.b16 %v4411
  %v4640 = vunpack.c.l.b16 %v4412
  %v4641 = vunpack.c.l.b16 %v4413
  %v4642 = vunpack.c.l.b16 %v4414
  %v4643 = vunpack.c.l.b16 %v4415
  %v4644 = vunpack.c.l.b16 %v4416
  %v4645 = vunpack.c.l.b16 %v4417
  %v4646 = vunpack.c.l.b16 %v4418
  %v4647 = vpack.c.b16 %v4536, %v4535
  %v4648 = vpack.c.b16 %v4538, %v4537
  %v4649 = vpack.c.b16 %v4540, %v4539
  %v4650 = vpack.c.b16 %v4542, %v4541
  %v4651 = vpack.c.b16 %v4544, %v4543
  %v4652 = vpack.c.b16 %v4546, %v4545
  %v4653 = vpack.c.b16 %v4548, %v4547
  %v4654 = vpack.c.b16 %v4550, %v4549
  %v4655 = vpack.c.b16 %v4552, %v4551
  %v4656 = vpack.c.b16 %v4554, %v4553
  %v4657 = vpack.c.b16 %v4556, %v4555
  %v4658 = vpack.c.b16 %v4558, %v4557
  %v4659 = vpack.c.b16 %v4560, %v4559
  %v4660 = vpack.c.b16 %v4562, %v4561
  %v4661 = vpack.c.b16 %v4564, %v4563
  %v4662 = vpack.c.b16 %v4566, %v4565
  %v4663 = vpack.c.b16 %v4568, %v4567
  %v4664 = vpack.c.b16 %v4570, %v4569
  %v4665 = vpack.c.b16 %v4572, %v4571
  %v4666 = vpack.c.b16 %v4574, %v4573
  %v4667 = vpack.c.b16 %v4576, %v4575
  %v4668 = vpack.c.b16 %v4578, %v4577
  %v4669 = vpack.c.b16 %v4580, %v4579
  %v4670 = vpack.c.b16 %v4582, %v4581
  %v4671 = vpack.c.b16 %v4584, %v4583
  %v4672 = vpack.c.b16 %v4586, %v4585
  %v4673 = vpack.c.b16 %v4588, %v4587
  %v4674 = vpack.c.b16 %v4590, %v4589
  %v4675 = vpack.c.b16 %v4592, %v4591
  %v4676 = vpack.c.b16 %v4594, %v4593
  %v4677 = vpack.c.b16 %v4596, %v4595
  %v4678 = vpack.c.b16 %v4598, %v4597
  %v4679 = vpack.c.b16 %v4600, %v4599
  %v4680 = vpack.c.b16 %v4602, %v4601
  %v4681 = vpack.c.b16 %v4604, %v4603
  %v4682 = vpack.c.b16 %v4606, %v4605
  %v4683 = vpack.c.b16 %v4608, %v4607
  %v4684 = vpack.c.b16 %v4610, %v4609
  %v4685 = vpack.c.b16 %v4612, %v4611
  %v4686 = vpack.c.b16 %v4614, %v4613
  %v4687 = vpack.c.b16 %v4616, %v4615
  %v4688 = vpack.c.b16 %v4618, %v4617
  %v4689 = vpack.c.b16 %v4620, %v4619
  %v4690 = vpack.c.b16 %v4622, %v4621
  %v4691 = vpack.c.b16 %v4624, %v4623
  %v4692 = vpack.c.b16 %v4626, %v4625
  %v4693 = vpack.c.b16 %v4628, %v4627
  %v4694 = vpack.c.b16 %v4630, %v4629
  %v4695 = vpack.c.b16 %v4632, %v4631
  %v4696 = vpack.c.b16 %v4634, %v4633
  %v4697 = vpack.c.b16 %v4636, %v4635
  %v4698 = vpack.c.b16 %v4638, %v4637
  %v4699 = vpack.c.b16 %v4640, %v4639
  %v4700 = vpack.c.b16 %v4642, %v4641
  %v4701 = vpack.c.b16 %v4644, %v4643
  %v4702 = vpack.c.b16 %v4646, %v4645
  %4759 = vmatprep.subr.bf16.mxu0 0
  %4760 = vmatpush1.bf16.msra.mxu0 %v4647
  %4761 = vmatprep.subr.bf16.mxu0 0
  %4762 = vmatpush1.bf16.msra.mxu0 %v4648
  %4763 = vmatprep.subr.bf16.mxu0 0
  %4764 = vmatpush1.bf16.msra.mxu0 %v4649
  %4765 = vmatprep.subr.bf16.mxu0 0
  %4766 = vmatpush1.bf16.msra.mxu0 %v4650
  %4767 = vmatprep.subr.bf16.mxu0 0
  %4768 = vmatpush1.bf16.msra.mxu0 %v4651
  %4769 = vmatprep.subr.bf16.mxu0 0
  %4770 = vmatpush1.bf16.msra.mxu0 %v4652
  %4771 = vmatprep.subr.bf16.mxu0 0
  %4772 = vmatpush1.bf16.msra.mxu0 %v4653
  %4773 = vmatprep.subr.bf16.mxu0 0
  %4774 = vmatpush1.bf16.msra.mxu0 %v4654
  %4775 = vmatprep.subr.bf16.mxu0 0
  %4776 = vmatpush1.bf16.msra.mxu0 %v4655
  %4777 = vmatprep.subr.bf16.mxu0 0
  %4778 = vmatpush1.bf16.msra.mxu0 %v4656
  %4779 = vmatprep.subr.bf16.mxu0 0
  %4780 = vmatpush1.bf16.msra.mxu0 %v4657
  %4781 = vmatprep.subr.bf16.mxu0 0
  %4782 = vmatpush1.bf16.msra.mxu0 %v4658
  %4783 = vmatprep.subr.bf16.mxu0 0
  %4784 = vmatpush1.bf16.msra.mxu0 %v4659
  %4785 = vmatprep.subr.bf16.mxu0 0
  %4786 = vmatpush1.bf16.msra.mxu0 %v4660
  %4787 = vmatprep.subr.bf16.mxu0 0
  %4788 = vmatpush1.bf16.msra.mxu0 %v4661
  %4789 = vmatprep.subr.bf16.mxu0 0
  %4790 = vmatpush1.bf16.msra.mxu0 %v4662
  %4791 = vmatprep.mubr.bf16.mxu0 %v4294
  %4792 = vmatmul.mubr.bf16.gmra.mrb[0].mxu0 %v4293
  %v4793 = vpop.f32.mrb[0].mxu0
  %v4794 = vadd.f32 %v4422, %v4793
  %v4795 = vpop.f32.mrb[0].mxu0
  %v4796 = vpop.f32.mrb[0].mxu0
  %v4797 = vadd.f32 %v4422, %v4796
  %v4798 = vpop.f32.mrb[0].mxu0
  %4799 = vmatprep.mubr.bf16.mxu0 %v4301
  %4800 = vmatmul.mubr.bf16.gmra.mrb[0].mxu0 %v4300
  %v4801 = vpop.f32.mrb[0].mxu0
  %v4802 = vadd.f32 %v4422, %v4801
  %v4803 = vpop.f32.mrb[0].mxu0
  %v4804 = vpop.f32.mrb[0].mxu0
  %v4805 = vadd.f32 %v4422, %v4804
  %v4806 = vpop.f32.mrb[0].mxu0
  %4807 = vdwg.mxu0
  %4808 = vmatprep.subr.bf16.mxu0 0
  %4809 = vmatpush1.bf16.msra.mxu0 %v4663
  %4810 = vmatprep.subr.bf16.mxu0 0
  %4811 = vmatpush1.bf16.msra.mxu0 %v4664
  %4812 = vmatprep.subr.bf16.mxu0 0
  %4813 = vmatpush1.bf16.msra.mxu0 %v4665
  %4814 = vmatprep.subr.bf16.mxu0 0
  %4815 = vmatpush1.bf16.msra.mxu0 %v4666
  %4816 = vmatprep.subr.bf16.mxu0 0
  %4817 = vmatpush1.bf16.msra.mxu0 %v4667
  %4818 = vmatprep.subr.bf16.mxu0 0
  %4819 = vmatpush1.bf16.msra.mxu0 %v4668
  %4820 = vmatprep.subr.bf16.mxu0 0
  %4821 = vmatpush1.bf16.msra.mxu0 %v4669
  %4822 = vmatprep.subr.bf16.mxu0 0
  %4823 = vmatpush1.bf16.msra.mxu0 %v4670
  %4824 = vmatprep.subr.bf16.mxu0 0
  %4825 = vmatpush1.bf16.msra.mxu0 %v4671
  %4826 = vmatprep.subr.bf16.mxu0 0
  %4827 = vmatpush1.bf16.msra.mxu0 %v4672
  %4828 = vmatprep.subr.bf16.mxu0 0
  %4829 = vmatpush1.bf16.msra.mxu0 %v4673
  %4830 = vmatprep.subr.bf16.mxu0 0
  %4831 = vmatpush1.bf16.msra.mxu0 %v4674
  %4832 = vmatprep.subr.bf16.mxu0 0
  %4833 = vmatpush1.bf16.msra.mxu0 %v4675
  %4834 = vmatprep.subr.bf16.mxu0 0
  %4835 = vmatpush1.bf16.msra.mxu0 %v4676
  %4836 = vmatprep.subr.bf16.mxu0 0
  %4837 = vmatpush1.bf16.msra.mxu0 %v4677
  %4838 = vmatprep.subr.bf16.mxu0 0
  %4839 = vmatpush1.bf16.msra.mxu0 %v4678
  %4840 = vmatprep.mubr.bf16.mxu0 %v4296
  %4841 = vmatmul.mubr.bf16.gmra.mrb[0].mxu0 %v4295
  %v4842 = vpop.f32.mrb[0].mxu0
  %v4843 = vadd.f32 %v4794, %v4842
  %v4844 = vpop.f32.mrb[0].mxu0
  %v4845 = vpop.f32.mrb[0].mxu0
  %v4846 = vadd.f32 %v4797, %v4845
  %v4847 = vpop.f32.mrb[0].mxu0
  %4848 = vmatprep.mubr.bf16.mxu0 %v4303
  %4849 = vmatmul.mubr.bf16.gmra.mrb[0].mxu0 %v4302
  %v4850 = vpop.f32.mrb[0].mxu0
  %v4851 = vadd.f32 %v4802, %v4850
  %v4852 = vpop.f32.mrb[0].mxu0
  %v4853 = vpop.f32.mrb[0].mxu0
  %v4854 = vadd.f32 %v4805, %v4853
  %v4855 = vpop.f32.mrb[0].mxu0
  %4856 = vdwg.mxu0
  %4857 = vmatprep.subr.bf16.mxu0 0
  %4858 = vmatpush1.bf16.msra.mxu0 %v4679
  %4859 = vmatprep.subr.bf16.mxu0 0
  %4860 = vmatpush1.bf16.msra.mxu0 %v4680
  %4861 = vmatprep.subr.bf16.mxu0 0
  %4862 = vmatpush1.bf16.msra.mxu0 %v4681
  %4863 = vmatprep.subr.bf16.mxu0 0
  %4864 = vmatpush1.bf16.msra.mxu0 %v4682
  %4865 = vmatprep.subr.bf16.mxu0 0
  %4866 = vmatpush1.bf16.msra.mxu0 %v4683
  %4867 = vmatprep.subr.bf16.mxu0 0
  %4868 = vmatpush1.bf16.msra.mxu0 %v4684
  %4869 = vmatprep.subr.bf16.mxu0 0
  %4870 = vmatpush1.bf16.msra.mxu0 %v4685
  %4871 = vmatprep.subr.bf16.mxu0 0
  %4872 = vmatpush1.bf16.msra.mxu0 %v4686
  %4873 = vmatprep.subr.bf16.mxu0 0
  %4874 = vmatpush1.bf16.msra.mxu0 %v4687
  %4875 = vmatprep.subr.bf16.mxu0 0
  %4876 = vmatpush1.bf16.msra.mxu0 %v4688
  %4877 = vmatprep.subr.bf16.mxu0 0
  %4878 = vmatpush1.bf16.msra.mxu0 %v4689
  %4879 = vmatprep.subr.bf16.mxu0 0
  %4880 = vmatpush1.bf16.msra.mxu0 %v4690
  %4881 = vmatprep.subr.bf16.mxu0 0
  %4882 = vmatpush1.bf16.msra.mxu0 %v4691
  %4883 = vmatprep.subr.bf16.mxu0 0
  %4884 = vmatpush1.bf16.msra.mxu0 %v4692
  %4885 = vmatprep.subr.bf16.mxu0 0
  %4886 = vmatpush1.bf16.msra.mxu0 %v4693
  %4887 = vmatprep.subr.bf16.mxu0 0
  %4888 = vmatpush1.bf16.msra.mxu0 %v4694
  %4889 = vmatprep.mubr.bf16.mxu0 %v4298
  %4890 = vmatmul.mubr.bf16.gmra.mrb[0].mxu0 %v4297
  %v4891 = vpop.f32.mrb[0].mxu0
  %v4892 = vadd.f32 %v4843, %v4891
  %v4893 = vpop.f32.mrb[0].mxu0
  %v4894 = vpop.f32.mrb[0].mxu0
  %v4895 = vadd.f32 %v4846, %v4894
  %v4896 = vpop.f32.mrb[0].mxu0
  %4897 = vmatprep.mubr.bf16.mxu0 %v4305
  %4898 = vmatmul.mubr.bf16.gmra.mrb[0].mxu0 %v4304
  %v4899 = vpop.f32.mrb[0].mxu0
  %v4900 = vadd.f32 %v4851, %v4899
  %v4901 = vpop.f32.mrb[0].mxu0
  %v4902 = vpop.f32.mrb[0].mxu0
  %v4903 = vadd.f32 %v4854, %v4902
  %v4904 = vpop.f32.mrb[0].mxu0
  %4905 = vdwg.mxu0
  %4906 = vmatprep.subr.bf16.mxu0 0
  %4907 = vmatpush1.bf16.msra.mxu0 %v4695
  %4908 = vmatprep.subr.bf16.mxu0 0
  %4909 = vmatpush1.bf16.msra.mxu0 %v4696
  %4910 = vmatprep.subr.bf16.mxu0 0
  %4911 = vmatpush1.bf16.msra.mxu0 %v4697
  %4912 = vmatprep.subr.bf16.mxu0 0
  %4913 = vmatpush1.bf16.msra.mxu0 %v4698
  %4914 = vmatprep.subr.bf16.mxu0 0
  %4915 = vmatpush1.bf16.msra.mxu0 %v4699
  %4916 = vmatprep.subr.bf16.mxu0 0
  %4917 = vmatpush1.bf16.msra.mxu0 %v4700
  %4918 = vmatprep.subr.bf16.mxu0 0
  %4919 = vmatpush1.bf16.msra.mxu0 %v4701
  %4920 = vmatprep.subr.bf16.mxu0 0
  %4921 = vmatpush1.bf16.msra.mxu0 %v4702
  %4922 = vmatprep.subr.bf16.mxu0 0
  %4923 = vmatpush1.bf16.msra.mxu0 0
  %4924 = vmatprep.subr.bf16.mxu0 0
  %4925 = vmatpush1.bf16.msra.mxu0 0
  %4926 = vmatprep.subr.bf16.mxu0 0
  %4927 = vmatpush1.bf16.msra.mxu0 0
  %4928 = vmatprep.subr.bf16.mxu0 0
  %4929 = vmatpush1.bf16.msra.mxu0 0
  %4930 = vmatprep.subr.bf16.mxu0 0
  %4931 = vmatpush1.bf16.msra.mxu0 0
  %4932 = vmatprep.subr.bf16.mxu0 0
  %4933 = vmatpush1.bf16.msra.mxu0 0
  %4934 = vmatprep.subr.bf16.mxu0 0
  %4935 = vmatpush1.bf16.msra.mxu0 0
  %4936 = vmatprep.subr.bf16.mxu0 0
  %4937 = vmatpush1.bf16.msra.mxu0 0
  %4938 = vmatprep.mubr.bf16.mxu0 0
  %4939 = vmatmul.mubr.bf16.gmra.mrb[0].mxu0 %v4299
  %v4940 = vpop.f32.mrb[0].mxu0
  %v4941 = vadd.f32 %v4892, %v4940
  %v4942 = vpop.f32.mrb[0].mxu0
  %v4943 = vpop.f32.mrb[0].mxu0
  %v4944 = vadd.f32 %v4895, %v4943
  %v4945 = vpop.f32.mrb[0].mxu0
  %4946 = vmatprep.mubr.bf16.mxu0 0
  %4947 = vmatmul.mubr.bf16.gmra.mrb[0].mxu0 %v4306
  %v4948 = vpop.f32.mrb[0].mxu0
  %v4949 = vadd.f32 %v4900, %v4948
  %v4950 = vpop.f32.mrb[0].mxu0
  %v4951 = vpop.f32.mrb[0].mxu0
  %v4952 = vadd.f32 %v4903, %v4951
  %v4953 = vpop.f32.mrb[0].mxu0
  %4954 = vdwg.mxu0
  %v4955 = vld [vmem:[%s3] sm:$0xff]
  %v4956 = vld [vmem:[%s3 + $0x8] sm:$0xff]
  %v4957 = vld [vmem:[%s3 + $0x10] sm:$0xff]
  %v4958 = vld [vmem:[%s3 + $0x18] sm:$0xff]
  %v4959 = vld [vmem:[%s3 + $0x20] sm:$0xff]
  %v4960 = vld [vmem:[%s3 + $0x28] sm:$0xff]
  %v4961 = vld [vmem:[%s3 + $0x30] sm:$0xff]
  %v4962 = vld [vmem:[%s3 + $0x38] sm:$0xff]
  %v4963 = vld [vmem:[%s3 + $0x40] sm:$0xff]
  %v4964 = vld [vmem:[%s3 + $0x48] sm:$0xff]
  %v4965 = vld [vmem:[%s3 + $0x50] sm:$0xff]
  %v4966 = vld [vmem:[%s3 + $0x58] sm:$0xff]
  %v4967 = vld [vmem:[%s3 + $0x60] sm:$0xff]
  %v4968 = vld [vmem:[%s3 + $0x68] sm:$0xff]
  %v4969 = vld [vmem:[%s3 + $0x70] sm:$0xff]
  %v4970 = vld [vmem:[%s3 + $0x78] sm:$0xff]
  %4971 = vmatprep.subr.mxu0 0.0
  %4972 = vmatpush1.msra.mxu0 %v4955
  %4973 = vmatprep.subr.mxu0 0.0
  %4974 = vmatpush1.msra.mxu0 %v4956
  %4975 = vmatprep.subr.mxu0 0.0
  %4976 = vmatpush1.msra.mxu0 %v4957
  %4977 = vmatprep.subr.mxu0 0.0
  %4978 = vmatpush1.msra.mxu0 %v4958
  %4979 = vmatprep.subr.mxu0 0.0
  %4980 = vmatpush1.msra.mxu0 %v4959
  %4981 = vmatprep.subr.mxu0 0.0
  %4982 = vmatpush1.msra.mxu0 %v4960
  %4983 = vmatprep.subr.mxu0 0.0
  %4984 = vmatpush1.msra.mxu0 %v4961
  %4985 = vmatprep.subr.mxu0 0.0
  %4986 = vmatpush1.msra.mxu0 %v4962
  %4987 = vmatprep.subr.mxu0 0.0
  %4988 = vmatpush1.msra.mxu0 %v4963
  %4989 = vmatprep.subr.mxu0 0.0
  %4990 = vmatpush1.msra.mxu0 %v4964
  %4991 = vmatprep.subr.mxu0 0.0
  %4992 = vmatpush1.msra.mxu0 %v4965
  %4993 = vmatprep.subr.mxu0 0.0
  %4994 = vmatpush1.msra.mxu0 %v4966
  %4995 = vmatprep.subr.mxu0 0.0
  %4996 = vmatpush1.msra.mxu0 %v4967
  %4997 = vmatprep.subr.mxu0 0.0
  %4998 = vmatpush1.msra.mxu0 %v4968
  %4999 = vmatprep.subr.mxu0 0.0
  %5000 = vmatpush1.msra.mxu0 %v4969
  %5001 = vmatprep.subr.mxu0 0.0
  %5002 = vmatpush1.msra.mxu0 %v4970
  %5003 = vmatprep.subr.mxu0 0.0
  %5004 = vmatpush1.msra.mxu0 0.0
  %5005 = vmatprep.subr.mxu0 0.0
  %5006 = vmatpush1.msra.mxu0 0.0
  %5007 = vmatprep.subr.mxu0 0.0
  %5008 = vmatpush1.msra.mxu0 0.0
  %5009 = vmatprep.subr.mxu0 0.0
  %5010 = vmatpush1.msra.mxu0 0.0
  %5011 = vmatprep.subr.mxu0 0.0
  %5012 = vmatpush1.msra.mxu0 0.0
  %5013 = vmatprep.subr.mxu0 0.0
  %5014 = vmatpush1.msra.mxu0 0.0
  %5015 = vmatprep.subr.mxu0 0.0
  %5016 = vmatpush1.msra.mxu0 0.0
  %5017 = vmatprep.subr.mxu0 0.0
  %5018 = vmatpush1.msra.mxu0 0.0
  %5019 = vmatprep.subr.mxu0 0.0
  %5020 = vmatpush1.msra.mxu0 0.0
  %5021 = vmatprep.subr.mxu0 0.0
  %5022 = vmatpush1.msra.mxu0 0.0
  %5023 = vmatprep.subr.mxu0 0.0
  %5024 = vmatpush1.msra.mxu0 0.0
  %5025 = vmatprep.subr.mxu0 0.0
  %5026 = vmatpush1.msra.mxu0 0.0
  %5027 = vmatprep.subr.mxu0 0.0
  %5028 = vmatpush1.msra.mxu0 0.0
  %5029 = vmatprep.subr.mxu0 0.0
  %5030 = vmatpush1.msra.mxu0 0.0
  %5031 = vmatprep.subr.mxu0 0.0
  %5032 = vmatpush1.msra.mxu0 0.0
  %5033 = vmatprep.subr.mxu0 0.0
  %5034 = vmatpush1.msra.mxu0 0.0
  %5035 = vmatprep.mubr.f32.mxu0 0.0
  %5036 = vmatmul.mubr.f32.gmra.mrb[0].mxu0 %v4941
  %v5037 = vpop.f32.mrb[0].mxu0
  %v5038 = vadd.f32 0.0, %v5037
  %v5039 = vpop.f32.mrb[0].mxu0
  %5040 = vmatprep.mubr.f32.mxu0 0.0
  %5041 = vmatmul.mubr.f32.gmra.mrb[0].mxu0 %v4944
  %v5042 = vpop.f32.mrb[0].mxu0
  %v5043 = vadd.f32 0.0, %v5042
  %v5044 = vpop.f32.mrb[0].mxu0
  %5045 = vmatprep.mubr.f32.mxu0 0.0
  %5046 = vmatmul.mubr.f32.gmra.mrb[0].mxu0 %v4949
  %v5047 = vpop.f32.mrb[0].mxu0
  %v5048 = vadd.f32 0.0, %v5047
  %v5049 = vpop.f32.mrb[0].mxu0
  %5050 = vmatprep.mubr.f32.mxu0 0.0
  %5051 = vmatmul.mubr.f32.gmra.mrb[0].mxu0 %v4952
  %v5052 = vpop.f32.mrb[0].mxu0
  %v5053 = vadd.f32 0.0, %v5052
  %v5054 = vpop.f32.mrb[0].mxu0
  %5055 = vdwg.mxu0
  %v5056 = vsub.f32 %v4941, %v5038
  %v5057 = vsub.f32 %v4944, %v5043
  %v5058 = vsub.f32 %v4949, %v5048
  %v5059 = vsub.f32 %v4952, %v5053
  %v5060 = vmul.f32 %v5056, %v5056
  %v5061 = vmul.f32 %v5057, %v5057
  %v5062 = vmul.f32 %v5058, %v5058
  %v5063 = vmul.f32 %v5059, %v5059
  %5064 = vmatprep.subr.mxu0 0.0
  %5065 = vmatpush1.msra.mxu0 %v4955
  %5066 = vmatprep.subr.mxu0 0.0
  %5067 = vmatpush1.msra.mxu0 %v4956
  %5068 = vmatprep.subr.mxu0 0.0
  %5069 = vmatpush1.msra.mxu0 %v4957
  %5070 = vmatprep.subr.mxu0 0.0
  %5071 = vmatpush1.msra.mxu0 %v4958
  %5072 = vmatprep.subr.mxu0 0.0
  %5073 = vmatpush1.msra.mxu0 %v4959
  %5074 = vmatprep.subr.mxu0 0.0
  %5075 = vmatpush1.msra.mxu0 %v4960
  %5076 = vmatprep.subr.mxu0 0.0
  %5077 = vmatpush1.msra.mxu0 %v4961
  %5078 = vmatprep.subr.mxu0 0.0
  %5079 = vmatpush1.msra.mxu0 %v4962
  %5080 = vmatprep.subr.mxu0 0.0
  %5081 = vmatpush1.msra.mxu0 %v4963
  %5082 = vmatprep.subr.mxu0 0.0
  %5083 = vmatpush1.msra.mxu0 %v4964
  %5084 = vmatprep.subr.mxu0 0.0
  %5085 = vmatpush1.msra.mxu0 %v4965
  %5086 = vmatprep.subr.mxu0 0.0
  %5087 = vmatpush1.msra.mxu0 %v4966
  %5088 = vmatprep.subr.mxu0 0.0
  %5089 = vmatpush1.msra.mxu0 %v4967
  %5090 = vmatprep.subr.mxu0 0.0
  %5091 = vmatpush1.msra.mxu0 %v4968
  %5092 = vmatprep.subr.mxu0 0.0
  %5093 = vmatpush1.msra.mxu0 %v4969
  %5094 = vmatprep.subr.mxu0 0.0
  %5095 = vmatpush1.msra.mxu0 %v4970
  %5096 = vmatprep.subr.mxu0 0.0
  %5097 = vmatpush1.msra.mxu0 0.0
  %5098 = vmatprep.subr.mxu0 0.0
  %5099 = vmatpush1.msra.mxu0 0.0
  %5100 = vmatprep.subr.mxu0 0.0
  %5101 = vmatpush1.msra.mxu0 0.0
  %5102 = vmatprep.subr.mxu0 0.0
  %5103 = vmatpush1.msra.mxu0 0.0
  %5104 = vmatprep.subr.mxu0 0.0
  %5105 = vmatpush1.msra.mxu0 0.0
  %5106 = vmatprep.subr.mxu0 0.0
  %5107 = vmatpush1.msra.mxu0 0.0
  %5108 = vmatprep.subr.mxu0 0.0
  %5109 = vmatpush1.msra.mxu0 0.0
  %5110 = vmatprep.subr.mxu0 0.0
  %5111 = vmatpush1.msra.mxu0 0.0
  %5112 = vmatprep.subr.mxu0 0.0
  %5113 = vmatpush1.msra.mxu0 0.0
  %5114 = vmatprep.subr.mxu0 0.0
  %5115 = vmatpush1.msra.mxu0 0.0
  %5116 = vmatprep.subr.mxu0 0.0
  %5117 = vmatpush1.msra.mxu0 0.0
  %5118 = vmatprep.subr.mxu0 0.0
  %5119 = vmatpush1.msra.mxu0 0.0
  %5120 = vmatprep.subr.mxu0 0.0
  %5121 = vmatpush1.msra.mxu0 0.0
  %5122 = vmatprep.subr.mxu0 0.0
  %5123 = vmatpush1.msra.mxu0 0.0
  %5124 = vmatprep.subr.mxu0 0.0
  %5125 = vmatpush1.msra.mxu0 0.0
  %5126 = vmatprep.subr.mxu0 0.0
  %5127 = vmatpush1.msra.mxu0 0.0
  %5128 = vmatprep.mubr.f32.mxu0 0.0
  %5129 = vmatmul.mubr.f32.gmra.mrb[0].mxu0 %v5060
  %v5130 = vpop.f32.mrb[0].mxu0
  %v5131 = vadd.f32 1e-06, %v5130
  %v5132 = vpop.f32.mrb[0].mxu0
  %5133 = vmatprep.mubr.f32.mxu0 0.0
  %5134 = vmatmul.mubr.f32.gmra.mrb[0].mxu0 %v5061
  %v5135 = vpop.f32.mrb[0].mxu0
  %v5136 = vadd.f32 1e-06, %v5135
  %v5137 = vpop.f32.mrb[0].mxu0
  %5138 = vmatprep.mubr.f32.mxu0 0.0
  %5139 = vmatmul.mubr.f32.gmra.mrb[0].mxu0 %v5062
  %v5140 = vpop.f32.mrb[0].mxu0
  %v5141 = vadd.f32 1e-06, %v5140
  %v5142 = vpop.f32.mrb[0].mxu0
  %5143 = vmatprep.mubr.f32.mxu0 0.0
  %5144 = vmatmul.mubr.f32.gmra.mrb[0].mxu0 %v5063
  %v5145 = vpop.f32.mrb[0].mxu0
  %v5146 = vadd.f32 1e-06, %v5145
  %v5147 = vpop.f32.mrb[0].mxu0
  %5148 = vdwg.mxu0
  %v5149 = vrsqrt.pop %v5131
  %v5150 = vrsqrt.pop %v5136
  %v5151 = vrsqrt.pop %v5141
  %v5152 = vrsqrt.pop %v5146
  %v5153 = vmul.f32 %v5056, %v5149
  %v5154 = vmul.f32 %v5057, %v5150
  %v5155 = vmul.f32 %v5058, %v5151
  %v5156 = vmul.f32 %v5059, %v5152
  %v5157 = vlaneseq
  %v5158 = vshrl.u32 %v5157, 7
  %v5159 = vsub.s32 0, %v5158
  %v5160 = vrot.slane %v4024, %v5159
  %v5161 = vmul.f32 %v5153, %v5160
  %v5162 = vmul.f32 %v5154, %v5160
  %v5163 = vmul.f32 %v5155, %v5160
  %v5164 = vmul.f32 %v5156, %v5160
  %v5165 = vlaneseq
  %v5166 = vshrl.u32 %v5165, 7
  %v5167 = vsub.s32 0, %v5166
  %v5168 = vrot.slane %v4025, %v5167
  %v5169 = vadd.f32 %v5161, %v5168
  %v5170 = vadd.f32 %v5162, %v5168
  %v5171 = vadd.f32 %v5163, %v5168
  %v5172 = vadd.f32 %v5164, %v5168
  %v5173 = vpack.c.bf16 %v5170, %v5169
  %v5174 = vpack.c.bf16 %v5172, %v5171
  %v5175 = vld [vmem:[%s12] sm:$0xff]
  %v5176 = vld [vmem:[%s12 + $0x8] sm:$0xff]
  %v5177 = vld [vmem:[%s12 + $0x10] sm:$0xff]
  %v5178 = vld [vmem:[%s12 + $0x18] sm:$0xff]
  %v5179 = vld [vmem:[%s12 + $0x20] sm:$0xff]
  %v5180 = vld [vmem:[%s12 + $0x28] sm:$0xff]
  %v5181 = vld [vmem:[%s12 + $0x30] sm:$0xff]
  %v5182 = vld [vmem:[%s12 + $0x38] sm:$0xff]
  %v5183 = vld [vmem:[%s12 + $0x40] sm:$0xff]
  %v5184 = vld [vmem:[%s12 + $0x48] sm:$0xff]
  %v5185 = vld [vmem:[%s12 + $0x50] sm:$0xff]
  %v5186 = vld [vmem:[%s12 + $0x58] sm:$0xff]
  %v5187 = vld [vmem:[%s12 + $0x60] sm:$0xff]
  %v5188 = vld [vmem:[%s12 + $0x68] sm:$0xff]
  %v5189 = vld [vmem:[%s12 + $0x70] sm:$0xff]
  %v5190 = vld [vmem:[%s12 + $0x78] sm:$0xff]
  %v5191 = vld [vmem:[%s12 + $0x80] sm:$0xff]
  %v5192 = vld [vmem:[%s12 + $0x88] sm:$0xff]
  %v5193 = vld [vmem:[%s12 + $0x90] sm:$0xff]
  %v5194 = vld [vmem:[%s12 + $0x98] sm:$0xff]
  %v5195 = vld [vmem:[%s12 + $0xa0] sm:$0xff]
  %v5196 = vld [vmem:[%s12 + $0xa8] sm:$0xff]
  %v5197 = vld [vmem:[%s12 + $0xb0] sm:$0xff]
  %v5198 = vld [vmem:[%s12 + $0xb8] sm:$0xff]
  %v5199 = vld [vmem:[%s12 + $0xc0] sm:$0xff]
  %v5200 = vld [vmem:[%s12 + $0xc8] sm:$0xff]
  %v5201 = vld [vmem:[%s12 + $0xd0] sm:$0xff]
  %v5202 = vld [vmem:[%s12 + $0xd8] sm:$0xff]
  %v5203 = vld [vmem:[%s12 + $0xe0] sm:$0xff]
  %v5204 = vld [vmem:[%s12 + $0xe8] sm:$0xff]
  %v5205 = vld [vmem:[%s12 + $0xf0] sm:$0xff]
  %v5206 = vld [vmem:[%s12 + $0xf8] sm:$0xff]
  %v5208 = vlaneseq
  %v5209 = vshrl.u32 %v5208, 7
  %v5210 = vsub.s32 0, %v5209
  %v5211 = vrot.slane %v4027, %v5210
  %v5212 = vlaneseq
  %v5213 = vshrl.u32 %v5212, 7
  %v5214 = vsub.s32 1, %v5213
  %v5215 = vrot.slane %v4027, %v5214
  %v5216 = vlaneseq
  %v5217 = vshrl.u32 %v5216, 7
  %v5218 = vsub.s32 2, %v5217
  %v5219 = vrot.slane %v4027, %v5218
  %v5220 = vlaneseq
  %v5221 = vshrl.u32 %v5220, 7
  %v5222 = vsub.s32 3, %v5221
  %v5223 = vrot.slane %v4027, %v5222
  %v5260 = vunpack.c.l.b16 %v5175
  %v5261 = vunpack.c.h.b16 %v5175
  %v5262 = vunpack.c.l.b16 %v5176
  %v5263 = vunpack.c.h.b16 %v5176
  %v5264 = vunpack.c.l.b16 %v5177
  %v5265 = vunpack.c.h.b16 %v5177
  %v5266 = vunpack.c.l.b16 %v5178
  %v5267 = vunpack.c.h.b16 %v5178
  %v5268 = vunpack.c.l.b16 %v5179
  %v5269 = vunpack.c.h.b16 %v5179
  %v5270 = vunpack.c.l.b16 %v5180
  %v5271 = vunpack.c.h.b16 %v5180
  %v5272 = vunpack.c.l.b16 %v5181
  %v5273 = vunpack.c.h.b16 %v5181
  %v5274 = vunpack.c.l.b16 %v5182
  %v5275 = vunpack.c.h.b16 %v5182
  %v5276 = vunpack.c.l.b16 %v5183
  %v5277 = vunpack.c.h.b16 %v5183
  %v5278 = vunpack.c.l.b16 %v5184
  %v5279 = vunpack.c.h.b16 %v5184
  %v5280 = vunpack.c.l.b16 %v5185
  %v5281 = vunpack.c.h.b16 %v5185
  %v5282 = vunpack.c.l.b16 %v5186
  %v5283 = vunpack.c.h.b16 %v5186
  %v5284 = vunpack.c.l.b16 %v5187
  %v5285 = vunpack.c.h.b16 %v5187
  %v5286 = vunpack.c.l.b16 %v5188
  %v5287 = vunpack.c.h.b16 %v5188
  %v5288 = vunpack.c.l.b16 %v5189
  %v5289 = vunpack.c.h.b16 %v5189
  %v5290 = vunpack.c.l.b16 %v5190
  %v5291 = vunpack.c.h.b16 %v5190
  %v5292 = vunpack.c.l.b16 %v5191
  %v5293 = vunpack.c.h.b16 %v5191
  %v5294 = vunpack.c.l.b16 %v5192
  %v5295 = vunpack.c.h.b16 %v5192
  %v5296 = vunpack.c.l.b16 %v5193
  %v5297 = vunpack.c.h.b16 %v5193
  %v5298 = vunpack.c.l.b16 %v5194
  %v5299 = vunpack.c.h.b16 %v5194
  %v5300 = vunpack.c.l.b16 %v5195
  %v5301 = vunpack.c.h.b16 %v5195
  %v5302 = vunpack.c.l.b16 %v5196
  %v5303 = vunpack.c.h.b16 %v5196
  %v5304 = vunpack.c.l.b16 %v5197
  %v5305 = vunpack.c.h.b16 %v5197
  %v5306 = vunpack.c.l.b16 %v5198
  %v5307 = vunpack.c.h.b16 %v5198
  %v5308 = vunpack.c.l.b16 %v5199
  %v5309 = vunpack.c.h.b16 %v5199
  %v5310 = vunpack.c.l.b16 %v5200
  %v5311 = vunpack.c.h.b16 %v5200
  %v5312 = vunpack.c.l.b16 %v5201
  %v5313 = vunpack.c.h.b16 %v5201
  %v5314 = vunpack.c.l.b16 %v5202
  %v5315 = vunpack.c.h.b16 %v5202
  %v5316 = vunpack.c.l.b16 %v5203
  %v5317 = vunpack.c.h.b16 %v5203
  %v5318 = vunpack.c.l.b16 %v5204
  %v5319 = vunpack.c.h.b16 %v5204
  %v5320 = vunpack.c.l.b16 %v5205
  %v5321 = vunpack.c.h.b16 %v5205
  %v5322 = vunpack.c.l.b16 %v5206
  %v5323 = vunpack.c.h.b16 %v5206
  %v5324 = vpack.c.b16 %v5264, %v5260
  %v5325 = vpack.c.b16 %v5265, %v5261
  %v5326 = vpack.c.b16 %v5266, %v5262
  %v5327 = vpack.c.b16 %v5267, %v5263
  %v5328 = vpack.c.b16 %v5272, %v5268
  %v5329 = vpack.c.b16 %v5273, %v5269
  %v5330 = vpack.c.b16 %v5274, %v5270
  %v5331 = vpack.c.b16 %v5275, %v5271
  %v5332 = vpack.c.b16 %v5280, %v5276
  %v5333 = vpack.c.b16 %v5281, %v5277
  %v5334 = vpack.c.b16 %v5282, %v5278
  %v5335 = vpack.c.b16 %v5283, %v5279
  %v5336 = vpack.c.b16 %v5288, %v5284
  %v5337 = vpack.c.b16 %v5289, %v5285
  %v5338 = vpack.c.b16 %v5290, %v5286
  %v5339 = vpack.c.b16 %v5291, %v5287
  %v5340 = vpack.c.b16 %v5296, %v5292
  %v5341 = vpack.c.b16 %v5297, %v5293
  %v5342 = vpack.c.b16 %v5298, %v5294
  %v5343 = vpack.c.b16 %v5299, %v5295
  %v5344 = vpack.c.b16 %v5304, %v5300
  %v5345 = vpack.c.b16 %v5305, %v5301
  %v5346 = vpack.c.b16 %v5306, %v5302
  %v5347 = vpack.c.b16 %v5307, %v5303
  %v5348 = vpack.c.b16 %v5312, %v5308
  %v5349 = vpack.c.b16 %v5313, %v5309
  %v5350 = vpack.c.b16 %v5314, %v5310
  %v5351 = vpack.c.b16 %v5315, %v5311
  %v5352 = vpack.c.b16 %v5320, %v5316
  %v5353 = vpack.c.b16 %v5321, %v5317
  %v5354 = vpack.c.b16 %v5322, %v5318
  %v5355 = vpack.c.b16 %v5323, %v5319
  %5388 = vmatprep.subr.bf16.mxu0 %v5325
  %5389 = vmatpush1.bf16.msra.mxu0 %v5324
  %5390 = vmatprep.subr.bf16.mxu0 %v5329
  %5391 = vmatpush1.bf16.msra.mxu0 %v5328
  %5392 = vmatprep.subr.bf16.mxu0 %v5333
  %5393 = vmatpush1.bf16.msra.mxu0 %v5332
  %5394 = vmatprep.subr.bf16.mxu0 %v5337
  %5395 = vmatpush1.bf16.msra.mxu0 %v5336
  %5396 = vmatprep.subr.bf16.mxu0 %v5341
  %5397 = vmatpush1.bf16.msra.mxu0 %v5340
  %5398 = vmatprep.subr.bf16.mxu0 %v5345
  %5399 = vmatpush1.bf16.msra.mxu0 %v5344
  %5400 = vmatprep.subr.bf16.mxu0 %v5349
  %5401 = vmatpush1.bf16.msra.mxu0 %v5348
  %5402 = vmatprep.subr.bf16.mxu0 %v5353
  %5403 = vmatpush1.bf16.msra.mxu0 %v5352
  %5404 = vmatprep.subr.bf16.mxu0 0
  %5405 = vmatpush1.bf16.msra.mxu0 0
  %5406 = vmatprep.subr.bf16.mxu0 0
  %5407 = vmatpush1.bf16.msra.mxu0 0
  %5408 = vmatprep.subr.bf16.mxu0 0
  %5409 = vmatpush1.bf16.msra.mxu0 0
  %5410 = vmatprep.subr.bf16.mxu0 0
  %5411 = vmatpush1.bf16.msra.mxu0 0
  %5412 = vmatprep.subr.bf16.mxu0 0
  %5413 = vmatpush1.bf16.msra.mxu0 0
  %5414 = vmatprep.subr.bf16.mxu0 0
  %5415 = vmatpush1.bf16.msra.mxu0 0
  %5416 = vmatprep.subr.bf16.mxu0 0
  %5417 = vmatpush1.bf16.msra.mxu0 0
  %5418 = vmatprep.subr.bf16.mxu0 0
  %5419 = vmatpush1.bf16.msra.mxu0 0
  %5420 = vmatprep.mubr.bf16.mxu0 0
  %5421 = vmatmul.mubr.bf16.gmra.mrb[0].mxu0 %v5173
  %v5422 = vpop.f32.mrb[0].mxu0
  %v5423 = vadd.f32 %v5211, %v5422
  %v5424 = vpop.f32.mrb[0].mxu0
  %v5425 = vadd.f32 %v5215, %v5424
  %v5426 = vpop.f32.mrb[0].mxu0
  %v5427 = vadd.f32 %v5211, %v5426
  %v5428 = vpop.f32.mrb[0].mxu0
  %v5429 = vadd.f32 %v5215, %v5428
  %5430 = vmatprep.mubr.bf16.mxu0 0
  %5431 = vmatmul.mubr.bf16.gmra.mrb[0].mxu0 %v5174
  %v5432 = vpop.f32.mrb[0].mxu0
  %v5433 = vadd.f32 %v5211, %v5432
  %v5434 = vpop.f32.mrb[0].mxu0
  %v5435 = vadd.f32 %v5215, %v5434
  %v5436 = vpop.f32.mrb[0].mxu0
  %v5437 = vadd.f32 %v5211, %v5436
  %v5438 = vpop.f32.mrb[0].mxu0
  %v5439 = vadd.f32 %v5215, %v5438
  %5440 = vdwg.mxu0
  %5441 = vmatprep.subr.bf16.mxu0 %v5327
  %5442 = vmatpush1.bf16.msra.mxu0 %v5326
  %5443 = vmatprep.subr.bf16.mxu0 %v5331
  %5444 = vmatpush1.bf16.msra.mxu0 %v5330
  %5445 = vmatprep.subr.bf16.mxu0 %v5335
  %5446 = vmatpush1.bf16.msra.mxu0 %v5334
  %5447 = vmatprep.subr.bf16.mxu0 %v5339
  %5448 = vmatpush1.bf16.msra.mxu0 %v5338
  %5449 = vmatprep.subr.bf16.mxu0 %v5343
  %5450 = vmatpush1.bf16.msra.mxu0 %v5342
  %5451 = vmatprep.subr.bf16.mxu0 %v5347
  %5452 = vmatpush1.bf16.msra.mxu0 %v5346
  %5453 = vmatprep.subr.bf16.mxu0 %v5351
  %5454 = vmatpush1.bf16.msra.mxu0 %v5350
  %5455 = vmatprep.subr.bf16.mxu0 %v5355
  %5456 = vmatpush1.bf16.msra.mxu0 %v5354
  %5457 = vmatprep.subr.bf16.mxu0 0
  %5458 = vmatpush1.bf16.msra.mxu0 0
  %5459 = vmatprep.subr.bf16.mxu0 0
  %5460 = vmatpush1.bf16.msra.mxu0 0
  %5461 = vmatprep.subr.bf16.mxu0 0
  %5462 = vmatpush1.bf16.msra.mxu0 0
  %5463 = vmatprep.subr.bf16.mxu0 0
  %5464 = vmatpush1.bf16.msra.mxu0 0
  %5465 = vmatprep.subr.bf16.mxu0 0
  %5466 = vmatpush1.bf16.msra.mxu0 0
  %5467 = vmatprep.subr.bf16.mxu0 0
  %5468 = vmatpush1.bf16.msra.mxu0 0
  %5469 = vmatprep.subr.bf16.mxu0 0
  %5470 = vmatpush1.bf16.msra.mxu0 0
  %5471 = vmatprep.subr.bf16.mxu0 0
  %5472 = vmatpush1.bf16.msra.mxu0 0
  %5473 = vmatprep.mubr.bf16.mxu0 0
  %5474 = vmatmul.mubr.bf16.gmra.mrb[0].mxu0 %v5173
  %v5475 = vpop.f32.mrb[0].mxu0
  %v5476 = vadd.f32 %v5219, %v5475
  %v5477 = vpop.f32.mrb[0].mxu0
  %v5478 = vadd.f32 %v5223, %v5477
  %v5479 = vpop.f32.mrb[0].mxu0
  %v5480 = vadd.f32 %v5219, %v5479
  %v5481 = vpop.f32.mrb[0].mxu0
  %v5482 = vadd.f32 %v5223, %v5481
  %5483 = vmatprep.mubr.bf16.mxu0 0
  %5484 = vmatmul.mubr.bf16.gmra.mrb[0].mxu0 %v5174
  %v5485 = vpop.f32.mrb[0].mxu0
  %v5486 = vadd.f32 %v5219, %v5485
  %v5487 = vpop.f32.mrb[0].mxu0
  %v5488 = vadd.f32 %v5223, %v5487
  %v5489 = vpop.f32.mrb[0].mxu0
  %v5490 = vadd.f32 %v5219, %v5489
  %v5491 = vpop.f32.mrb[0].mxu0
  %v5492 = vadd.f32 %v5223, %v5491
  %5493 = vdwg.mxu0
  %v5494 = vmul.f32 %v5423, %v5423
  %v5495 = vmul.f32 %v5425, %v5425
  %v5496 = vmul.f32 %v5476, %v5476
  %v5497 = vmul.f32 %v5478, %v5478
  %v5498 = vmul.f32 %v5427, %v5427
  %v5499 = vmul.f32 %v5429, %v5429
  %v5500 = vmul.f32 %v5480, %v5480
  %v5501 = vmul.f32 %v5482, %v5482
  %v5502 = vmul.f32 %v5433, %v5433
  %v5503 = vmul.f32 %v5435, %v5435
  %v5504 = vmul.f32 %v5486, %v5486
  %v5505 = vmul.f32 %v5488, %v5488
  %v5506 = vmul.f32 %v5437, %v5437
  %v5507 = vmul.f32 %v5439, %v5439
  %v5508 = vmul.f32 %v5490, %v5490
  %v5509 = vmul.f32 %v5492, %v5492
  %v5510 = vmul.f32 %v5423, %v5494
  %v5511 = vmul.f32 %v5425, %v5495
  %v5512 = vmul.f32 %v5476, %v5496
  %v5513 = vmul.f32 %v5478, %v5497
  %v5514 = vmul.f32 %v5427, %v5498
  %v5515 = vmul.f32 %v5429, %v5499
  %v5516 = vmul.f32 %v5480, %v5500
  %v5517 = vmul.f32 %v5482, %v5501
  %v5518 = vmul.f32 %v5433, %v5502
  %v5519 = vmul.f32 %v5435, %v5503
  %v5520 = vmul.f32 %v5486, %v5504
  %v5521 = vmul.f32 %v5488, %v5505
  %v5522 = vmul.f32 %v5437, %v5506
  %v5523 = vmul.f32 %v5439, %v5507
  %v5524 = vmul.f32 %v5490, %v5508
  %v5525 = vmul.f32 %v5492, %v5509
  %v5526 = vmul.f32 %v5510, 0.044715
  %v5527 = vmul.f32 %v5511, 0.044715
  %v5528 = vmul.f32 %v5512, 0.044715
  %v5529 = vmul.f32 %v5513, 0.044715
  %v5530 = vmul.f32 %v5514, 0.044715
  %v5531 = vmul.f32 %v5515, 0.044715
  %v5532 = vmul.f32 %v5516, 0.044715
  %v5533 = vmul.f32 %v5517, 0.044715
  %v5534 = vmul.f32 %v5518, 0.044715
  %v5535 = vmul.f32 %v5519, 0.044715
  %v5536 = vmul.f32 %v5520, 0.044715
  %v5537 = vmul.f32 %v5521, 0.044715
  %v5538 = vmul.f32 %v5522, 0.044715
  %v5539 = vmul.f32 %v5523, 0.044715
  %v5540 = vmul.f32 %v5524, 0.044715
  %v5541 = vmul.f32 %v5525, 0.044715
  %v5542 = vadd.f32 %v5423, %v5526
  %v5543 = vadd.f32 %v5425, %v5527
  %v5544 = vadd.f32 %v5476, %v5528
  %v5545 = vadd.f32 %v5478, %v5529
  %v5546 = vadd.f32 %v5427, %v5530
  %v5547 = vadd.f32 %v5429, %v5531
  %v5548 = vadd.f32 %v5480, %v5532
  %v5549 = vadd.f32 %v5482, %v5533
  %v5550 = vadd.f32 %v5433, %v5534
  %v5551 = vadd.f32 %v5435, %v5535
  %v5552 = vadd.f32 %v5486, %v5536
  %v5553 = vadd.f32 %v5488, %v5537
  %v5554 = vadd.f32 %v5437, %v5538
  %v5555 = vadd.f32 %v5439, %v5539
  %v5556 = vadd.f32 %v5490, %v5540
  %v5557 = vadd.f32 %v5492, %v5541
  %v5558 = vmul.f32 %v5542, 0.7978846
  %v5559 = vmul.f32 %v5543, 0.7978846
  %v5560 = vmul.f32 %v5544, 0.7978846
  %v5561 = vmul.f32 %v5545, 0.7978846
  %v5562 = vmul.f32 %v5546, 0.7978846
  %v5563 = vmul.f32 %v5547, 0.7978846
  %v5564 = vmul.f32 %v5548, 0.7978846
  %v5565 = vmul.f32 %v5549, 0.7978846
  %v5566 = vmul.f32 %v5550, 0.7978846
  %v5567 = vmul.f32 %v5551, 0.7978846
  %v5568 = vmul.f32 %v5552, 0.7978846
  %v5569 = vmul.f32 %v5553, 0.7978846
  %v5570 = vmul.f32 %v5554, 0.7978846
  %v5571 = vmul.f32 %v5555, 0.7978846
  %v5572 = vmul.f32 %v5556, 0.7978846
  %v5573 = vmul.f32 %v5557, 0.7978846
  %v5574 = vtanh.pop %v5558
  %v5575 = vtanh.pop %v5559
  %v5576 = vtanh.pop %v5560
  %v5577 = vtanh.pop %v5561
  %v5578 = vtanh.pop %v5562
  %v5579 = vtanh.pop %v5563
  %v5580 = vtanh.pop %v5564
  %v5581 = vtanh.pop %v5565
  %v5582 = vtanh.pop %v5566
  %v5583 = vtanh.pop %v5567
  %v5584 = vtanh.pop %v5568
  %v5585 = vtanh.pop %v5569
  %v5586 = vtanh.pop %v5570
  %v5587 = vtanh.pop %v5571
  %v5588 = vtanh.pop %v5572
  %v5589 = vtanh.pop %v5573
  %v5590 = vadd.f32 %v5574, 1.0
  %v5591 = vadd.f32 %v5575, 1.0
  %v5592 = vadd.f32 %v5576, 1.0
  %v5593 = vadd.f32 %v5577, 1.0
  %v5594 = vadd.f32 %v5578, 1.0
  %v5595 = vadd.f32 %v5579, 1.0
  %v5596 = vadd.f32 %v5580, 1.0
  %v5597 = vadd.f32 %v5581, 1.0
  %v5598 = vadd.f32 %v5582, 1.0
  %v5599 = vadd.f32 %v5583, 1.0
  %v5600 = vadd.f32 %v5584, 1.0
  %v5601 = vadd.f32 %v5585, 1.0
  %v5602 = vadd.f32 %v5586, 1.0
  %v5603 = vadd.f32 %v5587, 1.0
  %v5604 = vadd.f32 %v5588, 1.0
  %v5605 = vadd.f32 %v5589, 1.0
  %v5606 = vmul.f32 %v5590, 0.5
  %v5607 = vmul.f32 %v5591, 0.5
  %v5608 = vmul.f32 %v5592, 0.5
  %v5609 = vmul.f32 %v5593, 0.5
  %v5610 = vmul.f32 %v5594, 0.5
  %v5611 = vmul.f32 %v5595, 0.5
  %v5612 = vmul.f32 %v5596, 0.5
  %v5613 = vmul.f32 %v5597, 0.5
  %v5614 = vmul.f32 %v5598, 0.5
  %v5615 = vmul.f32 %v5599, 0.5
  %v5616 = vmul.f32 %v5600, 0.5
  %v5617 = vmul.f32 %v5601, 0.5
  %v5618 = vmul.f32 %v5602, 0.5
  %v5619 = vmul.f32 %v5603, 0.5
  %v5620 = vmul.f32 %v5604, 0.5
  %v5621 = vmul.f32 %v5605, 0.5
  %v5622 = vmul.f32 %v5423, %v5606
  %v5623 = vmul.f32 %v5425, %v5607
  %v5624 = vmul.f32 %v5476, %v5608
  %v5625 = vmul.f32 %v5478, %v5609
  %v5626 = vmul.f32 %v5427, %v5610
  %v5627 = vmul.f32 %v5429, %v5611
  %v5628 = vmul.f32 %v5480, %v5612
  %v5629 = vmul.f32 %v5482, %v5613
  %v5630 = vmul.f32 %v5433, %v5614
  %v5631 = vmul.f32 %v5435, %v5615
  %v5632 = vmul.f32 %v5486, %v5616
  %v5633 = vmul.f32 %v5488, %v5617
  %v5634 = vmul.f32 %v5437, %v5618
  %v5635 = vmul.f32 %v5439, %v5619
  %v5636 = vmul.f32 %v5490, %v5620
  %v5637 = vmul.f32 %v5492, %v5621
  %v5638 = vpack.c.bf16 %v5626, %v5622
  %v5639 = vpack.c.bf16 %v5627, %v5623
  %v5640 = vpack.c.bf16 %v5628, %v5624
  %v5641 = vpack.c.bf16 %v5629, %v5625
  %v5642 = vpack.c.bf16 %v5634, %v5630
  %v5643 = vpack.c.bf16 %v5635, %v5631
  %v5644 = vpack.c.bf16 %v5636, %v5632
  %v5645 = vpack.c.bf16 %v5637, %v5633
  %v5646 = vld [vmem:[%s13] sm:$0xf]
  %v5647 = vld [vmem:[%s13 + $0x4] sm:$0xf]
  %v5648 = vld [vmem:[%s13 + $0x8] sm:$0xf]
  %v5649 = vld [vmem:[%s13 + $0xc] sm:$0xf]
  %v5650 = vld [vmem:[%s13 + $0x10] sm:$0xf]
  %v5651 = vld [vmem:[%s13 + $0x14] sm:$0xf]
  %v5652 = vld [vmem:[%s13 + $0x18] sm:$0xf]
  %v5653 = vld [vmem:[%s13 + $0x1c] sm:$0xf]
  %v5654 = vld [vmem:[%s13 + $0x20] sm:$0xf]
  %v5655 = vld [vmem:[%s13 + $0x24] sm:$0xf]
  %v5656 = vld [vmem:[%s13 + $0x28] sm:$0xf]
  %v5657 = vld [vmem:[%s13 + $0x2c] sm:$0xf]
  %v5658 = vld [vmem:[%s13 + $0x30] sm:$0xf]
  %v5659 = vld [vmem:[%s13 + $0x34] sm:$0xf]
  %v5660 = vld [vmem:[%s13 + $0x38] sm:$0xf]
  %v5661 = vld [vmem:[%s13 + $0x3c] sm:$0xf]
  %v5662 = vld [vmem:[%s13 + $0x40] sm:$0xf]
  %v5663 = vld [vmem:[%s13 + $0x44] sm:$0xf]
  %v5664 = vld [vmem:[%s13 + $0x48] sm:$0xf]
  %v5665 = vld [vmem:[%s13 + $0x4c] sm:$0xf]
  %v5666 = vld [vmem:[%s13 + $0x50] sm:$0xf]
  %v5667 = vld [vmem:[%s13 + $0x54] sm:$0xf]
  %v5668 = vld [vmem:[%s13 + $0x58] sm:$0xf]
  %v5669 = vld [vmem:[%s13 + $0x5c] sm:$0xf]
  %v5670 = vld [vmem:[%s13 + $0x60] sm:$0xf]
  %v5671 = vld [vmem:[%s13 + $0x64] sm:$0xf]
  %v5672 = vld [vmem:[%s13 + $0x68] sm:$0xf]
  %v5673 = vld [vmem:[%s13 + $0x6c] sm:$0xf]
  %v5674 = vld [vmem:[%s13 + $0x70] sm:$0xf]
  %v5675 = vld [vmem:[%s13 + $0x74] sm:$0xf]
  %v5676 = vld [vmem:[%s13 + $0x78] sm:$0xf]
  %v5677 = vld [vmem:[%s13 + $0x7c] sm:$0xf]
  %v5678 = vld [vmem:[%s13 + $0x80] sm:$0xf]
  %v5679 = vld [vmem:[%s13 + $0x84] sm:$0xf]
  %v5680 = vld [vmem:[%s13 + $0x88] sm:$0xf]
  %v5681 = vld [vmem:[%s13 + $0x8c] sm:$0xf]
  %v5682 = vld [vmem:[%s13 + $0x90] sm:$0xf]
  %v5683 = vld [vmem:[%s13 + $0x94] sm:$0xf]
  %v5684 = vld [vmem:[%s13 + $0x98] sm:$0xf]
  %v5685 = vld [vmem:[%s13 + $0x9c] sm:$0xf]
  %v5686 = vld [vmem:[%s13 + $0xa0] sm:$0xf]
  %v5687 = vld [vmem:[%s13 + $0xa4] sm:$0xf]
  %v5688 = vld [vmem:[%s13 + $0xa8] sm:$0xf]
  %v5689 = vld [vmem:[%s13 + $0xac] sm:$0xf]
  %v5690 = vld [vmem:[%s13 + $0xb0] sm:$0xf]
  %v5691 = vld [vmem:[%s13 + $0xb4] sm:$0xf]
  %v5692 = vld [vmem:[%s13 + $0xb8] sm:$0xf]
  %v5693 = vld [vmem:[%s13 + $0xbc] sm:$0xf]
  %v5694 = vld [vmem:[%s13 + $0xc0] sm:$0xf]
  %v5695 = vld [vmem:[%s13 + $0xc4] sm:$0xf]
  %v5696 = vld [vmem:[%s13 + $0xc8] sm:$0xf]
  %v5697 = vld [vmem:[%s13 + $0xcc] sm:$0xf]
  %v5698 = vld [vmem:[%s13 + $0xd0] sm:$0xf]
  %v5699 = vld [vmem:[%s13 + $0xd4] sm:$0xf]
  %v5700 = vld [vmem:[%s13 + $0xd8] sm:$0xf]
  %v5701 = vld [vmem:[%s13 + $0xdc] sm:$0xf]
  %v5702 = vld [vmem:[%s13 + $0xe0] sm:$0xf]
  %v5703 = vld [vmem:[%s13 + $0xe4] sm:$0xf]
  %v5704 = vld [vmem:[%s13 + $0xe8] sm:$0xf]
  %v5705 = vld [vmem:[%s13 + $0xec] sm:$0xf]
  %v5706 = vld [vmem:[%s13 + $0xf0] sm:$0xf]
  %v5707 = vld [vmem:[%s13 + $0xf4] sm:$0xf]
  %v5708 = vld [vmem:[%s13 + $0xf8] sm:$0xf]
  %v5709 = vld [vmem:[%s13 + $0xfc] sm:$0xf]
  %v5710 = vlaneseq
  %v5711 = vshrl.u32 %v5710, 7
  %v5712 = vsub.s32 0, %v5711
  %v5713 = vrot.slane %v4028, %v5712
  %v5778 = vunpack.c.l.b16 %v5646
  %v5779 = vunpack.c.l.b16 %v5647
  %v5780 = vunpack.c.l.b16 %v5648
  %v5781 = vunpack.c.l.b16 %v5649
  %v5782 = vunpack.c.l.b16 %v5650
  %v5783 = vunpack.c.l.b16 %v5651
  %v5784 = vunpack.c.l.b16 %v5652
  %v5785 = vunpack.c.l.b16 %v5653
  %v5786 = vunpack.c.l.b16 %v5654
  %v5787 = vunpack.c.l.b16 %v5655
  %v5788 = vunpack.c.l.b16 %v5656
  %v5789 = vunpack.c.l.b16 %v5657
  %v5790 = vunpack.c.l.b16 %v5658
  %v5791 = vunpack.c.l.b16 %v5659
  %v5792 = vunpack.c.l.b16 %v5660
  %v5793 = vunpack.c.l.b16 %v5661
  %v5794 = vunpack.c.l.b16 %v5662
  %v5795 = vunpack.c.l.b16 %v5663
  %v5796 = vunpack.c.l.b16 %v5664
  %v5797 = vunpack.c.l.b16 %v5665
  %v5798 = vunpack.c.l.b16 %v5666
  %v5799 = vunpack.c.l.b16 %v5667
  %v5800 = vunpack.c.l.b16 %v5668
  %v5801 = vunpack.c.l.b16 %v5669
  %v5802 = vunpack.c.l.b16 %v5670
  %v5803 = vunpack.c.l.b16 %v5671
  %v5804 = vunpack.c.l.b16 %v5672
  %v5805 = vunpack.c.l.b16 %v5673
  %v5806 = vunpack.c.l.b16 %v5674
  %v5807 = vunpack.c.l.b16 %v5675
  %v5808 = vunpack.c.l.b16 %v5676
  %v5809 = vunpack.c.l.b16 %v5677
  %v5810 = vunpack.c.l.b16 %v5678
  %v5811 = vunpack.c.l.b16 %v5679
  %v5812 = vunpack.c.l.b16 %v5680
  %v5813 = vunpack.c.l.b16 %v5681
  %v5814 = vunpack.c.l.b16 %v5682
  %v5815 = vunpack.c.l.b16 %v5683
  %v5816 = vunpack.c.l.b16 %v5684
  %v5817 = vunpack.c.l.b16 %v5685
  %v5818 = vunpack.c.l.b16 %v5686
  %v5819 = vunpack.c.l.b16 %v5687
  %v5820 = vunpack.c.l.b16 %v5688
  %v5821 = vunpack.c.l.b16 %v5689
  %v5822 = vunpack.c.l.b16 %v5690
  %v5823 = vunpack.c.l.b16 %v5691
  %v5824 = vunpack.c.l.b16 %v5692
  %v5825 = vunpack.c.l.b16 %v5693
  %v5826 = vunpack.c.l.b16 %v5694
  %v5827 = vunpack.c.l.b16 %v5695
  %v5828 = vunpack.c.l.b16 %v5696
  %v5829 = vunpack.c.l.b16 %v5697
  %v5830 = vunpack.c.l.b16 %v5698
  %v5831 = vunpack.c.l.b16 %v5699
  %v5832 = vunpack.c.l.b16 %v5700
  %v5833 = vunpack.c.l.b16 %v5701
  %v5834 = vunpack.c.l.b16 %v5702
  %v5835 = vunpack.c.l.b16 %v5703
  %v5836 = vunpack.c.l.b16 %v5704
  %v5837 = vunpack.c.l.b16 %v5705
  %v5838 = vunpack.c.l.b16 %v5706
  %v5839 = vunpack.c.l.b16 %v5707
  %v5840 = vunpack.c.l.b16 %v5708
  %v5841 = vunpack.c.l.b16 %v5709
  %v5842 = vpack.c.b16 %v5779, %v5778
  %v5843 = vpack.c.b16 %v5781, %v5780
  %v5844 = vpack.c.b16 %v5783, %v5782
  %v5845 = vpack.c.b16 %v5785, %v5784
  %v5846 = vpack.c.b16 %v5787, %v5786
  %v5847 = vpack.c.b16 %v5789, %v5788
  %v5848 = vpack.c.b16 %v5791, %v5790
  %v5849 = vpack.c.b16 %v5793, %v5792
  %v5850 = vpack.c.b16 %v5795, %v5794
  %v5851 = vpack.c.b16 %v5797, %v5796
  %v5852 = vpack.c.b16 %v5799, %v5798
  %v5853 = vpack.c.b16 %v5801, %v5800
  %v5854 = vpack.c.b16 %v5803, %v5802
  %v5855 = vpack.c.b16 %v5805, %v5804
  %v5856 = vpack.c.b16 %v5807, %v5806
  %v5857 = vpack.c.b16 %v5809, %v5808
  %v5858 = vpack.c.b16 %v5811, %v5810
  %v5859 = vpack.c.b16 %v5813, %v5812
  %v5860 = vpack.c.b16 %v5815, %v5814
  %v5861 = vpack.c.b16 %v5817, %v5816
  %v5862 = vpack.c.b16 %v5819, %v5818
  %v5863 = vpack.c.b16 %v5821, %v5820
  %v5864 = vpack.c.b16 %v5823, %v5822
  %v5865 = vpack.c.b16 %v5825, %v5824
  %v5866 = vpack.c.b16 %v5827, %v5826
  %v5867 = vpack.c.b16 %v5829, %v5828
  %v5868 = vpack.c.b16 %v5831, %v5830
  %v5869 = vpack.c.b16 %v5833, %v5832
  %v5870 = vpack.c.b16 %v5835, %v5834
  %v5871 = vpack.c.b16 %v5837, %v5836
  %v5872 = vpack.c.b16 %v5839, %v5838
  %v5873 = vpack.c.b16 %v5841, %v5840
  %5906 = vmatprep.subr.bf16.mxu0 0
  %5907 = vmatpush1.bf16.msra.mxu0 %v5842
  %5908 = vmatprep.subr.bf16.mxu0 0
  %5909 = vmatpush1.bf16.msra.mxu0 %v5843
  %5910 = vmatprep.subr.bf16.mxu0 0
  %5911 = vmatpush1.bf16.msra.mxu0 %v5844
  %5912 = vmatprep.subr.bf16.mxu0 0
  %5913 = vmatpush1.bf16.msra.mxu0 %v5845
  %5914 = vmatprep.subr.bf16.mxu0 0
  %5915 = vmatpush1.bf16.msra.mxu0 %v5846
  %5916 = vmatprep.subr.bf16.mxu0 0
  %5917 = vmatpush1.bf16.msra.mxu0 %v5847
  %5918 = vmatprep.subr.bf16.mxu0 0
  %5919 = vmatpush1.bf16.msra.mxu0 %v5848
  %5920 = vmatprep.subr.bf16.mxu0 0
  %5921 = vmatpush1.bf16.msra.mxu0 %v5849
  %5922 = vmatprep.subr.bf16.mxu0 0
  %5923 = vmatpush1.bf16.msra.mxu0 %v5850
  %5924 = vmatprep.subr.bf16.mxu0 0
  %5925 = vmatpush1.bf16.msra.mxu0 %v5851
  %5926 = vmatprep.subr.bf16.mxu0 0
  %5927 = vmatpush1.bf16.msra.mxu0 %v5852
  %5928 = vmatprep.subr.bf16.mxu0 0
  %5929 = vmatpush1.bf16.msra.mxu0 %v5853
  %5930 = vmatprep.subr.bf16.mxu0 0
  %5931 = vmatpush1.bf16.msra.mxu0 %v5854
  %5932 = vmatprep.subr.bf16.mxu0 0
  %5933 = vmatpush1.bf16.msra.mxu0 %v5855
  %5934 = vmatprep.subr.bf16.mxu0 0
  %5935 = vmatpush1.bf16.msra.mxu0 %v5856
  %5936 = vmatprep.subr.bf16.mxu0 0
  %5937 = vmatpush1.bf16.msra.mxu0 %v5857
  %5938 = vmatprep.mubr.bf16.mxu0 %v5639
  %5939 = vmatmul.mubr.bf16.gmra.mrb[0].mxu0 %v5638
  %v5940 = vpop.f32.mrb[0].mxu0
  %v5941 = vadd.f32 %v5713, %v5940
  %v5942 = vpop.f32.mrb[0].mxu0
  %v5943 = vpop.f32.mrb[0].mxu0
  %v5944 = vadd.f32 %v5713, %v5943
  %v5945 = vpop.f32.mrb[0].mxu0
  %5946 = vmatprep.mubr.bf16.mxu0 %v5643
  %5947 = vmatmul.mubr.bf16.gmra.mrb[0].mxu0 %v5642
  %v5948 = vpop.f32.mrb[0].mxu0
  %v5949 = vadd.f32 %v5713, %v5948
  %v5950 = vpop.f32.mrb[0].mxu0
  %v5951 = vpop.f32.mrb[0].mxu0
  %v5952 = vadd.f32 %v5713, %v5951
  %v5953 = vpop.f32.mrb[0].mxu0
  %5954 = vdwg.mxu0
  %5955 = vmatprep.subr.bf16.mxu0 0
  %5956 = vmatpush1.bf16.msra.mxu0 %v5858
  %5957 = vmatprep.subr.bf16.mxu0 0
  %5958 = vmatpush1.bf16.msra.mxu0 %v5859
  %5959 = vmatprep.subr.bf16.mxu0 0
  %5960 = vmatpush1.bf16.msra.mxu0 %v5860
  %5961 = vmatprep.subr.bf16.mxu0 0
  %5962 = vmatpush1.bf16.msra.mxu0 %v5861
  %5963 = vmatprep.subr.bf16.mxu0 0
  %5964 = vmatpush1.bf16.msra.mxu0 %v5862
  %5965 = vmatprep.subr.bf16.mxu0 0
  %5966 = vmatpush1.bf16.msra.mxu0 %v5863
  %5967 = vmatprep.subr.bf16.mxu0 0
  %5968 = vmatpush1.bf16.msra.mxu0 %v5864
  %5969 = vmatprep.subr.bf16.mxu0 0
  %5970 = vmatpush1.bf16.msra.mxu0 %v5865
  %5971 = vmatprep.subr.bf16.mxu0 0
  %5972 = vmatpush1.bf16.msra.mxu0 %v5866
  %5973 = vmatprep.subr.bf16.mxu0 0
  %5974 = vmatpush1.bf16.msra.mxu0 %v5867
  %5975 = vmatprep.subr.bf16.mxu0 0
  %5976 = vmatpush1.bf16.msra.mxu0 %v5868
  %5977 = vmatprep.subr.bf16.mxu0 0
  %5978 = vmatpush1.bf16.msra.mxu0 %v5869
  %5979 = vmatprep.subr.bf16.mxu0 0
  %5980 = vmatpush1.bf16.msra.mxu0 %v5870
  %5981 = vmatprep.subr.bf16.mxu0 0
  %5982 = vmatpush1.bf16.msra.mxu0 %v5871
  %5983 = vmatprep.subr.bf16.mxu0 0
  %5984 = vmatpush1.bf16.msra.mxu0 %v5872
  %5985 = vmatprep.subr.bf16.mxu0 0
  %5986 = vmatpush1.bf16.msra.mxu0 %v5873
  %5987 = vmatprep.mubr.bf16.mxu0 %v5641
  %5988 = vmatmul.mubr.bf16.gmra.mrb[0].mxu0 %v5640
  %v5989 = vpop.f32.mrb[0].mxu0
  %v5990 = vadd.f32 %v5941, %v5989
  %v5991 = vpop.f32.mrb[0].mxu0
  %v5992 = vpop.f32.mrb[0].mxu0
  %v5993 = vadd.f32 %v5944, %v5992
  %v5994 = vpop.f32.mrb[0].mxu0
  %5995 = vmatprep.mubr.bf16.mxu0 %v5645
  %5996 = vmatmul.mubr.bf16.gmra.mrb[0].mxu0 %v5644
  %v5997 = vpop.f32.mrb[0].mxu0
  %v5998 = vadd.f32 %v5949, %v5997
  %v5999 = vpop.f32.mrb[0].mxu0
  %v6000 = vpop.f32.mrb[0].mxu0
  %v6001 = vadd.f32 %v5952, %v6000
  %v6002 = vpop.f32.mrb[0].mxu0
  %6003 = vdwg.mxu0
  %v6004 = vadd.f32 %v4019, %v5990
  %v6005 = vadd.f32 %v4020, %v5993
  %v6006 = vadd.f32 %v4021, %v5998
  %v6007 = vadd.f32 %v4022, %v6001
  %v6008 = vld [vmem:[%s14] sm:$0xff]
  %v6009 = vld [vmem:[%s14 + $0x8] sm:$0xff]
  %v6010 = vld [vmem:[%s14 + $0x10] sm:$0xff]
  %v6011 = vld [vmem:[%s14 + $0x18] sm:$0xff]
  %v6012 = vld [vmem:[%s14 + $0x20] sm:$0xff]
  %v6013 = vld [vmem:[%s14 + $0x28] sm:$0xff]
  %v6014 = vld [vmem:[%s14 + $0x30] sm:$0xff]
  %v6015 = vld [vmem:[%s14 + $0x38] sm:$0xff]
  %v6016 = vld [vmem:[%s14 + $0x40] sm:$0xff]
  %v6017 = vld [vmem:[%s14 + $0x48] sm:$0xff]
  %v6018 = vld [vmem:[%s14 + $0x50] sm:$0xff]
  %v6019 = vld [vmem:[%s14 + $0x58] sm:$0xff]
  %v6020 = vld [vmem:[%s14 + $0x60] sm:$0xff]
  %v6021 = vld [vmem:[%s14 + $0x68] sm:$0xff]
  %v6022 = vld [vmem:[%s14 + $0x70] sm:$0xff]
  %v6023 = vld [vmem:[%s14 + $0x78] sm:$0xff]
  %6024 = vmatprep.subr.mxu0 0.0
  %6025 = vmatpush1.msra.mxu0 %v6008
  %6026 = vmatprep.subr.mxu0 0.0
  %6027 = vmatpush1.msra.mxu0 %v6009
  %6028 = vmatprep.subr.mxu0 0.0
  %6029 = vmatpush1.msra.mxu0 %v6010
  %6030 = vmatprep.subr.mxu0 0.0
  %6031 = vmatpush1.msra.mxu0 %v6011
  %6032 = vmatprep.subr.mxu0 0.0
  %6033 = vmatpush1.msra.mxu0 %v6012
  %6034 = vmatprep.subr.mxu0 0.0
  %6035 = vmatpush1.msra.mxu0 %v6013
  %6036 = vmatprep.subr.mxu0 0.0
  %6037 = vmatpush1.msra.mxu0 %v6014
  %6038 = vmatprep.subr.mxu0 0.0
  %6039 = vmatpush1.msra.mxu0 %v6015
  %6040 = vmatprep.subr.mxu0 0.0
  %6041 = vmatpush1.msra.mxu0 %v6016
  %6042 = vmatprep.subr.mxu0 0.0
  %6043 = vmatpush1.msra.mxu0 %v6017
  %6044 = vmatprep.subr.mxu0 0.0
  %6045 = vmatpush1.msra.mxu0 %v6018
  %6046 = vmatprep.subr.mxu0 0.0
  %6047 = vmatpush1.msra.mxu0 %v6019
  %6048 = vmatprep.subr.mxu0 0.0
  %6049 = vmatpush1.msra.mxu0 %v6020
  %6050 = vmatprep.subr.mxu0 0.0
  %6051 = vmatpush1.msra.mxu0 %v6021
  %6052 = vmatprep.subr.mxu0 0.0
  %6053 = vmatpush1.msra.mxu0 %v6022
  %6054 = vmatprep.subr.mxu0 0.0
  %6055 = vmatpush1.msra.mxu0 %v6023
  %6056 = vmatprep.subr.mxu0 0.0
  %6057 = vmatpush1.msra.mxu0 0.0
  %6058 = vmatprep.subr.mxu0 0.0
  %6059 = vmatpush1.msra.mxu0 0.0
  %6060 = vmatprep.subr.mxu0 0.0
  %6061 = vmatpush1.msra.mxu0 0.0
  %6062 = vmatprep.subr.mxu0 0.0
  %6063 = vmatpush1.msra.mxu0 0.0
  %6064 = vmatprep.subr.mxu0 0.0
  %6065 = vmatpush1.msra.mxu0 0.0
  %6066 = vmatprep.subr.mxu0 0.0
  %6067 = vmatpush1.msra.mxu0 0.0
  %6068 = vmatprep.subr.mxu0 0.0
  %6069 = vmatpush1.msra.mxu0 0.0
  %6070 = vmatprep.subr.mxu0 0.0
  %6071 = vmatpush1.msra.mxu0 0.0
  %6072 = vmatprep.subr.mxu0 0.0
  %6073 = vmatpush1.msra.mxu0 0.0
  %6074 = vmatprep.subr.mxu0 0.0
  %6075 = vmatpush1.msra.mxu0 0.0
  %6076 = vmatprep.subr.mxu0 0.0
  %6077 = vmatpush1.msra.mxu0 0.0
  %6078 = vmatprep.subr.mxu0 0.0
  %6079 = vmatpush1.msra.mxu0 0.0
  %6080 = vmatprep.subr.mxu0 0.0
  %6081 = vmatpush1.msra.mxu0 0.0
  %6082 = vmatprep.subr.mxu0 0.0
  %6083 = vmatpush1.msra.mxu0 0.0
  %6084 = vmatprep.subr.mxu0 0.0
  %6085 = vmatpush1.msra.mxu0 0.0
  %6086 = vmatprep.subr.mxu0 0.0
  %6087 = vmatpush1.msra.mxu0 0.0
  %6088 = vmatprep.mubr.f32.mxu0 0.0
  %6089 = vmatmul.mubr.f32.gmra.mrb[0].mxu0 %v6004
  %v6090 = vpop.f32.mrb[0].mxu0
  %v6091 = vadd.f32 0.0, %v6090
  %v6092 = vpop.f32.mrb[0].mxu0
  %6093 = vmatprep.mubr.f32.mxu0 0.0
  %6094 = vmatmul.mubr.f32.gmra.mrb[0].mxu0 %v6005
  %v6095 = vpop.f32.mrb[0].mxu0
  %v6096 = vadd.f32 0.0, %v6095
  %v6097 = vpop.f32.mrb[0].mxu0
  %6098 = vmatprep.mubr.f32.mxu0 0.0
  %6099 = vmatmul.mubr.f32.gmra.mrb[0].mxu0 %v6006
  %v6100 = vpop.f32.mrb[0].mxu0
  %v6101 = vadd.f32 0.0, %v6100
  %v6102 = vpop.f32.mrb[0].mxu0
  %6103 = vmatprep.mubr.f32.mxu0 0.0
  %6104 = vmatmul.mubr.f32.gmra.mrb[0].mxu0 %v6007
  %v6105 = vpop.f32.mrb[0].mxu0
  %v6106 = vadd.f32 0.0, %v6105
  %v6107 = vpop.f32.mrb[0].mxu0
  %6108 = vdwg.mxu0
  %v6109 = vld [vmem:[%s15] sm:$0xff]
  %vm6110 = vcmask 261120
  %v6112 = vsel %vm6110, %v6109, 0
  %6114 = vmatprep.subr.mxu0 0.0
  %6115 = vmatpush1.msra.mxu0 %v6091
  %6116 = vmatprep.subr.mxu0 0.0
  %6117 = vmatpush1.msra.mxu0 %v6096
  %6118 = vmatprep.subr.mxu0 0.0
  %6119 = vmatpush1.msra.mxu0 %v6101
  %6120 = vmatprep.subr.mxu0 0.0
  %6121 = vmatpush1.msra.mxu0 %v6106
  %6122 = vmatprep.subr.mxu0 0.0
  %6123 = vmatpush1.msra.mxu0 0.0
  %6124 = vmatprep.subr.mxu0 0.0
  %6125 = vmatpush1.msra.mxu0 0.0
  %6126 = vmatprep.subr.mxu0 0.0
  %6127 = vmatpush1.msra.mxu0 0.0
  %6128 = vmatprep.subr.mxu0 0.0
  %6129 = vmatpush1.msra.mxu0 0.0
  %6130 = vmatprep.subr.mxu0 0.0
  %6131 = vmatpush1.msra.mxu0 0.0
  %6132 = vmatprep.subr.mxu0 0.0
  %6133 = vmatpush1.msra.mxu0 0.0
  %6134 = vmatprep.subr.mxu0 0.0
  %6135 = vmatpush1.msra.mxu0 0.0
  %6136 = vmatprep.subr.mxu0 0.0
  %6137 = vmatpush1.msra.mxu0 0.0
  %6138 = vmatprep.subr.mxu0 0.0
  %6139 = vmatpush1.msra.mxu0 0.0
  %6140 = vmatprep.subr.mxu0 0.0
  %6141 = vmatpush1.msra.mxu0 0.0
  %6142 = vmatprep.subr.mxu0 0.0
  %6143 = vmatpush1.msra.mxu0 0.0
  %6144 = vmatprep.subr.mxu0 0.0
  %6145 = vmatpush1.msra.mxu0 0.0
  %6146 = vmatprep.subr.mxu0 0.0
  %6147 = vmatpush1.msra.mxu0 0.0
  %6148 = vmatprep.subr.mxu0 0.0
  %6149 = vmatpush1.msra.mxu0 0.0
  %6150 = vmatprep.subr.mxu0 0.0
  %6151 = vmatpush1.msra.mxu0 0.0
  %6152 = vmatprep.subr.mxu0 0.0
  %6153 = vmatpush1.msra.mxu0 0.0
  %6154 = vmatprep.subr.mxu0 0.0
  %6155 = vmatpush1.msra.mxu0 0.0
  %6156 = vmatprep.subr.mxu0 0.0
  %6157 = vmatpush1.msra.mxu0 0.0
  %6158 = vmatprep.subr.mxu0 0.0
  %6159 = vmatpush1.msra.mxu0 0.0
  %6160 = vmatprep.subr.mxu0 0.0
  %6161 = vmatpush1.msra.mxu0 0.0
  %6162 = vmatprep.subr.mxu0 0.0
  %6163 = vmatpush1.msra.mxu0 0.0
  %6164 = vmatprep.subr.mxu0 0.0
  %6165 = vmatpush1.msra.mxu0 0.0
  %6166 = vmatprep.subr.mxu0 0.0
  %6167 = vmatpush1.msra.mxu0 0.0
  %6168 = vmatprep.subr.mxu0 0.0
  %6169 = vmatpush1.msra.mxu0 0.0
  %6170 = vmatprep.subr.mxu0 0.0
  %6171 = vmatpush1.msra.mxu0 0.0
  %6172 = vmatprep.subr.mxu0 0.0
  %6173 = vmatpush1.msra.mxu0 0.0
  %6174 = vmatprep.subr.mxu0 0.0
  %6175 = vmatpush1.msra.mxu0 0.0
  %6176 = vmatprep.subr.mxu0 0.0
  %6177 = vmatpush1.msra.mxu0 0.0
  %6178 = vmatprep.mubr.f32.mxu0 0.0
  %6179 = vmatmul.mubr.f32.gmra.mrb[0].mxu0 %v6112
  %v6180 = vpop.f32.mrb[0].mxu0
  %v6181 = vadd.f32 0.0, %v6180
  %v6182 = vpop.f32.mrb[0].mxu0
  %6183 = vdwg.mxu0
  %v6184 = vsel %vm6110, %v6181, 0.0
  %6185 = vadd.xlane.f32.xlu0 %v6184
  %v6186 = vpop.xlane.xlu0 %6185
  %v6187 = vrcp.pop 32.0
  %v6188 = vmul.f32 %v6186, %v6187
  %v6189 = vsub.f32 %v6181, %v6188
  %v6190 = vmul.f32 %v6189, %v6189
  %v6191 = vsel %vm6110, %v6190, 0.0
  %6192 = vadd.xlane.f32.xlu0 %v6191
  %v6193 = vpop.xlane.xlu0 %6192
  %v6194 = vmul.f32 %v6193, %v6187
  %v6195 = vadd.f32 %v6194, 1e-12
  %v6196 = vrsqrt.pop %v6195
  %v6197 = vmul.f32 %v6189, %v6196
  %v6198 = vld [vmem:[%s16] sm:$0xff]
  %v6199 = vld [vmem:[%s16 + $0x8] sm:$0xff]
  %v6200 = vld [vmem:[%s16 + $0x10] sm:$0xff]
  %v6201 = vld [vmem:[%s16 + $0x18] sm:$0xff]
  %v6202 = vld [vmem:[%s17 + $0xe] sm:$0x1]
  %v6203 = vlaneseq
  %v6204 = vshrl.u32 %v6203, 7
  %v6205 = vsub.s32 0, %v6204
  %v6206 = vrot.slane %v6202, %v6205
  %v6208 = vsel %vm6110, %v6197, 0
  %6210 = vmatprep.subr.mxu0 0.0
  %6211 = vmatpush1.msra.mxu0 %v6198
  %6212 = vmatprep.subr.mxu0 0.0
  %6213 = vmatpush1.msra.mxu0 %v6199
  %6214 = vmatprep.subr.mxu0 0.0
  %6215 = vmatpush1.msra.mxu0 %v6200
  %6216 = vmatprep.subr.mxu0 0.0
  %6217 = vmatpush1.msra.mxu0 %v6201
  %6218 = vmatprep.subr.mxu0 0.0
  %6219 = vmatpush1.msra.mxu0 0.0
  %6220 = vmatprep.subr.mxu0 0.0
  %6221 = vmatpush1.msra.mxu0 0.0
  %6222 = vmatprep.subr.mxu0 0.0
  %6223 = vmatpush1.msra.mxu0 0.0
  %6224 = vmatprep.subr.mxu0 0.0
  %6225 = vmatpush1.msra.mxu0 0.0
  %6226 = vmatprep.subr.mxu0 0.0
  %6227 = vmatpush1.msra.mxu0 0.0
  %6228 = vmatprep.subr.mxu0 0.0
  %6229 = vmatpush1.msra.mxu0 0.0
  %6230 = vmatprep.subr.mxu0 0.0
  %6231 = vmatpush1.msra.mxu0 0.0
  %6232 = vmatprep.subr.mxu0 0.0
  %6233 = vmatpush1.msra.mxu0 0.0
  %6234 = vmatprep.subr.mxu0 0.0
  %6235 = vmatpush1.msra.mxu0 0.0
  %6236 = vmatprep.subr.mxu0 0.0
  %6237 = vmatpush1.msra.mxu0 0.0
  %6238 = vmatprep.subr.mxu0 0.0
  %6239 = vmatpush1.msra.mxu0 0.0
  %6240 = vmatprep.subr.mxu0 0.0
  %6241 = vmatpush1.msra.mxu0 0.0
  %6242 = vmatprep.subr.mxu0 0.0
  %6243 = vmatpush1.msra.mxu0 0.0
  %6244 = vmatprep.subr.mxu0 0.0
  %6245 = vmatpush1.msra.mxu0 0.0
  %6246 = vmatprep.subr.mxu0 0.0
  %6247 = vmatpush1.msra.mxu0 0.0
  %6248 = vmatprep.subr.mxu0 0.0
  %6249 = vmatpush1.msra.mxu0 0.0
  %6250 = vmatprep.subr.mxu0 0.0
  %6251 = vmatpush1.msra.mxu0 0.0
  %6252 = vmatprep.subr.mxu0 0.0
  %6253 = vmatpush1.msra.mxu0 0.0
  %6254 = vmatprep.subr.mxu0 0.0
  %6255 = vmatpush1.msra.mxu0 0.0
  %6256 = vmatprep.subr.mxu0 0.0
  %6257 = vmatpush1.msra.mxu0 0.0
  %6258 = vmatprep.subr.mxu0 0.0
  %6259 = vmatpush1.msra.mxu0 0.0
  %6260 = vmatprep.subr.mxu0 0.0
  %6261 = vmatpush1.msra.mxu0 0.0
  %6262 = vmatprep.subr.mxu0 0.0
  %6263 = vmatpush1.msra.mxu0 0.0
  %6264 = vmatprep.subr.mxu0 0.0
  %6265 = vmatpush1.msra.mxu0 0.0
  %6266 = vmatprep.subr.mxu0 0.0
  %6267 = vmatpush1.msra.mxu0 0.0
  %6268 = vmatprep.subr.mxu0 0.0
  %6269 = vmatpush1.msra.mxu0 0.0
  %6270 = vmatprep.subr.mxu0 0.0
  %6271 = vmatpush1.msra.mxu0 0.0
  %6272 = vmatprep.subr.mxu0 0.0
  %6273 = vmatpush1.msra.mxu0 0.0
  %6274 = vmatprep.mubr.f32.mxu0 0.0
  %6275 = vmatmul.mubr.f32.gmra.mrb[0].mxu0 %v6208
  %v6276 = vpop.f32.mrb[0].mxu0
  %v6277 = vadd.f32 %v6206, %v6276
  %v6278 = vpop.f32.mrb[0].mxu0
  %6279 = vdwg.mxu0
  %6280 = vst [vmem:[%s19] sm:$0xff] %v6277
  // Predicated region
  $region78: #{_forward.1} parent=0 // pred_check
    _
  $region79: #{_forward.1} parent=0 // pred_check_branch
    %6282 = sbr.rel (0) target = $region81
  $region80: #{_forward.1} parent=0 // pred_region
    _
  $region81: #{_forward.1} parent=0 // pred_fallthru
    _
  // Predicated region
  $region82: #{_forward.1} parent=0 // pred_check
    _
  $region83: #{_forward.1} parent=0 // pred_check_branch
    %6284 = sbr.rel (0) target = $region85
  $region84: #{_forward.1} parent=0 // pred_region
    _
  $region85: #{_forward.1} parent=0 // pred_fallthru
    _

</llo_original>
